<compile_context>
chip_gen: v6e
topology: v6e:2x2x1
jax: 0.10.0
libtpu: 0.0.40
codegen_flags: <defaults>
</compile_context>

<pallas_src>
import numpy as np
import jax
import jax.numpy as jnp
from jax.experimental import pallas as pl
from jax.experimental.pallas import tpu as pltpu

# Demo sizes (small but consistent with the module; production FEAT would be 2048)
B = 8          # number of videos
T = 16         # padded frames per video
FEAT = 512     # args.feature_dim
D0 = 1024      # fc0 out
D1 = 256       # fc1 out / language feature dim
DLR = 100      # fc_lr out (lane-padded to 128 inside the kernel)
TEXT_T = 8     # language time steps
TEXT_D = 300   # language input dim


def visual_kernel(valid_ref, x_ref, lang_ref,
                  w0_ref, b0_ref, w1_ref, b1_ref, w2_ref, b2_ref,
                  wlr_ref, blr_ref,
                  packed_ref, pooledlr_ref, frameslr_ref):
    x = x_ref[...]                                    # [bt, T, F] bf16
    bt, Tt, Fk = x.shape
    x2 = x.reshape(bt * Tt, Fk)                       # fill MXU rows across the batch tile

    validf = valid_ref[...].reshape(bt, Tt)           # [bt, T] f32: 1 = real frame, 0 = padding
    valid = validf > 0.5

    # bilinear = relu(fc1(relu(fc0(v))) * sigmoid(lang));  bf16 MXU operands, f32 accumulation
    h0 = jnp.maximum(
        jnp.dot(x2, w0_ref[...], preferred_element_type=jnp.float32) + b0_ref[...], 0.0)
    h1f = jnp.dot(h0.astype(jnp.bfloat16), w1_ref[...],
                  preferred_element_type=jnp.float32) + b1_ref[...]
    lf = jax.nn.sigmoid(lang_ref[...])                 # [bt, 1, D1] f32 (EUP)
    h1 = jnp.maximum(h1f.reshape(bt, Tt, -1) * lf, 0.0)

    # fc2 (single output column): VPU multiply + lane reduction (no 1-wide MXU result)
    att = jax.nn.sigmoid(jnp.sum(h1 * w2_ref[...], axis=-1) + b2_ref[...])   # [bt, T] f32
    att_m = att * validf

    # attention_to_binary: threshold = max - 0.5*(max - min) over valid frames
    a_max = jnp.max(jnp.where(valid, att, -jnp.inf), axis=-1, keepdims=True)
    a_min = jnp.min(jnp.where(valid, att, jnp.inf), axis=-1, keepdims=True)
    thr = a_max - (a_max - a_min) * 0.5
    pos = jnp.logical_and(att > thr, valid).astype(jnp.float32)              # [bt, T]
    neg = validf - pos

    seq_f = jnp.maximum(jnp.sum(validf, axis=-1, keepdims=True), 1.0)        # guards vs 0/0
    cnt_p = jnp.maximum(jnp.sum(pos, axis=-1, keepdims=True), 1.0)
    cnt_n = jnp.maximum(jnp.sum(neg, axis=-1, keepdims=True), 1.0)

    # fc_lr over ALL frames once; padded frames give bias-only rows (masked downstream)
    xw = jnp.dot(x2, wlr_ref[...], preferred_element_type=jnp.float32)       # [bt*T, 128]
    blr = blr_ref[...]                                                       # [1, 128]
    xw3 = xw.reshape(bt, Tt, -1)
    frameslr_ref[...] = xw3 + blr   # TODO(synk): emit bf16 here if the downstream consumer allows

    # pooled projections reuse xw algebraically:
    #   fc_lr(sum_t m_t x_t / c) = (sum_t m_t (x_t @ Wlr)) / c + blr
    # rows: 0 = att/seq_len (weighted pooling), 1 = pos/|pos|, 2 = neg/|neg|
    # done on VPU + sublane-sum instead of a 3-row MXU matmul.
    w_row = (att_m / seq_f)[:, None, :]                                      # [bt, 1, T]
    p_row = (pos / cnt_p)[:, None, :]
    n_row = (neg / cnt_n)[:, None, :]
    m_id = jax.lax.broadcasted_iota(jnp.int32, (bt, 3, Tt), 1)
    masks = jnp.where(m_id == 0, w_row, jnp.where(m_id == 1, p_row, n_row))  # [bt, 3, T]
    pooled = jnp.sum(masks[:, :, :, None] * xw3[:, None, :, :], axis=2)      # [bt, 3, 128]
    pooledlr_ref[...] = pooled + blr

    # pack the narrow outputs into ONE lane-dense store: [att | negmask | zero pad]
    pack_w = packed_ref.shape[-1]
    pieces = [att_m, neg]
    if pack_w > 2 * Tt:
        pieces.append(jnp.zeros((bt, pack_w - 2 * Tt), jnp.float32))
    packed_ref[...] = jnp.concatenate(pieces, axis=-1).reshape(bt, 1, pack_w)


def visual_model_forward(features, lang_feat, params, seq_lens=None,
                         videos_per_tile=4, megacore=False):
    """features: [B, T, FEAT] f32 (zero-padded tail frames); lang_feat: [B, D1] f32."""
    w0, b0, w1, b1, w2, b2, wlr, blr = params
    Bv, Tv, Fv = features.shape
    D0v, D1v = w0.shape[1], w1.shape[1]
    dlr = wlr.shape[1]
    dlr_pad = ((dlr + 127) // 128) * 128
    pack_w = max(((2 * Tv + 127) // 128) * 128, 128)

    if seq_lens is None:
        # same rule as the PyTorch reference; done once in plain JAX if the host doesn't know it
        seq_lens = jnp.sum((jnp.max(jnp.abs(features), axis=-1) > 0.0).astype(jnp.int32), axis=-1)
    validf = (jnp.arange(Tv)[None, :] < seq_lens[:, None]).astype(jnp.float32)[:, None, :]

    # bf16 storage for the big MXU operands (HBM traffic is the entire cost at these shapes);
    # biases / language feature / validity stay f32 (all VPU math in the kernel is f32).
    xb = features.astype(jnp.bfloat16)
    w0b = w0.astype(jnp.bfloat16)
    w1b = w1.astype(jnp.bfloat16)
    wlr_p = jnp.pad(wlr, ((0, 0), (0, dlr_pad - dlr))).astype(jnp.bfloat16)
    blr_p = jnp.pad(blr, ((0, 0), (0, dlr_pad - dlr)))
    lang3 = lang_feat[:, None, :]                       # [B, 1, D1]
    w2row = w2.reshape(1, -1)                           # [D1, 1] -> [1, D1]

    bt = max(1, min(videos_per_tile, Bv))
    while Bv % bt:
        bt -= 1
    grid = (Bv // bt,)

    in_specs = [
        pl.BlockSpec((bt, 1, Tv), lambda i: (i, 0, 0)),        # frame-validity mask
        pl.BlockSpec((bt, Tv, Fv), lambda i: (i, 0, 0)),       # features (bf16)
        pl.BlockSpec((bt, 1, D1v), lambda i: (i, 0, 0)),       # language feature
        pl.BlockSpec((Fv, D0v), lambda i: (0, 0)),             # w0  (VMEM-resident across grid)
        pl.BlockSpec((1, D0v), lambda i: (0, 0)),              # b0
        pl.BlockSpec((D0v, D1v), lambda i: (0, 0)),            # w1
        pl.BlockSpec((1, D1v), lambda i: (0, 0)),              # b1
        pl.BlockSpec((1, D1v), lambda i: (0, 0)),              # w2 (row)
        pl.BlockSpec((1, 1), lambda i: (0, 0)),                # b2
        pl.BlockSpec((Fv, dlr_pad), lambda i: (0, 0)),         # w_lr (lane-padded, bf16)
        pl.BlockSpec((1, dlr_pad), lambda i: (0, 0)),          # b_lr (lane-padded)
    ]
    out_specs = (
        pl.BlockSpec((bt, 1, pack_w), lambda i: (i, 0, 0)),    # packed [att | negmask]
        pl.BlockSpec((bt, 3, dlr_pad), lambda i: (i, 0, 0)),   # fc_lr(weighted / pos / neg mean)
        pl.BlockSpec((bt, Tv, dlr_pad), lambda i: (i, 0, 0)),  # fc_lr per frame
    )
    out_shape = (
        jax.ShapeDtypeStruct((Bv, 1, pack_w), jnp.float32),
        jax.ShapeDtypeStruct((Bv, 3, dlr_pad), jnp.float32),
        jax.ShapeDtypeStruct((Bv, Tv, dlr_pad), jnp.float32),
    )

    flops = 2 * Bv * Tv * (Fv * D0v + D0v * D1v + Fv * dlr_pad)
    bytes_accessed = (xb.size * 2 + w0b.size * 2 + w1b.size * 2 + wlr_p.size * 2
                      + (b0.size + b1.size + blr_p.size + lang3.size + validf.size) * 4
                      + (Bv * pack_w + Bv * 3 * dlr_pad + Bv * Tv * dlr_pad) * 4)
    cost = pl.CostEstimate(flops=int(flops),
                           transcendentals=int(Bv * (D1v + Tv)),
                           bytes_accessed=int(bytes_accessed))

    # "arbitrary" keeps weights single-copy on multi-TC chips at small batch; use
    # megacore=True ("parallel") once activation bytes dominate the (bf16) weight bytes.
    dims = ("parallel",) if megacore else ("arbitrary",)

    packed, pooled_lr, frames_lr = pl.pallas_call(
        visual_kernel,
        out_shape=out_shape,
        grid_spec=pltpu.PrefetchScalarGridSpec(
            num_scalar_prefetch=0, grid=grid,
            in_specs=in_specs, out_specs=out_specs),
        compiler_params=pltpu.CompilerParams(
            dimension_semantics=dims,
            vmem_limit_bytes=32 * 1024 * 1024),
        cost_estimate=cost,
    )(validf, xb, lang3, w0b, b0, w1b, b1, w2row, b2, wlr_p, blr_p)

    att = packed[:, 0, :Tv]
    negmask = packed[:, 0, Tv:2 * Tv]
    out_lr = pooled_lr[:, 0, :dlr]
    pos_lr = pooled_lr[:, 1, :dlr]
    negmean_lr = pooled_lr[:, 2, :dlr]
    frames_lr = frames_lr[..., :dlr]
    return att, negmask, out_lr, pos_lr, negmean_lr, frames_lr, seq_lens


# TODO(synk): Language_encoder (2-layer LSTM, in=300, hidden=300, out=256) is not defined in the
# provided source; deterministic mean-pool + linear stand-in.
def language_encoder(text, wl, bl):
    return jnp.mean(text, axis=1) @ wl + bl            # [B, D1]


if __name__ == "__main__":
    key = jax.random.PRNGKey(0)
    ks = jax.random.split(key, 12)
    s = 0.05
    w0 = jax.random.normal(ks[0], (FEAT, D0), jnp.float32) * s
    b0 = jax.random.normal(ks[1], (1, D0), jnp.float32) * s
    w1 = jax.random.normal(ks[2], (D0, D1), jnp.float32) * s
    b1 = jax.random.normal(ks[3], (1, D1), jnp.float32) * s
    w2 = jax.random.normal(ks[4], (D1, 1), jnp.float32) * s
    b2 = jax.random.normal(ks[5], (1, 1), jnp.float32) * s
    wlr = jax.random.normal(ks[6], (FEAT, DLR), jnp.float32) * s
    blr = jax.random.normal(ks[7], (1, DLR), jnp.float32) * s
    wl = jax.random.normal(ks[8], (TEXT_D, D1), jnp.float32) * s
    bl = jax.random.normal(ks[9], (D1,), jnp.float32) * s

    features = jax.random.normal(ks[10], (B, T, FEAT), jnp.float32)
    # ragged sequence lengths; zero-pad the tails (host knows these lengths)
    seq_lens_np = np.array([16, 11, 16, 7, 16, 16, 13, 16], dtype=np.int32)
    frame_valid_np = (np.arange(T)[None, :] < seq_lens_np[:, None]).astype(np.float32)
    features = features * jnp.asarray(frame_valid_np)[:, :, None]
    text = jax.random.normal(ks[11], (B, TEXT_T, TEXT_D), jnp.float32)

    lang = language_encoder(text, wl, bl)               # [B, D1]
    params = (w0, b0, w1, b1, w2, b2, wlr, blr)
    seq_lens = jnp.asarray(seq_lens_np)

    att, negmask, out_lr, pos_lr, negmean_lr, frames_lr, seq = visual_model_forward(
        features, lang, params, seq_lens=seq_lens, videos_per_tile=4)
    jax.block_until_ready((att, negmask, out_lr, pos_lr, negmean_lr, frames_lr, seq))

    # ---- numpy reference (mirrors the PyTorch per-video loop) ----
    # Matmuls use bf16 operands / f32 accumulation -> loose tolerances.  The pos/neg threshold
    # split is recomputed from the kernel's own f32 attention output, so that check is exact.
    fnp, lnp = np.asarray(features), np.asarray(lang)
    W0, B0n, W1, B1n, W2, B2n, WLR, BLRn = [np.asarray(p) for p in params]
    sig = lambda z: 1.0 / (1.0 + np.exp(-z))
    seq_np = np.asarray(seq)
    att_np, negmask_np = np.asarray(att), np.asarray(negmask)
    out_np, pos_np, negm_np, frames_np = map(np.asarray, (out_lr, pos_lr, negmean_lr, frames_lr))

    RT, AT = 4e-2, 2e-2
    for i in range(B):
        sl = int(seq_np[i])
        assert sl == int(seq_lens_np[i]), f"bad seq_len {sl}"
        vf = fnp[i, :sl]
        lf = sig(lnp[i])
        h0 = np.maximum(vf @ W0 + B0n[0], 0.0)
        h1 = np.maximum((h0 @ W1 + B1n[0]) * lf, 0.0)
        a_ref = sig(h1 @ W2 + B2n[0])[:, 0]
        np.testing.assert_allclose(att_np[i, :sl], a_ref, rtol=5e-2, atol=1.5e-2)
        assert not np.any(att_np[i, sl:] != 0.0)

        # threshold split from the kernel's own attention values (matches in-kernel f32 math)
        a = att_np[i, :sl].astype(np.float32)
        amax, amin = np.float32(a.max()), np.float32(a.min())
        thr = np.float32(amax - (amax - amin) * np.float32(0.5))
        pos = a > thr
        neg = ~pos
        assert np.array_equal(negmask_np[i, :sl] > 0.5, neg), "neg/pos split mismatch"
        assert not np.any(negmask_np[i, sl:] > 0.5)

        wp = (a[:, None] * vf).sum(0) / sl
        pos_f = vf[pos].sum(0) / pos.sum()
        neg_m = vf[neg].sum(0) / neg.sum()
        np.testing.assert_allclose(out_np[i], wp @ WLR + BLRn[0], rtol=RT, atol=AT)
        np.testing.assert_allclose(pos_np[i], pos_f @ WLR + BLRn[0], rtol=RT, atol=AT)
        np.testing.assert_allclose(negm_np[i], neg_m @ WLR + BLRn[0], rtol=RT, atol=AT)
        np.testing.assert_allclose(frames_np[i, :sl][neg], vf[neg] @ WLR + BLRn[0],
                                   rtol=RT, atol=AT)

    print("KERNEL_OK")
</pallas_src>

<mosaic_0001>
module attributes {stable_mosaic.version = 11 : i64} {
  func.func @visual_kernel(%arg0: i32, %arg1: memref<4x1x16xf32, #tpu.memory_space<vmem>>, %arg2: memref<4x16x512xbf16, #tpu.memory_space<vmem>>, %arg3: memref<4x1x256xf32, #tpu.memory_space<vmem>>, %arg4: memref<512x1024xbf16, #tpu.memory_space<vmem>>, %arg5: memref<1x1024xf32, #tpu.memory_space<vmem>>, %arg6: memref<1024x256xbf16, #tpu.memory_space<vmem>>, %arg7: memref<1x256xf32, #tpu.memory_space<vmem>>, %arg8: memref<1x256xf32, #tpu.memory_space<vmem>>, %arg9: memref<1x1xf32, #tpu.memory_space<vmem>>, %arg10: memref<512x128xbf16, #tpu.memory_space<vmem>>, %arg11: memref<1x128xf32, #tpu.memory_space<vmem>>, %arg12: memref<4x1x128xf32, #tpu.memory_space<vmem>>, %arg13: memref<4x3x128xf32, #tpu.memory_space<vmem>>, %arg14: memref<4x16x128xf32, #tpu.memory_space<vmem>>) attributes {dimension_semantics = [#tpu.dimension_semantics<arbitrary>], iteration_bounds = array<i64: 2>, scalar_prefetch = 0 : i64, scratch_operands = 0 : i64, tpu.core_type = #tpu.core_type<tc>, window_params = [{transform_indices = @transform_0, window_bounds = array<i64: 4, 1, 16>}, {transform_indices = @transform_1, window_bounds = array<i64: 4, 16, 512>}, {transform_indices = @transform_2, window_bounds = array<i64: 4, 1, 256>}, {pipeline_mode = #tpu.pipeline_mode<synchronous>, transform_indices = @transform_3, window_bounds = array<i64: 512, 1024>}, {pipeline_mode = #tpu.pipeline_mode<synchronous>, transform_indices = @transform_4, window_bounds = array<i64: 1, 1024>}, {pipeline_mode = #tpu.pipeline_mode<synchronous>, transform_indices = @transform_5, window_bounds = array<i64: 1024, 256>}, {pipeline_mode = #tpu.pipeline_mode<synchronous>, transform_indices = @transform_6, window_bounds = array<i64: 1, 256>}, {pipeline_mode = #tpu.pipeline_mode<synchronous>, transform_indices = @transform_7, window_bounds = array<i64: 1, 256>}, {pipeline_mode = #tpu.pipeline_mode<synchronous>, transform_indices = @transform_8, window_bounds = array<i64: 1, 1>}, {pipeline_mode = #tpu.pipeline_mode<synchronous>, transform_indices = @transform_9, window_bounds = array<i64: 512, 128>}, {pipeline_mode = #tpu.pipeline_mode<synchronous>, transform_indices = @transform_10, window_bounds = array<i64: 1, 128>}, {transform_indices = @transform_11, window_bounds = array<i64: 4, 1, 128>}, {transform_indices = @transform_12, window_bounds = array<i64: 4, 3, 128>}, {transform_indices = @transform_13, window_bounds = array<i64: 4, 16, 128>}]} {
    %c0 = arith.constant 0 : index
    %c0_0 = arith.constant 0 : index
    %c0_1 = arith.constant 0 : index
    %0 = vector.load %arg2[%c0, %c0_0, %c0_1] : memref<4x16x512xbf16, #tpu.memory_space<vmem>>, vector<4x16x512xbf16>
    %1 = vector.shape_cast %0 : vector<4x16x512xbf16> to vector<64x512xbf16>
    %c0_2 = arith.constant 0 : index
    %c0_3 = arith.constant 0 : index
    %c0_4 = arith.constant 0 : index
    %2 = vector.load %arg1[%c0_2, %c0_3, %c0_4] : memref<4x1x16xf32, #tpu.memory_space<vmem>>, vector<4x1x16xf32>
    %3 = vector.shape_cast %2 : vector<4x1x16xf32> to vector<4x16xf32>
    %cst = arith.constant 5.000000e-01 : f32
    %4 = vector.broadcast %cst : f32 to vector<4x16xf32>
    %5 = arith.cmpf ogt, %3, %4 : vector<4x16xf32>
    %c0_5 = arith.constant 0 : index
    %c0_6 = arith.constant 0 : index
    %6 = vector.load %arg4[%c0_5, %c0_6] : memref<512x1024xbf16, #tpu.memory_space<vmem>>, vector<512x1024xbf16>
    %cst_7 = arith.constant dense<0.000000e+00> : vector<64x1024xf32>
    %7 = tpu.matmul %1, %6, %cst_7 {dimension_numbers = #tpu.dot_dimension_numbers<[1], [0], [0], [1], [0, 0, 1, 1], [], []>} : vector<64x512xbf16>, vector<512x1024xbf16>, vector<64x1024xf32> -> vector<64x1024xf32>
    %c0_8 = arith.constant 0 : index
    %c0_9 = arith.constant 0 : index
    %8 = vector.load %arg5[%c0_8, %c0_9] : memref<1x1024xf32, #tpu.memory_space<vmem>>, vector<1x1024xf32>
    %9 = vector.broadcast %8 : vector<1x1024xf32> to vector<64x1024xf32>
    %10 = arith.addf %7, %9 : vector<64x1024xf32>
    %cst_10 = arith.constant 0.000000e+00 : f32
    %11 = vector.broadcast %cst_10 : f32 to vector<64x1024xf32>
    %12 = arith.maximumf %10, %11 : vector<64x1024xf32>
    %13 = arith.truncf %12 : vector<64x1024xf32> to vector<64x1024xbf16>
    %c0_11 = arith.constant 0 : index
    %c0_12 = arith.constant 0 : index
    %14 = vector.load %arg6[%c0_11, %c0_12] : memref<1024x256xbf16, #tpu.memory_space<vmem>>, vector<1024x256xbf16>
    %cst_13 = arith.constant dense<0.000000e+00> : vector<64x256xf32>
    %15 = tpu.matmul %13, %14, %cst_13 {dimension_numbers = #tpu.dot_dimension_numbers<[1], [0], [0], [1], [0, 0, 1, 1], [], []>} : vector<64x1024xbf16>, vector<1024x256xbf16>, vector<64x256xf32> -> vector<64x256xf32>
    %c0_14 = arith.constant 0 : index
    %c0_15 = arith.constant 0 : index
    %16 = vector.load %arg7[%c0_14, %c0_15] : memref<1x256xf32, #tpu.memory_space<vmem>>, vector<1x256xf32>
    %17 = vector.broadcast %16 : vector<1x256xf32> to vector<64x256xf32>
    %18 = arith.addf %15, %17 : vector<64x256xf32>
    %c0_16 = arith.constant 0 : index
    %c0_17 = arith.constant 0 : index
    %c0_18 = arith.constant 0 : index
    %19 = vector.load %arg3[%c0_16, %c0_17, %c0_18] : memref<4x1x256xf32, #tpu.memory_space<vmem>>, vector<4x1x256xf32>
    %20 = arith.negf %19 : vector<4x1x256xf32>
    %21 = math.exp %20 : vector<4x1x256xf32>
    %cst_19 = arith.constant 1.000000e+00 : f32
    %22 = vector.broadcast %cst_19 : f32 to vector<4x1x256xf32>
    %23 = arith.addf %22, %21 : vector<4x1x256xf32>
    %24 = arith.divf %22, %23 : vector<4x1x256xf32>
    %25 = vector.shape_cast %18 : vector<64x256xf32> to vector<4x16x256xf32>
    %26 = vector.broadcast %24 : vector<4x1x256xf32> to vector<4x16x256xf32>
    %27 = arith.mulf %25, %26 : vector<4x16x256xf32>
    %cst_20 = arith.constant 0.000000e+00 : f32
    %28 = vector.broadcast %cst_20 : f32 to vector<4x16x256xf32>
    %29 = arith.maximumf %27, %28 : vector<4x16x256xf32>
    %c0_21 = arith.constant 0 : index
    %c0_22 = arith.constant 0 : index
    %30 = vector.load %arg8[%c0_21, %c0_22] : memref<1x256xf32, #tpu.memory_space<vmem>>, vector<1x256xf32>
    %31 = vector.shape_cast %30 : vector<1x256xf32> to vector<1x1x256xf32>
    %32 = vector.broadcast %31 : vector<1x1x256xf32> to vector<4x16x256xf32>
    %33 = arith.mulf %29, %32 : vector<4x16x256xf32>
    %cst_23 = arith.constant dense<0.000000e+00> : vector<4x16xf32>
    %34 = vector.multi_reduction <add>, %33, %cst_23 [2] : vector<4x16x256xf32> to vector<4x16xf32>
    %c0_24 = arith.constant 0 : index
    %c0_25 = arith.constant 0 : index
    %35 = vector.load %arg9[%c0_24, %c0_25] : memref<1x1xf32, #tpu.memory_space<vmem>>, vector<1x1xf32>
    %36 = vector.broadcast %35 : vector<1x1xf32> to vector<4x16xf32>
    %37 = arith.addf %34, %36 : vector<4x16xf32>
    %38 = arith.negf %37 : vector<4x16xf32>
    %39 = math.exp %38 : vector<4x16xf32>
    %cst_26 = arith.constant 1.000000e+00 : f32
    %40 = vector.broadcast %cst_26 : f32 to vector<4x16xf32>
    %41 = arith.addf %40, %39 : vector<4x16xf32>
    %42 = arith.divf %40, %41 : vector<4x16xf32>
    %43 = arith.mulf %42, %3 : vector<4x16xf32>
    %cst_27 = arith.constant 0xFF800000 : f32
    %44 = vector.broadcast %cst_27 : f32 to vector<4x16xf32>
    %45 = arith.select %5, %42, %44 : vector<4x16xi1>, vector<4x16xf32>
    %cst_28 = arith.constant dense<0xFF800000> : vector<4xf32>
    %46 = vector.multi_reduction <maximumf>, %45, %cst_28 [1] : vector<4x16xf32> to vector<4xf32>
    %47 = vector.shape_cast %46 : vector<4xf32> to vector<4x1xf32>
    %cst_29 = arith.constant 0x7F800000 : f32
    %48 = vector.broadcast %cst_29 : f32 to vector<4x16xf32>
    %49 = arith.select %5, %42, %48 : vector<4x16xi1>, vector<4x16xf32>
    %cst_30 = arith.constant dense<0x7F800000> : vector<4xf32>
    %50 = vector.multi_reduction <minimumf>, %49, %cst_30 [1] : vector<4x16xf32> to vector<4xf32>
    %51 = vector.shape_cast %50 : vector<4xf32> to vector<4x1xf32>
    %52 = arith.subf %47, %51 : vector<4x1xf32>
    %cst_31 = arith.constant 5.000000e-01 : f32
    %53 = vector.broadcast %cst_31 : f32 to vector<4x1xf32>
    %54 = arith.mulf %52, %53 : vector<4x1xf32>
    %55 = arith.subf %47, %54 : vector<4x1xf32>
    %56 = vector.broadcast %55 : vector<4x1xf32> to vector<4x16xf32>
    %57 = arith.cmpf ogt, %42, %56 : vector<4x16xf32>
    %58 = arith.andi %57, %5 : vector<4x16xi1>
    %59 = arith.extui %58 : vector<4x16xi1> to vector<4x16xi32>
    %60 = arith.sitofp %59 : vector<4x16xi32> to vector<4x16xf32>
    %61 = arith.subf %3, %60 : vector<4x16xf32>
    %cst_32 = arith.constant dense<0.000000e+00> : vector<4xf32>
    %62 = vector.multi_reduction <add>, %3, %cst_32 [1] : vector<4x16xf32> to vector<4xf32>
    %63 = vector.shape_cast %62 : vector<4xf32> to vector<4x1xf32>
    %cst_33 = arith.constant 1.000000e+00 : f32
    %64 = vector.broadcast %cst_33 : f32 to vector<4x1xf32>
    %65 = arith.maximumf %63, %64 : vector<4x1xf32>
    %cst_34 = arith.constant dense<0.000000e+00> : vector<4xf32>
    %66 = vector.multi_reduction <add>, %60, %cst_34 [1] : vector<4x16xf32> to vector<4xf32>
    %67 = vector.shape_cast %66 : vector<4xf32> to vector<4x1xf32>
    %cst_35 = arith.constant 1.000000e+00 : f32
    %68 = vector.broadcast %cst_35 : f32 to vector<4x1xf32>
    %69 = arith.maximumf %67, %68 : vector<4x1xf32>
    %cst_36 = arith.constant dense<0.000000e+00> : vector<4xf32>
    %70 = vector.multi_reduction <add>, %61, %cst_36 [1] : vector<4x16xf32> to vector<4xf32>
    %71 = vector.shape_cast %70 : vector<4xf32> to vector<4x1xf32>
    %cst_37 = arith.constant 1.000000e+00 : f32
    %72 = vector.broadcast %cst_37 : f32 to vector<4x1xf32>
    %73 = arith.maximumf %71, %72 : vector<4x1xf32>
    %c0_38 = arith.constant 0 : index
    %c0_39 = arith.constant 0 : index
    %74 = vector.load %arg10[%c0_38, %c0_39] : memref<512x128xbf16, #tpu.memory_space<vmem>>, vector<512x128xbf16>
    %cst_40 = arith.constant dense<0.000000e+00> : vector<64x128xf32>
    %75 = tpu.matmul %1, %74, %cst_40 {dimension_numbers = #tpu.dot_dimension_numbers<[1], [0], [0], [1], [0, 0, 1, 1], [], []>} : vector<64x512xbf16>, vector<512x128xbf16>, vector<64x128xf32> -> vector<64x128xf32>
    %c0_41 = arith.constant 0 : index
    %c0_42 = arith.constant 0 : index
    %76 = vector.load %arg11[%c0_41, %c0_42] : memref<1x128xf32, #tpu.memory_space<vmem>>, vector<1x128xf32>
    %77 = vector.shape_cast %75 : vector<64x128xf32> to vector<4x16x128xf32>
    %78 = vector.shape_cast %76 : vector<1x128xf32> to vector<1x1x128xf32>
    %79 = vector.broadcast %78 : vector<1x1x128xf32> to vector<4x16x128xf32>
    %80 = arith.addf %77, %79 : vector<4x16x128xf32>
    %c0_43 = arith.constant 0 : index
    %c0_44 = arith.constant 0 : index
    %c0_45 = arith.constant 0 : index
    %81 = vector.load %arg14[%c0_43, %c0_44, %c0_45] : memref<4x16x128xf32, #tpu.memory_space<vmem>>, vector<4x16x128xf32>
    tpu.vector_store %arg14[%c0_43, %c0_44, %c0_45], %80 {strides = array<i32>} : memref<4x16x128xf32, #tpu.memory_space<vmem>>, vector<4x16x128xf32>,
    %82 = vector.broadcast %65 : vector<4x1xf32> to vector<4x16xf32>
    %83 = arith.divf %43, %82 : vector<4x16xf32>
    %84 = vector.shape_cast %83 : vector<4x16xf32> to vector<4x1x16xf32>
    %85 = vector.broadcast %69 : vector<4x1xf32> to vector<4x16xf32>
    %86 = arith.divf %60, %85 : vector<4x16xf32>
    %87 = vector.shape_cast %86 : vector<4x16xf32> to vector<4x1x16xf32>
    %88 = vector.broadcast %73 : vector<4x1xf32> to vector<4x16xf32>
    %89 = arith.divf %61, %88 : vector<4x16xf32>
    %90 = vector.shape_cast %89 : vector<4x16xf32> to vector<4x1x16xf32>
    %91 = tpu.iota {dimensions = array<i32: 1>} : vector<4x3x16xi32>
    %c0_i32 = arith.constant 0 : i32
    %92 = vector.broadcast %c0_i32 : i32 to vector<4x3x16xi32>
    %93 = arith.cmpi eq, %91, %92 : vector<4x3x16xi32>
    %c1_i32 = arith.constant 1 : i32
    %94 = vector.broadcast %c1_i32 : i32 to vector<4x3x16xi32>
    %95 = arith.cmpi eq, %91, %94 : vector<4x3x16xi32>
    %96 = vector.shape_cast %87 : vector<4x1x16xf32> to vector<4x1x16xf32>
    %97 = vector.broadcast %96 : vector<4x1x16xf32> to vector<4x3x16xf32>
    %98 = vector.shape_cast %90 : vector<4x1x16xf32> to vector<4x1x16xf32>
    %99 = vector.broadcast %98 : vector<4x1x16xf32> to vector<4x3x16xf32>
    %100 = arith.select %95, %97, %99 : vector<4x3x16xi1>, vector<4x3x16xf32>
    %101 = vector.shape_cast %84 : vector<4x1x16xf32> to vector<4x1x16xf32>
    %102 = vector.broadcast %101 : vector<4x1x16xf32> to vector<4x3x16xf32>
    %103 = arith.select %93, %102, %100 : vector<4x3x16xi1>, vector<4x3x16xf32>
    %104 = vector.shape_cast %103 : vector<4x3x16xf32> to vector<4x3x16x1xf32>
    %105 = vector.shape_cast %77 : vector<4x16x128xf32> to vector<4x1x16x128xf32>
    %106 = vector.broadcast %104 : vector<4x3x16x1xf32> to vector<4x3x16x128xf32>
    %107 = vector.broadcast %105 : vector<4x1x16x128xf32> to vector<4x3x16x128xf32>
    %108 = arith.mulf %106, %107 : vector<4x3x16x128xf32>
    %cst_46 = arith.constant dense<0.000000e+00> : vector<4x3x128xf32>
    %109 = vector.multi_reduction <add>, %108, %cst_46 [2] : vector<4x3x16x128xf32> to vector<4x3x128xf32>
    %110 = vector.shape_cast %76 : vector<1x128xf32> to vector<1x1x128xf32>
    %111 = vector.broadcast %110 : vector<1x1x128xf32> to vector<4x3x128xf32>
    %112 = arith.addf %109, %111 : vector<4x3x128xf32>
    %c0_47 = arith.constant 0 : index
    %c0_48 = arith.constant 0 : index
    %c0_49 = arith.constant 0 : index
    %113 = vector.load %arg13[%c0_47, %c0_48, %c0_49] : memref<4x3x128xf32, #tpu.memory_space<vmem>>, vector<4x3x128xf32>
    tpu.vector_store %arg13[%c0_47, %c0_48, %c0_49], %112 {strides = array<i32>} : memref<4x3x128xf32, #tpu.memory_space<vmem>>, vector<4x3x128xf32>,
    %cst_50 = arith.constant 0.000000e+00 : f32
    %114 = vector.broadcast %cst_50 : f32 to vector<4x96xf32>
    %115 = tpu.concatenate %43, %61, %114 in 1 : vector<4x16xf32>, vector<4x16xf32>, vector<4x96xf32> -> vector<4x128xf32>
    %116 = vector.shape_cast %115 : vector<4x128xf32> to vector<4x1x128xf32>
    %c0_51 = arith.constant 0 : index
    %c0_52 = arith.constant 0 : index
    %c0_53 = arith.constant 0 : index
    %117 = vector.load %arg12[%c0_51, %c0_52, %c0_53] : memref<4x1x128xf32, #tpu.memory_space<vmem>>, vector<4x1x128xf32>
    tpu.vector_store %arg12[%c0_51, %c0_52, %c0_53], %116 {strides = array<i32>} : memref<4x1x128xf32, #tpu.memory_space<vmem>>, vector<4x1x128xf32>,
    return
  }
  func.func @transform_0(%arg0: i32) -> (i32, i32, i32) {
    %c0_i32 = arith.constant 0 : i32
    %c0_i32_0 = arith.constant 0 : i32
    %c0_i32_1 = arith.constant 0 : i32
    return %arg0, %c0_i32, %c0_i32_0 : i32, i32, i32
  }
  func.func @transform_1(%arg0: i32) -> (i32, i32, i32) {
    %c0_i32 = arith.constant 0 : i32
    %c0_i32_0 = arith.constant 0 : i32
    %c0_i32_1 = arith.constant 0 : i32
    return %arg0, %c0_i32, %c0_i32_0 : i32, i32, i32
  }
  func.func @transform_2(%arg0: i32) -> (i32, i32, i32) {
    %c0_i32 = arith.constant 0 : i32
    %c0_i32_0 = arith.constant 0 : i32
    %c0_i32_1 = arith.constant 0 : i32
    return %arg0, %c0_i32, %c0_i32_0 : i32, i32, i32
  }
  func.func @transform_3(%arg0: i32) -> (i32, i32) {
    %c0_i32 = arith.constant 0 : i32
    %c0_i32_0 = arith.constant 0 : i32
    %c0_i32_1 = arith.constant 0 : i32
    return %c0_i32, %c0_i32_0 : i32, i32
  }
  func.func @transform_4(%arg0: i32) -> (i32, i32) {
    %c0_i32 = arith.constant 0 : i32
    %c0_i32_0 = arith.constant 0 : i32
    %c0_i32_1 = arith.constant 0 : i32
    return %c0_i32, %c0_i32_0 : i32, i32
  }
  func.func @transform_5(%arg0: i32) -> (i32, i32) {
    %c0_i32 = arith.constant 0 : i32
    %c0_i32_0 = arith.constant 0 : i32
    %c0_i32_1 = arith.constant 0 : i32
    return %c0_i32, %c0_i32_0 : i32, i32
  }
  func.func @transform_6(%arg0: i32) -> (i32, i32) {
    %c0_i32 = arith.constant 0 : i32
    %c0_i32_0 = arith.constant 0 : i32
    %c0_i32_1 = arith.constant 0 : i32
    return %c0_i32, %c0_i32_0 : i32, i32
  }
  func.func @transform_7(%arg0: i32) -> (i32, i32) {
    %c0_i32 = arith.constant 0 : i32
    %c0_i32_0 = arith.constant 0 : i32
    %c0_i32_1 = arith.constant 0 : i32
    return %c0_i32, %c0_i32_0 : i32, i32
  }
  func.func @transform_8(%arg0: i32) -> (i32, i32) {
    %c0_i32 = arith.constant 0 : i32
    %c0_i32_0 = arith.constant 0 : i32
    %c0_i32_1 = arith.constant 0 : i32
    return %c0_i32, %c0_i32_0 : i32, i32
  }
  func.func @transform_9(%arg0: i32) -> (i32, i32) {
    %c0_i32 = arith.constant 0 : i32
    %c0_i32_0 = arith.constant 0 : i32
    %c0_i32_1 = arith.constant 0 : i32
    return %c0_i32, %c0_i32_0 : i32, i32
  }
  func.func @transform_10(%arg0: i32) -> (i32, i32) {
    %c0_i32 = arith.constant 0 : i32
    %c0_i32_0 = arith.constant 0 : i32
    %c0_i32_1 = arith.constant 0 : i32
    return %c0_i32, %c0_i32_0 : i32, i32
  }
  func.func @transform_11(%arg0: i32) -> (i32, i32, i32) {
    %c0_i32 = arith.constant 0 : i32
    %c0_i32_0 = arith.constant 0 : i32
    %c0_i32_1 = arith.constant 0 : i32
    return %arg0, %c0_i32, %c0_i32_0 : i32, i32, i32
  }
  func.func @transform_12(%arg0: i32) -> (i32, i32, i32) {
    %c0_i32 = arith.constant 0 : i32
    %c0_i32_0 = arith.constant 0 : i32
    %c0_i32_1 = arith.constant 0 : i32
    return %arg0, %c0_i32, %c0_i32_0 : i32, i32, i32
  }
  func.func @transform_13(%arg0: i32) -> (i32, i32, i32) {
    %c0_i32 = arith.constant 0 : i32
    %c0_i32_0 = arith.constant 0 : i32
    %c0_i32_1 = arith.constant 0 : i32
    return %arg0, %c0_i32, %c0_i32_0 : i32, i32, i32
  }
}

</mosaic_0001>

<llo_original>
// kernel: tpu_custom_call.1
$region0: #{tpu_custom_call.1}
  #allocation0 [shape = 'u32[]', space=smem, size = 0x4, offset = 0x4, fixed_abs, tag = 'smem constant byte address 0x4 - core index']
  #allocation1 [shape = 'u32[144,128]{1,0:T(1,128)}', space=vmem, size = 0x12000, scoped, tag = 'internal scratch']
  #allocation2 [shape = 'f32[1,1]{1,0:T(1,128)S(1)}', space=vmem, size = 0x200, scoped, tag = 'scoped memory for tpu_custom_call.1']
  %s0 = inlined_call_operand.hbm [shape: f32[8,1,16], index: 0, kind: input, shape index: {}]
  %s1 = inlined_call_operand.hbm [shape: bf16[8,16,512], index: 1, kind: input, shape index: {}]
  %s2 = inlined_call_operand.hbm [shape: f32[8,1,256], index: 2, kind: input, shape index: {}]
  %s3 = inlined_call_operand.hbm [shape: bf16[512,1024], index: 3, kind: input, shape index: {}]
  %s4 = inlined_call_operand.vmem [shape: f32[1,1024], index: 4, kind: input, shape index: {}]
  %s5 = inlined_call_operand.hbm [shape: bf16[1024,256], index: 5, kind: input, shape index: {}]
  %s6 = inlined_call_operand.vmem [shape: f32[1,256], index: 6, kind: input, shape index: {}]
  %s7 = inlined_call_operand.vmem [shape: f32[1,256], index: 7, kind: input, shape index: {}]
  %s8 = inlined_call_operand.<no memory space> [shape: f32[1,1], index: 8, kind: input, shape index: {}]
  %s9 = inlined_call_operand.hbm [shape: bf16[512,128], index: 9, kind: input, shape index: {}]
  %s10 = inlined_call_operand.vmem [shape: f32[1,128], index: 10, kind: input, shape index: {}]
  %s11 = inlined_call_operand.hbm [shape: f32[8,1,128], index: 11, kind: output, shape index: {0}]
  %s12 = inlined_call_operand.vmem [shape: f32[8,3,128], index: 12, kind: output, shape index: {1}]
  %s13 = inlined_call_operand.hbm [shape: f32[8,16,128], index: 13, kind: output, shape index: {2}]
  %14 = xla_tuple %s11, %s12, %s13
  %s15 = sld [smem:[#allocation0]]
  $region117: #{tpu_custom_call.1} parent=0
    _
  %s17 = ssub.s32 1, %s15
  %s18 = scalar_select 0, %s17, %s15
  %v19 = vstv %s8
  %20 = vst [vmem:[#allocation2] sm:$0x1] %v19
  $region1: #{tpu_custom_call.1} parent=0
    #allocation3 [shape = 'u8[4096]{0}', space=vmem, size = 0x1000, scoped, tag = 'input window, operand 0']
    #allocation4 [shape = 's32[2]{0}', space=sflag, size = 0x8, scoped, tag = 'scoped memory for tpu_custom_call.1']
    #allocation5 [shape = 's32[2]{0}', space=sflag, size = 0x8, scoped, tag = 'scoped memory for tpu_custom_call.1']
    #allocation6 [shape = 'u8[131072]{0}', space=vmem, size = 0x20000, scoped, tag = 'input window, operand 1']
    #allocation7 [shape = 's32[2]{0}', space=sflag, size = 0x8, scoped, tag = 'scoped memory for tpu_custom_call.1']
    #allocation8 [shape = 'u8[8192]{0}', space=vmem, size = 0x2000, scoped, tag = 'input window, operand 2']
    #allocation9 [shape = 'u8[1048576]{0}', space=vmem, size = 0x100000, scoped, tag = 'input window, operand 3, single buffered']
    #allocation10 [shape = 's32[1]{0}', space=sflag, size = 0x4, scoped, tag = 'scoped memory for tpu_custom_call.1']
    #allocation11 [shape = 'u8[524288]{0}', space=vmem, size = 0x80000, scoped, tag = 'input window, operand 5, single buffered']
    #allocation12 [shape = 'u8[131072]{0}', space=vmem, size = 0x20000, scoped, tag = 'input window, operand 9, single buffered']
    #allocation13 [shape = 's32[1]{0}', space=sflag, size = 0x4, scoped, tag = 'scoped memory for tpu_custom_call.1']
    #allocation14 [shape = 'u8[4096]{0}', space=vmem, size = 0x1000, scoped, tag = 'output window, operand 0']
    #allocation15 [shape = 'u8[65536]{0}', space=vmem, size = 0x10000, scoped, tag = 'output window, operand 2']
    #allocation16 [shape = 's32[2]{0}', space=sflag, size = 0x8, scoped, tag = 'scoped memory for tpu_custom_call.1']
    %21 = vsyncpa [#allocation4], 0
    %s22 = scalar_lea.sflag [#allocation4], 1
    %23 = vsyncpa %s22, 0
    %24 = vsyncpa [#allocation7], 0
    %s25 = scalar_lea.sflag [#allocation7], 1
    %26 = vsyncpa %s25, 0
    %27 = vsyncpa [#allocation10], 0
    %28 = vsyncpa [#allocation13], 0
    %29 = vsyncpa [#allocation5], 0
    %s30 = scalar_lea.sflag [#allocation5], 1
    %31 = vsyncpa %s30, 0
    %32 = vsyncpa [#allocation16], 0
    %s33 = scalar_lea.sflag [#allocation16], 1
    %34 = vsyncpa %s33, 0
    loop: start=0, step=1, limit=4
    $region2: #{tpu_custom_call.1} parent=1 // loop_pre_header
      _
    $region3: #{tpu_custom_call.1} parent=1 // loop_header
      %s36 = sphi 0, %s40
      %p37 = scmp.ge.s32.totalorder %s36, 4
      %s46 = sphi 0, %s48
      %s49 = sphi 0, %s46
      %s50 = sphi 0, %s49
      %s66 = sphi 0, %s50
      %s72 = sphi 0, %s74
      %s75 = sphi 0, %s72
      %s76 = sphi 0, %s75
      %s92 = sphi 0, %s76
      %s98 = sphi 0, %s100
      %s101 = sphi 0, %s98
      %s102 = sphi 0, %s101
      %s118 = sphi 0, %s102
      %s122 = sphi 0, %s122
      %s124 = sphi 0, %s122
      %s125 = sphi 0, %s124
      %s139 = sphi 0, %s125
      %s143 = sphi 0, %s143
      %s145 = sphi 0, %s143
      %s146 = sphi 0, %s145
      %s160 = sphi 0, %s146
      %s164 = sphi 0, %s164
      %s166 = sphi 0, %s164
      %s167 = sphi 0, %s166
      %s181 = sphi 0, %s167
      %s185 = sphi 0, %s185
      %s187 = sphi 0, %s185
      %s188 = sphi 0, %s187
      %s202 = sphi 0, %s188
      %s206 = sphi 0, %s206
      %s208 = sphi 0, %s206
      %s209 = sphi 0, %s208
      %s223 = sphi 0, %s209
      %s227 = sphi 0, %s227
      %s229 = sphi 0, %s227
      %s230 = sphi 0, %s229
      %s244 = sphi 0, %s230
      %s248 = sphi 0, %s248
      %s250 = sphi 0, %s248
      %s251 = sphi 0, %s250
      %s265 = sphi 0, %s251
      %s269 = sphi 0, %s269
      %s271 = sphi 0, %s269
      %s272 = sphi 0, %s271
      %s286 = sphi 0, %s272
      %s292 = sphi 0, %s294
      %s295 = sphi 0, %s292
      %s296 = sphi 0, %s295
      %s312 = sphi 0, %s296
      %s318 = sphi 0, %s320
      %s321 = sphi 0, %s318
      %s322 = sphi 0, %s321
      %s338 = sphi 0, %s322
      %s344 = sphi 0, %s346
      %s347 = sphi 0, %s344
      %s348 = sphi 0, %s347
      %s364 = sphi 0, %s348
    $region4: #{tpu_custom_call.1} parent=1 // loop_header_branch
      %39 = sbr.rel (%p37) target = $region8
    $region5: #{tpu_custom_call.1} parent=1 // loop_body
      %s41 = ssub.s32 %s36, 1
      %s42 = ssub.s32 %s36, 2
      %s43 = sadd.s32 %s36, 1
      %s44 = ssub.s32 %s36, %s43
      %p45 = scmp.eq.s32.totalorder %s44, 0
      %s47 = sadd.s32 %s46, 1
      %s48 = scalar_select %p45, %s46, %s47
      %p51 = pneg %p45
      %p52 = scmp.eq.s32.totalorder %s36, 1
      %p53 = por %p51, %p52
      %p54 = scmp.ne.s32.totalorder %s46, %s49
      %p55 = scmp.eq.s32.totalorder %s36, 0
      %p56 = por %p54, %p55
      %p57 = scmp.ne.s32.totalorder %s46, %s49
      %p58 = scmp.eq.s32.totalorder %s41, 1
      %p59 = por %p57, %p58
      %p60 = scmp.ne.s32.totalorder %s49, %s50
      %p61 = scmp.eq.s32.totalorder %s41, 0
      %p62 = por %p60, %p61
      %p63 = scmp.ne.s32.totalorder %s49, %s50
      %p64 = scmp.eq.s32.totalorder %s42, 1
      %p65 = por %p63, %p64
      %p67 = scmp.ne.s32.totalorder %s50, %s66
      %p68 = scmp.eq.s32.totalorder %s42, 0
      %p69 = por %p67, %p68
      %s70 = ssub.s32 %s36, %s43
      %p71 = scmp.eq.s32.totalorder %s70, 0
      %s73 = sadd.s32 %s72, 1
      %s74 = scalar_select %p71, %s72, %s73
      %p77 = pneg %p71
      %p78 = scmp.eq.s32.totalorder %s36, 1
      %p79 = por %p77, %p78
      %p80 = scmp.ne.s32.totalorder %s72, %s75
      %p81 = scmp.eq.s32.totalorder %s36, 0
      %p82 = por %p80, %p81
      %p83 = scmp.ne.s32.totalorder %s72, %s75
      %p84 = scmp.eq.s32.totalorder %s41, 1
      %p85 = por %p83, %p84
      %p86 = scmp.ne.s32.totalorder %s75, %s76
      %p87 = scmp.eq.s32.totalorder %s41, 0
      %p88 = por %p86, %p87
      %p89 = scmp.ne.s32.totalorder %s75, %s76
      %p90 = scmp.eq.s32.totalorder %s42, 1
      %p91 = por %p89, %p90
      %p93 = scmp.ne.s32.totalorder %s76, %s92
      %p94 = scmp.eq.s32.totalorder %s42, 0
      %p95 = por %p93, %p94
      %s96 = ssub.s32 %s36, %s43
      %p97 = scmp.eq.s32.totalorder %s96, 0
      %s99 = sadd.s32 %s98, 1
      %s100 = scalar_select %p97, %s98, %s99
      %p103 = pneg %p97
      %p104 = scmp.eq.s32.totalorder %s36, 1
      %p105 = por %p103, %p104
      %p106 = scmp.ne.s32.totalorder %s98, %s101
      %p107 = scmp.eq.s32.totalorder %s36, 0
      %p108 = por %p106, %p107
      %p109 = scmp.ne.s32.totalorder %s98, %s101
      %p110 = scmp.eq.s32.totalorder %s41, 1
      %p111 = por %p109, %p110
      %p112 = scmp.ne.s32.totalorder %s101, %s102
      %p113 = scmp.eq.s32.totalorder %s41, 0
      %p114 = por %p112, %p113
      %p115 = scmp.ne.s32.totalorder %s101, %s102
      %p116 = scmp.eq.s32.totalorder %s42, 1
      %p117 = por %p115, %p116
      %p119 = scmp.ne.s32.totalorder %s102, %s118
      %p120 = scmp.eq.s32.totalorder %s42, 0
      %p121 = por %p119, %p120
      %s123 = sadd.s32 %s122, 1
      %p126 = scmp.eq.s32.totalorder %s36, 1
      %p127 = scmp.ne.s32.totalorder %s122, %s124
      %p128 = scmp.eq.s32.totalorder %s36, 0
      %p129 = por %p127, %p128
      %p130 = scmp.ne.s32.totalorder %s122, %s124
      %p131 = scmp.eq.s32.totalorder %s41, 1
      %p132 = por %p130, %p131
      %p133 = scmp.ne.s32.totalorder %s124, %s125
      %p134 = scmp.eq.s32.totalorder %s41, 0
      %p135 = por %p133, %p134
      %p136 = scmp.ne.s32.totalorder %s124, %s125
      %p137 = scmp.eq.s32.totalorder %s42, 1
      %p138 = por %p136, %p137
      %p140 = scmp.ne.s32.totalorder %s125, %s139
      %p141 = scmp.eq.s32.totalorder %s42, 0
      %p142 = por %p140, %p141
      %s144 = sadd.s32 %s143, 1
      %p147 = scmp.eq.s32.totalorder %s36, 1
      %p148 = scmp.ne.s32.totalorder %s143, %s145
      %p149 = scmp.eq.s32.totalorder %s36, 0
      %p150 = por %p148, %p149
      %p151 = scmp.ne.s32.totalorder %s143, %s145
      %p152 = scmp.eq.s32.totalorder %s41, 1
      %p153 = por %p151, %p152
      %p154 = scmp.ne.s32.totalorder %s145, %s146
      %p155 = scmp.eq.s32.totalorder %s41, 0
      %p156 = por %p154, %p155
      %p157 = scmp.ne.s32.totalorder %s145, %s146
      %p158 = scmp.eq.s32.totalorder %s42, 1
      %p159 = por %p157, %p158
      %p161 = scmp.ne.s32.totalorder %s146, %s160
      %p162 = scmp.eq.s32.totalorder %s42, 0
      %p163 = por %p161, %p162
      %s165 = sadd.s32 %s164, 1
      %p168 = scmp.eq.s32.totalorder %s36, 1
      %p169 = scmp.ne.s32.totalorder %s164, %s166
      %p170 = scmp.eq.s32.totalorder %s36, 0
      %p171 = por %p169, %p170
      %p172 = scmp.ne.s32.totalorder %s164, %s166
      %p173 = scmp.eq.s32.totalorder %s41, 1
      %p174 = por %p172, %p173
      %p175 = scmp.ne.s32.totalorder %s166, %s167
      %p176 = scmp.eq.s32.totalorder %s41, 0
      %p177 = por %p175, %p176
      %p178 = scmp.ne.s32.totalorder %s166, %s167
      %p179 = scmp.eq.s32.totalorder %s42, 1
      %p180 = por %p178, %p179
      %p182 = scmp.ne.s32.totalorder %s167, %s181
      %p183 = scmp.eq.s32.totalorder %s42, 0
      %p184 = por %p182, %p183
      %s186 = sadd.s32 %s185, 1
      %p189 = scmp.eq.s32.totalorder %s36, 1
      %p190 = scmp.ne.s32.totalorder %s185, %s187
      %p191 = scmp.eq.s32.totalorder %s36, 0
      %p192 = por %p190, %p191
      %p193 = scmp.ne.s32.totalorder %s185, %s187
      %p194 = scmp.eq.s32.totalorder %s41, 1
      %p195 = por %p193, %p194
      %p196 = scmp.ne.s32.totalorder %s187, %s188
      %p197 = scmp.eq.s32.totalorder %s41, 0
      %p198 = por %p196, %p197
      %p199 = scmp.ne.s32.totalorder %s187, %s188
      %p200 = scmp.eq.s32.totalorder %s42, 1
      %p201 = por %p199, %p200
      %p203 = scmp.ne.s32.totalorder %s188, %s202
      %p204 = scmp.eq.s32.totalorder %s42, 0
      %p205 = por %p203, %p204
      %s207 = sadd.s32 %s206, 1
      %p210 = scmp.eq.s32.totalorder %s36, 1
      %p211 = scmp.ne.s32.totalorder %s206, %s208
      %p212 = scmp.eq.s32.totalorder %s36, 0
      %p213 = por %p211, %p212
      %p214 = scmp.ne.s32.totalorder %s206, %s208
      %p215 = scmp.eq.s32.totalorder %s41, 1
      %p216 = por %p214, %p215
      %p217 = scmp.ne.s32.totalorder %s208, %s209
      %p218 = scmp.eq.s32.totalorder %s41, 0
      %p219 = por %p217, %p218
      %p220 = scmp.ne.s32.totalorder %s208, %s209
      %p221 = scmp.eq.s32.totalorder %s42, 1
      %p222 = por %p220, %p221
      %p224 = scmp.ne.s32.totalorder %s209, %s223
      %p225 = scmp.eq.s32.totalorder %s42, 0
      %p226 = por %p224, %p225
      %s228 = sadd.s32 %s227, 1
      %p231 = scmp.eq.s32.totalorder %s36, 1
      %p232 = scmp.ne.s32.totalorder %s227, %s229
      %p233 = scmp.eq.s32.totalorder %s36, 0
      %p234 = por %p232, %p233
      %p235 = scmp.ne.s32.totalorder %s227, %s229
      %p236 = scmp.eq.s32.totalorder %s41, 1
      %p237 = por %p235, %p236
      %p238 = scmp.ne.s32.totalorder %s229, %s230
      %p239 = scmp.eq.s32.totalorder %s41, 0
      %p240 = por %p238, %p239
      %p241 = scmp.ne.s32.totalorder %s229, %s230
      %p242 = scmp.eq.s32.totalorder %s42, 1
      %p243 = por %p241, %p242
      %p245 = scmp.ne.s32.totalorder %s230, %s244
      %p246 = scmp.eq.s32.totalorder %s42, 0
      %p247 = por %p245, %p246
      %s249 = sadd.s32 %s248, 1
      %p252 = scmp.eq.s32.totalorder %s36, 1
      %p253 = scmp.ne.s32.totalorder %s248, %s250
      %p254 = scmp.eq.s32.totalorder %s36, 0
      %p255 = por %p253, %p254
      %p256 = scmp.ne.s32.totalorder %s248, %s250
      %p257 = scmp.eq.s32.totalorder %s41, 1
      %p258 = por %p256, %p257
      %p259 = scmp.ne.s32.totalorder %s250, %s251
      %p260 = scmp.eq.s32.totalorder %s41, 0
      %p261 = por %p259, %p260
      %p262 = scmp.ne.s32.totalorder %s250, %s251
      %p263 = scmp.eq.s32.totalorder %s42, 1
      %p264 = por %p262, %p263
      %p266 = scmp.ne.s32.totalorder %s251, %s265
      %p267 = scmp.eq.s32.totalorder %s42, 0
      %p268 = por %p266, %p267
      %s270 = sadd.s32 %s269, 1
      %p273 = scmp.eq.s32.totalorder %s36, 1
      %p274 = scmp.ne.s32.totalorder %s269, %s271
      %p275 = scmp.eq.s32.totalorder %s36, 0
      %p276 = por %p274, %p275
      %p277 = scmp.ne.s32.totalorder %s269, %s271
      %p278 = scmp.eq.s32.totalorder %s41, 1
      %p279 = por %p277, %p278
      %p280 = scmp.ne.s32.totalorder %s271, %s272
      %p281 = scmp.eq.s32.totalorder %s41, 0
      %p282 = por %p280, %p281
      %p283 = scmp.ne.s32.totalorder %s271, %s272
      %p284 = scmp.eq.s32.totalorder %s42, 1
      %p285 = por %p283, %p284
      %p287 = scmp.ne.s32.totalorder %s272, %s286
      %p288 = scmp.eq.s32.totalorder %s42, 0
      %p289 = por %p287, %p288
      %s290 = ssub.s32 %s36, %s43
      %p291 = scmp.eq.s32.totalorder %s290, 0
      %s293 = sadd.s32 %s292, 1
      %s294 = scalar_select %p291, %s292, %s293
      %p297 = pneg %p291
      %p298 = scmp.eq.s32.totalorder %s36, 1
      %p299 = por %p297, %p298
      %p300 = scmp.ne.s32.totalorder %s292, %s295
      %p301 = scmp.eq.s32.totalorder %s36, 0
      %p302 = por %p300, %p301
      %p303 = scmp.ne.s32.totalorder %s292, %s295
      %p304 = scmp.eq.s32.totalorder %s41, 1
      %p305 = por %p303, %p304
      %p306 = scmp.ne.s32.totalorder %s295, %s296
      %p307 = scmp.eq.s32.totalorder %s41, 0
      %p308 = por %p306, %p307
      %p309 = scmp.ne.s32.totalorder %s295, %s296
      %p310 = scmp.eq.s32.totalorder %s42, 1
      %p311 = por %p309, %p310
      %p313 = scmp.ne.s32.totalorder %s296, %s312
      %p314 = scmp.eq.s32.totalorder %s42, 0
      %p315 = por %p313, %p314
      %s316 = ssub.s32 %s36, %s43
      %p317 = scmp.eq.s32.totalorder %s316, 0
      %s319 = sadd.s32 %s318, 1
      %s320 = scalar_select %p317, %s318, %s319
      %p323 = pneg %p317
      %p324 = scmp.eq.s32.totalorder %s36, 1
      %p325 = por %p323, %p324
      %p326 = scmp.ne.s32.totalorder %s318, %s321
      %p327 = scmp.eq.s32.totalorder %s36, 0
      %p328 = por %p326, %p327
      %p329 = scmp.ne.s32.totalorder %s318, %s321
      %p330 = scmp.eq.s32.totalorder %s41, 1
      %p331 = por %p329, %p330
      %p332 = scmp.ne.s32.totalorder %s321, %s322
      %p333 = scmp.eq.s32.totalorder %s41, 0
      %p334 = por %p332, %p333
      %p335 = scmp.ne.s32.totalorder %s321, %s322
      %p336 = scmp.eq.s32.totalorder %s42, 1
      %p337 = por %p335, %p336
      %p339 = scmp.ne.s32.totalorder %s322, %s338
      %p340 = scmp.eq.s32.totalorder %s42, 0
      %p341 = por %p339, %p340
      %s342 = ssub.s32 %s36, %s43
      %p343 = scmp.eq.s32.totalorder %s342, 0
      %s345 = sadd.s32 %s344, 1
      %s346 = scalar_select %p343, %s344, %s345
      %p349 = pneg %p343
      %p350 = scmp.eq.s32.totalorder %s36, 1
      %p351 = por %p349, %p350
      %p352 = scmp.ne.s32.totalorder %s344, %s347
      %p353 = scmp.eq.s32.totalorder %s36, 0
      %p354 = por %p352, %p353
      %p355 = scmp.ne.s32.totalorder %s344, %s347
      %p356 = scmp.eq.s32.totalorder %s41, 1
      %p357 = por %p355, %p356
      %p358 = scmp.ne.s32.totalorder %s347, %s348
      %p359 = scmp.eq.s32.totalorder %s41, 0
      %p360 = por %p358, %p359
      %p361 = scmp.ne.s32.totalorder %s347, %s348
      %p362 = scmp.eq.s32.totalorder %s42, 1
      %p363 = por %p361, %p362
      %p365 = scmp.ne.s32.totalorder %s348, %s364
      %p366 = scmp.eq.s32.totalorder %s42, 0
      %p367 = por %p365, %p366
      %p368 = scmp.le.s32.totalorder 1, %s36
      %p369 = scmp.lt.s32.totalorder %s36, 3
      %p370 = pnand %p368, %p369
      %p371 = pneg %p370
      // Predicated region
      $region9: #{tpu_custom_call.1} parent=5 // pred_check
        _
      $region10: #{tpu_custom_call.1} parent=5 // pred_check_branch
        %373 = sbr.rel (%p370) target = $region12
      $region11: #{tpu_custom_call.1} parent=5 // pred_region
        %s374 = ssub.s32 %s36, 1
        // Predicated region
        $region13: #{tpu_custom_call.1} parent=11 // pred_check
          %p375 = pneg %p135
        $region14: #{tpu_custom_call.1} parent=11 // pred_check_branch
          %377 = sbr.rel (%p375) target = $region16
        $region15: #{tpu_custom_call.1} parent=11 // pred_region
          %s379 = ssub.s32 32768, 32768
          %380 = vsyncadd [#allocation10], %s379
          %s381 = sshll.u32 [#allocation9], 4
          %s382 = int_to_ptr.vmem [resolvable:$true] %s381
          %387 = dma.hbm_to_vmem [thread:$0]  %s3, 32768, %s382, [#allocation10], 512, 512, 32
        $region16: #{tpu_custom_call.1} parent=11 // pred_fallthru
          _
        // Predicated region
        $region17: #{tpu_custom_call.1} parent=11 // pred_check
          %p388 = pneg %p156
        $region18: #{tpu_custom_call.1} parent=11 // pred_check_branch
          %390 = sbr.rel (%p388) target = $region20
        $region19: #{tpu_custom_call.1} parent=11 // pred_region
          _
        $region20: #{tpu_custom_call.1} parent=11 // pred_fallthru
          _
        // Predicated region
        $region21: #{tpu_custom_call.1} parent=11 // pred_check
          %p391 = pneg %p177
        $region22: #{tpu_custom_call.1} parent=11 // pred_check_branch
          %393 = sbr.rel (%p391) target = $region24
        $region23: #{tpu_custom_call.1} parent=11 // pred_region
          %s395 = ssub.s32 16384, 16384
          %396 = vsyncadd [#allocation10], %s395
          %s397 = sshll.u32 [#allocation11], 4
          %s398 = int_to_ptr.vmem [resolvable:$true] %s397
          %403 = dma.hbm_to_vmem [thread:$0]  %s5, 16384, %s398, [#allocation10], 128, 128, 8
        $region24: #{tpu_custom_call.1} parent=11 // pred_fallthru
          _
        // Predicated region
        $region25: #{tpu_custom_call.1} parent=11 // pred_check
          %p404 = pneg %p198
        $region26: #{tpu_custom_call.1} parent=11 // pred_check_branch
          %406 = sbr.rel (%p404) target = $region28
        $region27: #{tpu_custom_call.1} parent=11 // pred_region
          _
        $region28: #{tpu_custom_call.1} parent=11 // pred_fallthru
          _
        // Predicated region
        $region29: #{tpu_custom_call.1} parent=11 // pred_check
          %p407 = pneg %p219
        $region30: #{tpu_custom_call.1} parent=11 // pred_check_branch
          %409 = sbr.rel (%p407) target = $region32
        $region31: #{tpu_custom_call.1} parent=11 // pred_region
          _
        $region32: #{tpu_custom_call.1} parent=11 // pred_fallthru
          _
        // Predicated region
        $region33: #{tpu_custom_call.1} parent=11 // pred_check
          %p410 = pneg %p240
        $region34: #{tpu_custom_call.1} parent=11 // pred_check_branch
          %412 = sbr.rel (%p410) target = $region36
        $region35: #{tpu_custom_call.1} parent=11 // pred_region
          _
        $region36: #{tpu_custom_call.1} parent=11 // pred_fallthru
          _
        // Predicated region
        $region37: #{tpu_custom_call.1} parent=11 // pred_check
          %p413 = pneg %p261
        $region38: #{tpu_custom_call.1} parent=11 // pred_check_branch
          %415 = sbr.rel (%p413) target = $region40
        $region39: #{tpu_custom_call.1} parent=11 // pred_region
          %s417 = ssub.s32 4096, 4096
          %418 = vsyncadd [#allocation13], %s417
          %s419 = sshll.u32 [#allocation12], 4
          %s420 = int_to_ptr.vmem [resolvable:$true] %s419
          %425 = dma.hbm_to_vmem [thread:$0]  %s9, 4096, %s420, [#allocation13], 64, 64, 4
        $region40: #{tpu_custom_call.1} parent=11 // pred_fallthru
          _
        // Predicated region
        $region41: #{tpu_custom_call.1} parent=11 // pred_check
          %p426 = pneg %p282
        $region42: #{tpu_custom_call.1} parent=11 // pred_check_branch
          %428 = sbr.rel (%p426) target = $region44
        $region43: #{tpu_custom_call.1} parent=11 // pred_region
          _
        $region44: #{tpu_custom_call.1} parent=11 // pred_fallthru
          _
      $region12: #{tpu_custom_call.1} parent=5 // pred_fallthru
        _
      %p429 = scmp.lt.s32.totalorder %s36, 2
      // Predicated region
      $region45: #{tpu_custom_call.1} parent=5 // pred_check
        %p430 = pneg %p429
      $region46: #{tpu_custom_call.1} parent=5 // pred_check_branch
        %432 = sbr.rel (%p430) target = $region48
      $region47: #{tpu_custom_call.1} parent=5 // pred_region
        // Predicated region
        $region49: #{tpu_custom_call.1} parent=47 // pred_check
          %p433 = pneg %p56
        $region50: #{tpu_custom_call.1} parent=47 // pred_check_branch
          %435 = sbr.rel (%p433) target = $region52
        $region51: #{tpu_custom_call.1} parent=47 // pred_region
          %s436 = sand.u32 %s46, 1
          %s437 = scalar_lea.sflag [#allocation4], %s436
          %s438 = sand.u32 %s46, 1
          %s439 = smul.addr %s438, 4
          %s440 = scalar_lea.vmem [#allocation3], %s439
          %s441 = smul.u32 4, %s36
          %s443 = ssub.s32 64, 64
          %444 = vsyncadd %s437, %s443
          %s445 = smul.addr %s441, 16
          %s446 = scalar_lea.hbm %s0, %s445
          %s447 = sshll.u32 %s440, 4
          %s448 = int_to_ptr.vmem [resolvable:$true] %s447
          %453 = dma.hbm_to_vmem [thread:$0]  %s446, 64, %s448, %s437, 16, 16, 1
        $region52: #{tpu_custom_call.1} parent=47 // pred_fallthru
          _
        // Predicated region
        $region53: #{tpu_custom_call.1} parent=47 // pred_check
          %p454 = pneg %p82
        $region54: #{tpu_custom_call.1} parent=47 // pred_check_branch
          %456 = sbr.rel (%p454) target = $region56
        $region55: #{tpu_custom_call.1} parent=47 // pred_region
          %s457 = sand.u32 %s36, 1
          %s458 = scalar_lea.sflag [#allocation7], %s457
          %s459 = sand.u32 %s72, 1
          %s460 = smul.addr %s459, 128
          %s461 = scalar_lea.vmem [#allocation6], %s460
          %s462 = smul.u32 4, %s36
          %s464 = ssub.s32 2048, 2048
          %465 = vsyncadd %s458, %s464
          %s466 = smul.addr %s462, 8
          %s467 = smul.addr %s466, 64
          %s468 = scalar_lea.hbm %s1, %s467
          %s469 = sshll.u32 %s461, 4
          %s470 = int_to_ptr.vmem [resolvable:$true] %s469
          %475 = dma.hbm_to_vmem [thread:$0]  %s468, 2048, %s470, %s458, 256, 256, 16
        $region56: #{tpu_custom_call.1} parent=47 // pred_fallthru
          _
        // Predicated region
        $region57: #{tpu_custom_call.1} parent=47 // pred_check
          %p476 = pneg %p108
        $region58: #{tpu_custom_call.1} parent=47 // pred_check_branch
          %478 = sbr.rel (%p476) target = $region60
        $region59: #{tpu_custom_call.1} parent=47 // pred_region
          %s479 = sand.u32 %s36, 1
          %s480 = scalar_lea.sflag [#allocation7], %s479
          %s481 = sand.u32 %s98, 1
          %s482 = smul.addr %s481, 8
          %s483 = scalar_lea.vmem [#allocation8], %s482
          %s484 = smul.u32 4, %s36
          %s486 = ssub.s32 128, 128
          %487 = vsyncadd %s480, %s486
          %s488 = smul.addr %s484, 2
          %s489 = smul.addr %s488, 16
          %s490 = scalar_lea.hbm %s2, %s489
          %s491 = sshll.u32 %s483, 4
          %s492 = int_to_ptr.vmem [resolvable:$true] %s491
          %497 = dma.hbm_to_vmem [thread:$0]  %s490, 128, %s492, %s480, 32, 32, 2
        $region60: #{tpu_custom_call.1} parent=47 // pred_fallthru
          _
      $region48: #{tpu_custom_call.1} parent=5 // pred_fallthru
        _
      %p498 = scmp.le.s32.totalorder 1, %s36
      %p499 = scmp.lt.s32.totalorder %s36, 3
      %p500 = pnand %p498, %p499
      %p501 = pneg %p500
      // Predicated region
      $region61: #{tpu_custom_call.1} parent=5 // pred_check
        _
      $region62: #{tpu_custom_call.1} parent=5 // pred_check_branch
        %503 = sbr.rel (%p500) target = $region64
      $region63: #{tpu_custom_call.1} parent=5 // pred_region
        %s504 = ssub.s32 %s36, 1
        %s505 = sand.u32 %s49, 1
        %s506 = scalar_lea.sflag [#allocation4], %s505
        %s507 = sand.u32 %s49, 1
        %s508 = smul.addr %s507, 4
        %s509 = scalar_lea.vmem [#allocation3], %s508
        // Predicated region
        $region65: #{tpu_custom_call.1} parent=63 // pred_check
          %p510 = pneg %p62
        $region66: #{tpu_custom_call.1} parent=63 // pred_check_branch
          %512 = sbr.rel (%p510) target = $region68
        $region67: #{tpu_custom_call.1} parent=63 // pred_region
          %513 = dma.done %s506, 64
        $region68: #{tpu_custom_call.1} parent=63 // pred_fallthru
          _
        %s514 = sand.u32 %s41, 1
        %s515 = scalar_lea.sflag [#allocation7], %s514
        %s516 = sand.u32 %s75, 1
        %s517 = smul.addr %s516, 128
        %s518 = scalar_lea.vmem [#allocation6], %s517
        // Predicated region
        $region69: #{tpu_custom_call.1} parent=63 // pred_check
          %p519 = pneg %p88
        $region70: #{tpu_custom_call.1} parent=63 // pred_check_branch
          %521 = sbr.rel (%p519) target = $region72
        $region71: #{tpu_custom_call.1} parent=63 // pred_region
          %522 = dma.done %s515, 2048
        $region72: #{tpu_custom_call.1} parent=63 // pred_fallthru
          _
        %s523 = sand.u32 %s41, 1
        %s524 = scalar_lea.sflag [#allocation7], %s523
        %s525 = sand.u32 %s101, 1
        %s526 = smul.addr %s525, 8
        %s527 = scalar_lea.vmem [#allocation8], %s526
        // Predicated region
        $region73: #{tpu_custom_call.1} parent=63 // pred_check
          %p528 = pneg %p114
        $region74: #{tpu_custom_call.1} parent=63 // pred_check_branch
          %530 = sbr.rel (%p528) target = $region76
        $region75: #{tpu_custom_call.1} parent=63 // pred_region
          %531 = dma.done %s524, 128
        $region76: #{tpu_custom_call.1} parent=63 // pred_fallthru
          _
        // Predicated region
        $region77: #{tpu_custom_call.1} parent=63 // pred_check
          %p532 = pneg %p135
        $region78: #{tpu_custom_call.1} parent=63 // pred_check_branch
          %534 = sbr.rel (%p532) target = $region80
        $region79: #{tpu_custom_call.1} parent=63 // pred_region
          %535 = dma.done [#allocation10], 32768
        $region80: #{tpu_custom_call.1} parent=63 // pred_fallthru
          _
        // Predicated region
        $region81: #{tpu_custom_call.1} parent=63 // pred_check
          %p536 = pneg %p177
        $region82: #{tpu_custom_call.1} parent=63 // pred_check_branch
          %538 = sbr.rel (%p536) target = $region84
        $region83: #{tpu_custom_call.1} parent=63 // pred_region
          %539 = dma.done [#allocation10], 16384
        $region84: #{tpu_custom_call.1} parent=63 // pred_fallthru
          _
        // Predicated region
        $region85: #{tpu_custom_call.1} parent=63 // pred_check
          %p540 = pneg %p261
        $region86: #{tpu_custom_call.1} parent=63 // pred_check_branch
          %542 = sbr.rel (%p540) target = $region88
        $region87: #{tpu_custom_call.1} parent=63 // pred_region
          %543 = dma.done [#allocation13], 4096
        $region88: #{tpu_custom_call.1} parent=63 // pred_fallthru
          _
        %s544 = sand.u32 %s49, 1
        %s545 = scalar_lea.sflag [#allocation4], %s544
        %s546 = sand.u32 %s49, 1
        %s547 = smul.addr %s546, 4
        %s548 = scalar_lea.vmem [#allocation3], %s547
        %p549 = pneg %p62
        %p550 = pneg %p59
        %s551 = sand.u32 %s41, 1
        %s552 = scalar_lea.sflag [#allocation7], %s551
        %s553 = sand.u32 %s75, 1
        %s554 = smul.addr %s553, 128
        %s555 = scalar_lea.vmem [#allocation6], %s554
        %p556 = pneg %p88
        %p557 = pneg %p85
        %s558 = sand.u32 %s41, 1
        %s559 = scalar_lea.sflag [#allocation7], %s558
        %s560 = sand.u32 %s101, 1
        %s561 = smul.addr %s560, 8
        %s562 = scalar_lea.vmem [#allocation8], %s561
        %p563 = pneg %p114
        %p564 = pneg %p111
        %p565 = pneg %p135
        %p566 = pneg %p132
        %p567 = pneg %p156
        %p568 = pneg %p153
        %p569 = pneg %p177
        %p570 = pneg %p174
        %p571 = pneg %p198
        %p572 = pneg %p195
        %p573 = pneg %p219
        %p574 = pneg %p216
        %p575 = pneg %p240
        %p576 = pneg %p237
        %p577 = pneg %p261
        %p578 = pneg %p258
        %p579 = pneg %p282
        %p580 = pneg %p279
        %p581 = pneg %p308
        %p582 = pneg %p305
        %s583 = sand.u32 %s295, 1
        %s584 = scalar_lea.sflag [#allocation5], %s583
        %s585 = sand.u32 %s295, 1
        %s586 = smul.addr %s585, 4
        %s587 = scalar_lea.vmem [#allocation14], %s586
        %p588 = pneg %p334
        %p589 = pneg %p331
        %s590 = smul.u32 4, %s41
        %p591 = scmp.lt.s32.totalorder %s590, 7
        %s592 = scalar_select %p591, %s590, 7
        %s593 = smul.addr %s592, 4
        %s594 = scalar_lea.vmem %s12, %s593
        %p595 = pneg %p360
        %p596 = pneg %p357
        %s597 = sand.u32 %s347, 1
        %s598 = scalar_lea.sflag [#allocation16], %s597
        %s599 = sand.u32 %s347, 1
        %s600 = smul.addr %s599, 64
        %s601 = scalar_lea.vmem [#allocation15], %s600
        %s602 = smul.u32 4, %s41
        %s603 = smul.u32 4, %s41
        %s604 = smul.u32 4, %s41
        %s605 = smul.u32 4, %s41
        %s606 = smul.u32 4, %s41
        %p607 = scmp.lt.s32.totalorder %s606, 7
        %s608 = scalar_select %p607, %s606, 7
        %s609 = smul.addr %s608, 4
        %s610 = scalar_lea.vmem %s12, %s609
        %s611 = smul.u32 4, %s41
        %s612 = smul.u32 4, %s41
        %v614 = vld [vmem:[%s518] sm:$0xff]
        %v615 = vld [vmem:[%s518 + $0x8] sm:$0xff]
        %v616 = vld [vmem:[%s518 + $0x10] sm:$0xff]
        %v617 = vld [vmem:[%s518 + $0x18] sm:$0xff]
        %v618 = vld [vmem:[%s518 + $0x20] sm:$0xff]
        %v619 = vld [vmem:[%s518 + $0x28] sm:$0xff]
        %v620 = vld [vmem:[%s518 + $0x30] sm:$0xff]
        %v621 = vld [vmem:[%s518 + $0x38] sm:$0xff]
        %v622 = vld [vmem:[%s518 + $0x40] sm:$0xff]
        %v623 = vld [vmem:[%s518 + $0x48] sm:$0xff]
        %v624 = vld [vmem:[%s518 + $0x50] sm:$0xff]
        %v625 = vld [vmem:[%s518 + $0x58] sm:$0xff]
        %v626 = vld [vmem:[%s518 + $0x60] sm:$0xff]
        %v627 = vld [vmem:[%s518 + $0x68] sm:$0xff]
        %v628 = vld [vmem:[%s518 + $0x70] sm:$0xff]
        %v629 = vld [vmem:[%s518 + $0x78] sm:$0xff]
        %v630 = vld [vmem:[%s509] sm:$0x1]
        %v631 = vld [vmem:[%s509 + $0x1] sm:$0x1]
        %v632 = vld [vmem:[%s509 + $0x2] sm:$0x1]
        %v633 = vld [vmem:[%s509 + $0x3] sm:$0x1]
        %vm634 = vcmp.gt.f32.partialorder %v630, 0.5
        %vm635 = vcmp.gt.f32.partialorder %v631, 0.5
        %vm636 = vcmp.gt.f32.partialorder %v632, 0.5
        %vm637 = vcmp.gt.f32.partialorder %v633, 0.5
        %v638 = vld [vmem:[#allocation9] sm:$0xff]
        %v639 = vld [vmem:[#allocation9 + $0x8] sm:$0xff]
        %v640 = vld [vmem:[#allocation9 + $0x10] sm:$0xff]
        %v641 = vld [vmem:[#allocation9 + $0x18] sm:$0xff]
        %v642 = vld [vmem:[#allocation9 + $0x20] sm:$0xff]
        %v643 = vld [vmem:[#allocation9 + $0x28] sm:$0xff]
        %v644 = vld [vmem:[#allocation9 + $0x30] sm:$0xff]
        %v645 = vld [vmem:[#allocation9 + $0x38] sm:$0xff]
        %v646 = vld [vmem:[#allocation9 + $0x40] sm:$0xff]
        %v647 = vld [vmem:[#allocation9 + $0x48] sm:$0xff]
        %v648 = vld [vmem:[#allocation9 + $0x50] sm:$0xff]
        %v649 = vld [vmem:[#allocation9 + $0x58] sm:$0xff]
        %v650 = vld [vmem:[#allocation9 + $0x60] sm:$0xff]
        %v651 = vld [vmem:[#allocation9 + $0x68] sm:$0xff]
        %v652 = vld [vmem:[#allocation9 + $0x70] sm:$0xff]
        %v653 = vld [vmem:[#allocation9 + $0x78] sm:$0xff]
        %v654 = vld [vmem:[#allocation9 + $0x80] sm:$0xff]
        %v655 = vld [vmem:[#allocation9 + $0x88] sm:$0xff]
        %v656 = vld [vmem:[#allocation9 + $0x90] sm:$0xff]
        %v657 = vld [vmem:[#allocation9 + $0x98] sm:$0xff]
        %v658 = vld [vmem:[#allocation9 + $0xa0] sm:$0xff]
        %v659 = vld [vmem:[#allocation9 + $0xa8] sm:$0xff]
        %v660 = vld [vmem:[#allocation9 + $0xb0] sm:$0xff]
        %v661 = vld [vmem:[#allocation9 + $0xb8] sm:$0xff]
        %v662 = vld [vmem:[#allocation9 + $0xc0] sm:$0xff]
        %v663 = vld [vmem:[#allocation9 + $0xc8] sm:$0xff]
        %v664 = vld [vmem:[#allocation9 + $0xd0] sm:$0xff]
        %v665 = vld [vmem:[#allocation9 + $0xd8] sm:$0xff]
        %v666 = vld [vmem:[#allocation9 + $0xe0] sm:$0xff]
        %v667 = vld [vmem:[#allocation9 + $0xe8] sm:$0xff]
        %v668 = vld [vmem:[#allocation9 + $0xf0] sm:$0xff]
        %v669 = vld [vmem:[#allocation9 + $0xf8] sm:$0xff]
        %v670 = vld [vmem:[#allocation9 + $0x100] sm:$0xff]
        %v671 = vld [vmem:[#allocation9 + $0x108] sm:$0xff]
        %v672 = vld [vmem:[#allocation9 + $0x110] sm:$0xff]
        %v673 = vld [vmem:[#allocation9 + $0x118] sm:$0xff]
        %v674 = vld [vmem:[#allocation9 + $0x120] sm:$0xff]
        %v675 = vld [vmem:[#allocation9 + $0x128] sm:$0xff]
        %v676 = vld [vmem:[#allocation9 + $0x130] sm:$0xff]
        %v677 = vld [vmem:[#allocation9 + $0x138] sm:$0xff]
        %v678 = vld [vmem:[#allocation9 + $0x140] sm:$0xff]
        %v679 = vld [vmem:[#allocation9 + $0x148] sm:$0xff]
        %v680 = vld [vmem:[#allocation9 + $0x150] sm:$0xff]
        %v681 = vld [vmem:[#allocation9 + $0x158] sm:$0xff]
        %v682 = vld [vmem:[#allocation9 + $0x160] sm:$0xff]
        %v683 = vld [vmem:[#allocation9 + $0x168] sm:$0xff]
        %v684 = vld [vmem:[#allocation9 + $0x170] sm:$0xff]
        %v685 = vld [vmem:[#allocation9 + $0x178] sm:$0xff]
        %v686 = vld [vmem:[#allocation9 + $0x180] sm:$0xff]
        %v687 = vld [vmem:[#allocation9 + $0x188] sm:$0xff]
        %v688 = vld [vmem:[#allocation9 + $0x190] sm:$0xff]
        %v689 = vld [vmem:[#allocation9 + $0x198] sm:$0xff]
        %v690 = vld [vmem:[#allocation9 + $0x1a0] sm:$0xff]
        %v691 = vld [vmem:[#allocation9 + $0x1a8] sm:$0xff]
        %v692 = vld [vmem:[#allocation9 + $0x1b0] sm:$0xff]
        %v693 = vld [vmem:[#allocation9 + $0x1b8] sm:$0xff]
        %v694 = vld [vmem:[#allocation9 + $0x1c0] sm:$0xff]
        %v695 = vld [vmem:[#allocation9 + $0x1c8] sm:$0xff]
        %v696 = vld [vmem:[#allocation9 + $0x1d0] sm:$0xff]
        %v697 = vld [vmem:[#allocation9 + $0x1d8] sm:$0xff]
        %v698 = vld [vmem:[#allocation9 + $0x1e0] sm:$0xff]
        %v699 = vld [vmem:[#allocation9 + $0x1e8] sm:$0xff]
        %v700 = vld [vmem:[#allocation9 + $0x1f0] sm:$0xff]
        %v701 = vld [vmem:[#allocation9 + $0x1f8] sm:$0xff]
        %v702 = vld [vmem:[#allocation9 + $0x200] sm:$0xff]
        %v703 = vld [vmem:[#allocation9 + $0x208] sm:$0xff]
        %v704 = vld [vmem:[#allocation9 + $0x210] sm:$0xff]
        %v705 = vld [vmem:[#allocation9 + $0x218] sm:$0xff]
        %v706 = vld [vmem:[#allocation9 + $0x220] sm:$0xff]
        %v707 = vld [vmem:[#allocation9 + $0x228] sm:$0xff]
        %v708 = vld [vmem:[#allocation9 + $0x230] sm:$0xff]
        %v709 = vld [vmem:[#allocation9 + $0x238] sm:$0xff]
        %v710 = vld [vmem:[#allocation9 + $0x240] sm:$0xff]
        %v711 = vld [vmem:[#allocation9 + $0x248] sm:$0xff]
        %v712 = vld [vmem:[#allocation9 + $0x250] sm:$0xff]
        %v713 = vld [vmem:[#allocation9 + $0x258] sm:$0xff]
        %v714 = vld [vmem:[#allocation9 + $0x260] sm:$0xff]
        %v715 = vld [vmem:[#allocation9 + $0x268] sm:$0xff]
        %v716 = vld [vmem:[#allocation9 + $0x270] sm:$0xff]
        %v717 = vld [vmem:[#allocation9 + $0x278] sm:$0xff]
        %v718 = vld [vmem:[#allocation9 + $0x280] sm:$0xff]
        %v719 = vld [vmem:[#allocation9 + $0x288] sm:$0xff]
        %v720 = vld [vmem:[#allocation9 + $0x290] sm:$0xff]
        %v721 = vld [vmem:[#allocation9 + $0x298] sm:$0xff]
        %v722 = vld [vmem:[#allocation9 + $0x2a0] sm:$0xff]
        %v723 = vld [vmem:[#allocation9 + $0x2a8] sm:$0xff]
        %v724 = vld [vmem:[#allocation9 + $0x2b0] sm:$0xff]
        %v725 = vld [vmem:[#allocation9 + $0x2b8] sm:$0xff]
        %v726 = vld [vmem:[#allocation9 + $0x2c0] sm:$0xff]
        %v727 = vld [vmem:[#allocation9 + $0x2c8] sm:$0xff]
        %v728 = vld [vmem:[#allocation9 + $0x2d0] sm:$0xff]
        %v729 = vld [vmem:[#allocation9 + $0x2d8] sm:$0xff]
        %v730 = vld [vmem:[#allocation9 + $0x2e0] sm:$0xff]
        %v731 = vld [vmem:[#allocation9 + $0x2e8] sm:$0xff]
        %v732 = vld [vmem:[#allocation9 + $0x2f0] sm:$0xff]
        %v733 = vld [vmem:[#allocation9 + $0x2f8] sm:$0xff]
        %v734 = vld [vmem:[#allocation9 + $0x300] sm:$0xff]
        %v735 = vld [vmem:[#allocation9 + $0x308] sm:$0xff]
        %v736 = vld [vmem:[#allocation9 + $0x310] sm:$0xff]
        %v737 = vld [vmem:[#allocation9 + $0x318] sm:$0xff]
        %v738 = vld [vmem:[#allocation9 + $0x320] sm:$0xff]
        %v739 = vld [vmem:[#allocation9 + $0x328] sm:$0xff]
        %v740 = vld [vmem:[#allocation9 + $0x330] sm:$0xff]
        %v741 = vld [vmem:[#allocation9 + $0x338] sm:$0xff]
        %v742 = vld [vmem:[#allocation9 + $0x340] sm:$0xff]
        %v743 = vld [vmem:[#allocation9 + $0x348] sm:$0xff]
        %v744 = vld [vmem:[#allocation9 + $0x350] sm:$0xff]
        %v745 = vld [vmem:[#allocation9 + $0x358] sm:$0xff]
        %v746 = vld [vmem:[#allocation9 + $0x360] sm:$0xff]
        %v747 = vld [vmem:[#allocation9 + $0x368] sm:$0xff]
        %v748 = vld [vmem:[#allocation9 + $0x370] sm:$0xff]
        %v749 = vld [vmem:[#allocation9 + $0x378] sm:$0xff]
        %v750 = vld [vmem:[#allocation9 + $0x380] sm:$0xff]
        %v751 = vld [vmem:[#allocation9 + $0x388] sm:$0xff]
        %v752 = vld [vmem:[#allocation9 + $0x390] sm:$0xff]
        %v753 = vld [vmem:[#allocation9 + $0x398] sm:$0xff]
        %v754 = vld [vmem:[#allocation9 + $0x3a0] sm:$0xff]
        %v755 = vld [vmem:[#allocation9 + $0x3a8] sm:$0xff]
        %v756 = vld [vmem:[#allocation9 + $0x3b0] sm:$0xff]
        %v757 = vld [vmem:[#allocation9 + $0x3b8] sm:$0xff]
        %v758 = vld [vmem:[#allocation9 + $0x3c0] sm:$0xff]
        %v759 = vld [vmem:[#allocation9 + $0x3c8] sm:$0xff]
        %v760 = vld [vmem:[#allocation9 + $0x3d0] sm:$0xff]
        %v761 = vld [vmem:[#allocation9 + $0x3d8] sm:$0xff]
        %v762 = vld [vmem:[#allocation9 + $0x3e0] sm:$0xff]
        %v763 = vld [vmem:[#allocation9 + $0x3e8] sm:$0xff]
        %v764 = vld [vmem:[#allocation9 + $0x3f0] sm:$0xff]
        %v765 = vld [vmem:[#allocation9 + $0x3f8] sm:$0xff]
        %v766 = vld [vmem:[#allocation9 + $0x400] sm:$0xff]
        %v767 = vld [vmem:[#allocation9 + $0x408] sm:$0xff]
        %v768 = vld [vmem:[#allocation9 + $0x410] sm:$0xff]
        %v769 = vld [vmem:[#allocation9 + $0x418] sm:$0xff]
        %v770 = vld [vmem:[#allocation9 + $0x420] sm:$0xff]
        %v771 = vld [vmem:[#allocation9 + $0x428] sm:$0xff]
        %v772 = vld [vmem:[#allocation9 + $0x430] sm:$0xff]
        %v773 = vld [vmem:[#allocation9 + $0x438] sm:$0xff]
        %v774 = vld [vmem:[#allocation9 + $0x440] sm:$0xff]
        %v775 = vld [vmem:[#allocation9 + $0x448] sm:$0xff]
        %v776 = vld [vmem:[#allocation9 + $0x450] sm:$0xff]
        %v777 = vld [vmem:[#allocation9 + $0x458] sm:$0xff]
        %v778 = vld [vmem:[#allocation9 + $0x460] sm:$0xff]
        %v779 = vld [vmem:[#allocation9 + $0x468] sm:$0xff]
        %v780 = vld [vmem:[#allocation9 + $0x470] sm:$0xff]
        %v781 = vld [vmem:[#allocation9 + $0x478] sm:$0xff]
        %v782 = vld [vmem:[#allocation9 + $0x480] sm:$0xff]
        %v783 = vld [vmem:[#allocation9 + $0x488] sm:$0xff]
        %v784 = vld [vmem:[#allocation9 + $0x490] sm:$0xff]
        %v785 = vld [vmem:[#allocation9 + $0x498] sm:$0xff]
        %v786 = vld [vmem:[#allocation9 + $0x4a0] sm:$0xff]
        %v787 = vld [vmem:[#allocation9 + $0x4a8] sm:$0xff]
        %v788 = vld [vmem:[#allocation9 + $0x4b0] sm:$0xff]
        %v789 = vld [vmem:[#allocation9 + $0x4b8] sm:$0xff]
        %v790 = vld [vmem:[#allocation9 + $0x4c0] sm:$0xff]
        %v791 = vld [vmem:[#allocation9 + $0x4c8] sm:$0xff]
        %v792 = vld [vmem:[#allocation9 + $0x4d0] sm:$0xff]
        %v793 = vld [vmem:[#allocation9 + $0x4d8] sm:$0xff]
        %v794 = vld [vmem:[#allocation9 + $0x4e0] sm:$0xff]
        %v795 = vld [vmem:[#allocation9 + $0x4e8] sm:$0xff]
        %v796 = vld [vmem:[#allocation9 + $0x4f0] sm:$0xff]
        %v797 = vld [vmem:[#allocation9 + $0x4f8] sm:$0xff]
        %v798 = vld [vmem:[#allocation9 + $0x500] sm:$0xff]
        %v799 = vld [vmem:[#allocation9 + $0x508] sm:$0xff]
        %v800 = vld [vmem:[#allocation9 + $0x510] sm:$0xff]
        %v801 = vld [vmem:[#allocation9 + $0x518] sm:$0xff]
        %v802 = vld [vmem:[#allocation9 + $0x520] sm:$0xff]
        %v803 = vld [vmem:[#allocation9 + $0x528] sm:$0xff]
        %v804 = vld [vmem:[#allocation9 + $0x530] sm:$0xff]
        %v805 = vld [vmem:[#allocation9 + $0x538] sm:$0xff]
        %v806 = vld [vmem:[#allocation9 + $0x540] sm:$0xff]
        %v807 = vld [vmem:[#allocation9 + $0x548] sm:$0xff]
        %v808 = vld [vmem:[#allocation9 + $0x550] sm:$0xff]
        %v809 = vld [vmem:[#allocation9 + $0x558] sm:$0xff]
        %v810 = vld [vmem:[#allocation9 + $0x560] sm:$0xff]
        %v811 = vld [vmem:[#allocation9 + $0x568] sm:$0xff]
        %v812 = vld [vmem:[#allocation9 + $0x570] sm:$0xff]
        %v813 = vld [vmem:[#allocation9 + $0x578] sm:$0xff]
        %v814 = vld [vmem:[#allocation9 + $0x580] sm:$0xff]
        %v815 = vld [vmem:[#allocation9 + $0x588] sm:$0xff]
        %v816 = vld [vmem:[#allocation9 + $0x590] sm:$0xff]
        %v817 = vld [vmem:[#allocation9 + $0x598] sm:$0xff]
        %v818 = vld [vmem:[#allocation9 + $0x5a0] sm:$0xff]
        %v819 = vld [vmem:[#allocation9 + $0x5a8] sm:$0xff]
        %v820 = vld [vmem:[#allocation9 + $0x5b0] sm:$0xff]
        %v821 = vld [vmem:[#allocation9 + $0x5b8] sm:$0xff]
        %v822 = vld [vmem:[#allocation9 + $0x5c0] sm:$0xff]
        %v823 = vld [vmem:[#allocation9 + $0x5c8] sm:$0xff]
        %v824 = vld [vmem:[#allocation9 + $0x5d0] sm:$0xff]
        %v825 = vld [vmem:[#allocation9 + $0x5d8] sm:$0xff]
        %v826 = vld [vmem:[#allocation9 + $0x5e0] sm:$0xff]
        %v827 = vld [vmem:[#allocation9 + $0x5e8] sm:$0xff]
        %v828 = vld [vmem:[#allocation9 + $0x5f0] sm:$0xff]
        %v829 = vld [vmem:[#allocation9 + $0x5f8] sm:$0xff]
        %v830 = vld [vmem:[#allocation9 + $0x600] sm:$0xff]
        %v831 = vld [vmem:[#allocation9 + $0x608] sm:$0xff]
        %v832 = vld [vmem:[#allocation9 + $0x610] sm:$0xff]
        %v833 = vld [vmem:[#allocation9 + $0x618] sm:$0xff]
        %v834 = vld [vmem:[#allocation9 + $0x620] sm:$0xff]
        %v835 = vld [vmem:[#allocation9 + $0x628] sm:$0xff]
        %v836 = vld [vmem:[#allocation9 + $0x630] sm:$0xff]
        %v837 = vld [vmem:[#allocation9 + $0x638] sm:$0xff]
        %v838 = vld [vmem:[#allocation9 + $0x640] sm:$0xff]
        %v839 = vld [vmem:[#allocation9 + $0x648] sm:$0xff]
        %v840 = vld [vmem:[#allocation9 + $0x650] sm:$0xff]
        %v841 = vld [vmem:[#allocation9 + $0x658] sm:$0xff]
        %v842 = vld [vmem:[#allocation9 + $0x660] sm:$0xff]
        %v843 = vld [vmem:[#allocation9 + $0x668] sm:$0xff]
        %v844 = vld [vmem:[#allocation9 + $0x670] sm:$0xff]
        %v845 = vld [vmem:[#allocation9 + $0x678] sm:$0xff]
        %v846 = vld [vmem:[#allocation9 + $0x680] sm:$0xff]
        %v847 = vld [vmem:[#allocation9 + $0x688] sm:$0xff]
        %v848 = vld [vmem:[#allocation9 + $0x690] sm:$0xff]
        %v849 = vld [vmem:[#allocation9 + $0x698] sm:$0xff]
        %v850 = vld [vmem:[#allocation9 + $0x6a0] sm:$0xff]
        %v851 = vld [vmem:[#allocation9 + $0x6a8] sm:$0xff]
        %v852 = vld [vmem:[#allocation9 + $0x6b0] sm:$0xff]
        %v853 = vld [vmem:[#allocation9 + $0x6b8] sm:$0xff]
        %v854 = vld [vmem:[#allocation9 + $0x6c0] sm:$0xff]
        %v855 = vld [vmem:[#allocation9 + $0x6c8] sm:$0xff]
        %v856 = vld [vmem:[#allocation9 + $0x6d0] sm:$0xff]
        %v857 = vld [vmem:[#allocation9 + $0x6d8] sm:$0xff]
        %v858 = vld [vmem:[#allocation9 + $0x6e0] sm:$0xff]
        %v859 = vld [vmem:[#allocation9 + $0x6e8] sm:$0xff]
        %v860 = vld [vmem:[#allocation9 + $0x6f0] sm:$0xff]
        %v861 = vld [vmem:[#allocation9 + $0x6f8] sm:$0xff]
        %v862 = vld [vmem:[#allocation9 + $0x700] sm:$0xff]
        %v863 = vld [vmem:[#allocation9 + $0x708] sm:$0xff]
        %v864 = vld [vmem:[#allocation9 + $0x710] sm:$0xff]
        %v865 = vld [vmem:[#allocation9 + $0x718] sm:$0xff]
        %v866 = vld [vmem:[#allocation9 + $0x720] sm:$0xff]
        %v867 = vld [vmem:[#allocation9 + $0x728] sm:$0xff]
        %v868 = vld [vmem:[#allocation9 + $0x730] sm:$0xff]
        %v869 = vld [vmem:[#allocation9 + $0x738] sm:$0xff]
        %v870 = vld [vmem:[#allocation9 + $0x740] sm:$0xff]
        %v871 = vld [vmem:[#allocation9 + $0x748] sm:$0xff]
        %v872 = vld [vmem:[#allocation9 + $0x750] sm:$0xff]
        %v873 = vld [vmem:[#allocation9 + $0x758] sm:$0xff]
        %v874 = vld [vmem:[#allocation9 + $0x760] sm:$0xff]
        %v875 = vld [vmem:[#allocation9 + $0x768] sm:$0xff]
        %v876 = vld [vmem:[#allocation9 + $0x770] sm:$0xff]
        %v877 = vld [vmem:[#allocation9 + $0x778] sm:$0xff]
        %v878 = vld [vmem:[#allocation9 + $0x780] sm:$0xff]
        %v879 = vld [vmem:[#allocation9 + $0x788] sm:$0xff]
        %v880 = vld [vmem:[#allocation9 + $0x790] sm:$0xff]
        %v881 = vld [vmem:[#allocation9 + $0x798] sm:$0xff]
        %v882 = vld [vmem:[#allocation9 + $0x7a0] sm:$0xff]
        %v883 = vld [vmem:[#allocation9 + $0x7a8] sm:$0xff]
        %v884 = vld [vmem:[#allocation9 + $0x7b0] sm:$0xff]
        %v885 = vld [vmem:[#allocation9 + $0x7b8] sm:$0xff]
        %v886 = vld [vmem:[#allocation9 + $0x7c0] sm:$0xff]
        %v887 = vld [vmem:[#allocation9 + $0x7c8] sm:$0xff]
        %v888 = vld [vmem:[#allocation9 + $0x7d0] sm:$0xff]
        %v889 = vld [vmem:[#allocation9 + $0x7d8] sm:$0xff]
        %v890 = vld [vmem:[#allocation9 + $0x7e0] sm:$0xff]
        %v891 = vld [vmem:[#allocation9 + $0x7e8] sm:$0xff]
        %v892 = vld [vmem:[#allocation9 + $0x7f0] sm:$0xff]
        %v893 = vld [vmem:[#allocation9 + $0x7f8] sm:$0xff]
        %v894 = vld [vmem:[%s4] sm:$0xff]
        %v896 = vlaneseq
        %v897 = vshrl.u32 %v896, 7
        %v898 = vsub.s32 0, %v897
        %v899 = vrot.slane %v894, %v898
        %v900 = vlaneseq
        %v901 = vshrl.u32 %v900, 7
        %v902 = vsub.s32 1, %v901
        %v903 = vrot.slane %v894, %v902
        %v904 = vlaneseq
        %v905 = vshrl.u32 %v904, 7
        %v906 = vsub.s32 2, %v905
        %v907 = vrot.slane %v894, %v906
        %v908 = vlaneseq
        %v909 = vshrl.u32 %v908, 7
        %v910 = vsub.s32 3, %v909
        %v911 = vrot.slane %v894, %v910
        %v912 = vlaneseq
        %v913 = vshrl.u32 %v912, 7
        %v914 = vsub.s32 4, %v913
        %v915 = vrot.slane %v894, %v914
        %v916 = vlaneseq
        %v917 = vshrl.u32 %v916, 7
        %v918 = vsub.s32 5, %v917
        %v919 = vrot.slane %v894, %v918
        %v920 = vlaneseq
        %v921 = vshrl.u32 %v920, 7
        %v922 = vsub.s32 6, %v921
        %v923 = vrot.slane %v894, %v922
        %v924 = vlaneseq
        %v925 = vshrl.u32 %v924, 7
        %v926 = vsub.s32 7, %v925
        %v927 = vrot.slane %v894, %v926
        %v952 = vunpack.c.l.b16 %v614
        %v953 = vunpack.c.h.b16 %v614
        %v954 = vunpack.c.l.b16 %v615
        %v955 = vunpack.c.h.b16 %v615
        %v956 = vunpack.c.l.b16 %v616
        %v957 = vunpack.c.h.b16 %v616
        %v958 = vunpack.c.l.b16 %v617
        %v959 = vunpack.c.h.b16 %v617
        %v960 = vunpack.c.l.b16 %v618
        %v961 = vunpack.c.h.b16 %v618
        %v962 = vunpack.c.l.b16 %v619
        %v963 = vunpack.c.h.b16 %v619
        %v964 = vunpack.c.l.b16 %v620
        %v965 = vunpack.c.h.b16 %v620
        %v966 = vunpack.c.l.b16 %v621
        %v967 = vunpack.c.h.b16 %v621
        %v968 = vunpack.c.l.b16 %v622
        %v969 = vunpack.c.h.b16 %v622
        %v970 = vunpack.c.l.b16 %v623
        %v971 = vunpack.c.h.b16 %v623
        %v972 = vunpack.c.l.b16 %v624
        %v973 = vunpack.c.h.b16 %v624
        %v974 = vunpack.c.l.b16 %v625
        %v975 = vunpack.c.h.b16 %v625
        %v976 = vunpack.c.l.b16 %v626
        %v977 = vunpack.c.h.b16 %v626
        %v978 = vunpack.c.l.b16 %v627
        %v979 = vunpack.c.h.b16 %v627
        %v980 = vunpack.c.l.b16 %v628
        %v981 = vunpack.c.h.b16 %v628
        %v982 = vunpack.c.l.b16 %v629
        %v983 = vunpack.c.h.b16 %v629
        %v984 = vpack.c.b16 %v956, %v952
        %v985 = vpack.c.b16 %v957, %v953
        %v986 = vpack.c.b16 %v958, %v954
        %v987 = vpack.c.b16 %v959, %v955
        %v988 = vpack.c.b16 %v964, %v960
        %v989 = vpack.c.b16 %v965, %v961
        %v990 = vpack.c.b16 %v966, %v962
        %v991 = vpack.c.b16 %v967, %v963
        %v992 = vpack.c.b16 %v972, %v968
        %v993 = vpack.c.b16 %v973, %v969
        %v994 = vpack.c.b16 %v974, %v970
        %v995 = vpack.c.b16 %v975, %v971
        %v996 = vpack.c.b16 %v980, %v976
        %v997 = vpack.c.b16 %v981, %v977
        %v998 = vpack.c.b16 %v982, %v978
        %v999 = vpack.c.b16 %v983, %v979
        %v1272 = vunpack.c.l.b16 %v638
        %v1273 = vunpack.c.h.b16 %v638
        %v1274 = vunpack.c.l.b16 %v639
        %v1275 = vunpack.c.h.b16 %v639
        %v1276 = vunpack.c.l.b16 %v640
        %v1277 = vunpack.c.h.b16 %v640
        %v1278 = vunpack.c.l.b16 %v641
        %v1279 = vunpack.c.h.b16 %v641
        %v1280 = vunpack.c.l.b16 %v642
        %v1281 = vunpack.c.h.b16 %v642
        %v1282 = vunpack.c.l.b16 %v643
        %v1283 = vunpack.c.h.b16 %v643
        %v1284 = vunpack.c.l.b16 %v644
        %v1285 = vunpack.c.h.b16 %v644
        %v1286 = vunpack.c.l.b16 %v645
        %v1287 = vunpack.c.h.b16 %v645
        %v1288 = vunpack.c.l.b16 %v646
        %v1289 = vunpack.c.h.b16 %v646
        %v1290 = vunpack.c.l.b16 %v647
        %v1291 = vunpack.c.h.b16 %v647
        %v1292 = vunpack.c.l.b16 %v648
        %v1293 = vunpack.c.h.b16 %v648
        %v1294 = vunpack.c.l.b16 %v649
        %v1295 = vunpack.c.h.b16 %v649
        %v1296 = vunpack.c.l.b16 %v650
        %v1297 = vunpack.c.h.b16 %v650
        %v1298 = vunpack.c.l.b16 %v651
        %v1299 = vunpack.c.h.b16 %v651
        %v1300 = vunpack.c.l.b16 %v652
        %v1301 = vunpack.c.h.b16 %v652
        %v1302 = vunpack.c.l.b16 %v653
        %v1303 = vunpack.c.h.b16 %v653
        %v1304 = vunpack.c.l.b16 %v654
        %v1305 = vunpack.c.h.b16 %v654
        %v1306 = vunpack.c.l.b16 %v655
        %v1307 = vunpack.c.h.b16 %v655
        %v1308 = vunpack.c.l.b16 %v656
        %v1309 = vunpack.c.h.b16 %v656
        %v1310 = vunpack.c.l.b16 %v657
        %v1311 = vunpack.c.h.b16 %v657
        %v1312 = vunpack.c.l.b16 %v658
        %v1313 = vunpack.c.h.b16 %v658
        %v1314 = vunpack.c.l.b16 %v659
        %v1315 = vunpack.c.h.b16 %v659
        %v1316 = vunpack.c.l.b16 %v660
        %v1317 = vunpack.c.h.b16 %v660
        %v1318 = vunpack.c.l.b16 %v661
        %v1319 = vunpack.c.h.b16 %v661
        %v1320 = vunpack.c.l.b16 %v662
        %v1321 = vunpack.c.h.b16 %v662
        %v1322 = vunpack.c.l.b16 %v663
        %v1323 = vunpack.c.h.b16 %v663
        %v1324 = vunpack.c.l.b16 %v664
        %v1325 = vunpack.c.h.b16 %v664
        %v1326 = vunpack.c.l.b16 %v665
        %v1327 = vunpack.c.h.b16 %v665
        %v1328 = vunpack.c.l.b16 %v666
        %v1329 = vunpack.c.h.b16 %v666
        %v1330 = vunpack.c.l.b16 %v667
        %v1331 = vunpack.c.h.b16 %v667
        %v1332 = vunpack.c.l.b16 %v668
        %v1333 = vunpack.c.h.b16 %v668
        %v1334 = vunpack.c.l.b16 %v669
        %v1335 = vunpack.c.h.b16 %v669
        %v1336 = vunpack.c.l.b16 %v670
        %v1337 = vunpack.c.h.b16 %v670
        %v1338 = vunpack.c.l.b16 %v671
        %v1339 = vunpack.c.h.b16 %v671
        %v1340 = vunpack.c.l.b16 %v672
        %v1341 = vunpack.c.h.b16 %v672
        %v1342 = vunpack.c.l.b16 %v673
        %v1343 = vunpack.c.h.b16 %v673
        %v1344 = vunpack.c.l.b16 %v674
        %v1345 = vunpack.c.h.b16 %v674
        %v1346 = vunpack.c.l.b16 %v675
        %v1347 = vunpack.c.h.b16 %v675
        %v1348 = vunpack.c.l.b16 %v676
        %v1349 = vunpack.c.h.b16 %v676
        %v1350 = vunpack.c.l.b16 %v677
        %v1351 = vunpack.c.h.b16 %v677
        %v1352 = vunpack.c.l.b16 %v678
        %v1353 = vunpack.c.h.b16 %v678
        %v1354 = vunpack.c.l.b16 %v679
        %v1355 = vunpack.c.h.b16 %v679
        %v1356 = vunpack.c.l.b16 %v680
        %v1357 = vunpack.c.h.b16 %v680
        %v1358 = vunpack.c.l.b16 %v681
        %v1359 = vunpack.c.h.b16 %v681
        %v1360 = vunpack.c.l.b16 %v682
        %v1361 = vunpack.c.h.b16 %v682
        %v1362 = vunpack.c.l.b16 %v683
        %v1363 = vunpack.c.h.b16 %v683
        %v1364 = vunpack.c.l.b16 %v684
        %v1365 = vunpack.c.h.b16 %v684
        %v1366 = vunpack.c.l.b16 %v685
        %v1367 = vunpack.c.h.b16 %v685
        %v1368 = vunpack.c.l.b16 %v686
        %v1369 = vunpack.c.h.b16 %v686
        %v1370 = vunpack.c.l.b16 %v687
        %v1371 = vunpack.c.h.b16 %v687
        %v1372 = vunpack.c.l.b16 %v688
        %v1373 = vunpack.c.h.b16 %v688
        %v1374 = vunpack.c.l.b16 %v689
        %v1375 = vunpack.c.h.b16 %v689
        %v1376 = vunpack.c.l.b16 %v690
        %v1377 = vunpack.c.h.b16 %v690
        %v1378 = vunpack.c.l.b16 %v691
        %v1379 = vunpack.c.h.b16 %v691
        %v1380 = vunpack.c.l.b16 %v692
        %v1381 = vunpack.c.h.b16 %v692
        %v1382 = vunpack.c.l.b16 %v693
        %v1383 = vunpack.c.h.b16 %v693
        %v1384 = vunpack.c.l.b16 %v694
        %v1385 = vunpack.c.h.b16 %v694
        %v1386 = vunpack.c.l.b16 %v695
        %v1387 = vunpack.c.h.b16 %v695
        %v1388 = vunpack.c.l.b16 %v696
        %v1389 = vunpack.c.h.b16 %v696
        %v1390 = vunpack.c.l.b16 %v697
        %v1391 = vunpack.c.h.b16 %v697
        %v1392 = vunpack.c.l.b16 %v698
        %v1393 = vunpack.c.h.b16 %v698
        %v1394 = vunpack.c.l.b16 %v699
        %v1395 = vunpack.c.h.b16 %v699
        %v1396 = vunpack.c.l.b16 %v700
        %v1397 = vunpack.c.h.b16 %v700
        %v1398 = vunpack.c.l.b16 %v701
        %v1399 = vunpack.c.h.b16 %v701
        %v1400 = vunpack.c.l.b16 %v702
        %v1401 = vunpack.c.h.b16 %v702
        %v1402 = vunpack.c.l.b16 %v703
        %v1403 = vunpack.c.h.b16 %v703
        %v1404 = vunpack.c.l.b16 %v704
        %v1405 = vunpack.c.h.b16 %v704
        %v1406 = vunpack.c.l.b16 %v705
        %v1407 = vunpack.c.h.b16 %v705
        %v1408 = vunpack.c.l.b16 %v706
        %v1409 = vunpack.c.h.b16 %v706
        %v1410 = vunpack.c.l.b16 %v707
        %v1411 = vunpack.c.h.b16 %v707
        %v1412 = vunpack.c.l.b16 %v708
        %v1413 = vunpack.c.h.b16 %v708
        %v1414 = vunpack.c.l.b16 %v709
        %v1415 = vunpack.c.h.b16 %v709
        %v1416 = vunpack.c.l.b16 %v710
        %v1417 = vunpack.c.h.b16 %v710
        %v1418 = vunpack.c.l.b16 %v711
        %v1419 = vunpack.c.h.b16 %v711
        %v1420 = vunpack.c.l.b16 %v712
        %v1421 = vunpack.c.h.b16 %v712
        %v1422 = vunpack.c.l.b16 %v713
        %v1423 = vunpack.c.h.b16 %v713
        %v1424 = vunpack.c.l.b16 %v714
        %v1425 = vunpack.c.h.b16 %v714
        %v1426 = vunpack.c.l.b16 %v715
        %v1427 = vunpack.c.h.b16 %v715
        %v1428 = vunpack.c.l.b16 %v716
        %v1429 = vunpack.c.h.b16 %v716
        %v1430 = vunpack.c.l.b16 %v717
        %v1431 = vunpack.c.h.b16 %v717
        %v1432 = vunpack.c.l.b16 %v718
        %v1433 = vunpack.c.h.b16 %v718
        %v1434 = vunpack.c.l.b16 %v719
        %v1435 = vunpack.c.h.b16 %v719
        %v1436 = vunpack.c.l.b16 %v720
        %v1437 = vunpack.c.h.b16 %v720
        %v1438 = vunpack.c.l.b16 %v721
        %v1439 = vunpack.c.h.b16 %v721
        %v1440 = vunpack.c.l.b16 %v722
        %v1441 = vunpack.c.h.b16 %v722
        %v1442 = vunpack.c.l.b16 %v723
        %v1443 = vunpack.c.h.b16 %v723
        %v1444 = vunpack.c.l.b16 %v724
        %v1445 = vunpack.c.h.b16 %v724
        %v1446 = vunpack.c.l.b16 %v725
        %v1447 = vunpack.c.h.b16 %v725
        %v1448 = vunpack.c.l.b16 %v726
        %v1449 = vunpack.c.h.b16 %v726
        %v1450 = vunpack.c.l.b16 %v727
        %v1451 = vunpack.c.h.b16 %v727
        %v1452 = vunpack.c.l.b16 %v728
        %v1453 = vunpack.c.h.b16 %v728
        %v1454 = vunpack.c.l.b16 %v729
        %v1455 = vunpack.c.h.b16 %v729
        %v1456 = vunpack.c.l.b16 %v730
        %v1457 = vunpack.c.h.b16 %v730
        %v1458 = vunpack.c.l.b16 %v731
        %v1459 = vunpack.c.h.b16 %v731
        %v1460 = vunpack.c.l.b16 %v732
        %v1461 = vunpack.c.h.b16 %v732
        %v1462 = vunpack.c.l.b16 %v733
        %v1463 = vunpack.c.h.b16 %v733
        %v1464 = vunpack.c.l.b16 %v734
        %v1465 = vunpack.c.h.b16 %v734
        %v1466 = vunpack.c.l.b16 %v735
        %v1467 = vunpack.c.h.b16 %v735
        %v1468 = vunpack.c.l.b16 %v736
        %v1469 = vunpack.c.h.b16 %v736
        %v1470 = vunpack.c.l.b16 %v737
        %v1471 = vunpack.c.h.b16 %v737
        %v1472 = vunpack.c.l.b16 %v738
        %v1473 = vunpack.c.h.b16 %v738
        %v1474 = vunpack.c.l.b16 %v739
        %v1475 = vunpack.c.h.b16 %v739
        %v1476 = vunpack.c.l.b16 %v740
        %v1477 = vunpack.c.h.b16 %v740
        %v1478 = vunpack.c.l.b16 %v741
        %v1479 = vunpack.c.h.b16 %v741
        %v1480 = vunpack.c.l.b16 %v742
        %v1481 = vunpack.c.h.b16 %v742
        %v1482 = vunpack.c.l.b16 %v743
        %v1483 = vunpack.c.h.b16 %v743
        %v1484 = vunpack.c.l.b16 %v744
        %v1485 = vunpack.c.h.b16 %v744
        %v1486 = vunpack.c.l.b16 %v745
        %v1487 = vunpack.c.h.b16 %v745
        %v1488 = vunpack.c.l.b16 %v746
        %v1489 = vunpack.c.h.b16 %v746
        %v1490 = vunpack.c.l.b16 %v747
        %v1491 = vunpack.c.h.b16 %v747
        %v1492 = vunpack.c.l.b16 %v748
        %v1493 = vunpack.c.h.b16 %v748
        %v1494 = vunpack.c.l.b16 %v749
        %v1495 = vunpack.c.h.b16 %v749
        %v1496 = vunpack.c.l.b16 %v750
        %v1497 = vunpack.c.h.b16 %v750
        %v1498 = vunpack.c.l.b16 %v751
        %v1499 = vunpack.c.h.b16 %v751
        %v1500 = vunpack.c.l.b16 %v752
        %v1501 = vunpack.c.h.b16 %v752
        %v1502 = vunpack.c.l.b16 %v753
        %v1503 = vunpack.c.h.b16 %v753
        %v1504 = vunpack.c.l.b16 %v754
        %v1505 = vunpack.c.h.b16 %v754
        %v1506 = vunpack.c.l.b16 %v755
        %v1507 = vunpack.c.h.b16 %v755
        %v1508 = vunpack.c.l.b16 %v756
        %v1509 = vunpack.c.h.b16 %v756
        %v1510 = vunpack.c.l.b16 %v757
        %v1511 = vunpack.c.h.b16 %v757
        %v1512 = vunpack.c.l.b16 %v758
        %v1513 = vunpack.c.h.b16 %v758
        %v1514 = vunpack.c.l.b16 %v759
        %v1515 = vunpack.c.h.b16 %v759
        %v1516 = vunpack.c.l.b16 %v760
        %v1517 = vunpack.c.h.b16 %v760
        %v1518 = vunpack.c.l.b16 %v761
        %v1519 = vunpack.c.h.b16 %v761
        %v1520 = vunpack.c.l.b16 %v762
        %v1521 = vunpack.c.h.b16 %v762
        %v1522 = vunpack.c.l.b16 %v763
        %v1523 = vunpack.c.h.b16 %v763
        %v1524 = vunpack.c.l.b16 %v764
        %v1525 = vunpack.c.h.b16 %v764
        %v1526 = vunpack.c.l.b16 %v765
        %v1527 = vunpack.c.h.b16 %v765
        %v1528 = vunpack.c.l.b16 %v766
        %v1529 = vunpack.c.h.b16 %v766
        %v1530 = vunpack.c.l.b16 %v767
        %v1531 = vunpack.c.h.b16 %v767
        %v1532 = vunpack.c.l.b16 %v768
        %v1533 = vunpack.c.h.b16 %v768
        %v1534 = vunpack.c.l.b16 %v769
        %v1535 = vunpack.c.h.b16 %v769
        %v1536 = vunpack.c.l.b16 %v770
        %v1537 = vunpack.c.h.b16 %v770
        %v1538 = vunpack.c.l.b16 %v771
        %v1539 = vunpack.c.h.b16 %v771
        %v1540 = vunpack.c.l.b16 %v772
        %v1541 = vunpack.c.h.b16 %v772
        %v1542 = vunpack.c.l.b16 %v773
        %v1543 = vunpack.c.h.b16 %v773
        %v1544 = vunpack.c.l.b16 %v774
        %v1545 = vunpack.c.h.b16 %v774
        %v1546 = vunpack.c.l.b16 %v775
        %v1547 = vunpack.c.h.b16 %v775
        %v1548 = vunpack.c.l.b16 %v776
        %v1549 = vunpack.c.h.b16 %v776
        %v1550 = vunpack.c.l.b16 %v777
        %v1551 = vunpack.c.h.b16 %v777
        %v1552 = vunpack.c.l.b16 %v778
        %v1553 = vunpack.c.h.b16 %v778
        %v1554 = vunpack.c.l.b16 %v779
        %v1555 = vunpack.c.h.b16 %v779
        %v1556 = vunpack.c.l.b16 %v780
        %v1557 = vunpack.c.h.b16 %v780
        %v1558 = vunpack.c.l.b16 %v781
        %v1559 = vunpack.c.h.b16 %v781
        %v1560 = vunpack.c.l.b16 %v782
        %v1561 = vunpack.c.h.b16 %v782
        %v1562 = vunpack.c.l.b16 %v783
        %v1563 = vunpack.c.h.b16 %v783
        %v1564 = vunpack.c.l.b16 %v784
        %v1565 = vunpack.c.h.b16 %v784
        %v1566 = vunpack.c.l.b16 %v785
        %v1567 = vunpack.c.h.b16 %v785
        %v1568 = vunpack.c.l.b16 %v786
        %v1569 = vunpack.c.h.b16 %v786
        %v1570 = vunpack.c.l.b16 %v787
        %v1571 = vunpack.c.h.b16 %v787
        %v1572 = vunpack.c.l.b16 %v788
        %v1573 = vunpack.c.h.b16 %v788
        %v1574 = vunpack.c.l.b16 %v789
        %v1575 = vunpack.c.h.b16 %v789
        %v1576 = vunpack.c.l.b16 %v790
        %v1577 = vunpack.c.h.b16 %v790
        %v1578 = vunpack.c.l.b16 %v791
        %v1579 = vunpack.c.h.b16 %v791
        %v1580 = vunpack.c.l.b16 %v792
        %v1581 = vunpack.c.h.b16 %v792
        %v1582 = vunpack.c.l.b16 %v793
        %v1583 = vunpack.c.h.b16 %v793
        %v1584 = vunpack.c.l.b16 %v794
        %v1585 = vunpack.c.h.b16 %v794
        %v1586 = vunpack.c.l.b16 %v795
        %v1587 = vunpack.c.h.b16 %v795
        %v1588 = vunpack.c.l.b16 %v796
        %v1589 = vunpack.c.h.b16 %v796
        %v1590 = vunpack.c.l.b16 %v797
        %v1591 = vunpack.c.h.b16 %v797
        %v1592 = vunpack.c.l.b16 %v798
        %v1593 = vunpack.c.h.b16 %v798
        %v1594 = vunpack.c.l.b16 %v799
        %v1595 = vunpack.c.h.b16 %v799
        %v1596 = vunpack.c.l.b16 %v800
        %v1597 = vunpack.c.h.b16 %v800
        %v1598 = vunpack.c.l.b16 %v801
        %v1599 = vunpack.c.h.b16 %v801
        %v1600 = vunpack.c.l.b16 %v802
        %v1601 = vunpack.c.h.b16 %v802
        %v1602 = vunpack.c.l.b16 %v803
        %v1603 = vunpack.c.h.b16 %v803
        %v1604 = vunpack.c.l.b16 %v804
        %v1605 = vunpack.c.h.b16 %v804
        %v1606 = vunpack.c.l.b16 %v805
        %v1607 = vunpack.c.h.b16 %v805
        %v1608 = vunpack.c.l.b16 %v806
        %v1609 = vunpack.c.h.b16 %v806
        %v1610 = vunpack.c.l.b16 %v807
        %v1611 = vunpack.c.h.b16 %v807
        %v1612 = vunpack.c.l.b16 %v808
        %v1613 = vunpack.c.h.b16 %v808
        %v1614 = vunpack.c.l.b16 %v809
        %v1615 = vunpack.c.h.b16 %v809
        %v1616 = vunpack.c.l.b16 %v810
        %v1617 = vunpack.c.h.b16 %v810
        %v1618 = vunpack.c.l.b16 %v811
        %v1619 = vunpack.c.h.b16 %v811
        %v1620 = vunpack.c.l.b16 %v812
        %v1621 = vunpack.c.h.b16 %v812
        %v1622 = vunpack.c.l.b16 %v813
        %v1623 = vunpack.c.h.b16 %v813
        %v1624 = vunpack.c.l.b16 %v814
        %v1625 = vunpack.c.h.b16 %v814
        %v1626 = vunpack.c.l.b16 %v815
        %v1627 = vunpack.c.h.b16 %v815
        %v1628 = vunpack.c.l.b16 %v816
        %v1629 = vunpack.c.h.b16 %v816
        %v1630 = vunpack.c.l.b16 %v817
        %v1631 = vunpack.c.h.b16 %v817
        %v1632 = vunpack.c.l.b16 %v818
        %v1633 = vunpack.c.h.b16 %v818
        %v1634 = vunpack.c.l.b16 %v819
        %v1635 = vunpack.c.h.b16 %v819
        %v1636 = vunpack.c.l.b16 %v820
        %v1637 = vunpack.c.h.b16 %v820
        %v1638 = vunpack.c.l.b16 %v821
        %v1639 = vunpack.c.h.b16 %v821
        %v1640 = vunpack.c.l.b16 %v822
        %v1641 = vunpack.c.h.b16 %v822
        %v1642 = vunpack.c.l.b16 %v823
        %v1643 = vunpack.c.h.b16 %v823
        %v1644 = vunpack.c.l.b16 %v824
        %v1645 = vunpack.c.h.b16 %v824
        %v1646 = vunpack.c.l.b16 %v825
        %v1647 = vunpack.c.h.b16 %v825
        %v1648 = vunpack.c.l.b16 %v826
        %v1649 = vunpack.c.h.b16 %v826
        %v1650 = vunpack.c.l.b16 %v827
        %v1651 = vunpack.c.h.b16 %v827
        %v1652 = vunpack.c.l.b16 %v828
        %v1653 = vunpack.c.h.b16 %v828
        %v1654 = vunpack.c.l.b16 %v829
        %v1655 = vunpack.c.h.b16 %v829
        %v1656 = vunpack.c.l.b16 %v830
        %v1657 = vunpack.c.h.b16 %v830
        %v1658 = vunpack.c.l.b16 %v831
        %v1659 = vunpack.c.h.b16 %v831
        %v1660 = vunpack.c.l.b16 %v832
        %v1661 = vunpack.c.h.b16 %v832
        %v1662 = vunpack.c.l.b16 %v833
        %v1663 = vunpack.c.h.b16 %v833
        %v1664 = vunpack.c.l.b16 %v834
        %v1665 = vunpack.c.h.b16 %v834
        %v1666 = vunpack.c.l.b16 %v835
        %v1667 = vunpack.c.h.b16 %v835
        %v1668 = vunpack.c.l.b16 %v836
        %v1669 = vunpack.c.h.b16 %v836
        %v1670 = vunpack.c.l.b16 %v837
        %v1671 = vunpack.c.h.b16 %v837
        %v1672 = vunpack.c.l.b16 %v838
        %v1673 = vunpack.c.h.b16 %v838
        %v1674 = vunpack.c.l.b16 %v839
        %v1675 = vunpack.c.h.b16 %v839
        %v1676 = vunpack.c.l.b16 %v840
        %v1677 = vunpack.c.h.b16 %v840
        %v1678 = vunpack.c.l.b16 %v841
        %v1679 = vunpack.c.h.b16 %v841
        %v1680 = vunpack.c.l.b16 %v842
        %v1681 = vunpack.c.h.b16 %v842
        %v1682 = vunpack.c.l.b16 %v843
        %v1683 = vunpack.c.h.b16 %v843
        %v1684 = vunpack.c.l.b16 %v844
        %v1685 = vunpack.c.h.b16 %v844
        %v1686 = vunpack.c.l.b16 %v845
        %v1687 = vunpack.c.h.b16 %v845
        %v1688 = vunpack.c.l.b16 %v846
        %v1689 = vunpack.c.h.b16 %v846
        %v1690 = vunpack.c.l.b16 %v847
        %v1691 = vunpack.c.h.b16 %v847
        %v1692 = vunpack.c.l.b16 %v848
        %v1693 = vunpack.c.h.b16 %v848
        %v1694 = vunpack.c.l.b16 %v849
        %v1695 = vunpack.c.h.b16 %v849
        %v1696 = vunpack.c.l.b16 %v850
        %v1697 = vunpack.c.h.b16 %v850
        %v1698 = vunpack.c.l.b16 %v851
        %v1699 = vunpack.c.h.b16 %v851
        %v1700 = vunpack.c.l.b16 %v852
        %v1701 = vunpack.c.h.b16 %v852
        %v1702 = vunpack.c.l.b16 %v853
        %v1703 = vunpack.c.h.b16 %v853
        %v1704 = vunpack.c.l.b16 %v854
        %v1705 = vunpack.c.h.b16 %v854
        %v1706 = vunpack.c.l.b16 %v855
        %v1707 = vunpack.c.h.b16 %v855
        %v1708 = vunpack.c.l.b16 %v856
        %v1709 = vunpack.c.h.b16 %v856
        %v1710 = vunpack.c.l.b16 %v857
        %v1711 = vunpack.c.h.b16 %v857
        %v1712 = vunpack.c.l.b16 %v858
        %v1713 = vunpack.c.h.b16 %v858
        %v1714 = vunpack.c.l.b16 %v859
        %v1715 = vunpack.c.h.b16 %v859
        %v1716 = vunpack.c.l.b16 %v860
        %v1717 = vunpack.c.h.b16 %v860
        %v1718 = vunpack.c.l.b16 %v861
        %v1719 = vunpack.c.h.b16 %v861
        %v1720 = vunpack.c.l.b16 %v862
        %v1721 = vunpack.c.h.b16 %v862
        %v1722 = vunpack.c.l.b16 %v863
        %v1723 = vunpack.c.h.b16 %v863
        %v1724 = vunpack.c.l.b16 %v864
        %v1725 = vunpack.c.h.b16 %v864
        %v1726 = vunpack.c.l.b16 %v865
        %v1727 = vunpack.c.h.b16 %v865
        %v1728 = vunpack.c.l.b16 %v866
        %v1729 = vunpack.c.h.b16 %v866
        %v1730 = vunpack.c.l.b16 %v867
        %v1731 = vunpack.c.h.b16 %v867
        %v1732 = vunpack.c.l.b16 %v868
        %v1733 = vunpack.c.h.b16 %v868
        %v1734 = vunpack.c.l.b16 %v869
        %v1735 = vunpack.c.h.b16 %v869
        %v1736 = vunpack.c.l.b16 %v870
        %v1737 = vunpack.c.h.b16 %v870
        %v1738 = vunpack.c.l.b16 %v871
        %v1739 = vunpack.c.h.b16 %v871
        %v1740 = vunpack.c.l.b16 %v872
        %v1741 = vunpack.c.h.b16 %v872
        %v1742 = vunpack.c.l.b16 %v873
        %v1743 = vunpack.c.h.b16 %v873
        %v1744 = vunpack.c.l.b16 %v874
        %v1745 = vunpack.c.h.b16 %v874
        %v1746 = vunpack.c.l.b16 %v875
        %v1747 = vunpack.c.h.b16 %v875
        %v1748 = vunpack.c.l.b16 %v876
        %v1749 = vunpack.c.h.b16 %v876
        %v1750 = vunpack.c.l.b16 %v877
        %v1751 = vunpack.c.h.b16 %v877
        %v1752 = vunpack.c.l.b16 %v878
        %v1753 = vunpack.c.h.b16 %v878
        %v1754 = vunpack.c.l.b16 %v879
        %v1755 = vunpack.c.h.b16 %v879
        %v1756 = vunpack.c.l.b16 %v880
        %v1757 = vunpack.c.h.b16 %v880
        %v1758 = vunpack.c.l.b16 %v881
        %v1759 = vunpack.c.h.b16 %v881
        %v1760 = vunpack.c.l.b16 %v882
        %v1761 = vunpack.c.h.b16 %v882
        %v1762 = vunpack.c.l.b16 %v883
        %v1763 = vunpack.c.h.b16 %v883
        %v1764 = vunpack.c.l.b16 %v884
        %v1765 = vunpack.c.h.b16 %v884
        %v1766 = vunpack.c.l.b16 %v885
        %v1767 = vunpack.c.h.b16 %v885
        %v1768 = vunpack.c.l.b16 %v886
        %v1769 = vunpack.c.h.b16 %v886
        %v1770 = vunpack.c.l.b16 %v887
        %v1771 = vunpack.c.h.b16 %v887
        %v1772 = vunpack.c.l.b16 %v888
        %v1773 = vunpack.c.h.b16 %v888
        %v1774 = vunpack.c.l.b16 %v889
        %v1775 = vunpack.c.h.b16 %v889
        %v1776 = vunpack.c.l.b16 %v890
        %v1777 = vunpack.c.h.b16 %v890
        %v1778 = vunpack.c.l.b16 %v891
        %v1779 = vunpack.c.h.b16 %v891
        %v1780 = vunpack.c.l.b16 %v892
        %v1781 = vunpack.c.h.b16 %v892
        %v1782 = vunpack.c.l.b16 %v893
        %v1783 = vunpack.c.h.b16 %v893
        %v1784 = vpack.c.b16 %v1280, %v1272
        %v1785 = vpack.c.b16 %v1281, %v1273
        %v1786 = vpack.c.b16 %v1282, %v1274
        %v1787 = vpack.c.b16 %v1283, %v1275
        %v1788 = vpack.c.b16 %v1284, %v1276
        %v1789 = vpack.c.b16 %v1285, %v1277
        %v1790 = vpack.c.b16 %v1286, %v1278
        %v1791 = vpack.c.b16 %v1287, %v1279
        %v1792 = vpack.c.b16 %v1296, %v1288
        %v1793 = vpack.c.b16 %v1297, %v1289
        %v1794 = vpack.c.b16 %v1298, %v1290
        %v1795 = vpack.c.b16 %v1299, %v1291
        %v1796 = vpack.c.b16 %v1300, %v1292
        %v1797 = vpack.c.b16 %v1301, %v1293
        %v1798 = vpack.c.b16 %v1302, %v1294
        %v1799 = vpack.c.b16 %v1303, %v1295
        %v1800 = vpack.c.b16 %v1312, %v1304
        %v1801 = vpack.c.b16 %v1313, %v1305
        %v1802 = vpack.c.b16 %v1314, %v1306
        %v1803 = vpack.c.b16 %v1315, %v1307
        %v1804 = vpack.c.b16 %v1316, %v1308
        %v1805 = vpack.c.b16 %v1317, %v1309
        %v1806 = vpack.c.b16 %v1318, %v1310
        %v1807 = vpack.c.b16 %v1319, %v1311
        %v1808 = vpack.c.b16 %v1328, %v1320
        %v1809 = vpack.c.b16 %v1329, %v1321
        %v1810 = vpack.c.b16 %v1330, %v1322
        %v1811 = vpack.c.b16 %v1331, %v1323
        %v1812 = vpack.c.b16 %v1332, %v1324
        %v1813 = vpack.c.b16 %v1333, %v1325
        %v1814 = vpack.c.b16 %v1334, %v1326
        %v1815 = vpack.c.b16 %v1335, %v1327
        %v1816 = vpack.c.b16 %v1344, %v1336
        %v1817 = vpack.c.b16 %v1345, %v1337
        %v1818 = vpack.c.b16 %v1346, %v1338
        %v1819 = vpack.c.b16 %v1347, %v1339
        %v1820 = vpack.c.b16 %v1348, %v1340
        %v1821 = vpack.c.b16 %v1349, %v1341
        %v1822 = vpack.c.b16 %v1350, %v1342
        %v1823 = vpack.c.b16 %v1351, %v1343
        %v1824 = vpack.c.b16 %v1360, %v1352
        %v1825 = vpack.c.b16 %v1361, %v1353
        %v1826 = vpack.c.b16 %v1362, %v1354
        %v1827 = vpack.c.b16 %v1363, %v1355
        %v1828 = vpack.c.b16 %v1364, %v1356
        %v1829 = vpack.c.b16 %v1365, %v1357
        %v1830 = vpack.c.b16 %v1366, %v1358
        %v1831 = vpack.c.b16 %v1367, %v1359
        %v1832 = vpack.c.b16 %v1376, %v1368
        %v1833 = vpack.c.b16 %v1377, %v1369
        %v1834 = vpack.c.b16 %v1378, %v1370
        %v1835 = vpack.c.b16 %v1379, %v1371
        %v1836 = vpack.c.b16 %v1380, %v1372
        %v1837 = vpack.c.b16 %v1381, %v1373
        %v1838 = vpack.c.b16 %v1382, %v1374
        %v1839 = vpack.c.b16 %v1383, %v1375
        %v1840 = vpack.c.b16 %v1392, %v1384
        %v1841 = vpack.c.b16 %v1393, %v1385
        %v1842 = vpack.c.b16 %v1394, %v1386
        %v1843 = vpack.c.b16 %v1395, %v1387
        %v1844 = vpack.c.b16 %v1396, %v1388
        %v1845 = vpack.c.b16 %v1397, %v1389
        %v1846 = vpack.c.b16 %v1398, %v1390
        %v1847 = vpack.c.b16 %v1399, %v1391
        %v1848 = vpack.c.b16 %v1408, %v1400
        %v1849 = vpack.c.b16 %v1409, %v1401
        %v1850 = vpack.c.b16 %v1410, %v1402
        %v1851 = vpack.c.b16 %v1411, %v1403
        %v1852 = vpack.c.b16 %v1412, %v1404
        %v1853 = vpack.c.b16 %v1413, %v1405
        %v1854 = vpack.c.b16 %v1414, %v1406
        %v1855 = vpack.c.b16 %v1415, %v1407
        %v1856 = vpack.c.b16 %v1424, %v1416
        %v1857 = vpack.c.b16 %v1425, %v1417
        %v1858 = vpack.c.b16 %v1426, %v1418
        %v1859 = vpack.c.b16 %v1427, %v1419
        %v1860 = vpack.c.b16 %v1428, %v1420
        %v1861 = vpack.c.b16 %v1429, %v1421
        %v1862 = vpack.c.b16 %v1430, %v1422
        %v1863 = vpack.c.b16 %v1431, %v1423
        %v1864 = vpack.c.b16 %v1440, %v1432
        %v1865 = vpack.c.b16 %v1441, %v1433
        %v1866 = vpack.c.b16 %v1442, %v1434
        %v1867 = vpack.c.b16 %v1443, %v1435
        %v1868 = vpack.c.b16 %v1444, %v1436
        %v1869 = vpack.c.b16 %v1445, %v1437
        %v1870 = vpack.c.b16 %v1446, %v1438
        %v1871 = vpack.c.b16 %v1447, %v1439
        %v1872 = vpack.c.b16 %v1456, %v1448
        %v1873 = vpack.c.b16 %v1457, %v1449
        %v1874 = vpack.c.b16 %v1458, %v1450
        %v1875 = vpack.c.b16 %v1459, %v1451
        %v1876 = vpack.c.b16 %v1460, %v1452
        %v1877 = vpack.c.b16 %v1461, %v1453
        %v1878 = vpack.c.b16 %v1462, %v1454
        %v1879 = vpack.c.b16 %v1463, %v1455
        %v1880 = vpack.c.b16 %v1472, %v1464
        %v1881 = vpack.c.b16 %v1473, %v1465
        %v1882 = vpack.c.b16 %v1474, %v1466
        %v1883 = vpack.c.b16 %v1475, %v1467
        %v1884 = vpack.c.b16 %v1476, %v1468
        %v1885 = vpack.c.b16 %v1477, %v1469
        %v1886 = vpack.c.b16 %v1478, %v1470
        %v1887 = vpack.c.b16 %v1479, %v1471
        %v1888 = vpack.c.b16 %v1488, %v1480
        %v1889 = vpack.c.b16 %v1489, %v1481
        %v1890 = vpack.c.b16 %v1490, %v1482
        %v1891 = vpack.c.b16 %v1491, %v1483
        %v1892 = vpack.c.b16 %v1492, %v1484
        %v1893 = vpack.c.b16 %v1493, %v1485
        %v1894 = vpack.c.b16 %v1494, %v1486
        %v1895 = vpack.c.b16 %v1495, %v1487
        %v1896 = vpack.c.b16 %v1504, %v1496
        %v1897 = vpack.c.b16 %v1505, %v1497
        %v1898 = vpack.c.b16 %v1506, %v1498
        %v1899 = vpack.c.b16 %v1507, %v1499
        %v1900 = vpack.c.b16 %v1508, %v1500
        %v1901 = vpack.c.b16 %v1509, %v1501
        %v1902 = vpack.c.b16 %v1510, %v1502
        %v1903 = vpack.c.b16 %v1511, %v1503
        %v1904 = vpack.c.b16 %v1520, %v1512
        %v1905 = vpack.c.b16 %v1521, %v1513
        %v1906 = vpack.c.b16 %v1522, %v1514
        %v1907 = vpack.c.b16 %v1523, %v1515
        %v1908 = vpack.c.b16 %v1524, %v1516
        %v1909 = vpack.c.b16 %v1525, %v1517
        %v1910 = vpack.c.b16 %v1526, %v1518
        %v1911 = vpack.c.b16 %v1527, %v1519
        %v1912 = vpack.c.b16 %v1536, %v1528
        %v1913 = vpack.c.b16 %v1537, %v1529
        %v1914 = vpack.c.b16 %v1538, %v1530
        %v1915 = vpack.c.b16 %v1539, %v1531
        %v1916 = vpack.c.b16 %v1540, %v1532
        %v1917 = vpack.c.b16 %v1541, %v1533
        %v1918 = vpack.c.b16 %v1542, %v1534
        %v1919 = vpack.c.b16 %v1543, %v1535
        %v1920 = vpack.c.b16 %v1552, %v1544
        %v1921 = vpack.c.b16 %v1553, %v1545
        %v1922 = vpack.c.b16 %v1554, %v1546
        %v1923 = vpack.c.b16 %v1555, %v1547
        %v1924 = vpack.c.b16 %v1556, %v1548
        %v1925 = vpack.c.b16 %v1557, %v1549
        %v1926 = vpack.c.b16 %v1558, %v1550
        %v1927 = vpack.c.b16 %v1559, %v1551
        %v1928 = vpack.c.b16 %v1568, %v1560
        %v1929 = vpack.c.b16 %v1569, %v1561
        %v1930 = vpack.c.b16 %v1570, %v1562
        %v1931 = vpack.c.b16 %v1571, %v1563
        %v1932 = vpack.c.b16 %v1572, %v1564
        %v1933 = vpack.c.b16 %v1573, %v1565
        %v1934 = vpack.c.b16 %v1574, %v1566
        %v1935 = vpack.c.b16 %v1575, %v1567
        %v1936 = vpack.c.b16 %v1584, %v1576
        %v1937 = vpack.c.b16 %v1585, %v1577
        %v1938 = vpack.c.b16 %v1586, %v1578
        %v1939 = vpack.c.b16 %v1587, %v1579
        %v1940 = vpack.c.b16 %v1588, %v1580
        %v1941 = vpack.c.b16 %v1589, %v1581
        %v1942 = vpack.c.b16 %v1590, %v1582
        %v1943 = vpack.c.b16 %v1591, %v1583
        %v1944 = vpack.c.b16 %v1600, %v1592
        %v1945 = vpack.c.b16 %v1601, %v1593
        %v1946 = vpack.c.b16 %v1602, %v1594
        %v1947 = vpack.c.b16 %v1603, %v1595
        %v1948 = vpack.c.b16 %v1604, %v1596
        %v1949 = vpack.c.b16 %v1605, %v1597
        %v1950 = vpack.c.b16 %v1606, %v1598
        %v1951 = vpack.c.b16 %v1607, %v1599
        %v1952 = vpack.c.b16 %v1616, %v1608
        %v1953 = vpack.c.b16 %v1617, %v1609
        %v1954 = vpack.c.b16 %v1618, %v1610
        %v1955 = vpack.c.b16 %v1619, %v1611
        %v1956 = vpack.c.b16 %v1620, %v1612
        %v1957 = vpack.c.b16 %v1621, %v1613
        %v1958 = vpack.c.b16 %v1622, %v1614
        %v1959 = vpack.c.b16 %v1623, %v1615
        %v1960 = vpack.c.b16 %v1632, %v1624
        %v1961 = vpack.c.b16 %v1633, %v1625
        %v1962 = vpack.c.b16 %v1634, %v1626
        %v1963 = vpack.c.b16 %v1635, %v1627
        %v1964 = vpack.c.b16 %v1636, %v1628
        %v1965 = vpack.c.b16 %v1637, %v1629
        %v1966 = vpack.c.b16 %v1638, %v1630
        %v1967 = vpack.c.b16 %v1639, %v1631
        %v1968 = vpack.c.b16 %v1648, %v1640
        %v1969 = vpack.c.b16 %v1649, %v1641
        %v1970 = vpack.c.b16 %v1650, %v1642
        %v1971 = vpack.c.b16 %v1651, %v1643
        %v1972 = vpack.c.b16 %v1652, %v1644
        %v1973 = vpack.c.b16 %v1653, %v1645
        %v1974 = vpack.c.b16 %v1654, %v1646
        %v1975 = vpack.c.b16 %v1655, %v1647
        %v1976 = vpack.c.b16 %v1664, %v1656
        %v1977 = vpack.c.b16 %v1665, %v1657
        %v1978 = vpack.c.b16 %v1666, %v1658
        %v1979 = vpack.c.b16 %v1667, %v1659
        %v1980 = vpack.c.b16 %v1668, %v1660
        %v1981 = vpack.c.b16 %v1669, %v1661
        %v1982 = vpack.c.b16 %v1670, %v1662
        %v1983 = vpack.c.b16 %v1671, %v1663
        %v1984 = vpack.c.b16 %v1680, %v1672
        %v1985 = vpack.c.b16 %v1681, %v1673
        %v1986 = vpack.c.b16 %v1682, %v1674
        %v1987 = vpack.c.b16 %v1683, %v1675
        %v1988 = vpack.c.b16 %v1684, %v1676
        %v1989 = vpack.c.b16 %v1685, %v1677
        %v1990 = vpack.c.b16 %v1686, %v1678
        %v1991 = vpack.c.b16 %v1687, %v1679
        %v1992 = vpack.c.b16 %v1696, %v1688
        %v1993 = vpack.c.b16 %v1697, %v1689
        %v1994 = vpack.c.b16 %v1698, %v1690
        %v1995 = vpack.c.b16 %v1699, %v1691
        %v1996 = vpack.c.b16 %v1700, %v1692
        %v1997 = vpack.c.b16 %v1701, %v1693
        %v1998 = vpack.c.b16 %v1702, %v1694
        %v1999 = vpack.c.b16 %v1703, %v1695
        %v2000 = vpack.c.b16 %v1712, %v1704
        %v2001 = vpack.c.b16 %v1713, %v1705
        %v2002 = vpack.c.b16 %v1714, %v1706
        %v2003 = vpack.c.b16 %v1715, %v1707
        %v2004 = vpack.c.b16 %v1716, %v1708
        %v2005 = vpack.c.b16 %v1717, %v1709
        %v2006 = vpack.c.b16 %v1718, %v1710
        %v2007 = vpack.c.b16 %v1719, %v1711
        %v2008 = vpack.c.b16 %v1728, %v1720
        %v2009 = vpack.c.b16 %v1729, %v1721
        %v2010 = vpack.c.b16 %v1730, %v1722
        %v2011 = vpack.c.b16 %v1731, %v1723
        %v2012 = vpack.c.b16 %v1732, %v1724
        %v2013 = vpack.c.b16 %v1733, %v1725
        %v2014 = vpack.c.b16 %v1734, %v1726
        %v2015 = vpack.c.b16 %v1735, %v1727
        %v2016 = vpack.c.b16 %v1744, %v1736
        %v2017 = vpack.c.b16 %v1745, %v1737
        %v2018 = vpack.c.b16 %v1746, %v1738
        %v2019 = vpack.c.b16 %v1747, %v1739
        %v2020 = vpack.c.b16 %v1748, %v1740
        %v2021 = vpack.c.b16 %v1749, %v1741
        %v2022 = vpack.c.b16 %v1750, %v1742
        %v2023 = vpack.c.b16 %v1751, %v1743
        %v2024 = vpack.c.b16 %v1760, %v1752
        %v2025 = vpack.c.b16 %v1761, %v1753
        %v2026 = vpack.c.b16 %v1762, %v1754
        %v2027 = vpack.c.b16 %v1763, %v1755
        %v2028 = vpack.c.b16 %v1764, %v1756
        %v2029 = vpack.c.b16 %v1765, %v1757
        %v2030 = vpack.c.b16 %v1766, %v1758
        %v2031 = vpack.c.b16 %v1767, %v1759
        %v2032 = vpack.c.b16 %v1776, %v1768
        %v2033 = vpack.c.b16 %v1777, %v1769
        %v2034 = vpack.c.b16 %v1778, %v1770
        %v2035 = vpack.c.b16 %v1779, %v1771
        %v2036 = vpack.c.b16 %v1780, %v1772
        %v2037 = vpack.c.b16 %v1781, %v1773
        %v2038 = vpack.c.b16 %v1782, %v1774
        %v2039 = vpack.c.b16 %v1783, %v1775
        %2296 = vmatprep.subr.bf16.mxu0 %v1841
        %2297 = vmatpush1.bf16.msra.mxu0 %v1840
        %2298 = vmatprep.subr.bf16.mxu0 %v1833
        %2299 = vmatpush1.bf16.msra.mxu0 %v1832
        %2300 = vmatprep.subr.bf16.mxu0 %v1825
        %2301 = vmatpush1.bf16.msra.mxu0 %v1824
        %2302 = vmatprep.subr.bf16.mxu0 %v1817
        %2303 = vmatpush1.bf16.msra.mxu0 %v1816
        %2304 = vmatprep.subr.bf16.mxu0 %v1809
        %2305 = vmatpush1.bf16.msra.mxu0 %v1808
        %2306 = vmatprep.subr.bf16.mxu0 %v1801
        %2307 = vmatpush1.bf16.msra.mxu0 %v1800
        %2308 = vmatprep.subr.bf16.mxu0 %v1793
        %2309 = vmatpush1.bf16.msra.mxu0 %v1792
        %2310 = vmatprep.subr.bf16.mxu0 %v1785
        %2311 = vmatpush1.bf16.msra.mxu0 %v1784
        %2312 = vmatprep.subr.bf16.mxu0 %v1905
        %2313 = vmatpush2.bf16.msra.mxu0 %v1904
        %2314 = vmatprep.subr.bf16.mxu0 %v1897
        %2315 = vmatpush2.bf16.msra.mxu0 %v1896
        %2316 = vmatprep.subr.bf16.mxu0 %v1889
        %2317 = vmatpush2.bf16.msra.mxu0 %v1888
        %2318 = vmatprep.subr.bf16.mxu0 %v1881
        %2319 = vmatpush2.bf16.msra.mxu0 %v1880
        %2320 = vmatprep.subr.bf16.mxu0 %v1873
        %2321 = vmatpush2.bf16.msra.mxu0 %v1872
        %2322 = vmatprep.subr.bf16.mxu0 %v1865
        %2323 = vmatpush2.bf16.msra.mxu0 %v1864
        %2324 = vmatprep.subr.bf16.mxu0 %v1857
        %2325 = vmatpush2.bf16.msra.mxu0 %v1856
        %2326 = vmatprep.subr.bf16.mxu0 %v1849
        %2327 = vmatpush2.bf16.msra.mxu0 %v1848
        %2328 = vmatprep.mubr.bf16.mxu0 %v985
        %2329 = vmatmul.mubr.bf16.gmra.mxu0 %v984
        %v2330 = vpop.f32.mrf.mxu0
        %v2331 = vadd.f32 %v899, %v2330
        %v2332 = vpop.f32.mrf.mxu0
        %v2333 = vadd.f32 %v903, %v2332
        %v2334 = vpop.f32.mrf.mxu0
        %v2335 = vadd.f32 %v899, %v2334
        %v2336 = vpop.f32.mrf.mxu0
        %v2337 = vadd.f32 %v903, %v2336
        %2338 = vmatprep.mubr.bf16.mxu0 %v989
        %2339 = vmatmul.mubr.bf16.gmra.mxu0 %v988
        %v2340 = vpop.f32.mrf.mxu0
        %v2341 = vadd.f32 %v899, %v2340
        %v2342 = vpop.f32.mrf.mxu0
        %v2343 = vadd.f32 %v903, %v2342
        %v2344 = vpop.f32.mrf.mxu0
        %v2345 = vadd.f32 %v899, %v2344
        %v2346 = vpop.f32.mrf.mxu0
        %v2347 = vadd.f32 %v903, %v2346
        %2348 = vmatprep.mubr.bf16.mxu0 %v993
        %2349 = vmatmul.mubr.bf16.gmra.mxu0 %v992
        %v2350 = vpop.f32.mrf.mxu0
        %v2351 = vadd.f32 %v899, %v2350
        %v2352 = vpop.f32.mrf.mxu0
        %v2353 = vadd.f32 %v903, %v2352
        %v2354 = vpop.f32.mrf.mxu0
        %v2355 = vadd.f32 %v899, %v2354
        %v2356 = vpop.f32.mrf.mxu0
        %v2357 = vadd.f32 %v903, %v2356
        %2358 = vmatprep.mubr.bf16.mxu0 %v997
        %2359 = vmatmul.mubr.bf16.gmra.mxu0 %v996
        %v2360 = vpop.f32.mrf.mxu0
        %v2361 = vadd.f32 %v899, %v2360
        %v2362 = vpop.f32.mrf.mxu0
        %v2363 = vadd.f32 %v903, %v2362
        %v2364 = vpop.f32.mrf.mxu0
        %v2365 = vadd.f32 %v899, %v2364
        %v2366 = vpop.f32.mrf.mxu0
        %v2367 = vadd.f32 %v903, %v2366
        %2368 = vdwg.mxu0
        %2369 = vmatprep.subr.bf16.mxu0 %v1969
        %2370 = vmatpush1.bf16.msra.mxu0 %v1968
        %2371 = vmatprep.subr.bf16.mxu0 %v1961
        %2372 = vmatpush1.bf16.msra.mxu0 %v1960
        %2373 = vmatprep.subr.bf16.mxu0 %v1953
        %2374 = vmatpush1.bf16.msra.mxu0 %v1952
        %2375 = vmatprep.subr.bf16.mxu0 %v1945
        %2376 = vmatpush1.bf16.msra.mxu0 %v1944
        %2377 = vmatprep.subr.bf16.mxu0 %v1937
        %2378 = vmatpush1.bf16.msra.mxu0 %v1936
        %2379 = vmatprep.subr.bf16.mxu0 %v1929
        %2380 = vmatpush1.bf16.msra.mxu0 %v1928
        %2381 = vmatprep.subr.bf16.mxu0 %v1921
        %2382 = vmatpush1.bf16.msra.mxu0 %v1920
        %2383 = vmatprep.subr.bf16.mxu0 %v1913
        %2384 = vmatpush1.bf16.msra.mxu0 %v1912
        %2385 = vmatprep.subr.bf16.mxu0 %v2033
        %2386 = vmatpush2.bf16.msra.mxu0 %v2032
        %2387 = vmatprep.subr.bf16.mxu0 %v2025
        %2388 = vmatpush2.bf16.msra.mxu0 %v2024
        %2389 = vmatprep.subr.bf16.mxu0 %v2017
        %2390 = vmatpush2.bf16.msra.mxu0 %v2016
        %2391 = vmatprep.subr.bf16.mxu0 %v2009
        %2392 = vmatpush2.bf16.msra.mxu0 %v2008
        %2393 = vmatprep.subr.bf16.mxu0 %v2001
        %2394 = vmatpush2.bf16.msra.mxu0 %v2000
        %2395 = vmatprep.subr.bf16.mxu0 %v1993
        %2396 = vmatpush2.bf16.msra.mxu0 %v1992
        %2397 = vmatprep.subr.bf16.mxu0 %v1985
        %2398 = vmatpush2.bf16.msra.mxu0 %v1984
        %2399 = vmatprep.subr.bf16.mxu0 %v1977
        %2400 = vmatpush2.bf16.msra.mxu0 %v1976
        %2401 = vmatprep.mubr.bf16.mxu0 %v987
        %2402 = vmatmul.mubr.bf16.gmra.mxu0 %v986
        %v2403 = vpop.f32.mrf.mxu0
        %v2404 = vadd.f32 %v2331, %v2403
        %v2405 = vpop.f32.mrf.mxu0
        %v2406 = vadd.f32 %v2333, %v2405
        %v2407 = vpop.f32.mrf.mxu0
        %v2408 = vadd.f32 %v2335, %v2407
        %v2409 = vpop.f32.mrf.mxu0
        %v2410 = vadd.f32 %v2337, %v2409
        %2411 = vmatprep.mubr.bf16.mxu0 %v991
        %2412 = vmatmul.mubr.bf16.gmra.mxu0 %v990
        %v2413 = vpop.f32.mrf.mxu0
        %v2414 = vadd.f32 %v2341, %v2413
        %v2415 = vpop.f32.mrf.mxu0
        %v2416 = vadd.f32 %v2343, %v2415
        %v2417 = vpop.f32.mrf.mxu0
        %v2418 = vadd.f32 %v2345, %v2417
        %v2419 = vpop.f32.mrf.mxu0
        %v2420 = vadd.f32 %v2347, %v2419
        %2421 = vmatprep.mubr.bf16.mxu0 %v995
        %2422 = vmatmul.mubr.bf16.gmra.mxu0 %v994
        %v2423 = vpop.f32.mrf.mxu0
        %v2424 = vadd.f32 %v2351, %v2423
        %v2425 = vpop.f32.mrf.mxu0
        %v2426 = vadd.f32 %v2353, %v2425
        %v2427 = vpop.f32.mrf.mxu0
        %v2428 = vadd.f32 %v2355, %v2427
        %v2429 = vpop.f32.mrf.mxu0
        %v2430 = vadd.f32 %v2357, %v2429
        %2431 = vmatprep.mubr.bf16.mxu0 %v999
        %2432 = vmatmul.mubr.bf16.gmra.mxu0 %v998
        %v2433 = vpop.f32.mrf.mxu0
        %v2434 = vadd.f32 %v2361, %v2433
        %v2435 = vpop.f32.mrf.mxu0
        %v2436 = vadd.f32 %v2363, %v2435
        %v2437 = vpop.f32.mrf.mxu0
        %v2438 = vadd.f32 %v2365, %v2437
        %v2439 = vpop.f32.mrf.mxu0
        %v2440 = vadd.f32 %v2367, %v2439
        %2441 = vdwg.mxu0
        %2442 = vmatprep.subr.bf16.mxu0 %v1843
        %2443 = vmatpush1.bf16.msra.mxu0 %v1842
        %2444 = vmatprep.subr.bf16.mxu0 %v1835
        %2445 = vmatpush1.bf16.msra.mxu0 %v1834
        %2446 = vmatprep.subr.bf16.mxu0 %v1827
        %2447 = vmatpush1.bf16.msra.mxu0 %v1826
        %2448 = vmatprep.subr.bf16.mxu0 %v1819
        %2449 = vmatpush1.bf16.msra.mxu0 %v1818
        %2450 = vmatprep.subr.bf16.mxu0 %v1811
        %2451 = vmatpush1.bf16.msra.mxu0 %v1810
        %2452 = vmatprep.subr.bf16.mxu0 %v1803
        %2453 = vmatpush1.bf16.msra.mxu0 %v1802
        %2454 = vmatprep.subr.bf16.mxu0 %v1795
        %2455 = vmatpush1.bf16.msra.mxu0 %v1794
        %2456 = vmatprep.subr.bf16.mxu0 %v1787
        %2457 = vmatpush1.bf16.msra.mxu0 %v1786
        %2458 = vmatprep.subr.bf16.mxu0 %v1907
        %2459 = vmatpush2.bf16.msra.mxu0 %v1906
        %2460 = vmatprep.subr.bf16.mxu0 %v1899
        %2461 = vmatpush2.bf16.msra.mxu0 %v1898
        %2462 = vmatprep.subr.bf16.mxu0 %v1891
        %2463 = vmatpush2.bf16.msra.mxu0 %v1890
        %2464 = vmatprep.subr.bf16.mxu0 %v1883
        %2465 = vmatpush2.bf16.msra.mxu0 %v1882
        %2466 = vmatprep.subr.bf16.mxu0 %v1875
        %2467 = vmatpush2.bf16.msra.mxu0 %v1874
        %2468 = vmatprep.subr.bf16.mxu0 %v1867
        %2469 = vmatpush2.bf16.msra.mxu0 %v1866
        %2470 = vmatprep.subr.bf16.mxu0 %v1859
        %2471 = vmatpush2.bf16.msra.mxu0 %v1858
        %2472 = vmatprep.subr.bf16.mxu0 %v1851
        %2473 = vmatpush2.bf16.msra.mxu0 %v1850
        %2474 = vmatprep.mubr.bf16.mxu0 %v985
        %2475 = vmatmul.mubr.bf16.gmra.mxu0 %v984
        %v2476 = vpop.f32.mrf.mxu0
        %v2477 = vadd.f32 %v907, %v2476
        %v2478 = vpop.f32.mrf.mxu0
        %v2479 = vadd.f32 %v911, %v2478
        %v2480 = vpop.f32.mrf.mxu0
        %v2481 = vadd.f32 %v907, %v2480
        %v2482 = vpop.f32.mrf.mxu0
        %v2483 = vadd.f32 %v911, %v2482
        %2484 = vmatprep.mubr.bf16.mxu0 %v989
        %2485 = vmatmul.mubr.bf16.gmra.mxu0 %v988
        %v2486 = vpop.f32.mrf.mxu0
        %v2487 = vadd.f32 %v907, %v2486
        %v2488 = vpop.f32.mrf.mxu0
        %v2489 = vadd.f32 %v911, %v2488
        %v2490 = vpop.f32.mrf.mxu0
        %v2491 = vadd.f32 %v907, %v2490
        %v2492 = vpop.f32.mrf.mxu0
        %v2493 = vadd.f32 %v911, %v2492
        %2494 = vmatprep.mubr.bf16.mxu0 %v993
        %2495 = vmatmul.mubr.bf16.gmra.mxu0 %v992
        %v2496 = vpop.f32.mrf.mxu0
        %v2497 = vadd.f32 %v907, %v2496
        %v2498 = vpop.f32.mrf.mxu0
        %v2499 = vadd.f32 %v911, %v2498
        %v2500 = vpop.f32.mrf.mxu0
        %v2501 = vadd.f32 %v907, %v2500
        %v2502 = vpop.f32.mrf.mxu0
        %v2503 = vadd.f32 %v911, %v2502
        %2504 = vmatprep.mubr.bf16.mxu0 %v997
        %2505 = vmatmul.mubr.bf16.gmra.mxu0 %v996
        %v2506 = vpop.f32.mrf.mxu0
        %v2507 = vadd.f32 %v907, %v2506
        %v2508 = vpop.f32.mrf.mxu0
        %v2509 = vadd.f32 %v911, %v2508
        %v2510 = vpop.f32.mrf.mxu0
        %v2511 = vadd.f32 %v907, %v2510
        %v2512 = vpop.f32.mrf.mxu0
        %v2513 = vadd.f32 %v911, %v2512
        %2514 = vdwg.mxu0
        %2515 = vmatprep.subr.bf16.mxu0 %v1971
        %2516 = vmatpush1.bf16.msra.mxu0 %v1970
        %2517 = vmatprep.subr.bf16.mxu0 %v1963
        %2518 = vmatpush1.bf16.msra.mxu0 %v1962
        %2519 = vmatprep.subr.bf16.mxu0 %v1955
        %2520 = vmatpush1.bf16.msra.mxu0 %v1954
        %2521 = vmatprep.subr.bf16.mxu0 %v1947
        %2522 = vmatpush1.bf16.msra.mxu0 %v1946
        %2523 = vmatprep.subr.bf16.mxu0 %v1939
        %2524 = vmatpush1.bf16.msra.mxu0 %v1938
        %2525 = vmatprep.subr.bf16.mxu0 %v1931
        %2526 = vmatpush1.bf16.msra.mxu0 %v1930
        %2527 = vmatprep.subr.bf16.mxu0 %v1923
        %2528 = vmatpush1.bf16.msra.mxu0 %v1922
        %2529 = vmatprep.subr.bf16.mxu0 %v1915
        %2530 = vmatpush1.bf16.msra.mxu0 %v1914
        %2531 = vmatprep.subr.bf16.mxu0 %v2035
        %2532 = vmatpush2.bf16.msra.mxu0 %v2034
        %2533 = vmatprep.subr.bf16.mxu0 %v2027
        %2534 = vmatpush2.bf16.msra.mxu0 %v2026
        %2535 = vmatprep.subr.bf16.mxu0 %v2019
        %2536 = vmatpush2.bf16.msra.mxu0 %v2018
        %2537 = vmatprep.subr.bf16.mxu0 %v2011
        %2538 = vmatpush2.bf16.msra.mxu0 %v2010
        %2539 = vmatprep.subr.bf16.mxu0 %v2003
        %2540 = vmatpush2.bf16.msra.mxu0 %v2002
        %2541 = vmatprep.subr.bf16.mxu0 %v1995
        %2542 = vmatpush2.bf16.msra.mxu0 %v1994
        %2543 = vmatprep.subr.bf16.mxu0 %v1987
        %2544 = vmatpush2.bf16.msra.mxu0 %v1986
        %2545 = vmatprep.subr.bf16.mxu0 %v1979
        %2546 = vmatpush2.bf16.msra.mxu0 %v1978
        %2547 = vmatprep.mubr.bf16.mxu0 %v987
        %2548 = vmatmul.mubr.bf16.gmra.mxu0 %v986
        %v2549 = vpop.f32.mrf.mxu0
        %v2550 = vadd.f32 %v2477, %v2549
        %v2551 = vpop.f32.mrf.mxu0
        %v2552 = vadd.f32 %v2479, %v2551
        %v2553 = vpop.f32.mrf.mxu0
        %v2554 = vadd.f32 %v2481, %v2553
        %v2555 = vpop.f32.mrf.mxu0
        %v2556 = vadd.f32 %v2483, %v2555
        %2557 = vmatprep.mubr.bf16.mxu0 %v991
        %2558 = vmatmul.mubr.bf16.gmra.mxu0 %v990
        %v2559 = vpop.f32.mrf.mxu0
        %v2560 = vadd.f32 %v2487, %v2559
        %v2561 = vpop.f32.mrf.mxu0
        %v2562 = vadd.f32 %v2489, %v2561
        %v2563 = vpop.f32.mrf.mxu0
        %v2564 = vadd.f32 %v2491, %v2563
        %v2565 = vpop.f32.mrf.mxu0
        %v2566 = vadd.f32 %v2493, %v2565
        %2567 = vmatprep.mubr.bf16.mxu0 %v995
        %2568 = vmatmul.mubr.bf16.gmra.mxu0 %v994
        %v2569 = vpop.f32.mrf.mxu0
        %v2570 = vadd.f32 %v2497, %v2569
        %v2571 = vpop.f32.mrf.mxu0
        %v2572 = vadd.f32 %v2499, %v2571
        %v2573 = vpop.f32.mrf.mxu0
        %v2574 = vadd.f32 %v2501, %v2573
        %v2575 = vpop.f32.mrf.mxu0
        %v2576 = vadd.f32 %v2503, %v2575
        %2577 = vmatprep.mubr.bf16.mxu0 %v999
        %2578 = vmatmul.mubr.bf16.gmra.mxu0 %v998
        %v2579 = vpop.f32.mrf.mxu0
        %v2580 = vadd.f32 %v2507, %v2579
        %v2581 = vpop.f32.mrf.mxu0
        %v2582 = vadd.f32 %v2509, %v2581
        %v2583 = vpop.f32.mrf.mxu0
        %v2584 = vadd.f32 %v2511, %v2583
        %v2585 = vpop.f32.mrf.mxu0
        %v2586 = vadd.f32 %v2513, %v2585
        %2587 = vdwg.mxu0
        %2588 = vmatprep.subr.bf16.mxu0 %v1845
        %2589 = vmatpush1.bf16.msra.mxu0 %v1844
        %2590 = vmatprep.subr.bf16.mxu0 %v1837
        %2591 = vmatpush1.bf16.msra.mxu0 %v1836
        %2592 = vmatprep.subr.bf16.mxu0 %v1829
        %2593 = vmatpush1.bf16.msra.mxu0 %v1828
        %2594 = vmatprep.subr.bf16.mxu0 %v1821
        %2595 = vmatpush1.bf16.msra.mxu0 %v1820
        %2596 = vmatprep.subr.bf16.mxu0 %v1813
        %2597 = vmatpush1.bf16.msra.mxu0 %v1812
        %2598 = vmatprep.subr.bf16.mxu0 %v1805
        %2599 = vmatpush1.bf16.msra.mxu0 %v1804
        %2600 = vmatprep.subr.bf16.mxu0 %v1797
        %2601 = vmatpush1.bf16.msra.mxu0 %v1796
        %2602 = vmatprep.subr.bf16.mxu0 %v1789
        %2603 = vmatpush1.bf16.msra.mxu0 %v1788
        %2604 = vmatprep.subr.bf16.mxu0 %v1909
        %2605 = vmatpush2.bf16.msra.mxu0 %v1908
        %2606 = vmatprep.subr.bf16.mxu0 %v1901
        %2607 = vmatpush2.bf16.msra.mxu0 %v1900
        %2608 = vmatprep.subr.bf16.mxu0 %v1893
        %2609 = vmatpush2.bf16.msra.mxu0 %v1892
        %2610 = vmatprep.subr.bf16.mxu0 %v1885
        %2611 = vmatpush2.bf16.msra.mxu0 %v1884
        %2612 = vmatprep.subr.bf16.mxu0 %v1877
        %2613 = vmatpush2.bf16.msra.mxu0 %v1876
        %2614 = vmatprep.subr.bf16.mxu0 %v1869
        %2615 = vmatpush2.bf16.msra.mxu0 %v1868
        %2616 = vmatprep.subr.bf16.mxu0 %v1861
        %2617 = vmatpush2.bf16.msra.mxu0 %v1860
        %2618 = vmatprep.subr.bf16.mxu0 %v1853
        %2619 = vmatpush2.bf16.msra.mxu0 %v1852
        %2620 = vmatprep.mubr.bf16.mxu0 %v985
        %2621 = vmatmul.mubr.bf16.gmra.mxu0 %v984
        %v2622 = vpop.f32.mrf.mxu0
        %v2623 = vadd.f32 %v915, %v2622
        %v2624 = vpop.f32.mrf.mxu0
        %v2625 = vadd.f32 %v919, %v2624
        %v2626 = vpop.f32.mrf.mxu0
        %v2627 = vadd.f32 %v915, %v2626
        %v2628 = vpop.f32.mrf.mxu0
        %v2629 = vadd.f32 %v919, %v2628
        %2630 = vmatprep.mubr.bf16.mxu0 %v989
        %2631 = vmatmul.mubr.bf16.gmra.mxu0 %v988
        %v2632 = vpop.f32.mrf.mxu0
        %v2633 = vadd.f32 %v915, %v2632
        %v2634 = vpop.f32.mrf.mxu0
        %v2635 = vadd.f32 %v919, %v2634
        %v2636 = vpop.f32.mrf.mxu0
        %v2637 = vadd.f32 %v915, %v2636
        %v2638 = vpop.f32.mrf.mxu0
        %v2639 = vadd.f32 %v919, %v2638
        %2640 = vmatprep.mubr.bf16.mxu0 %v993
        %2641 = vmatmul.mubr.bf16.gmra.mxu0 %v992
        %v2642 = vpop.f32.mrf.mxu0
        %v2643 = vadd.f32 %v915, %v2642
        %v2644 = vpop.f32.mrf.mxu0
        %v2645 = vadd.f32 %v919, %v2644
        %v2646 = vpop.f32.mrf.mxu0
        %v2647 = vadd.f32 %v915, %v2646
        %v2648 = vpop.f32.mrf.mxu0
        %v2649 = vadd.f32 %v919, %v2648
        %2650 = vmatprep.mubr.bf16.mxu0 %v997
        %2651 = vmatmul.mubr.bf16.gmra.mxu0 %v996
        %v2652 = vpop.f32.mrf.mxu0
        %v2653 = vadd.f32 %v915, %v2652
        %v2654 = vpop.f32.mrf.mxu0
        %v2655 = vadd.f32 %v919, %v2654
        %v2656 = vpop.f32.mrf.mxu0
        %v2657 = vadd.f32 %v915, %v2656
        %v2658 = vpop.f32.mrf.mxu0
        %v2659 = vadd.f32 %v919, %v2658
        %2660 = vdwg.mxu0
        %2661 = vmatprep.subr.bf16.mxu0 %v1973
        %2662 = vmatpush1.bf16.msra.mxu0 %v1972
        %2663 = vmatprep.subr.bf16.mxu0 %v1965
        %2664 = vmatpush1.bf16.msra.mxu0 %v1964
        %2665 = vmatprep.subr.bf16.mxu0 %v1957
        %2666 = vmatpush1.bf16.msra.mxu0 %v1956
        %2667 = vmatprep.subr.bf16.mxu0 %v1949
        %2668 = vmatpush1.bf16.msra.mxu0 %v1948
        %2669 = vmatprep.subr.bf16.mxu0 %v1941
        %2670 = vmatpush1.bf16.msra.mxu0 %v1940
        %2671 = vmatprep.subr.bf16.mxu0 %v1933
        %2672 = vmatpush1.bf16.msra.mxu0 %v1932
        %2673 = vmatprep.subr.bf16.mxu0 %v1925
        %2674 = vmatpush1.bf16.msra.mxu0 %v1924
        %2675 = vmatprep.subr.bf16.mxu0 %v1917
        %2676 = vmatpush1.bf16.msra.mxu0 %v1916
        %2677 = vmatprep.subr.bf16.mxu0 %v2037
        %2678 = vmatpush2.bf16.msra.mxu0 %v2036
        %2679 = vmatprep.subr.bf16.mxu0 %v2029
        %2680 = vmatpush2.bf16.msra.mxu0 %v2028
        %2681 = vmatprep.subr.bf16.mxu0 %v2021
        %2682 = vmatpush2.bf16.msra.mxu0 %v2020
        %2683 = vmatprep.subr.bf16.mxu0 %v2013
        %2684 = vmatpush2.bf16.msra.mxu0 %v2012
        %2685 = vmatprep.subr.bf16.mxu0 %v2005
        %2686 = vmatpush2.bf16.msra.mxu0 %v2004
        %2687 = vmatprep.subr.bf16.mxu0 %v1997
        %2688 = vmatpush2.bf16.msra.mxu0 %v1996
        %2689 = vmatprep.subr.bf16.mxu0 %v1989
        %2690 = vmatpush2.bf16.msra.mxu0 %v1988
        %2691 = vmatprep.subr.bf16.mxu0 %v1981
        %2692 = vmatpush2.bf16.msra.mxu0 %v1980
        %2693 = vmatprep.mubr.bf16.mxu0 %v987
        %2694 = vmatmul.mubr.bf16.gmra.mxu0 %v986
        %v2695 = vpop.f32.mrf.mxu0
        %v2696 = vadd.f32 %v2623, %v2695
        %v2697 = vpop.f32.mrf.mxu0
        %v2698 = vadd.f32 %v2625, %v2697
        %v2699 = vpop.f32.mrf.mxu0
        %v2700 = vadd.f32 %v2627, %v2699
        %v2701 = vpop.f32.mrf.mxu0
        %v2702 = vadd.f32 %v2629, %v2701
        %2703 = vmatprep.mubr.bf16.mxu0 %v991
        %2704 = vmatmul.mubr.bf16.gmra.mxu0 %v990
        %v2705 = vpop.f32.mrf.mxu0
        %v2706 = vadd.f32 %v2633, %v2705
        %v2707 = vpop.f32.mrf.mxu0
        %v2708 = vadd.f32 %v2635, %v2707
        %v2709 = vpop.f32.mrf.mxu0
        %v2710 = vadd.f32 %v2637, %v2709
        %v2711 = vpop.f32.mrf.mxu0
        %v2712 = vadd.f32 %v2639, %v2711
        %2713 = vmatprep.mubr.bf16.mxu0 %v995
        %2714 = vmatmul.mubr.bf16.gmra.mxu0 %v994
        %v2715 = vpop.f32.mrf.mxu0
        %v2716 = vadd.f32 %v2643, %v2715
        %v2717 = vpop.f32.mrf.mxu0
        %v2718 = vadd.f32 %v2645, %v2717
        %v2719 = vpop.f32.mrf.mxu0
        %v2720 = vadd.f32 %v2647, %v2719
        %v2721 = vpop.f32.mrf.mxu0
        %v2722 = vadd.f32 %v2649, %v2721
        %2723 = vmatprep.mubr.bf16.mxu0 %v999
        %2724 = vmatmul.mubr.bf16.gmra.mxu0 %v998
        %v2725 = vpop.f32.mrf.mxu0
        %v2726 = vadd.f32 %v2653, %v2725
        %v2727 = vpop.f32.mrf.mxu0
        %v2728 = vadd.f32 %v2655, %v2727
        %v2729 = vpop.f32.mrf.mxu0
        %v2730 = vadd.f32 %v2657, %v2729
        %v2731 = vpop.f32.mrf.mxu0
        %v2732 = vadd.f32 %v2659, %v2731
        %2733 = vdwg.mxu0
        %2734 = vmatprep.subr.bf16.mxu0 %v1847
        %2735 = vmatpush1.bf16.msra.mxu0 %v1846
        %2736 = vmatprep.subr.bf16.mxu0 %v1839
        %2737 = vmatpush1.bf16.msra.mxu0 %v1838
        %2738 = vmatprep.subr.bf16.mxu0 %v1831
        %2739 = vmatpush1.bf16.msra.mxu0 %v1830
        %2740 = vmatprep.subr.bf16.mxu0 %v1823
        %2741 = vmatpush1.bf16.msra.mxu0 %v1822
        %2742 = vmatprep.subr.bf16.mxu0 %v1815
        %2743 = vmatpush1.bf16.msra.mxu0 %v1814
        %2744 = vmatprep.subr.bf16.mxu0 %v1807
        %2745 = vmatpush1.bf16.msra.mxu0 %v1806
        %2746 = vmatprep.subr.bf16.mxu0 %v1799
        %2747 = vmatpush1.bf16.msra.mxu0 %v1798
        %2748 = vmatprep.subr.bf16.mxu0 %v1791
        %2749 = vmatpush1.bf16.msra.mxu0 %v1790
        %2750 = vmatprep.subr.bf16.mxu0 %v1911
        %2751 = vmatpush2.bf16.msra.mxu0 %v1910
        %2752 = vmatprep.subr.bf16.mxu0 %v1903
        %2753 = vmatpush2.bf16.msra.mxu0 %v1902
        %2754 = vmatprep.subr.bf16.mxu0 %v1895
        %2755 = vmatpush2.bf16.msra.mxu0 %v1894
        %2756 = vmatprep.subr.bf16.mxu0 %v1887
        %2757 = vmatpush2.bf16.msra.mxu0 %v1886
        %2758 = vmatprep.subr.bf16.mxu0 %v1879
        %2759 = vmatpush2.bf16.msra.mxu0 %v1878
        %2760 = vmatprep.subr.bf16.mxu0 %v1871
        %2761 = vmatpush2.bf16.msra.mxu0 %v1870
        %2762 = vmatprep.subr.bf16.mxu0 %v1863
        %2763 = vmatpush2.bf16.msra.mxu0 %v1862
        %2764 = vmatprep.subr.bf16.mxu0 %v1855
        %2765 = vmatpush2.bf16.msra.mxu0 %v1854
        %2766 = vmatprep.mubr.bf16.mxu0 %v985
        %2767 = vmatmul.mubr.bf16.gmra.mxu0 %v984
        %v2768 = vpop.f32.mrf.mxu0
        %v2769 = vadd.f32 %v923, %v2768
        %v2770 = vpop.f32.mrf.mxu0
        %v2771 = vadd.f32 %v927, %v2770
        %v2772 = vpop.f32.mrf.mxu0
        %v2773 = vadd.f32 %v923, %v2772
        %v2774 = vpop.f32.mrf.mxu0
        %v2775 = vadd.f32 %v927, %v2774
        %2776 = vmatprep.mubr.bf16.mxu0 %v989
        %2777 = vmatmul.mubr.bf16.gmra.mxu0 %v988
        %v2778 = vpop.f32.mrf.mxu0
        %v2779 = vadd.f32 %v923, %v2778
        %v2780 = vpop.f32.mrf.mxu0
        %v2781 = vadd.f32 %v927, %v2780
        %v2782 = vpop.f32.mrf.mxu0
        %v2783 = vadd.f32 %v923, %v2782
        %v2784 = vpop.f32.mrf.mxu0
        %v2785 = vadd.f32 %v927, %v2784
        %2786 = vmatprep.mubr.bf16.mxu0 %v993
        %2787 = vmatmul.mubr.bf16.gmra.mxu0 %v992
        %v2788 = vpop.f32.mrf.mxu0
        %v2789 = vadd.f32 %v923, %v2788
        %v2790 = vpop.f32.mrf.mxu0
        %v2791 = vadd.f32 %v927, %v2790
        %v2792 = vpop.f32.mrf.mxu0
        %v2793 = vadd.f32 %v923, %v2792
        %v2794 = vpop.f32.mrf.mxu0
        %v2795 = vadd.f32 %v927, %v2794
        %2796 = vmatprep.mubr.bf16.mxu0 %v997
        %2797 = vmatmul.mubr.bf16.gmra.mxu0 %v996
        %v2798 = vpop.f32.mrf.mxu0
        %v2799 = vadd.f32 %v923, %v2798
        %v2800 = vpop.f32.mrf.mxu0
        %v2801 = vadd.f32 %v927, %v2800
        %v2802 = vpop.f32.mrf.mxu0
        %v2803 = vadd.f32 %v923, %v2802
        %v2804 = vpop.f32.mrf.mxu0
        %v2805 = vadd.f32 %v927, %v2804
        %2806 = vdwg.mxu0
        %2807 = vmatprep.subr.bf16.mxu0 %v1975
        %2808 = vmatpush1.bf16.msra.mxu0 %v1974
        %2809 = vmatprep.subr.bf16.mxu0 %v1967
        %2810 = vmatpush1.bf16.msra.mxu0 %v1966
        %2811 = vmatprep.subr.bf16.mxu0 %v1959
        %2812 = vmatpush1.bf16.msra.mxu0 %v1958
        %2813 = vmatprep.subr.bf16.mxu0 %v1951
        %2814 = vmatpush1.bf16.msra.mxu0 %v1950
        %2815 = vmatprep.subr.bf16.mxu0 %v1943
        %2816 = vmatpush1.bf16.msra.mxu0 %v1942
        %2817 = vmatprep.subr.bf16.mxu0 %v1935
        %2818 = vmatpush1.bf16.msra.mxu0 %v1934
        %2819 = vmatprep.subr.bf16.mxu0 %v1927
        %2820 = vmatpush1.bf16.msra.mxu0 %v1926
        %2821 = vmatprep.subr.bf16.mxu0 %v1919
        %2822 = vmatpush1.bf16.msra.mxu0 %v1918
        %2823 = vmatprep.subr.bf16.mxu0 %v2039
        %2824 = vmatpush2.bf16.msra.mxu0 %v2038
        %2825 = vmatprep.subr.bf16.mxu0 %v2031
        %2826 = vmatpush2.bf16.msra.mxu0 %v2030
        %2827 = vmatprep.subr.bf16.mxu0 %v2023
        %2828 = vmatpush2.bf16.msra.mxu0 %v2022
        %2829 = vmatprep.subr.bf16.mxu0 %v2015
        %2830 = vmatpush2.bf16.msra.mxu0 %v2014
        %2831 = vmatprep.subr.bf16.mxu0 %v2007
        %2832 = vmatpush2.bf16.msra.mxu0 %v2006
        %2833 = vmatprep.subr.bf16.mxu0 %v1999
        %2834 = vmatpush2.bf16.msra.mxu0 %v1998
        %2835 = vmatprep.subr.bf16.mxu0 %v1991
        %2836 = vmatpush2.bf16.msra.mxu0 %v1990
        %2837 = vmatprep.subr.bf16.mxu0 %v1983
        %2838 = vmatpush2.bf16.msra.mxu0 %v1982
        %2839 = vmatprep.mubr.bf16.mxu0 %v987
        %2840 = vmatmul.mubr.bf16.gmra.mxu0 %v986
        %v2841 = vpop.f32.mrf.mxu0
        %v2842 = vadd.f32 %v2769, %v2841
        %v2843 = vpop.f32.mrf.mxu0
        %v2844 = vadd.f32 %v2771, %v2843
        %v2845 = vpop.f32.mrf.mxu0
        %v2846 = vadd.f32 %v2773, %v2845
        %v2847 = vpop.f32.mrf.mxu0
        %v2848 = vadd.f32 %v2775, %v2847
        %2849 = vmatprep.mubr.bf16.mxu0 %v991
        %2850 = vmatmul.mubr.bf16.gmra.mxu0 %v990
        %v2851 = vpop.f32.mrf.mxu0
        %v2852 = vadd.f32 %v2779, %v2851
        %v2853 = vpop.f32.mrf.mxu0
        %v2854 = vadd.f32 %v2781, %v2853
        %v2855 = vpop.f32.mrf.mxu0
        %v2856 = vadd.f32 %v2783, %v2855
        %v2857 = vpop.f32.mrf.mxu0
        %v2858 = vadd.f32 %v2785, %v2857
        %2859 = vmatprep.mubr.bf16.mxu0 %v995
        %2860 = vmatmul.mubr.bf16.gmra.mxu0 %v994
        %v2861 = vpop.f32.mrf.mxu0
        %v2862 = vadd.f32 %v2789, %v2861
        %v2863 = vpop.f32.mrf.mxu0
        %v2864 = vadd.f32 %v2791, %v2863
        %v2865 = vpop.f32.mrf.mxu0
        %v2866 = vadd.f32 %v2793, %v2865
        %v2867 = vpop.f32.mrf.mxu0
        %v2868 = vadd.f32 %v2795, %v2867
        %2869 = vmatprep.mubr.bf16.mxu0 %v999
        %2870 = vmatmul.mubr.bf16.gmra.mxu0 %v998
        %v2871 = vpop.f32.mrf.mxu0
        %v2872 = vadd.f32 %v2799, %v2871
        %v2873 = vpop.f32.mrf.mxu0
        %v2874 = vadd.f32 %v2801, %v2873
        %v2875 = vpop.f32.mrf.mxu0
        %v2876 = vadd.f32 %v2803, %v2875
        %v2877 = vpop.f32.mrf.mxu0
        %v2878 = vadd.f32 %v2805, %v2877
        %2879 = vdwg.mxu0
        %v2880 = vmax.f32 %v2404, 0.0
        %v2881 = vmax.f32 %v2406, 0.0
        %v2882 = vmax.f32 %v2550, 0.0
        %v2883 = vmax.f32 %v2552, 0.0
        %v2884 = vmax.f32 %v2696, 0.0
        %v2885 = vmax.f32 %v2698, 0.0
        %v2886 = vmax.f32 %v2842, 0.0
        %v2887 = vmax.f32 %v2844, 0.0
        %v2888 = vmax.f32 %v2408, 0.0
        %v2889 = vmax.f32 %v2410, 0.0
        %v2890 = vmax.f32 %v2554, 0.0
        %v2891 = vmax.f32 %v2556, 0.0
        %v2892 = vmax.f32 %v2700, 0.0
        %v2893 = vmax.f32 %v2702, 0.0
        %v2894 = vmax.f32 %v2846, 0.0
        %v2895 = vmax.f32 %v2848, 0.0
        %v2896 = vmax.f32 %v2414, 0.0
        %v2897 = vmax.f32 %v2416, 0.0
        %v2898 = vmax.f32 %v2560, 0.0
        %v2899 = vmax.f32 %v2562, 0.0
        %v2900 = vmax.f32 %v2706, 0.0
        %v2901 = vmax.f32 %v2708, 0.0
        %v2902 = vmax.f32 %v2852, 0.0
        %v2903 = vmax.f32 %v2854, 0.0
        %v2904 = vmax.f32 %v2418, 0.0
        %v2905 = vmax.f32 %v2420, 0.0
        %v2906 = vmax.f32 %v2564, 0.0
        %v2907 = vmax.f32 %v2566, 0.0
        %v2908 = vmax.f32 %v2710, 0.0
        %v2909 = vmax.f32 %v2712, 0.0
        %v2910 = vmax.f32 %v2856, 0.0
        %v2911 = vmax.f32 %v2858, 0.0
        %v2912 = vmax.f32 %v2424, 0.0
        %v2913 = vmax.f32 %v2426, 0.0
        %v2914 = vmax.f32 %v2570, 0.0
        %v2915 = vmax.f32 %v2572, 0.0
        %v2916 = vmax.f32 %v2716, 0.0
        %v2917 = vmax.f32 %v2718, 0.0
        %v2918 = vmax.f32 %v2862, 0.0
        %v2919 = vmax.f32 %v2864, 0.0
        %v2920 = vmax.f32 %v2428, 0.0
        %v2921 = vmax.f32 %v2430, 0.0
        %v2922 = vmax.f32 %v2574, 0.0
        %v2923 = vmax.f32 %v2576, 0.0
        %v2924 = vmax.f32 %v2720, 0.0
        %v2925 = vmax.f32 %v2722, 0.0
        %v2926 = vmax.f32 %v2866, 0.0
        %v2927 = vmax.f32 %v2868, 0.0
        %v2928 = vmax.f32 %v2434, 0.0
        %v2929 = vmax.f32 %v2436, 0.0
        %v2930 = vmax.f32 %v2580, 0.0
        %v2931 = vmax.f32 %v2582, 0.0
        %v2932 = vmax.f32 %v2726, 0.0
        %v2933 = vmax.f32 %v2728, 0.0
        %v2934 = vmax.f32 %v2872, 0.0
        %v2935 = vmax.f32 %v2874, 0.0
        %v2936 = vmax.f32 %v2438, 0.0
        %v2937 = vmax.f32 %v2440, 0.0
        %v2938 = vmax.f32 %v2584, 0.0
        %v2939 = vmax.f32 %v2586, 0.0
        %v2940 = vmax.f32 %v2730, 0.0
        %v2941 = vmax.f32 %v2732, 0.0
        %v2942 = vmax.f32 %v2876, 0.0
        %v2943 = vmax.f32 %v2878, 0.0
        %v2944 = vpack.c.bf16 %v2888, %v2880
        %v2945 = vpack.c.bf16 %v2889, %v2881
        %v2946 = vpack.c.bf16 %v2890, %v2882
        %v2947 = vpack.c.bf16 %v2891, %v2883
        %v2948 = vpack.c.bf16 %v2892, %v2884
        %v2949 = vpack.c.bf16 %v2893, %v2885
        %v2950 = vpack.c.bf16 %v2894, %v2886
        %v2951 = vpack.c.bf16 %v2895, %v2887
        %v2952 = vpack.c.bf16 %v2904, %v2896
        %v2953 = vpack.c.bf16 %v2905, %v2897
        %v2954 = vpack.c.bf16 %v2906, %v2898
        %v2955 = vpack.c.bf16 %v2907, %v2899
        %v2956 = vpack.c.bf16 %v2908, %v2900
        %v2957 = vpack.c.bf16 %v2909, %v2901
        %v2958 = vpack.c.bf16 %v2910, %v2902
        %v2959 = vpack.c.bf16 %v2911, %v2903
        %v2960 = vpack.c.bf16 %v2920, %v2912
        %v2961 = vpack.c.bf16 %v2921, %v2913
        %v2962 = vpack.c.bf16 %v2922, %v2914
        %v2963 = vpack.c.bf16 %v2923, %v2915
        %v2964 = vpack.c.bf16 %v2924, %v2916
        %v2965 = vpack.c.bf16 %v2925, %v2917
        %v2966 = vpack.c.bf16 %v2926, %v2918
        %v2967 = vpack.c.bf16 %v2927, %v2919
        %v2968 = vpack.c.bf16 %v2936, %v2928
        %v2969 = vpack.c.bf16 %v2937, %v2929
        %v2970 = vpack.c.bf16 %v2938, %v2930
        %v2971 = vpack.c.bf16 %v2939, %v2931
        %v2972 = vpack.c.bf16 %v2940, %v2932
        %v2973 = vpack.c.bf16 %v2941, %v2933
        %v2974 = vpack.c.bf16 %v2942, %v2934
        %v2975 = vpack.c.bf16 %v2943, %v2935
        %v2976 = vld [vmem:[#allocation11] sm:$0xff]
        %v2977 = vld [vmem:[#allocation11 + $0x8] sm:$0xff]
        %v2978 = vld [vmem:[#allocation11 + $0x10] sm:$0xff]
        %v2979 = vld [vmem:[#allocation11 + $0x18] sm:$0xff]
        %v2980 = vld [vmem:[#allocation11 + $0x20] sm:$0xff]
        %v2981 = vld [vmem:[#allocation11 + $0x28] sm:$0xff]
        %v2982 = vld [vmem:[#allocation11 + $0x30] sm:$0xff]
        %v2983 = vld [vmem:[#allocation11 + $0x38] sm:$0xff]
        %v2984 = vld [vmem:[#allocation11 + $0x40] sm:$0xff]
        %v2985 = vld [vmem:[#allocation11 + $0x48] sm:$0xff]
        %v2986 = vld [vmem:[#allocation11 + $0x50] sm:$0xff]
        %v2987 = vld [vmem:[#allocation11 + $0x58] sm:$0xff]
        %v2988 = vld [vmem:[#allocation11 + $0x60] sm:$0xff]
        %v2989 = vld [vmem:[#allocation11 + $0x68] sm:$0xff]
        %v2990 = vld [vmem:[#allocation11 + $0x70] sm:$0xff]
        %v2991 = vld [vmem:[#allocation11 + $0x78] sm:$0xff]
        %v2992 = vld [vmem:[#allocation11 + $0x80] sm:$0xff]
        %v2993 = vld [vmem:[#allocation11 + $0x88] sm:$0xff]
        %v2994 = vld [vmem:[#allocation11 + $0x90] sm:$0xff]
        %v2995 = vld [vmem:[#allocation11 + $0x98] sm:$0xff]
        %v2996 = vld [vmem:[#allocation11 + $0xa0] sm:$0xff]
        %v2997 = vld [vmem:[#allocation11 + $0xa8] sm:$0xff]
        %v2998 = vld [vmem:[#allocation11 + $0xb0] sm:$0xff]
        %v2999 = vld [vmem:[#allocation11 + $0xb8] sm:$0xff]
        %v3000 = vld [vmem:[#allocation11 + $0xc0] sm:$0xff]
        %v3001 = vld [vmem:[#allocation11 + $0xc8] sm:$0xff]
        %v3002 = vld [vmem:[#allocation11 + $0xd0] sm:$0xff]
        %v3003 = vld [vmem:[#allocation11 + $0xd8] sm:$0xff]
        %v3004 = vld [vmem:[#allocation11 + $0xe0] sm:$0xff]
        %v3005 = vld [vmem:[#allocation11 + $0xe8] sm:$0xff]
        %v3006 = vld [vmem:[#allocation11 + $0xf0] sm:$0xff]
        %v3007 = vld [vmem:[#allocation11 + $0xf8] sm:$0xff]
        %v3008 = vld [vmem:[#allocation11 + $0x100] sm:$0xff]
        %v3009 = vld [vmem:[#allocation11 + $0x108] sm:$0xff]
        %v3010 = vld [vmem:[#allocation11 + $0x110] sm:$0xff]
        %v3011 = vld [vmem:[#allocation11 + $0x118] sm:$0xff]
        %v3012 = vld [vmem:[#allocation11 + $0x120] sm:$0xff]
        %v3013 = vld [vmem:[#allocation11 + $0x128] sm:$0xff]
        %v3014 = vld [vmem:[#allocation11 + $0x130] sm:$0xff]
        %v3015 = vld [vmem:[#allocation11 + $0x138] sm:$0xff]
        %v3016 = vld [vmem:[#allocation11 + $0x140] sm:$0xff]
        %v3017 = vld [vmem:[#allocation11 + $0x148] sm:$0xff]
        %v3018 = vld [vmem:[#allocation11 + $0x150] sm:$0xff]
        %v3019 = vld [vmem:[#allocation11 + $0x158] sm:$0xff]
        %v3020 = vld [vmem:[#allocation11 + $0x160] sm:$0xff]
        %v3021 = vld [vmem:[#allocation11 + $0x168] sm:$0xff]
        %v3022 = vld [vmem:[#allocation11 + $0x170] sm:$0xff]
        %v3023 = vld [vmem:[#allocation11 + $0x178] sm:$0xff]
        %v3024 = vld [vmem:[#allocation11 + $0x180] sm:$0xff]
        %v3025 = vld [vmem:[#allocation11 + $0x188] sm:$0xff]
        %v3026 = vld [vmem:[#allocation11 + $0x190] sm:$0xff]
        %v3027 = vld [vmem:[#allocation11 + $0x198] sm:$0xff]
        %v3028 = vld [vmem:[#allocation11 + $0x1a0] sm:$0xff]
        %v3029 = vld [vmem:[#allocation11 + $0x1a8] sm:$0xff]
        %v3030 = vld [vmem:[#allocation11 + $0x1b0] sm:$0xff]
        %v3031 = vld [vmem:[#allocation11 + $0x1b8] sm:$0xff]
        %v3032 = vld [vmem:[#allocation11 + $0x1c0] sm:$0xff]
        %v3033 = vld [vmem:[#allocation11 + $0x1c8] sm:$0xff]
        %v3034 = vld [vmem:[#allocation11 + $0x1d0] sm:$0xff]
        %v3035 = vld [vmem:[#allocation11 + $0x1d8] sm:$0xff]
        %v3036 = vld [vmem:[#allocation11 + $0x1e0] sm:$0xff]
        %v3037 = vld [vmem:[#allocation11 + $0x1e8] sm:$0xff]
        %v3038 = vld [vmem:[#allocation11 + $0x1f0] sm:$0xff]
        %v3039 = vld [vmem:[#allocation11 + $0x1f8] sm:$0xff]
        %v3040 = vld [vmem:[#allocation11 + $0x200] sm:$0xff]
        %v3041 = vld [vmem:[#allocation11 + $0x208] sm:$0xff]
        %v3042 = vld [vmem:[#allocation11 + $0x210] sm:$0xff]
        %v3043 = vld [vmem:[#allocation11 + $0x218] sm:$0xff]
        %v3044 = vld [vmem:[#allocation11 + $0x220] sm:$0xff]
        %v3045 = vld [vmem:[#allocation11 + $0x228] sm:$0xff]
        %v3046 = vld [vmem:[#allocation11 + $0x230] sm:$0xff]
        %v3047 = vld [vmem:[#allocation11 + $0x238] sm:$0xff]
        %v3048 = vld [vmem:[#allocation11 + $0x240] sm:$0xff]
        %v3049 = vld [vmem:[#allocation11 + $0x248] sm:$0xff]
        %v3050 = vld [vmem:[#allocation11 + $0x250] sm:$0xff]
        %v3051 = vld [vmem:[#allocation11 + $0x258] sm:$0xff]
        %v3052 = vld [vmem:[#allocation11 + $0x260] sm:$0xff]
        %v3053 = vld [vmem:[#allocation11 + $0x268] sm:$0xff]
        %v3054 = vld [vmem:[#allocation11 + $0x270] sm:$0xff]
        %v3055 = vld [vmem:[#allocation11 + $0x278] sm:$0xff]
        %v3056 = vld [vmem:[#allocation11 + $0x280] sm:$0xff]
        %v3057 = vld [vmem:[#allocation11 + $0x288] sm:$0xff]
        %v3058 = vld [vmem:[#allocation11 + $0x290] sm:$0xff]
        %v3059 = vld [vmem:[#allocation11 + $0x298] sm:$0xff]
        %v3060 = vld [vmem:[#allocation11 + $0x2a0] sm:$0xff]
        %v3061 = vld [vmem:[#allocation11 + $0x2a8] sm:$0xff]
        %v3062 = vld [vmem:[#allocation11 + $0x2b0] sm:$0xff]
        %v3063 = vld [vmem:[#allocation11 + $0x2b8] sm:$0xff]
        %v3064 = vld [vmem:[#allocation11 + $0x2c0] sm:$0xff]
        %v3065 = vld [vmem:[#allocation11 + $0x2c8] sm:$0xff]
        %v3066 = vld [vmem:[#allocation11 + $0x2d0] sm:$0xff]
        %v3067 = vld [vmem:[#allocation11 + $0x2d8] sm:$0xff]
        %v3068 = vld [vmem:[#allocation11 + $0x2e0] sm:$0xff]
        %v3069 = vld [vmem:[#allocation11 + $0x2e8] sm:$0xff]
        %v3070 = vld [vmem:[#allocation11 + $0x2f0] sm:$0xff]
        %v3071 = vld [vmem:[#allocation11 + $0x2f8] sm:$0xff]
        %v3072 = vld [vmem:[#allocation11 + $0x300] sm:$0xff]
        %v3073 = vld [vmem:[#allocation11 + $0x308] sm:$0xff]
        %v3074 = vld [vmem:[#allocation11 + $0x310] sm:$0xff]
        %v3075 = vld [vmem:[#allocation11 + $0x318] sm:$0xff]
        %v3076 = vld [vmem:[#allocation11 + $0x320] sm:$0xff]
        %v3077 = vld [vmem:[#allocation11 + $0x328] sm:$0xff]
        %v3078 = vld [vmem:[#allocation11 + $0x330] sm:$0xff]
        %v3079 = vld [vmem:[#allocation11 + $0x338] sm:$0xff]
        %v3080 = vld [vmem:[#allocation11 + $0x340] sm:$0xff]
        %v3081 = vld [vmem:[#allocation11 + $0x348] sm:$0xff]
        %v3082 = vld [vmem:[#allocation11 + $0x350] sm:$0xff]
        %v3083 = vld [vmem:[#allocation11 + $0x358] sm:$0xff]
        %v3084 = vld [vmem:[#allocation11 + $0x360] sm:$0xff]
        %v3085 = vld [vmem:[#allocation11 + $0x368] sm:$0xff]
        %v3086 = vld [vmem:[#allocation11 + $0x370] sm:$0xff]
        %v3087 = vld [vmem:[#allocation11 + $0x378] sm:$0xff]
        %v3088 = vld [vmem:[#allocation11 + $0x380] sm:$0xff]
        %v3089 = vld [vmem:[#allocation11 + $0x388] sm:$0xff]
        %v3090 = vld [vmem:[#allocation11 + $0x390] sm:$0xff]
        %v3091 = vld [vmem:[#allocation11 + $0x398] sm:$0xff]
        %v3092 = vld [vmem:[#allocation11 + $0x3a0] sm:$0xff]
        %v3093 = vld [vmem:[#allocation11 + $0x3a8] sm:$0xff]
        %v3094 = vld [vmem:[#allocation11 + $0x3b0] sm:$0xff]
        %v3095 = vld [vmem:[#allocation11 + $0x3b8] sm:$0xff]
        %v3096 = vld [vmem:[#allocation11 + $0x3c0] sm:$0xff]
        %v3097 = vld [vmem:[#allocation11 + $0x3c8] sm:$0xff]
        %v3098 = vld [vmem:[#allocation11 + $0x3d0] sm:$0xff]
        %v3099 = vld [vmem:[#allocation11 + $0x3d8] sm:$0xff]
        %v3100 = vld [vmem:[#allocation11 + $0x3e0] sm:$0xff]
        %v3101 = vld [vmem:[#allocation11 + $0x3e8] sm:$0xff]
        %v3102 = vld [vmem:[#allocation11 + $0x3f0] sm:$0xff]
        %v3103 = vld [vmem:[#allocation11 + $0x3f8] sm:$0xff]
        %v3104 = vld [vmem:[%s6] sm:$0x3]
        %v3106 = vlaneseq
        %v3107 = vshrl.u32 %v3106, 7
        %v3108 = vsub.s32 0, %v3107
        %v3109 = vrot.slane %v3104, %v3108
        %v3110 = vlaneseq
        %v3111 = vshrl.u32 %v3110, 7
        %v3112 = vsub.s32 1, %v3111
        %v3113 = vrot.slane %v3104, %v3112
        %v3244 = vunpack.c.l.b16 %v2976
        %v3245 = vunpack.c.h.b16 %v2976
        %v3246 = vunpack.c.l.b16 %v2977
        %v3247 = vunpack.c.h.b16 %v2977
        %v3248 = vunpack.c.l.b16 %v2978
        %v3249 = vunpack.c.h.b16 %v2978
        %v3250 = vunpack.c.l.b16 %v2979
        %v3251 = vunpack.c.h.b16 %v2979
        %v3252 = vunpack.c.l.b16 %v2980
        %v3253 = vunpack.c.h.b16 %v2980
        %v3254 = vunpack.c.l.b16 %v2981
        %v3255 = vunpack.c.h.b16 %v2981
        %v3256 = vunpack.c.l.b16 %v2982
        %v3257 = vunpack.c.h.b16 %v2982
        %v3258 = vunpack.c.l.b16 %v2983
        %v3259 = vunpack.c.h.b16 %v2983
        %v3260 = vunpack.c.l.b16 %v2984
        %v3261 = vunpack.c.h.b16 %v2984
        %v3262 = vunpack.c.l.b16 %v2985
        %v3263 = vunpack.c.h.b16 %v2985
        %v3264 = vunpack.c.l.b16 %v2986
        %v3265 = vunpack.c.h.b16 %v2986
        %v3266 = vunpack.c.l.b16 %v2987
        %v3267 = vunpack.c.h.b16 %v2987
        %v3268 = vunpack.c.l.b16 %v2988
        %v3269 = vunpack.c.h.b16 %v2988
        %v3270 = vunpack.c.l.b16 %v2989
        %v3271 = vunpack.c.h.b16 %v2989
        %v3272 = vunpack.c.l.b16 %v2990
        %v3273 = vunpack.c.h.b16 %v2990
        %v3274 = vunpack.c.l.b16 %v2991
        %v3275 = vunpack.c.h.b16 %v2991
        %v3276 = vunpack.c.l.b16 %v2992
        %v3277 = vunpack.c.h.b16 %v2992
        %v3278 = vunpack.c.l.b16 %v2993
        %v3279 = vunpack.c.h.b16 %v2993
        %v3280 = vunpack.c.l.b16 %v2994
        %v3281 = vunpack.c.h.b16 %v2994
        %v3282 = vunpack.c.l.b16 %v2995
        %v3283 = vunpack.c.h.b16 %v2995
        %v3284 = vunpack.c.l.b16 %v2996
        %v3285 = vunpack.c.h.b16 %v2996
        %v3286 = vunpack.c.l.b16 %v2997
        %v3287 = vunpack.c.h.b16 %v2997
        %v3288 = vunpack.c.l.b16 %v2998
        %v3289 = vunpack.c.h.b16 %v2998
        %v3290 = vunpack.c.l.b16 %v2999
        %v3291 = vunpack.c.h.b16 %v2999
        %v3292 = vunpack.c.l.b16 %v3000
        %v3293 = vunpack.c.h.b16 %v3000
        %v3294 = vunpack.c.l.b16 %v3001
        %v3295 = vunpack.c.h.b16 %v3001
        %v3296 = vunpack.c.l.b16 %v3002
        %v3297 = vunpack.c.h.b16 %v3002
        %v3298 = vunpack.c.l.b16 %v3003
        %v3299 = vunpack.c.h.b16 %v3003
        %v3300 = vunpack.c.l.b16 %v3004
        %v3301 = vunpack.c.h.b16 %v3004
        %v3302 = vunpack.c.l.b16 %v3005
        %v3303 = vunpack.c.h.b16 %v3005
        %v3304 = vunpack.c.l.b16 %v3006
        %v3305 = vunpack.c.h.b16 %v3006
        %v3306 = vunpack.c.l.b16 %v3007
        %v3307 = vunpack.c.h.b16 %v3007
        %v3308 = vunpack.c.l.b16 %v3008
        %v3309 = vunpack.c.h.b16 %v3008
        %v3310 = vunpack.c.l.b16 %v3009
        %v3311 = vunpack.c.h.b16 %v3009
        %v3312 = vunpack.c.l.b16 %v3010
        %v3313 = vunpack.c.h.b16 %v3010
        %v3314 = vunpack.c.l.b16 %v3011
        %v3315 = vunpack.c.h.b16 %v3011
        %v3316 = vunpack.c.l.b16 %v3012
        %v3317 = vunpack.c.h.b16 %v3012
        %v3318 = vunpack.c.l.b16 %v3013
        %v3319 = vunpack.c.h.b16 %v3013
        %v3320 = vunpack.c.l.b16 %v3014
        %v3321 = vunpack.c.h.b16 %v3014
        %v3322 = vunpack.c.l.b16 %v3015
        %v3323 = vunpack.c.h.b16 %v3015
        %v3324 = vunpack.c.l.b16 %v3016
        %v3325 = vunpack.c.h.b16 %v3016
        %v3326 = vunpack.c.l.b16 %v3017
        %v3327 = vunpack.c.h.b16 %v3017
        %v3328 = vunpack.c.l.b16 %v3018
        %v3329 = vunpack.c.h.b16 %v3018
        %v3330 = vunpack.c.l.b16 %v3019
        %v3331 = vunpack.c.h.b16 %v3019
        %v3332 = vunpack.c.l.b16 %v3020
        %v3333 = vunpack.c.h.b16 %v3020
        %v3334 = vunpack.c.l.b16 %v3021
        %v3335 = vunpack.c.h.b16 %v3021
        %v3336 = vunpack.c.l.b16 %v3022
        %v3337 = vunpack.c.h.b16 %v3022
        %v3338 = vunpack.c.l.b16 %v3023
        %v3339 = vunpack.c.h.b16 %v3023
        %v3340 = vunpack.c.l.b16 %v3024
        %v3341 = vunpack.c.h.b16 %v3024
        %v3342 = vunpack.c.l.b16 %v3025
        %v3343 = vunpack.c.h.b16 %v3025
        %v3344 = vunpack.c.l.b16 %v3026
        %v3345 = vunpack.c.h.b16 %v3026
        %v3346 = vunpack.c.l.b16 %v3027
        %v3347 = vunpack.c.h.b16 %v3027
        %v3348 = vunpack.c.l.b16 %v3028
        %v3349 = vunpack.c.h.b16 %v3028
        %v3350 = vunpack.c.l.b16 %v3029
        %v3351 = vunpack.c.h.b16 %v3029
        %v3352 = vunpack.c.l.b16 %v3030
        %v3353 = vunpack.c.h.b16 %v3030
        %v3354 = vunpack.c.l.b16 %v3031
        %v3355 = vunpack.c.h.b16 %v3031
        %v3356 = vunpack.c.l.b16 %v3032
        %v3357 = vunpack.c.h.b16 %v3032
        %v3358 = vunpack.c.l.b16 %v3033
        %v3359 = vunpack.c.h.b16 %v3033
        %v3360 = vunpack.c.l.b16 %v3034
        %v3361 = vunpack.c.h.b16 %v3034
        %v3362 = vunpack.c.l.b16 %v3035
        %v3363 = vunpack.c.h.b16 %v3035
        %v3364 = vunpack.c.l.b16 %v3036
        %v3365 = vunpack.c.h.b16 %v3036
        %v3366 = vunpack.c.l.b16 %v3037
        %v3367 = vunpack.c.h.b16 %v3037
        %v3368 = vunpack.c.l.b16 %v3038
        %v3369 = vunpack.c.h.b16 %v3038
        %v3370 = vunpack.c.l.b16 %v3039
        %v3371 = vunpack.c.h.b16 %v3039
        %v3372 = vunpack.c.l.b16 %v3040
        %v3373 = vunpack.c.h.b16 %v3040
        %v3374 = vunpack.c.l.b16 %v3041
        %v3375 = vunpack.c.h.b16 %v3041
        %v3376 = vunpack.c.l.b16 %v3042
        %v3377 = vunpack.c.h.b16 %v3042
        %v3378 = vunpack.c.l.b16 %v3043
        %v3379 = vunpack.c.h.b16 %v3043
        %v3380 = vunpack.c.l.b16 %v3044
        %v3381 = vunpack.c.h.b16 %v3044
        %v3382 = vunpack.c.l.b16 %v3045
        %v3383 = vunpack.c.h.b16 %v3045
        %v3384 = vunpack.c.l.b16 %v3046
        %v3385 = vunpack.c.h.b16 %v3046
        %v3386 = vunpack.c.l.b16 %v3047
        %v3387 = vunpack.c.h.b16 %v3047
        %v3388 = vunpack.c.l.b16 %v3048
        %v3389 = vunpack.c.h.b16 %v3048
        %v3390 = vunpack.c.l.b16 %v3049
        %v3391 = vunpack.c.h.b16 %v3049
        %v3392 = vunpack.c.l.b16 %v3050
        %v3393 = vunpack.c.h.b16 %v3050
        %v3394 = vunpack.c.l.b16 %v3051
        %v3395 = vunpack.c.h.b16 %v3051
        %v3396 = vunpack.c.l.b16 %v3052
        %v3397 = vunpack.c.h.b16 %v3052
        %v3398 = vunpack.c.l.b16 %v3053
        %v3399 = vunpack.c.h.b16 %v3053
        %v3400 = vunpack.c.l.b16 %v3054
        %v3401 = vunpack.c.h.b16 %v3054
        %v3402 = vunpack.c.l.b16 %v3055
        %v3403 = vunpack.c.h.b16 %v3055
        %v3404 = vunpack.c.l.b16 %v3056
        %v3405 = vunpack.c.h.b16 %v3056
        %v3406 = vunpack.c.l.b16 %v3057
        %v3407 = vunpack.c.h.b16 %v3057
        %v3408 = vunpack.c.l.b16 %v3058
        %v3409 = vunpack.c.h.b16 %v3058
        %v3410 = vunpack.c.l.b16 %v3059
        %v3411 = vunpack.c.h.b16 %v3059
        %v3412 = vunpack.c.l.b16 %v3060
        %v3413 = vunpack.c.h.b16 %v3060
        %v3414 = vunpack.c.l.b16 %v3061
        %v3415 = vunpack.c.h.b16 %v3061
        %v3416 = vunpack.c.l.b16 %v3062
        %v3417 = vunpack.c.h.b16 %v3062
        %v3418 = vunpack.c.l.b16 %v3063
        %v3419 = vunpack.c.h.b16 %v3063
        %v3420 = vunpack.c.l.b16 %v3064
        %v3421 = vunpack.c.h.b16 %v3064
        %v3422 = vunpack.c.l.b16 %v3065
        %v3423 = vunpack.c.h.b16 %v3065
        %v3424 = vunpack.c.l.b16 %v3066
        %v3425 = vunpack.c.h.b16 %v3066
        %v3426 = vunpack.c.l.b16 %v3067
        %v3427 = vunpack.c.h.b16 %v3067
        %v3428 = vunpack.c.l.b16 %v3068
        %v3429 = vunpack.c.h.b16 %v3068
        %v3430 = vunpack.c.l.b16 %v3069
        %v3431 = vunpack.c.h.b16 %v3069
        %v3432 = vunpack.c.l.b16 %v3070
        %v3433 = vunpack.c.h.b16 %v3070
        %v3434 = vunpack.c.l.b16 %v3071
        %v3435 = vunpack.c.h.b16 %v3071
        %v3436 = vunpack.c.l.b16 %v3072
        %v3437 = vunpack.c.h.b16 %v3072
        %v3438 = vunpack.c.l.b16 %v3073
        %v3439 = vunpack.c.h.b16 %v3073
        %v3440 = vunpack.c.l.b16 %v3074
        %v3441 = vunpack.c.h.b16 %v3074
        %v3442 = vunpack.c.l.b16 %v3075
        %v3443 = vunpack.c.h.b16 %v3075
        %v3444 = vunpack.c.l.b16 %v3076
        %v3445 = vunpack.c.h.b16 %v3076
        %v3446 = vunpack.c.l.b16 %v3077
        %v3447 = vunpack.c.h.b16 %v3077
        %v3448 = vunpack.c.l.b16 %v3078
        %v3449 = vunpack.c.h.b16 %v3078
        %v3450 = vunpack.c.l.b16 %v3079
        %v3451 = vunpack.c.h.b16 %v3079
        %v3452 = vunpack.c.l.b16 %v3080
        %v3453 = vunpack.c.h.b16 %v3080
        %v3454 = vunpack.c.l.b16 %v3081
        %v3455 = vunpack.c.h.b16 %v3081
        %v3456 = vunpack.c.l.b16 %v3082
        %v3457 = vunpack.c.h.b16 %v3082
        %v3458 = vunpack.c.l.b16 %v3083
        %v3459 = vunpack.c.h.b16 %v3083
        %v3460 = vunpack.c.l.b16 %v3084
        %v3461 = vunpack.c.h.b16 %v3084
        %v3462 = vunpack.c.l.b16 %v3085
        %v3463 = vunpack.c.h.b16 %v3085
        %v3464 = vunpack.c.l.b16 %v3086
        %v3465 = vunpack.c.h.b16 %v3086
        %v3466 = vunpack.c.l.b16 %v3087
        %v3467 = vunpack.c.h.b16 %v3087
        %v3468 = vunpack.c.l.b16 %v3088
        %v3469 = vunpack.c.h.b16 %v3088
        %v3470 = vunpack.c.l.b16 %v3089
        %v3471 = vunpack.c.h.b16 %v3089
        %v3472 = vunpack.c.l.b16 %v3090
        %v3473 = vunpack.c.h.b16 %v3090
        %v3474 = vunpack.c.l.b16 %v3091
        %v3475 = vunpack.c.h.b16 %v3091
        %v3476 = vunpack.c.l.b16 %v3092
        %v3477 = vunpack.c.h.b16 %v3092
        %v3478 = vunpack.c.l.b16 %v3093
        %v3479 = vunpack.c.h.b16 %v3093
        %v3480 = vunpack.c.l.b16 %v3094
        %v3481 = vunpack.c.h.b16 %v3094
        %v3482 = vunpack.c.l.b16 %v3095
        %v3483 = vunpack.c.h.b16 %v3095
        %v3484 = vunpack.c.l.b16 %v3096
        %v3485 = vunpack.c.h.b16 %v3096
        %v3486 = vunpack.c.l.b16 %v3097
        %v3487 = vunpack.c.h.b16 %v3097
        %v3488 = vunpack.c.l.b16 %v3098
        %v3489 = vunpack.c.h.b16 %v3098
        %v3490 = vunpack.c.l.b16 %v3099
        %v3491 = vunpack.c.h.b16 %v3099
        %v3492 = vunpack.c.l.b16 %v3100
        %v3493 = vunpack.c.h.b16 %v3100
        %v3494 = vunpack.c.l.b16 %v3101
        %v3495 = vunpack.c.h.b16 %v3101
        %v3496 = vunpack.c.l.b16 %v3102
        %v3497 = vunpack.c.h.b16 %v3102
        %v3498 = vunpack.c.l.b16 %v3103
        %v3499 = vunpack.c.h.b16 %v3103
        %v3500 = vpack.c.b16 %v3246, %v3244
        %v3501 = vpack.c.b16 %v3247, %v3245
        %v3502 = vpack.c.b16 %v3250, %v3248
        %v3503 = vpack.c.b16 %v3251, %v3249
        %v3504 = vpack.c.b16 %v3254, %v3252
        %v3505 = vpack.c.b16 %v3255, %v3253
        %v3506 = vpack.c.b16 %v3258, %v3256
        %v3507 = vpack.c.b16 %v3259, %v3257
        %v3508 = vpack.c.b16 %v3262, %v3260
        %v3509 = vpack.c.b16 %v3263, %v3261
        %v3510 = vpack.c.b16 %v3266, %v3264
        %v3511 = vpack.c.b16 %v3267, %v3265
        %v3512 = vpack.c.b16 %v3270, %v3268
        %v3513 = vpack.c.b16 %v3271, %v3269
        %v3514 = vpack.c.b16 %v3274, %v3272
        %v3515 = vpack.c.b16 %v3275, %v3273
        %v3516 = vpack.c.b16 %v3278, %v3276
        %v3517 = vpack.c.b16 %v3279, %v3277
        %v3518 = vpack.c.b16 %v3282, %v3280
        %v3519 = vpack.c.b16 %v3283, %v3281
        %v3520 = vpack.c.b16 %v3286, %v3284
        %v3521 = vpack.c.b16 %v3287, %v3285
        %v3522 = vpack.c.b16 %v3290, %v3288
        %v3523 = vpack.c.b16 %v3291, %v3289
        %v3524 = vpack.c.b16 %v3294, %v3292
        %v3525 = vpack.c.b16 %v3295, %v3293
        %v3526 = vpack.c.b16 %v3298, %v3296
        %v3527 = vpack.c.b16 %v3299, %v3297
        %v3528 = vpack.c.b16 %v3302, %v3300
        %v3529 = vpack.c.b16 %v3303, %v3301
        %v3530 = vpack.c.b16 %v3306, %v3304
        %v3531 = vpack.c.b16 %v3307, %v3305
        %v3532 = vpack.c.b16 %v3310, %v3308
        %v3533 = vpack.c.b16 %v3311, %v3309
        %v3534 = vpack.c.b16 %v3314, %v3312
        %v3535 = vpack.c.b16 %v3315, %v3313
        %v3536 = vpack.c.b16 %v3318, %v3316
        %v3537 = vpack.c.b16 %v3319, %v3317
        %v3538 = vpack.c.b16 %v3322, %v3320
        %v3539 = vpack.c.b16 %v3323, %v3321
        %v3540 = vpack.c.b16 %v3326, %v3324
        %v3541 = vpack.c.b16 %v3327, %v3325
        %v3542 = vpack.c.b16 %v3330, %v3328
        %v3543 = vpack.c.b16 %v3331, %v3329
        %v3544 = vpack.c.b16 %v3334, %v3332
        %v3545 = vpack.c.b16 %v3335, %v3333
        %v3546 = vpack.c.b16 %v3338, %v3336
        %v3547 = vpack.c.b16 %v3339, %v3337
        %v3548 = vpack.c.b16 %v3342, %v3340
        %v3549 = vpack.c.b16 %v3343, %v3341
        %v3550 = vpack.c.b16 %v3346, %v3344
        %v3551 = vpack.c.b16 %v3347, %v3345
        %v3552 = vpack.c.b16 %v3350, %v3348
        %v3553 = vpack.c.b16 %v3351, %v3349
        %v3554 = vpack.c.b16 %v3354, %v3352
        %v3555 = vpack.c.b16 %v3355, %v3353
        %v3556 = vpack.c.b16 %v3358, %v3356
        %v3557 = vpack.c.b16 %v3359, %v3357
        %v3558 = vpack.c.b16 %v3362, %v3360
        %v3559 = vpack.c.b16 %v3363, %v3361
        %v3560 = vpack.c.b16 %v3366, %v3364
        %v3561 = vpack.c.b16 %v3367, %v3365
        %v3562 = vpack.c.b16 %v3370, %v3368
        %v3563 = vpack.c.b16 %v3371, %v3369
        %v3564 = vpack.c.b16 %v3374, %v3372
        %v3565 = vpack.c.b16 %v3375, %v3373
        %v3566 = vpack.c.b16 %v3378, %v3376
        %v3567 = vpack.c.b16 %v3379, %v3377
        %v3568 = vpack.c.b16 %v3382, %v3380
        %v3569 = vpack.c.b16 %v3383, %v3381
        %v3570 = vpack.c.b16 %v3386, %v3384
        %v3571 = vpack.c.b16 %v3387, %v3385
        %v3572 = vpack.c.b16 %v3390, %v3388
        %v3573 = vpack.c.b16 %v3391, %v3389
        %v3574 = vpack.c.b16 %v3394, %v3392
        %v3575 = vpack.c.b16 %v3395, %v3393
        %v3576 = vpack.c.b16 %v3398, %v3396
        %v3577 = vpack.c.b16 %v3399, %v3397
        %v3578 = vpack.c.b16 %v3402, %v3400
        %v3579 = vpack.c.b16 %v3403, %v3401
        %v3580 = vpack.c.b16 %v3406, %v3404
        %v3581 = vpack.c.b16 %v3407, %v3405
        %v3582 = vpack.c.b16 %v3410, %v3408
        %v3583 = vpack.c.b16 %v3411, %v3409
        %v3584 = vpack.c.b16 %v3414, %v3412
        %v3585 = vpack.c.b16 %v3415, %v3413
        %v3586 = vpack.c.b16 %v3418, %v3416
        %v3587 = vpack.c.b16 %v3419, %v3417
        %v3588 = vpack.c.b16 %v3422, %v3420
        %v3589 = vpack.c.b16 %v3423, %v3421
        %v3590 = vpack.c.b16 %v3426, %v3424
        %v3591 = vpack.c.b16 %v3427, %v3425
        %v3592 = vpack.c.b16 %v3430, %v3428
        %v3593 = vpack.c.b16 %v3431, %v3429
        %v3594 = vpack.c.b16 %v3434, %v3432
        %v3595 = vpack.c.b16 %v3435, %v3433
        %v3596 = vpack.c.b16 %v3438, %v3436
        %v3597 = vpack.c.b16 %v3439, %v3437
        %v3598 = vpack.c.b16 %v3442, %v3440
        %v3599 = vpack.c.b16 %v3443, %v3441
        %v3600 = vpack.c.b16 %v3446, %v3444
        %v3601 = vpack.c.b16 %v3447, %v3445
        %v3602 = vpack.c.b16 %v3450, %v3448
        %v3603 = vpack.c.b16 %v3451, %v3449
        %v3604 = vpack.c.b16 %v3454, %v3452
        %v3605 = vpack.c.b16 %v3455, %v3453
        %v3606 = vpack.c.b16 %v3458, %v3456
        %v3607 = vpack.c.b16 %v3459, %v3457
        %v3608 = vpack.c.b16 %v3462, %v3460
        %v3609 = vpack.c.b16 %v3463, %v3461
        %v3610 = vpack.c.b16 %v3466, %v3464
        %v3611 = vpack.c.b16 %v3467, %v3465
        %v3612 = vpack.c.b16 %v3470, %v3468
        %v3613 = vpack.c.b16 %v3471, %v3469
        %v3614 = vpack.c.b16 %v3474, %v3472
        %v3615 = vpack.c.b16 %v3475, %v3473
        %v3616 = vpack.c.b16 %v3478, %v3476
        %v3617 = vpack.c.b16 %v3479, %v3477
        %v3618 = vpack.c.b16 %v3482, %v3480
        %v3619 = vpack.c.b16 %v3483, %v3481
        %v3620 = vpack.c.b16 %v3486, %v3484
        %v3621 = vpack.c.b16 %v3487, %v3485
        %v3622 = vpack.c.b16 %v3490, %v3488
        %v3623 = vpack.c.b16 %v3491, %v3489
        %v3624 = vpack.c.b16 %v3494, %v3492
        %v3625 = vpack.c.b16 %v3495, %v3493
        %v3626 = vpack.c.b16 %v3498, %v3496
        %v3627 = vpack.c.b16 %v3499, %v3497
        %3756 = vmatprep.subr.bf16.mxu0 %v3515
        %3757 = vmatpush1.bf16.msra.mxu0 %v3514
        %3758 = vmatprep.subr.bf16.mxu0 %v3513
        %3759 = vmatpush1.bf16.msra.mxu0 %v3512
        %3760 = vmatprep.subr.bf16.mxu0 %v3511
        %3761 = vmatpush1.bf16.msra.mxu0 %v3510
        %3762 = vmatprep.subr.bf16.mxu0 %v3509
        %3763 = vmatpush1.bf16.msra.mxu0 %v3508
        %3764 = vmatprep.subr.bf16.mxu0 %v3507
        %3765 = vmatpush1.bf16.msra.mxu0 %v3506
        %3766 = vmatprep.subr.bf16.mxu0 %v3505
        %3767 = vmatpush1.bf16.msra.mxu0 %v3504
        %3768 = vmatprep.subr.bf16.mxu0 %v3503
        %3769 = vmatpush1.bf16.msra.mxu0 %v3502
        %3770 = vmatprep.subr.bf16.mxu0 %v3501
        %3771 = vmatpush1.bf16.msra.mxu0 %v3500
        %3772 = vmatprep.subr.bf16.mxu0 %v3531
        %3773 = vmatpush2.bf16.msra.mxu0 %v3530
        %3774 = vmatprep.subr.bf16.mxu0 %v3529
        %3775 = vmatpush2.bf16.msra.mxu0 %v3528
        %3776 = vmatprep.subr.bf16.mxu0 %v3527
        %3777 = vmatpush2.bf16.msra.mxu0 %v3526
        %3778 = vmatprep.subr.bf16.mxu0 %v3525
        %3779 = vmatpush2.bf16.msra.mxu0 %v3524
        %3780 = vmatprep.subr.bf16.mxu0 %v3523
        %3781 = vmatpush2.bf16.msra.mxu0 %v3522
        %3782 = vmatprep.subr.bf16.mxu0 %v3521
        %3783 = vmatpush2.bf16.msra.mxu0 %v3520
        %3784 = vmatprep.subr.bf16.mxu0 %v3519
        %3785 = vmatpush2.bf16.msra.mxu0 %v3518
        %3786 = vmatprep.subr.bf16.mxu0 %v3517
        %3787 = vmatpush2.bf16.msra.mxu0 %v3516
        %3788 = vmatprep.mubr.bf16.mxu0 %v2945
        %3789 = vmatmul.mubr.bf16.gmra.mxu0 %v2944
        %v3790 = vpop.f32.mrf.mxu0
        %v3791 = vadd.f32 %v3109, %v3790
        %v3792 = vpop.f32.mrf.mxu0
        %v3793 = vadd.f32 %v3113, %v3792
        %v3794 = vpop.f32.mrf.mxu0
        %v3795 = vadd.f32 %v3109, %v3794
        %v3796 = vpop.f32.mrf.mxu0
        %v3797 = vadd.f32 %v3113, %v3796
        %3798 = vmatprep.mubr.bf16.mxu0 %v2953
        %3799 = vmatmul.mubr.bf16.gmra.mxu0 %v2952
        %v3800 = vpop.f32.mrf.mxu0
        %v3801 = vadd.f32 %v3109, %v3800
        %v3802 = vpop.f32.mrf.mxu0
        %v3803 = vadd.f32 %v3113, %v3802
        %v3804 = vpop.f32.mrf.mxu0
        %v3805 = vadd.f32 %v3109, %v3804
        %v3806 = vpop.f32.mrf.mxu0
        %v3807 = vadd.f32 %v3113, %v3806
        %3808 = vmatprep.mubr.bf16.mxu0 %v2961
        %3809 = vmatmul.mubr.bf16.gmra.mxu0 %v2960
        %v3810 = vpop.f32.mrf.mxu0
        %v3811 = vadd.f32 %v3109, %v3810
        %v3812 = vpop.f32.mrf.mxu0
        %v3813 = vadd.f32 %v3113, %v3812
        %v3814 = vpop.f32.mrf.mxu0
        %v3815 = vadd.f32 %v3109, %v3814
        %v3816 = vpop.f32.mrf.mxu0
        %v3817 = vadd.f32 %v3113, %v3816
        %3818 = vmatprep.mubr.bf16.mxu0 %v2969
        %3819 = vmatmul.mubr.bf16.gmra.mxu0 %v2968
        %v3820 = vpop.f32.mrf.mxu0
        %v3821 = vadd.f32 %v3109, %v3820
        %v3822 = vpop.f32.mrf.mxu0
        %v3823 = vadd.f32 %v3113, %v3822
        %v3824 = vpop.f32.mrf.mxu0
        %v3825 = vadd.f32 %v3109, %v3824
        %v3826 = vpop.f32.mrf.mxu0
        %v3827 = vadd.f32 %v3113, %v3826
        %3828 = vdwg.mxu0
        %3829 = vmatprep.subr.bf16.mxu0 %v3547
        %3830 = vmatpush1.bf16.msra.mxu0 %v3546
        %3831 = vmatprep.subr.bf16.mxu0 %v3545
        %3832 = vmatpush1.bf16.msra.mxu0 %v3544
        %3833 = vmatprep.subr.bf16.mxu0 %v3543
        %3834 = vmatpush1.bf16.msra.mxu0 %v3542
        %3835 = vmatprep.subr.bf16.mxu0 %v3541
        %3836 = vmatpush1.bf16.msra.mxu0 %v3540
        %3837 = vmatprep.subr.bf16.mxu0 %v3539
        %3838 = vmatpush1.bf16.msra.mxu0 %v3538
        %3839 = vmatprep.subr.bf16.mxu0 %v3537
        %3840 = vmatpush1.bf16.msra.mxu0 %v3536
        %3841 = vmatprep.subr.bf16.mxu0 %v3535
        %3842 = vmatpush1.bf16.msra.mxu0 %v3534
        %3843 = vmatprep.subr.bf16.mxu0 %v3533
        %3844 = vmatpush1.bf16.msra.mxu0 %v3532
        %3845 = vmatprep.subr.bf16.mxu0 %v3563
        %3846 = vmatpush2.bf16.msra.mxu0 %v3562
        %3847 = vmatprep.subr.bf16.mxu0 %v3561
        %3848 = vmatpush2.bf16.msra.mxu0 %v3560
        %3849 = vmatprep.subr.bf16.mxu0 %v3559
        %3850 = vmatpush2.bf16.msra.mxu0 %v3558
        %3851 = vmatprep.subr.bf16.mxu0 %v3557
        %3852 = vmatpush2.bf16.msra.mxu0 %v3556
        %3853 = vmatprep.subr.bf16.mxu0 %v3555
        %3854 = vmatpush2.bf16.msra.mxu0 %v3554
        %3855 = vmatprep.subr.bf16.mxu0 %v3553
        %3856 = vmatpush2.bf16.msra.mxu0 %v3552
        %3857 = vmatprep.subr.bf16.mxu0 %v3551
        %3858 = vmatpush2.bf16.msra.mxu0 %v3550
        %3859 = vmatprep.subr.bf16.mxu0 %v3549
        %3860 = vmatpush2.bf16.msra.mxu0 %v3548
        %3861 = vmatprep.mubr.bf16.mxu0 %v2947
        %3862 = vmatmul.mubr.bf16.gmra.mxu0 %v2946
        %v3863 = vpop.f32.mrf.mxu0
        %v3864 = vadd.f32 %v3791, %v3863
        %v3865 = vpop.f32.mrf.mxu0
        %v3866 = vadd.f32 %v3793, %v3865
        %v3867 = vpop.f32.mrf.mxu0
        %v3868 = vadd.f32 %v3795, %v3867
        %v3869 = vpop.f32.mrf.mxu0
        %v3870 = vadd.f32 %v3797, %v3869
        %3871 = vmatprep.mubr.bf16.mxu0 %v2955
        %3872 = vmatmul.mubr.bf16.gmra.mxu0 %v2954
        %v3873 = vpop.f32.mrf.mxu0
        %v3874 = vadd.f32 %v3801, %v3873
        %v3875 = vpop.f32.mrf.mxu0
        %v3876 = vadd.f32 %v3803, %v3875
        %v3877 = vpop.f32.mrf.mxu0
        %v3878 = vadd.f32 %v3805, %v3877
        %v3879 = vpop.f32.mrf.mxu0
        %v3880 = vadd.f32 %v3807, %v3879
        %3881 = vmatprep.mubr.bf16.mxu0 %v2963
        %3882 = vmatmul.mubr.bf16.gmra.mxu0 %v2962
        %v3883 = vpop.f32.mrf.mxu0
        %v3884 = vadd.f32 %v3811, %v3883
        %v3885 = vpop.f32.mrf.mxu0
        %v3886 = vadd.f32 %v3813, %v3885
        %v3887 = vpop.f32.mrf.mxu0
        %v3888 = vadd.f32 %v3815, %v3887
        %v3889 = vpop.f32.mrf.mxu0
        %v3890 = vadd.f32 %v3817, %v3889
        %3891 = vmatprep.mubr.bf16.mxu0 %v2971
        %3892 = vmatmul.mubr.bf16.gmra.mxu0 %v2970
        %v3893 = vpop.f32.mrf.mxu0
        %v3894 = vadd.f32 %v3821, %v3893
        %v3895 = vpop.f32.mrf.mxu0
        %v3896 = vadd.f32 %v3823, %v3895
        %v3897 = vpop.f32.mrf.mxu0
        %v3898 = vadd.f32 %v3825, %v3897
        %v3899 = vpop.f32.mrf.mxu0
        %v3900 = vadd.f32 %v3827, %v3899
        %3901 = vdwg.mxu0
        %3902 = vmatprep.subr.bf16.mxu0 %v3579
        %3903 = vmatpush1.bf16.msra.mxu0 %v3578
        %3904 = vmatprep.subr.bf16.mxu0 %v3577
        %3905 = vmatpush1.bf16.msra.mxu0 %v3576
        %3906 = vmatprep.subr.bf16.mxu0 %v3575
        %3907 = vmatpush1.bf16.msra.mxu0 %v3574
        %3908 = vmatprep.subr.bf16.mxu0 %v3573
        %3909 = vmatpush1.bf16.msra.mxu0 %v3572
        %3910 = vmatprep.subr.bf16.mxu0 %v3571
        %3911 = vmatpush1.bf16.msra.mxu0 %v3570
        %3912 = vmatprep.subr.bf16.mxu0 %v3569
        %3913 = vmatpush1.bf16.msra.mxu0 %v3568
        %3914 = vmatprep.subr.bf16.mxu0 %v3567
        %3915 = vmatpush1.bf16.msra.mxu0 %v3566
        %3916 = vmatprep.subr.bf16.mxu0 %v3565
        %3917 = vmatpush1.bf16.msra.mxu0 %v3564
        %3918 = vmatprep.subr.bf16.mxu0 %v3595
        %3919 = vmatpush2.bf16.msra.mxu0 %v3594
        %3920 = vmatprep.subr.bf16.mxu0 %v3593
        %3921 = vmatpush2.bf16.msra.mxu0 %v3592
        %3922 = vmatprep.subr.bf16.mxu0 %v3591
        %3923 = vmatpush2.bf16.msra.mxu0 %v3590
        %3924 = vmatprep.subr.bf16.mxu0 %v3589
        %3925 = vmatpush2.bf16.msra.mxu0 %v3588
        %3926 = vmatprep.subr.bf16.mxu0 %v3587
        %3927 = vmatpush2.bf16.msra.mxu0 %v3586
        %3928 = vmatprep.subr.bf16.mxu0 %v3585
        %3929 = vmatpush2.bf16.msra.mxu0 %v3584
        %3930 = vmatprep.subr.bf16.mxu0 %v3583
        %3931 = vmatpush2.bf16.msra.mxu0 %v3582
        %3932 = vmatprep.subr.bf16.mxu0 %v3581
        %3933 = vmatpush2.bf16.msra.mxu0 %v3580
        %3934 = vmatprep.mubr.bf16.mxu0 %v2949
        %3935 = vmatmul.mubr.bf16.gmra.mxu0 %v2948
        %v3936 = vpop.f32.mrf.mxu0
        %v3937 = vadd.f32 %v3864, %v3936
        %v3938 = vpop.f32.mrf.mxu0
        %v3939 = vadd.f32 %v3866, %v3938
        %v3940 = vpop.f32.mrf.mxu0
        %v3941 = vadd.f32 %v3868, %v3940
        %v3942 = vpop.f32.mrf.mxu0
        %v3943 = vadd.f32 %v3870, %v3942
        %3944 = vmatprep.mubr.bf16.mxu0 %v2957
        %3945 = vmatmul.mubr.bf16.gmra.mxu0 %v2956
        %v3946 = vpop.f32.mrf.mxu0
        %v3947 = vadd.f32 %v3874, %v3946
        %v3948 = vpop.f32.mrf.mxu0
        %v3949 = vadd.f32 %v3876, %v3948
        %v3950 = vpop.f32.mrf.mxu0
        %v3951 = vadd.f32 %v3878, %v3950
        %v3952 = vpop.f32.mrf.mxu0
        %v3953 = vadd.f32 %v3880, %v3952
        %3954 = vmatprep.mubr.bf16.mxu0 %v2965
        %3955 = vmatmul.mubr.bf16.gmra.mxu0 %v2964
        %v3956 = vpop.f32.mrf.mxu0
        %v3957 = vadd.f32 %v3884, %v3956
        %v3958 = vpop.f32.mrf.mxu0
        %v3959 = vadd.f32 %v3886, %v3958
        %v3960 = vpop.f32.mrf.mxu0
        %v3961 = vadd.f32 %v3888, %v3960
        %v3962 = vpop.f32.mrf.mxu0
        %v3963 = vadd.f32 %v3890, %v3962
        %3964 = vmatprep.mubr.bf16.mxu0 %v2973
        %3965 = vmatmul.mubr.bf16.gmra.mxu0 %v2972
        %v3966 = vpop.f32.mrf.mxu0
        %v3967 = vadd.f32 %v3894, %v3966
        %v3968 = vpop.f32.mrf.mxu0
        %v3969 = vadd.f32 %v3896, %v3968
        %v3970 = vpop.f32.mrf.mxu0
        %v3971 = vadd.f32 %v3898, %v3970
        %v3972 = vpop.f32.mrf.mxu0
        %v3973 = vadd.f32 %v3900, %v3972
        %3974 = vdwg.mxu0
        %3975 = vmatprep.subr.bf16.mxu0 %v3611
        %3976 = vmatpush1.bf16.msra.mxu0 %v3610
        %3977 = vmatprep.subr.bf16.mxu0 %v3609
        %3978 = vmatpush1.bf16.msra.mxu0 %v3608
        %3979 = vmatprep.subr.bf16.mxu0 %v3607
        %3980 = vmatpush1.bf16.msra.mxu0 %v3606
        %3981 = vmatprep.subr.bf16.mxu0 %v3605
        %3982 = vmatpush1.bf16.msra.mxu0 %v3604
        %3983 = vmatprep.subr.bf16.mxu0 %v3603
        %3984 = vmatpush1.bf16.msra.mxu0 %v3602
        %3985 = vmatprep.subr.bf16.mxu0 %v3601
        %3986 = vmatpush1.bf16.msra.mxu0 %v3600
        %3987 = vmatprep.subr.bf16.mxu0 %v3599
        %3988 = vmatpush1.bf16.msra.mxu0 %v3598
        %3989 = vmatprep.subr.bf16.mxu0 %v3597
        %3990 = vmatpush1.bf16.msra.mxu0 %v3596
        %3991 = vmatprep.subr.bf16.mxu0 %v3627
        %3992 = vmatpush2.bf16.msra.mxu0 %v3626
        %3993 = vmatprep.subr.bf16.mxu0 %v3625
        %3994 = vmatpush2.bf16.msra.mxu0 %v3624
        %3995 = vmatprep.subr.bf16.mxu0 %v3623
        %3996 = vmatpush2.bf16.msra.mxu0 %v3622
        %3997 = vmatprep.subr.bf16.mxu0 %v3621
        %3998 = vmatpush2.bf16.msra.mxu0 %v3620
        %3999 = vmatprep.subr.bf16.mxu0 %v3619
        %4000 = vmatpush2.bf16.msra.mxu0 %v3618
        %4001 = vmatprep.subr.bf16.mxu0 %v3617
        %4002 = vmatpush2.bf16.msra.mxu0 %v3616
        %4003 = vmatprep.subr.bf16.mxu0 %v3615
        %4004 = vmatpush2.bf16.msra.mxu0 %v3614
        %4005 = vmatprep.subr.bf16.mxu0 %v3613
        %4006 = vmatpush2.bf16.msra.mxu0 %v3612
        %4007 = vmatprep.mubr.bf16.mxu0 %v2951
        %4008 = vmatmul.mubr.bf16.gmra.mxu0 %v2950
        %v4009 = vpop.f32.mrf.mxu0
        %v4010 = vadd.f32 %v3937, %v4009
        %v4011 = vpop.f32.mrf.mxu0
        %v4012 = vadd.f32 %v3939, %v4011
        %v4013 = vpop.f32.mrf.mxu0
        %v4014 = vadd.f32 %v3941, %v4013
        %v4015 = vpop.f32.mrf.mxu0
        %v4016 = vadd.f32 %v3943, %v4015
        %4017 = vmatprep.mubr.bf16.mxu0 %v2959
        %4018 = vmatmul.mubr.bf16.gmra.mxu0 %v2958
        %v4019 = vpop.f32.mrf.mxu0
        %v4020 = vadd.f32 %v3947, %v4019
        %v4021 = vpop.f32.mrf.mxu0
        %v4022 = vadd.f32 %v3949, %v4021
        %v4023 = vpop.f32.mrf.mxu0
        %v4024 = vadd.f32 %v3951, %v4023
        %v4025 = vpop.f32.mrf.mxu0
        %v4026 = vadd.f32 %v3953, %v4025
        %4027 = vmatprep.mubr.bf16.mxu0 %v2967
        %4028 = vmatmul.mubr.bf16.gmra.mxu0 %v2966
        %v4029 = vpop.f32.mrf.mxu0
        %v4030 = vadd.f32 %v3957, %v4029
        %v4031 = vpop.f32.mrf.mxu0
        %v4032 = vadd.f32 %v3959, %v4031
        %v4033 = vpop.f32.mrf.mxu0
        %v4034 = vadd.f32 %v3961, %v4033
        %v4035 = vpop.f32.mrf.mxu0
        %v4036 = vadd.f32 %v3963, %v4035
        %4037 = vmatprep.mubr.bf16.mxu0 %v2975
        %4038 = vmatmul.mubr.bf16.gmra.mxu0 %v2974
        %v4039 = vpop.f32.mrf.mxu0
        %v4040 = vadd.f32 %v3967, %v4039
        %v4041 = vpop.f32.mrf.mxu0
        %v4042 = vadd.f32 %v3969, %v4041
        %v4043 = vpop.f32.mrf.mxu0
        %v4044 = vadd.f32 %v3971, %v4043
        %v4045 = vpop.f32.mrf.mxu0
        %v4046 = vadd.f32 %v3973, %v4045
        %4047 = vdwg.mxu0
        %v4048 = vld [vmem:[%s527] sm:$0x3]
        %v4049 = vld [vmem:[%s527 + $0x2] sm:$0x3]
        %v4050 = vld [vmem:[%s527 + $0x4] sm:$0x3]
        %v4051 = vld [vmem:[%s527 + $0x6] sm:$0x3]
        %v4052 = vxor.u32 %v4048, 2147483648
        %v4053 = vxor.u32 %v4049, 2147483648
        %v4054 = vxor.u32 %v4050, 2147483648
        %v4055 = vxor.u32 %v4051, 2147483648
        %v4056 = vmul.f32 %v4052, 1.442695
        %v4057 = vpow.pop %v4056
        %v4058 = vmul.f32 %v4053, 1.442695
        %v4059 = vpow.pop %v4058
        %v4060 = vmul.f32 %v4054, 1.442695
        %v4061 = vpow.pop %v4060
        %v4062 = vmul.f32 %v4055, 1.442695
        %v4063 = vpow.pop %v4062
        %v4064 = vadd.f32 %v4057, 1.0
        %v4065 = vadd.f32 %v4059, 1.0
        %v4066 = vadd.f32 %v4061, 1.0
        %v4067 = vadd.f32 %v4063, 1.0
        %v4068 = vrcp.pop %v4064
        %v4069 = vmul.f32 1.0, %v4068
        %v4070 = vrcp.pop %v4065
        %v4071 = vmul.f32 1.0, %v4070
        %v4072 = vrcp.pop %v4066
        %v4073 = vmul.f32 1.0, %v4072
        %v4074 = vrcp.pop %v4067
        %v4075 = vmul.f32 1.0, %v4074
        %v4080 = vlaneseq
        %v4081 = vshrl.u32 %v4080, 7
        %v4082 = vsub.s32 0, %v4081
        %v4083 = vrot.slane %v4069, %v4082
        %v4084 = vlaneseq
        %v4085 = vshrl.u32 %v4084, 7
        %v4086 = vsub.s32 1, %v4085
        %v4087 = vrot.slane %v4069, %v4086
        %v4088 = vlaneseq
        %v4089 = vshrl.u32 %v4088, 7
        %v4090 = vsub.s32 0, %v4089
        %v4091 = vrot.slane %v4071, %v4090
        %v4092 = vlaneseq
        %v4093 = vshrl.u32 %v4092, 7
        %v4094 = vsub.s32 1, %v4093
        %v4095 = vrot.slane %v4071, %v4094
        %v4096 = vlaneseq
        %v4097 = vshrl.u32 %v4096, 7
        %v4098 = vsub.s32 0, %v4097
        %v4099 = vrot.slane %v4073, %v4098
        %v4100 = vlaneseq
        %v4101 = vshrl.u32 %v4100, 7
        %v4102 = vsub.s32 1, %v4101
        %v4103 = vrot.slane %v4073, %v4102
        %v4104 = vlaneseq
        %v4105 = vshrl.u32 %v4104, 7
        %v4106 = vsub.s32 0, %v4105
        %v4107 = vrot.slane %v4075, %v4106
        %v4108 = vlaneseq
        %v4109 = vshrl.u32 %v4108, 7
        %v4110 = vsub.s32 1, %v4109
        %v4111 = vrot.slane %v4075, %v4110
        %v4120 = vmul.f32 %v4010, %v4083
        %v4121 = vmul.f32 %v4012, %v4087
        %v4122 = vmul.f32 %v4014, %v4083
        %v4123 = vmul.f32 %v4016, %v4087
        %v4124 = vmul.f32 %v4020, %v4091
        %v4125 = vmul.f32 %v4022, %v4095
        %v4126 = vmul.f32 %v4024, %v4091
        %v4127 = vmul.f32 %v4026, %v4095
        %v4128 = vmul.f32 %v4030, %v4099
        %v4129 = vmul.f32 %v4032, %v4103
        %v4130 = vmul.f32 %v4034, %v4099
        %v4131 = vmul.f32 %v4036, %v4103
        %v4132 = vmul.f32 %v4040, %v4107
        %v4133 = vmul.f32 %v4042, %v4111
        %v4134 = vmul.f32 %v4044, %v4107
        %v4135 = vmul.f32 %v4046, %v4111
        %v4136 = vmax.f32 %v4120, 0.0
        %v4137 = vmax.f32 %v4121, 0.0
        %v4138 = vmax.f32 %v4122, 0.0
        %v4139 = vmax.f32 %v4123, 0.0
        %v4140 = vmax.f32 %v4124, 0.0
        %v4141 = vmax.f32 %v4125, 0.0
        %v4142 = vmax.f32 %v4126, 0.0
        %v4143 = vmax.f32 %v4127, 0.0
        %v4144 = vmax.f32 %v4128, 0.0
        %v4145 = vmax.f32 %v4129, 0.0
        %v4146 = vmax.f32 %v4130, 0.0
        %v4147 = vmax.f32 %v4131, 0.0
        %v4148 = vmax.f32 %v4132, 0.0
        %v4149 = vmax.f32 %v4133, 0.0
        %v4150 = vmax.f32 %v4134, 0.0
        %v4151 = vmax.f32 %v4135, 0.0
        %v4152 = vld [vmem:[%s7] sm:$0x3]
        %v4154 = vlaneseq
        %v4155 = vshrl.u32 %v4154, 7
        %v4156 = vsub.s32 0, %v4155
        %v4157 = vrot.slane %v4152, %v4156
        %v4158 = vlaneseq
        %v4159 = vshrl.u32 %v4158, 7
        %v4160 = vsub.s32 1, %v4159
        %v4161 = vrot.slane %v4152, %v4160
        %v4164 = vmul.f32 %v4136, %v4157
        %v4165 = vmul.f32 %v4137, %v4161
        %v4166 = vmul.f32 %v4138, %v4157
        %v4167 = vmul.f32 %v4139, %v4161
        %v4168 = vmul.f32 %v4140, %v4157
        %v4169 = vmul.f32 %v4141, %v4161
        %v4170 = vmul.f32 %v4142, %v4157
        %v4171 = vmul.f32 %v4143, %v4161
        %v4172 = vmul.f32 %v4144, %v4157
        %v4173 = vmul.f32 %v4145, %v4161
        %v4174 = vmul.f32 %v4146, %v4157
        %v4175 = vmul.f32 %v4147, %v4161
        %v4176 = vmul.f32 %v4148, %v4157
        %v4177 = vmul.f32 %v4149, %v4161
        %v4178 = vmul.f32 %v4150, %v4157
        %v4179 = vmul.f32 %v4151, %v4161
        %v4180 = vadd.f32 %v4164, %v4165
        %4181 = vadd.xlane.f32.xlu0 %v4180
        %v4182 = vpop.xlane.xlu0 %4181
        %v4183 = vadd.f32 %v4166, %v4167
        %4184 = vadd.xlane.f32.xlu0 %v4183
        %v4185 = vpop.xlane.xlu0 %4184
        %v4186 = vadd.f32 %v4168, %v4169
        %4187 = vadd.xlane.f32.xlu0 %v4186
        %v4188 = vpop.xlane.xlu0 %4187
        %v4189 = vadd.f32 %v4170, %v4171
        %4190 = vadd.xlane.f32.xlu0 %v4189
        %v4191 = vpop.xlane.xlu0 %4190
        %v4192 = vadd.f32 %v4172, %v4173
        %4193 = vadd.xlane.f32.xlu0 %v4192
        %v4194 = vpop.xlane.xlu0 %4193
        %v4195 = vadd.f32 %v4174, %v4175
        %4196 = vadd.xlane.f32.xlu0 %v4195
        %v4197 = vpop.xlane.xlu0 %4196
        %v4198 = vadd.f32 %v4176, %v4177
        %4199 = vadd.xlane.f32.xlu0 %v4198
        %v4200 = vpop.xlane.xlu0 %4199
        %v4201 = vadd.f32 %v4178, %v4179
        %4202 = vadd.xlane.f32.xlu0 %v4201
        %v4203 = vpop.xlane.xlu0 %4202
        %v4204 = vld [vmem:[#allocation2] sm:$0x1]
        %v4206 = vlaneseq
        %v4207 = vshrl.u32 %v4206, 7
        %v4208 = vsub.s32 0, %v4207
        %v4209 = vrot.slane %v4204, %v4208
        %4210 = vset.pattern.permute.xlu0 0
        %4211 = vperm.xlu0 %4210, %v4209
        %v4212 = vpop.permute.xlu0 %4211
        %v4214 = vadd.f32 %v4182, %v4212
        %v4215 = vadd.f32 %v4185, %v4212
        %v4216 = vadd.f32 %v4188, %v4212
        %v4217 = vadd.f32 %v4191, %v4212
        %v4218 = vadd.f32 %v4194, %v4212
        %v4219 = vadd.f32 %v4197, %v4212
        %v4220 = vadd.f32 %v4200, %v4212
        %v4221 = vadd.f32 %v4203, %v4212
        %v4222 = vxor.u32 %v4214, 2147483648
        %v4223 = vxor.u32 %v4215, 2147483648
        %v4224 = vxor.u32 %v4216, 2147483648
        %v4225 = vxor.u32 %v4217, 2147483648
        %v4226 = vxor.u32 %v4218, 2147483648
        %v4227 = vxor.u32 %v4219, 2147483648
        %v4228 = vxor.u32 %v4220, 2147483648
        %v4229 = vxor.u32 %v4221, 2147483648
        %v4230 = vmul.f32 %v4222, 1.442695
        %v4231 = vpow.pop %v4230
        %v4232 = vmul.f32 %v4223, 1.442695
        %v4233 = vpow.pop %v4232
        %v4234 = vmul.f32 %v4224, 1.442695
        %v4235 = vpow.pop %v4234
        %v4236 = vmul.f32 %v4225, 1.442695
        %v4237 = vpow.pop %v4236
        %v4238 = vmul.f32 %v4226, 1.442695
        %v4239 = vpow.pop %v4238
        %v4240 = vmul.f32 %v4227, 1.442695
        %v4241 = vpow.pop %v4240
        %v4242 = vmul.f32 %v4228, 1.442695
        %v4243 = vpow.pop %v4242
        %v4244 = vmul.f32 %v4229, 1.442695
        %v4245 = vpow.pop %v4244
        %v4246 = vadd.f32 %v4231, 1.0
        %v4247 = vadd.f32 %v4233, 1.0
        %v4248 = vadd.f32 %v4235, 1.0
        %v4249 = vadd.f32 %v4237, 1.0
        %v4250 = vadd.f32 %v4239, 1.0
        %v4251 = vadd.f32 %v4241, 1.0
        %v4252 = vadd.f32 %v4243, 1.0
        %v4253 = vadd.f32 %v4245, 1.0
        %v4254 = vrcp.pop %v4246
        %v4255 = vmul.f32 1.0, %v4254
        %v4256 = vrcp.pop %v4247
        %v4257 = vmul.f32 1.0, %v4256
        %v4258 = vrcp.pop %v4248
        %v4259 = vmul.f32 1.0, %v4258
        %v4260 = vrcp.pop %v4249
        %v4261 = vmul.f32 1.0, %v4260
        %v4262 = vrcp.pop %v4250
        %v4263 = vmul.f32 1.0, %v4262
        %v4264 = vrcp.pop %v4251
        %v4265 = vmul.f32 1.0, %v4264
        %v4266 = vrcp.pop %v4252
        %v4267 = vmul.f32 1.0, %v4266
        %v4268 = vrcp.pop %v4253
        %v4269 = vmul.f32 1.0, %v4268
        %v4274 = vlaneseq
        %v4275 = vshrl.u32 %v4274, 7
        %v4276 = vsub.s32 0, %v4275
        %v4277 = vrot.slane %v630, %v4276
        %v4278 = vlaneseq
        %v4279 = vshrl.u32 %v4278, 7
        %v4280 = vsub.s32 0, %v4279
        %v4281 = vrot.slane %v631, %v4280
        %v4282 = vlaneseq
        %v4283 = vshrl.u32 %v4282, 7
        %v4284 = vsub.s32 0, %v4283
        %v4285 = vrot.slane %v632, %v4284
        %v4286 = vlaneseq
        %v4287 = vshrl.u32 %v4286, 7
        %v4288 = vsub.s32 0, %v4287
        %v4289 = vrot.slane %v633, %v4288
        %4291 = vbcast.lane.b32.xlu0 %v4277, 256
        %v4292 = vpop.permute.xlu0 %4291
        %s4294 = sor.u32 256, 8
        %4295 = vbcast.lane.b32.xlu0 %v4277, %s4294
        %v4296 = vpop.permute.xlu0 %4295
        %4298 = vbcast.lane.b32.xlu0 %v4281, 256
        %v4299 = vpop.permute.xlu0 %4298
        %s4301 = sor.u32 256, 8
        %4302 = vbcast.lane.b32.xlu0 %v4281, %s4301
        %v4303 = vpop.permute.xlu0 %4302
        %4305 = vbcast.lane.b32.xlu0 %v4285, 256
        %v4306 = vpop.permute.xlu0 %4305
        %s4308 = sor.u32 256, 8
        %4309 = vbcast.lane.b32.xlu0 %v4285, %s4308
        %v4310 = vpop.permute.xlu0 %4309
        %4312 = vbcast.lane.b32.xlu0 %v4289, 256
        %v4313 = vpop.permute.xlu0 %4312
        %s4315 = sor.u32 256, 8
        %4316 = vbcast.lane.b32.xlu0 %v4289, %s4315
        %v4317 = vpop.permute.xlu0 %4316
        %v4326 = vmul.f32 %v4255, %v4292
        %v4327 = vmul.f32 %v4257, %v4296
        %v4328 = vmul.f32 %v4259, %v4299
        %v4329 = vmul.f32 %v4261, %v4303
        %v4330 = vmul.f32 %v4263, %v4306
        %v4331 = vmul.f32 %v4265, %v4310
        %v4332 = vmul.f32 %v4267, %v4313
        %v4333 = vmul.f32 %v4269, %v4317
        %v4342 = vlaneseq
        %v4343 = vshrl.u32 %v4342, 7
        %v4344 = vsub.s32 0, %v4343
        %v4345 = vrot.slane %v4255, %v4344
        %v4346 = vlaneseq
        %v4347 = vshrl.u32 %v4346, 7
        %v4348 = vsub.s32 1, %v4347
        %v4349 = vrot.slane %v4255, %v4348
        %v4350 = vlaneseq
        %v4351 = vshrl.u32 %v4350, 7
        %v4352 = vsub.s32 2, %v4351
        %v4353 = vrot.slane %v4255, %v4352
        %v4354 = vlaneseq
        %v4355 = vshrl.u32 %v4354, 7
        %v4356 = vsub.s32 3, %v4355
        %v4357 = vrot.slane %v4255, %v4356
        %v4358 = vlaneseq
        %v4359 = vshrl.u32 %v4358, 7
        %v4360 = vsub.s32 4, %v4359
        %v4361 = vrot.slane %v4255, %v4360
        %v4362 = vlaneseq
        %v4363 = vshrl.u32 %v4362, 7
        %v4364 = vsub.s32 5, %v4363
        %v4365 = vrot.slane %v4255, %v4364
        %v4366 = vlaneseq
        %v4367 = vshrl.u32 %v4366, 7
        %v4368 = vsub.s32 6, %v4367
        %v4369 = vrot.slane %v4255, %v4368
        %v4370 = vlaneseq
        %v4371 = vshrl.u32 %v4370, 7
        %v4372 = vsub.s32 7, %v4371
        %v4373 = vrot.slane %v4255, %v4372
        %v4374 = vlaneseq
        %v4375 = vshrl.u32 %v4374, 7
        %v4376 = vsub.s32 0, %v4375
        %v4377 = vrot.slane %v4257, %v4376
        %v4378 = vlaneseq
        %v4379 = vshrl.u32 %v4378, 7
        %v4380 = vsub.s32 1, %v4379
        %v4381 = vrot.slane %v4257, %v4380
        %v4382 = vlaneseq
        %v4383 = vshrl.u32 %v4382, 7
        %v4384 = vsub.s32 2, %v4383
        %v4385 = vrot.slane %v4257, %v4384
        %v4386 = vlaneseq
        %v4387 = vshrl.u32 %v4386, 7
        %v4388 = vsub.s32 3, %v4387
        %v4389 = vrot.slane %v4257, %v4388
        %v4390 = vlaneseq
        %v4391 = vshrl.u32 %v4390, 7
        %v4392 = vsub.s32 4, %v4391
        %v4393 = vrot.slane %v4257, %v4392
        %v4394 = vlaneseq
        %v4395 = vshrl.u32 %v4394, 7
        %v4396 = vsub.s32 5, %v4395
        %v4397 = vrot.slane %v4257, %v4396
        %v4398 = vlaneseq
        %v4399 = vshrl.u32 %v4398, 7
        %v4400 = vsub.s32 6, %v4399
        %v4401 = vrot.slane %v4257, %v4400
        %v4402 = vlaneseq
        %v4403 = vshrl.u32 %v4402, 7
        %v4404 = vsub.s32 7, %v4403
        %v4405 = vrot.slane %v4257, %v4404
        %v4406 = vlaneseq
        %v4407 = vshrl.u32 %v4406, 7
        %v4408 = vsub.s32 0, %v4407
        %v4409 = vrot.slane %v4259, %v4408
        %v4410 = vlaneseq
        %v4411 = vshrl.u32 %v4410, 7
        %v4412 = vsub.s32 1, %v4411
        %v4413 = vrot.slane %v4259, %v4412
        %v4414 = vlaneseq
        %v4415 = vshrl.u32 %v4414, 7
        %v4416 = vsub.s32 2, %v4415
        %v4417 = vrot.slane %v4259, %v4416
        %v4418 = vlaneseq
        %v4419 = vshrl.u32 %v4418, 7
        %v4420 = vsub.s32 3, %v4419
        %v4421 = vrot.slane %v4259, %v4420
        %v4422 = vlaneseq
        %v4423 = vshrl.u32 %v4422, 7
        %v4424 = vsub.s32 4, %v4423
        %v4425 = vrot.slane %v4259, %v4424
        %v4426 = vlaneseq
        %v4427 = vshrl.u32 %v4426, 7
        %v4428 = vsub.s32 5, %v4427
        %v4429 = vrot.slane %v4259, %v4428
        %v4430 = vlaneseq
        %v4431 = vshrl.u32 %v4430, 7
        %v4432 = vsub.s32 6, %v4431
        %v4433 = vrot.slane %v4259, %v4432
        %v4434 = vlaneseq
        %v4435 = vshrl.u32 %v4434, 7
        %v4436 = vsub.s32 7, %v4435
        %v4437 = vrot.slane %v4259, %v4436
        %v4438 = vlaneseq
        %v4439 = vshrl.u32 %v4438, 7
        %v4440 = vsub.s32 0, %v4439
        %v4441 = vrot.slane %v4261, %v4440
        %v4442 = vlaneseq
        %v4443 = vshrl.u32 %v4442, 7
        %v4444 = vsub.s32 1, %v4443
        %v4445 = vrot.slane %v4261, %v4444
        %v4446 = vlaneseq
        %v4447 = vshrl.u32 %v4446, 7
        %v4448 = vsub.s32 2, %v4447
        %v4449 = vrot.slane %v4261, %v4448
        %v4450 = vlaneseq
        %v4451 = vshrl.u32 %v4450, 7
        %v4452 = vsub.s32 3, %v4451
        %v4453 = vrot.slane %v4261, %v4452
        %v4454 = vlaneseq
        %v4455 = vshrl.u32 %v4454, 7
        %v4456 = vsub.s32 4, %v4455
        %v4457 = vrot.slane %v4261, %v4456
        %v4458 = vlaneseq
        %v4459 = vshrl.u32 %v4458, 7
        %v4460 = vsub.s32 5, %v4459
        %v4461 = vrot.slane %v4261, %v4460
        %v4462 = vlaneseq
        %v4463 = vshrl.u32 %v4462, 7
        %v4464 = vsub.s32 6, %v4463
        %v4465 = vrot.slane %v4261, %v4464
        %v4466 = vlaneseq
        %v4467 = vshrl.u32 %v4466, 7
        %v4468 = vsub.s32 7, %v4467
        %v4469 = vrot.slane %v4261, %v4468
        %v4470 = vlaneseq
        %v4471 = vshrl.u32 %v4470, 7
        %v4472 = vsub.s32 0, %v4471
        %v4473 = vrot.slane %v4263, %v4472
        %v4474 = vlaneseq
        %v4475 = vshrl.u32 %v4474, 7
        %v4476 = vsub.s32 1, %v4475
        %v4477 = vrot.slane %v4263, %v4476
        %v4478 = vlaneseq
        %v4479 = vshrl.u32 %v4478, 7
        %v4480 = vsub.s32 2, %v4479
        %v4481 = vrot.slane %v4263, %v4480
        %v4482 = vlaneseq
        %v4483 = vshrl.u32 %v4482, 7
        %v4484 = vsub.s32 3, %v4483
        %v4485 = vrot.slane %v4263, %v4484
        %v4486 = vlaneseq
        %v4487 = vshrl.u32 %v4486, 7
        %v4488 = vsub.s32 4, %v4487
        %v4489 = vrot.slane %v4263, %v4488
        %v4490 = vlaneseq
        %v4491 = vshrl.u32 %v4490, 7
        %v4492 = vsub.s32 5, %v4491
        %v4493 = vrot.slane %v4263, %v4492
        %v4494 = vlaneseq
        %v4495 = vshrl.u32 %v4494, 7
        %v4496 = vsub.s32 6, %v4495
        %v4497 = vrot.slane %v4263, %v4496
        %v4498 = vlaneseq
        %v4499 = vshrl.u32 %v4498, 7
        %v4500 = vsub.s32 7, %v4499
        %v4501 = vrot.slane %v4263, %v4500
        %v4502 = vlaneseq
        %v4503 = vshrl.u32 %v4502, 7
        %v4504 = vsub.s32 0, %v4503
        %v4505 = vrot.slane %v4265, %v4504
        %v4506 = vlaneseq
        %v4507 = vshrl.u32 %v4506, 7
        %v4508 = vsub.s32 1, %v4507
        %v4509 = vrot.slane %v4265, %v4508
        %v4510 = vlaneseq
        %v4511 = vshrl.u32 %v4510, 7
        %v4512 = vsub.s32 2, %v4511
        %v4513 = vrot.slane %v4265, %v4512
        %v4514 = vlaneseq
        %v4515 = vshrl.u32 %v4514, 7
        %v4516 = vsub.s32 3, %v4515
        %v4517 = vrot.slane %v4265, %v4516
        %v4518 = vlaneseq
        %v4519 = vshrl.u32 %v4518, 7
        %v4520 = vsub.s32 4, %v4519
        %v4521 = vrot.slane %v4265, %v4520
        %v4522 = vlaneseq
        %v4523 = vshrl.u32 %v4522, 7
        %v4524 = vsub.s32 5, %v4523
        %v4525 = vrot.slane %v4265, %v4524
        %v4526 = vlaneseq
        %v4527 = vshrl.u32 %v4526, 7
        %v4528 = vsub.s32 6, %v4527
        %v4529 = vrot.slane %v4265, %v4528
        %v4530 = vlaneseq
        %v4531 = vshrl.u32 %v4530, 7
        %v4532 = vsub.s32 7, %v4531
        %v4533 = vrot.slane %v4265, %v4532
        %v4534 = vlaneseq
        %v4535 = vshrl.u32 %v4534, 7
        %v4536 = vsub.s32 0, %v4535
        %v4537 = vrot.slane %v4267, %v4536
        %v4538 = vlaneseq
        %v4539 = vshrl.u32 %v4538, 7
        %v4540 = vsub.s32 1, %v4539
        %v4541 = vrot.slane %v4267, %v4540
        %v4542 = vlaneseq
        %v4543 = vshrl.u32 %v4542, 7
        %v4544 = vsub.s32 2, %v4543
        %v4545 = vrot.slane %v4267, %v4544
        %v4546 = vlaneseq
        %v4547 = vshrl.u32 %v4546, 7
        %v4548 = vsub.s32 3, %v4547
        %v4549 = vrot.slane %v4267, %v4548
        %v4550 = vlaneseq
        %v4551 = vshrl.u32 %v4550, 7
        %v4552 = vsub.s32 4, %v4551
        %v4553 = vrot.slane %v4267, %v4552
        %v4554 = vlaneseq
        %v4555 = vshrl.u32 %v4554, 7
        %v4556 = vsub.s32 5, %v4555
        %v4557 = vrot.slane %v4267, %v4556
        %v4558 = vlaneseq
        %v4559 = vshrl.u32 %v4558, 7
        %v4560 = vsub.s32 6, %v4559
        %v4561 = vrot.slane %v4267, %v4560
        %v4562 = vlaneseq
        %v4563 = vshrl.u32 %v4562, 7
        %v4564 = vsub.s32 7, %v4563
        %v4565 = vrot.slane %v4267, %v4564
        %v4566 = vlaneseq
        %v4567 = vshrl.u32 %v4566, 7
        %v4568 = vsub.s32 0, %v4567
        %v4569 = vrot.slane %v4269, %v4568
        %v4570 = vlaneseq
        %v4571 = vshrl.u32 %v4570, 7
        %v4572 = vsub.s32 1, %v4571
        %v4573 = vrot.slane %v4269, %v4572
        %v4574 = vlaneseq
        %v4575 = vshrl.u32 %v4574, 7
        %v4576 = vsub.s32 2, %v4575
        %v4577 = vrot.slane %v4269, %v4576
        %v4578 = vlaneseq
        %v4579 = vshrl.u32 %v4578, 7
        %v4580 = vsub.s32 3, %v4579
        %v4581 = vrot.slane %v4269, %v4580
        %v4582 = vlaneseq
        %v4583 = vshrl.u32 %v4582, 7
        %v4584 = vsub.s32 4, %v4583
        %v4585 = vrot.slane %v4269, %v4584
        %v4586 = vlaneseq
        %v4587 = vshrl.u32 %v4586, 7
        %v4588 = vsub.s32 5, %v4587
        %v4589 = vrot.slane %v4269, %v4588
        %v4590 = vlaneseq
        %v4591 = vshrl.u32 %v4590, 7
        %v4592 = vsub.s32 6, %v4591
        %v4593 = vrot.slane %v4269, %v4592
        %v4594 = vlaneseq
        %v4595 = vshrl.u32 %v4594, 7
        %v4596 = vsub.s32 7, %v4595
        %v4597 = vrot.slane %v4269, %v4596
        %v4598 = vcombine.low %v4345, %v4349
        %v4599 = vcombine.low %v4353, %v4357
        %v4600 = vcombine.low %v4361, %v4365
        %v4601 = vcombine.low %v4369, %v4373
        %v4603 = vunpack.c.l.s4 1966171168
        %v4604 = vunpack.c.0.s8 %v4603
        %v4605 = vlaneseq
        %v4606 = vshrl.u32 %v4605, 7
        %v4607 = vsub.s32 %v4604, %v4606
        %v4608 = vrot.slane %v4598, %v4607
        %v4610 = vunpack.c.l.s4 1966171168
        %v4611 = vunpack.c.0.s8 %v4610
        %v4612 = vlaneseq
        %v4613 = vshrl.u32 %v4612, 7
        %v4614 = vsub.s32 %v4611, %v4613
        %v4615 = vrot.slane %v4599, %v4614
        %v4617 = vunpack.c.l.s4 1966171168
        %v4618 = vunpack.c.0.s8 %v4617
        %v4619 = vlaneseq
        %v4620 = vshrl.u32 %v4619, 7
        %v4621 = vsub.s32 %v4618, %v4620
        %v4622 = vrot.slane %v4600, %v4621
        %v4624 = vunpack.c.l.s4 1966171168
        %v4625 = vunpack.c.0.s8 %v4624
        %v4626 = vlaneseq
        %v4627 = vshrl.u32 %v4626, 7
        %v4628 = vsub.s32 %v4625, %v4627
        %v4629 = vrot.slane %v4601, %v4628
        %v4630 = vcombine.low %v4608, %v4615
        %v4631 = vcombine.low %v4622, %v4629
        %v4633 = vunpack.c.l.s4 1966171168
        %v4634 = vunpack.c.0.s8 %v4633
        %v4635 = vlaneseq
        %v4636 = vshrl.u32 %v4635, 7
        %v4637 = vsub.s32 %v4634, %v4636
        %v4638 = vrot.slane %v4630, %v4637
        %v4640 = vunpack.c.l.s4 1966171168
        %v4641 = vunpack.c.0.s8 %v4640
        %v4642 = vlaneseq
        %v4643 = vshrl.u32 %v4642, 7
        %v4644 = vsub.s32 %v4641, %v4643
        %v4645 = vrot.slane %v4631, %v4644
        %v4646 = vcombine.low %v4638, %v4645
        %v4647 = vcombine.low %v4377, %v4381
        %v4648 = vcombine.low %v4385, %v4389
        %v4649 = vcombine.low %v4393, %v4397
        %v4650 = vcombine.low %v4401, %v4405
        %v4652 = vunpack.c.l.s4 1966171168
        %v4653 = vunpack.c.0.s8 %v4652
        %v4654 = vlaneseq
        %v4655 = vshrl.u32 %v4654, 7
        %v4656 = vsub.s32 %v4653, %v4655
        %v4657 = vrot.slane %v4647, %v4656
        %v4659 = vunpack.c.l.s4 1966171168
        %v4660 = vunpack.c.0.s8 %v4659
        %v4661 = vlaneseq
        %v4662 = vshrl.u32 %v4661, 7
        %v4663 = vsub.s32 %v4660, %v4662
        %v4664 = vrot.slane %v4648, %v4663
        %v4666 = vunpack.c.l.s4 1966171168
        %v4667 = vunpack.c.0.s8 %v4666
        %v4668 = vlaneseq
        %v4669 = vshrl.u32 %v4668, 7
        %v4670 = vsub.s32 %v4667, %v4669
        %v4671 = vrot.slane %v4649, %v4670
        %v4673 = vunpack.c.l.s4 1966171168
        %v4674 = vunpack.c.0.s8 %v4673
        %v4675 = vlaneseq
        %v4676 = vshrl.u32 %v4675, 7
        %v4677 = vsub.s32 %v4674, %v4676
        %v4678 = vrot.slane %v4650, %v4677
        %v4679 = vcombine.low %v4657, %v4664
        %v4680 = vcombine.low %v4671, %v4678
        %v4682 = vunpack.c.l.s4 1966171168
        %v4683 = vunpack.c.0.s8 %v4682
        %v4684 = vlaneseq
        %v4685 = vshrl.u32 %v4684, 7
        %v4686 = vsub.s32 %v4683, %v4685
        %v4687 = vrot.slane %v4679, %v4686
        %v4689 = vunpack.c.l.s4 1966171168
        %v4690 = vunpack.c.0.s8 %v4689
        %v4691 = vlaneseq
        %v4692 = vshrl.u32 %v4691, 7
        %v4693 = vsub.s32 %v4690, %v4692
        %v4694 = vrot.slane %v4680, %v4693
        %v4695 = vcombine.low %v4687, %v4694
        %v4696 = vcombine.low %v4409, %v4413
        %v4697 = vcombine.low %v4417, %v4421
        %v4698 = vcombine.low %v4425, %v4429
        %v4699 = vcombine.low %v4433, %v4437
        %v4701 = vunpack.c.l.s4 1966171168
        %v4702 = vunpack.c.0.s8 %v4701
        %v4703 = vlaneseq
        %v4704 = vshrl.u32 %v4703, 7
        %v4705 = vsub.s32 %v4702, %v4704
        %v4706 = vrot.slane %v4696, %v4705
        %v4708 = vunpack.c.l.s4 1966171168
        %v4709 = vunpack.c.0.s8 %v4708
        %v4710 = vlaneseq
        %v4711 = vshrl.u32 %v4710, 7
        %v4712 = vsub.s32 %v4709, %v4711
        %v4713 = vrot.slane %v4697, %v4712
        %v4715 = vunpack.c.l.s4 1966171168
        %v4716 = vunpack.c.0.s8 %v4715
        %v4717 = vlaneseq
        %v4718 = vshrl.u32 %v4717, 7
        %v4719 = vsub.s32 %v4716, %v4718
        %v4720 = vrot.slane %v4698, %v4719
        %v4722 = vunpack.c.l.s4 1966171168
        %v4723 = vunpack.c.0.s8 %v4722
        %v4724 = vlaneseq
        %v4725 = vshrl.u32 %v4724, 7
        %v4726 = vsub.s32 %v4723, %v4725
        %v4727 = vrot.slane %v4699, %v4726
        %v4728 = vcombine.low %v4706, %v4713
        %v4729 = vcombine.low %v4720, %v4727
        %v4731 = vunpack.c.l.s4 1966171168
        %v4732 = vunpack.c.0.s8 %v4731
        %v4733 = vlaneseq
        %v4734 = vshrl.u32 %v4733, 7
        %v4735 = vsub.s32 %v4732, %v4734
        %v4736 = vrot.slane %v4728, %v4735
        %v4738 = vunpack.c.l.s4 1966171168
        %v4739 = vunpack.c.0.s8 %v4738
        %v4740 = vlaneseq
        %v4741 = vshrl.u32 %v4740, 7
        %v4742 = vsub.s32 %v4739, %v4741
        %v4743 = vrot.slane %v4729, %v4742
        %v4744 = vcombine.low %v4736, %v4743
        %v4745 = vcombine.low %v4441, %v4445
        %v4746 = vcombine.low %v4449, %v4453
        %v4747 = vcombine.low %v4457, %v4461
        %v4748 = vcombine.low %v4465, %v4469
        %v4750 = vunpack.c.l.s4 1966171168
        %v4751 = vunpack.c.0.s8 %v4750
        %v4752 = vlaneseq
        %v4753 = vshrl.u32 %v4752, 7
        %v4754 = vsub.s32 %v4751, %v4753
        %v4755 = vrot.slane %v4745, %v4754
        %v4757 = vunpack.c.l.s4 1966171168
        %v4758 = vunpack.c.0.s8 %v4757
        %v4759 = vlaneseq
        %v4760 = vshrl.u32 %v4759, 7
        %v4761 = vsub.s32 %v4758, %v4760
        %v4762 = vrot.slane %v4746, %v4761
        %v4764 = vunpack.c.l.s4 1966171168
        %v4765 = vunpack.c.0.s8 %v4764
        %v4766 = vlaneseq
        %v4767 = vshrl.u32 %v4766, 7
        %v4768 = vsub.s32 %v4765, %v4767
        %v4769 = vrot.slane %v4747, %v4768
        %v4771 = vunpack.c.l.s4 1966171168
        %v4772 = vunpack.c.0.s8 %v4771
        %v4773 = vlaneseq
        %v4774 = vshrl.u32 %v4773, 7
        %v4775 = vsub.s32 %v4772, %v4774
        %v4776 = vrot.slane %v4748, %v4775
        %v4777 = vcombine.low %v4755, %v4762
        %v4778 = vcombine.low %v4769, %v4776
        %v4780 = vunpack.c.l.s4 1966171168
        %v4781 = vunpack.c.0.s8 %v4780
        %v4782 = vlaneseq
        %v4783 = vshrl.u32 %v4782, 7
        %v4784 = vsub.s32 %v4781, %v4783
        %v4785 = vrot.slane %v4777, %v4784
        %v4787 = vunpack.c.l.s4 1966171168
        %v4788 = vunpack.c.0.s8 %v4787
        %v4789 = vlaneseq
        %v4790 = vshrl.u32 %v4789, 7
        %v4791 = vsub.s32 %v4788, %v4790
        %v4792 = vrot.slane %v4778, %v4791
        %v4793 = vcombine.low %v4785, %v4792
        %v4794 = vcombine.low %v4473, %v4477
        %v4795 = vcombine.low %v4481, %v4485
        %v4796 = vcombine.low %v4489, %v4493
        %v4797 = vcombine.low %v4497, %v4501
        %v4799 = vunpack.c.l.s4 1966171168
        %v4800 = vunpack.c.0.s8 %v4799
        %v4801 = vlaneseq
        %v4802 = vshrl.u32 %v4801, 7
        %v4803 = vsub.s32 %v4800, %v4802
        %v4804 = vrot.slane %v4794, %v4803
        %v4806 = vunpack.c.l.s4 1966171168
        %v4807 = vunpack.c.0.s8 %v4806
        %v4808 = vlaneseq
        %v4809 = vshrl.u32 %v4808, 7
        %v4810 = vsub.s32 %v4807, %v4809
        %v4811 = vrot.slane %v4795, %v4810
        %v4813 = vunpack.c.l.s4 1966171168
        %v4814 = vunpack.c.0.s8 %v4813
        %v4815 = vlaneseq
        %v4816 = vshrl.u32 %v4815, 7
        %v4817 = vsub.s32 %v4814, %v4816
        %v4818 = vrot.slane %v4796, %v4817
        %v4820 = vunpack.c.l.s4 1966171168
        %v4821 = vunpack.c.0.s8 %v4820
        %v4822 = vlaneseq
        %v4823 = vshrl.u32 %v4822, 7
        %v4824 = vsub.s32 %v4821, %v4823
        %v4825 = vrot.slane %v4797, %v4824
        %v4826 = vcombine.low %v4804, %v4811
        %v4827 = vcombine.low %v4818, %v4825
        %v4829 = vunpack.c.l.s4 1966171168
        %v4830 = vunpack.c.0.s8 %v4829
        %v4831 = vlaneseq
        %v4832 = vshrl.u32 %v4831, 7
        %v4833 = vsub.s32 %v4830, %v4832
        %v4834 = vrot.slane %v4826, %v4833
        %v4836 = vunpack.c.l.s4 1966171168
        %v4837 = vunpack.c.0.s8 %v4836
        %v4838 = vlaneseq
        %v4839 = vshrl.u32 %v4838, 7
        %v4840 = vsub.s32 %v4837, %v4839
        %v4841 = vrot.slane %v4827, %v4840
        %v4842 = vcombine.low %v4834, %v4841
        %v4843 = vcombine.low %v4505, %v4509
        %v4844 = vcombine.low %v4513, %v4517
        %v4845 = vcombine.low %v4521, %v4525
        %v4846 = vcombine.low %v4529, %v4533
        %v4848 = vunpack.c.l.s4 1966171168
        %v4849 = vunpack.c.0.s8 %v4848
        %v4850 = vlaneseq
        %v4851 = vshrl.u32 %v4850, 7
        %v4852 = vsub.s32 %v4849, %v4851
        %v4853 = vrot.slane %v4843, %v4852
        %v4855 = vunpack.c.l.s4 1966171168
        %v4856 = vunpack.c.0.s8 %v4855
        %v4857 = vlaneseq
        %v4858 = vshrl.u32 %v4857, 7
        %v4859 = vsub.s32 %v4856, %v4858
        %v4860 = vrot.slane %v4844, %v4859
        %v4862 = vunpack.c.l.s4 1966171168
        %v4863 = vunpack.c.0.s8 %v4862
        %v4864 = vlaneseq
        %v4865 = vshrl.u32 %v4864, 7
        %v4866 = vsub.s32 %v4863, %v4865
        %v4867 = vrot.slane %v4845, %v4866
        %v4869 = vunpack.c.l.s4 1966171168
        %v4870 = vunpack.c.0.s8 %v4869
        %v4871 = vlaneseq
        %v4872 = vshrl.u32 %v4871, 7
        %v4873 = vsub.s32 %v4870, %v4872
        %v4874 = vrot.slane %v4846, %v4873
        %v4875 = vcombine.low %v4853, %v4860
        %v4876 = vcombine.low %v4867, %v4874
        %v4878 = vunpack.c.l.s4 1966171168
        %v4879 = vunpack.c.0.s8 %v4878
        %v4880 = vlaneseq
        %v4881 = vshrl.u32 %v4880, 7
        %v4882 = vsub.s32 %v4879, %v4881
        %v4883 = vrot.slane %v4875, %v4882
        %v4885 = vunpack.c.l.s4 1966171168
        %v4886 = vunpack.c.0.s8 %v4885
        %v4887 = vlaneseq
        %v4888 = vshrl.u32 %v4887, 7
        %v4889 = vsub.s32 %v4886, %v4888
        %v4890 = vrot.slane %v4876, %v4889
        %v4891 = vcombine.low %v4883, %v4890
        %v4892 = vcombine.low %v4537, %v4541
        %v4893 = vcombine.low %v4545, %v4549
        %v4894 = vcombine.low %v4553, %v4557
        %v4895 = vcombine.low %v4561, %v4565
        %v4897 = vunpack.c.l.s4 1966171168
        %v4898 = vunpack.c.0.s8 %v4897
        %v4899 = vlaneseq
        %v4900 = vshrl.u32 %v4899, 7
        %v4901 = vsub.s32 %v4898, %v4900
        %v4902 = vrot.slane %v4892, %v4901
        %v4904 = vunpack.c.l.s4 1966171168
        %v4905 = vunpack.c.0.s8 %v4904
        %v4906 = vlaneseq
        %v4907 = vshrl.u32 %v4906, 7
        %v4908 = vsub.s32 %v4905, %v4907
        %v4909 = vrot.slane %v4893, %v4908
        %v4911 = vunpack.c.l.s4 1966171168
        %v4912 = vunpack.c.0.s8 %v4911
        %v4913 = vlaneseq
        %v4914 = vshrl.u32 %v4913, 7
        %v4915 = vsub.s32 %v4912, %v4914
        %v4916 = vrot.slane %v4894, %v4915
        %v4918 = vunpack.c.l.s4 1966171168
        %v4919 = vunpack.c.0.s8 %v4918
        %v4920 = vlaneseq
        %v4921 = vshrl.u32 %v4920, 7
        %v4922 = vsub.s32 %v4919, %v4921
        %v4923 = vrot.slane %v4895, %v4922
        %v4924 = vcombine.low %v4902, %v4909
        %v4925 = vcombine.low %v4916, %v4923
        %v4927 = vunpack.c.l.s4 1966171168
        %v4928 = vunpack.c.0.s8 %v4927
        %v4929 = vlaneseq
        %v4930 = vshrl.u32 %v4929, 7
        %v4931 = vsub.s32 %v4928, %v4930
        %v4932 = vrot.slane %v4924, %v4931
        %v4934 = vunpack.c.l.s4 1966171168
        %v4935 = vunpack.c.0.s8 %v4934
        %v4936 = vlaneseq
        %v4937 = vshrl.u32 %v4936, 7
        %v4938 = vsub.s32 %v4935, %v4937
        %v4939 = vrot.slane %v4925, %v4938
        %v4940 = vcombine.low %v4932, %v4939
        %v4941 = vcombine.low %v4569, %v4573
        %v4942 = vcombine.low %v4577, %v4581
        %v4943 = vcombine.low %v4585, %v4589
        %v4944 = vcombine.low %v4593, %v4597
        %v4946 = vunpack.c.l.s4 1966171168
        %v4947 = vunpack.c.0.s8 %v4946
        %v4948 = vlaneseq
        %v4949 = vshrl.u32 %v4948, 7
        %v4950 = vsub.s32 %v4947, %v4949
        %v4951 = vrot.slane %v4941, %v4950
        %v4953 = vunpack.c.l.s4 1966171168
        %v4954 = vunpack.c.0.s8 %v4953
        %v4955 = vlaneseq
        %v4956 = vshrl.u32 %v4955, 7
        %v4957 = vsub.s32 %v4954, %v4956
        %v4958 = vrot.slane %v4942, %v4957
        %v4960 = vunpack.c.l.s4 1966171168
        %v4961 = vunpack.c.0.s8 %v4960
        %v4962 = vlaneseq
        %v4963 = vshrl.u32 %v4962, 7
        %v4964 = vsub.s32 %v4961, %v4963
        %v4965 = vrot.slane %v4943, %v4964
        %v4967 = vunpack.c.l.s4 1966171168
        %v4968 = vunpack.c.0.s8 %v4967
        %v4969 = vlaneseq
        %v4970 = vshrl.u32 %v4969, 7
        %v4971 = vsub.s32 %v4968, %v4970
        %v4972 = vrot.slane %v4944, %v4971
        %v4973 = vcombine.low %v4951, %v4958
        %v4974 = vcombine.low %v4965, %v4972
        %v4976 = vunpack.c.l.s4 1966171168
        %v4977 = vunpack.c.0.s8 %v4976
        %v4978 = vlaneseq
        %v4979 = vshrl.u32 %v4978, 7
        %v4980 = vsub.s32 %v4977, %v4979
        %v4981 = vrot.slane %v4973, %v4980
        %v4983 = vunpack.c.l.s4 1966171168
        %v4984 = vunpack.c.0.s8 %v4983
        %v4985 = vlaneseq
        %v4986 = vshrl.u32 %v4985, 7
        %v4987 = vsub.s32 %v4984, %v4986
        %v4988 = vrot.slane %v4974, %v4987
        %v4989 = vcombine.low %v4981, %v4988
        %4990 = vset.pattern.permute.xlu0 0
        %4991 = vperm.xlu0 %4990, %v4646
        %v4992 = vpop.permute.xlu0 %4991
        %4993 = vset.pattern.permute.xlu0 0
        %4994 = vperm.xlu0 %4993, %v4695
        %v4995 = vpop.permute.xlu0 %4994
        %4996 = vset.pattern.permute.xlu0 0
        %4997 = vperm.xlu0 %4996, %v4744
        %v4998 = vpop.permute.xlu0 %4997
        %4999 = vset.pattern.permute.xlu0 0
        %5000 = vperm.xlu0 %4999, %v4793
        %v5001 = vpop.permute.xlu0 %5000
        %5002 = vset.pattern.permute.xlu0 0
        %5003 = vperm.xlu0 %5002, %v4842
        %v5004 = vpop.permute.xlu0 %5003
        %5005 = vset.pattern.permute.xlu0 0
        %5006 = vperm.xlu0 %5005, %v4891
        %v5007 = vpop.permute.xlu0 %5006
        %5008 = vset.pattern.permute.xlu0 0
        %5009 = vperm.xlu0 %5008, %v4940
        %v5010 = vpop.permute.xlu0 %5009
        %5011 = vset.pattern.permute.xlu0 0
        %5012 = vperm.xlu0 %5011, %v4989
        %v5013 = vpop.permute.xlu0 %5012
        %v5014 = vlaneseq
        %v5015 = vand.u32 %v5014, 127
        %v5016 = vlaneseq
        %v5017 = vshrl.u32 %v5016, 7
        %v5018 = vsub.s32 %v5015, %v5017
        %v5019 = vrot.slane %v4992, %v5018
        %v5020 = vadd.s32 %v5015, 4294967288
        %v5021 = vlaneseq
        %v5022 = vshrl.u32 %v5021, 7
        %v5023 = vsub.s32 %v5020, %v5022
        %v5024 = vrot.slane %v4995, %v5023
        %vm5025 = vcmask 130112
        %v5026 = vsel %vm5025, %v5024, %v5019
        %v5027 = vlaneseq
        %v5028 = vshrl.u32 %v5027, 7
        %v5029 = vsub.s32 %v5015, %v5028
        %v5030 = vrot.slane %v4998, %v5029
        %v5031 = vlaneseq
        %v5032 = vshrl.u32 %v5031, 7
        %v5033 = vsub.s32 %v5020, %v5032
        %v5034 = vrot.slane %v5001, %v5033
        %v5035 = vsel %vm5025, %v5034, %v5030
        %v5036 = vlaneseq
        %v5037 = vshrl.u32 %v5036, 7
        %v5038 = vsub.s32 %v5015, %v5037
        %v5039 = vrot.slane %v5004, %v5038
        %v5040 = vlaneseq
        %v5041 = vshrl.u32 %v5040, 7
        %v5042 = vsub.s32 %v5020, %v5041
        %v5043 = vrot.slane %v5007, %v5042
        %v5044 = vsel %vm5025, %v5043, %v5039
        %v5045 = vlaneseq
        %v5046 = vshrl.u32 %v5045, 7
        %v5047 = vsub.s32 %v5015, %v5046
        %v5048 = vrot.slane %v5010, %v5047
        %v5049 = vlaneseq
        %v5050 = vshrl.u32 %v5049, 7
        %v5051 = vsub.s32 %v5020, %v5050
        %v5052 = vrot.slane %v5013, %v5051
        %v5053 = vsel %vm5025, %v5052, %v5048
        %v5055 = vunpack.c.l.s4 1966171168
        %v5056 = vunpack.c.0.s8 %v5055
        %v5057 = vlaneseq
        %v5058 = vshrl.u32 %v5057, 7
        %v5059 = vsub.s32 %v5056, %v5058
        %v5060 = vrot.slane %v5026, %v5059
        %v5062 = vunpack.c.l.s4 1966171168
        %v5063 = vunpack.c.0.s8 %v5062
        %v5064 = vlaneseq
        %v5065 = vshrl.u32 %v5064, 7
        %v5066 = vsub.s32 %v5063, %v5065
        %v5067 = vrot.slane %v5060, %v5066
        %v5069 = vunpack.c.l.s4 1966171168
        %v5070 = vunpack.c.0.s8 %v5069
        %v5071 = vlaneseq
        %v5072 = vshrl.u32 %v5071, 7
        %v5073 = vsub.s32 %v5070, %v5072
        %v5074 = vrot.slane %v5035, %v5073
        %v5076 = vunpack.c.l.s4 1966171168
        %v5077 = vunpack.c.0.s8 %v5076
        %v5078 = vlaneseq
        %v5079 = vshrl.u32 %v5078, 7
        %v5080 = vsub.s32 %v5077, %v5079
        %v5081 = vrot.slane %v5074, %v5080
        %v5083 = vunpack.c.l.s4 1966171168
        %v5084 = vunpack.c.0.s8 %v5083
        %v5085 = vlaneseq
        %v5086 = vshrl.u32 %v5085, 7
        %v5087 = vsub.s32 %v5084, %v5086
        %v5088 = vrot.slane %v5044, %v5087
        %v5090 = vunpack.c.l.s4 1966171168
        %v5091 = vunpack.c.0.s8 %v5090
        %v5092 = vlaneseq
        %v5093 = vshrl.u32 %v5092, 7
        %v5094 = vsub.s32 %v5091, %v5093
        %v5095 = vrot.slane %v5088, %v5094
        %v5097 = vunpack.c.l.s4 1966171168
        %v5098 = vunpack.c.0.s8 %v5097
        %v5099 = vlaneseq
        %v5100 = vshrl.u32 %v5099, 7
        %v5101 = vsub.s32 %v5098, %v5100
        %v5102 = vrot.slane %v5053, %v5101
        %v5104 = vunpack.c.l.s4 1966171168
        %v5105 = vunpack.c.0.s8 %v5104
        %v5106 = vlaneseq
        %v5107 = vshrl.u32 %v5106, 7
        %v5108 = vsub.s32 %v5105, %v5107
        %v5109 = vrot.slane %v5102, %v5108
        %v5114 = vsel %vm634, %v5067, -inf
        %v5115 = vsel %vm635, %v5081, -inf
        %v5116 = vsel %vm636, %v5095, -inf
        %v5117 = vsel %vm637, %v5109, -inf
        %v5122 = vcombine.low %v5114, %v5115
        %v5123 = vcombine.low %v5116, %v5117
        %v5125 = vunpack.c.l.s4 1966171168
        %v5126 = vunpack.c.0.s8 %v5125
        %v5127 = vlaneseq
        %v5128 = vshrl.u32 %v5127, 7
        %v5129 = vsub.s32 %v5126, %v5128
        %v5130 = vrot.slane %v5122, %v5129
        %v5132 = vunpack.c.l.s4 1966171168
        %v5133 = vunpack.c.0.s8 %v5132
        %v5134 = vlaneseq
        %v5135 = vshrl.u32 %v5134, 7
        %v5136 = vsub.s32 %v5133, %v5135
        %v5137 = vrot.slane %v5123, %v5136
        %v5138 = vcombine.low %v5130, %v5137
        %v5140 = vunpack.c.l.s4 1966171168
        %v5141 = vunpack.c.0.s8 %v5140
        %v5142 = vlaneseq
        %v5143 = vshrl.u32 %v5142, 7
        %v5144 = vsub.s32 %v5141, %v5143
        %v5145 = vrot.slane %v5138, %v5144
        %vm5147 = vcmask 125952
        %v5148 = vsel %vm5147, %v5145, -inf
        %5149 = vmax.xlane.f32.xlu0 %v5148
        %v5150 = vpop.xlane.xlu0 %5149
        %5151 = vset.pattern.permute.xlu0 0
        %5152 = vperm.xlu0 %5151, %v4646
        %v5153 = vpop.permute.xlu0 %5152
        %5154 = vset.pattern.permute.xlu0 0
        %5155 = vperm.xlu0 %5154, %v4695
        %v5156 = vpop.permute.xlu0 %5155
        %5157 = vset.pattern.permute.xlu0 0
        %5158 = vperm.xlu0 %5157, %v4744
        %v5159 = vpop.permute.xlu0 %5158
        %5160 = vset.pattern.permute.xlu0 0
        %5161 = vperm.xlu0 %5160, %v4793
        %v5162 = vpop.permute.xlu0 %5161
        %5163 = vset.pattern.permute.xlu0 0
        %5164 = vperm.xlu0 %5163, %v4842
        %v5165 = vpop.permute.xlu0 %5164
        %5166 = vset.pattern.permute.xlu0 0
        %5167 = vperm.xlu0 %5166, %v4891
        %v5168 = vpop.permute.xlu0 %5167
        %5169 = vset.pattern.permute.xlu0 0
        %5170 = vperm.xlu0 %5169, %v4940
        %v5171 = vpop.permute.xlu0 %5170
        %5172 = vset.pattern.permute.xlu0 0
        %5173 = vperm.xlu0 %5172, %v4989
        %v5174 = vpop.permute.xlu0 %5173
        %v5175 = vlaneseq
        %v5176 = vshrl.u32 %v5175, 7
        %v5177 = vsub.s32 %v5015, %v5176
        %v5178 = vrot.slane %v5153, %v5177
        %v5179 = vlaneseq
        %v5180 = vshrl.u32 %v5179, 7
        %v5181 = vsub.s32 %v5020, %v5180
        %v5182 = vrot.slane %v5156, %v5181
        %v5183 = vsel %vm5025, %v5182, %v5178
        %v5184 = vlaneseq
        %v5185 = vshrl.u32 %v5184, 7
        %v5186 = vsub.s32 %v5015, %v5185
        %v5187 = vrot.slane %v5159, %v5186
        %v5188 = vlaneseq
        %v5189 = vshrl.u32 %v5188, 7
        %v5190 = vsub.s32 %v5020, %v5189
        %v5191 = vrot.slane %v5162, %v5190
        %v5192 = vsel %vm5025, %v5191, %v5187
        %v5193 = vlaneseq
        %v5194 = vshrl.u32 %v5193, 7
        %v5195 = vsub.s32 %v5015, %v5194
        %v5196 = vrot.slane %v5165, %v5195
        %v5197 = vlaneseq
        %v5198 = vshrl.u32 %v5197, 7
        %v5199 = vsub.s32 %v5020, %v5198
        %v5200 = vrot.slane %v5168, %v5199
        %v5201 = vsel %vm5025, %v5200, %v5196
        %v5202 = vlaneseq
        %v5203 = vshrl.u32 %v5202, 7
        %v5204 = vsub.s32 %v5015, %v5203
        %v5205 = vrot.slane %v5171, %v5204
        %v5206 = vlaneseq
        %v5207 = vshrl.u32 %v5206, 7
        %v5208 = vsub.s32 %v5020, %v5207
        %v5209 = vrot.slane %v5174, %v5208
        %v5210 = vsel %vm5025, %v5209, %v5205
        %v5212 = vunpack.c.l.s4 1966171168
        %v5213 = vunpack.c.0.s8 %v5212
        %v5214 = vlaneseq
        %v5215 = vshrl.u32 %v5214, 7
        %v5216 = vsub.s32 %v5213, %v5215
        %v5217 = vrot.slane %v5183, %v5216
        %v5219 = vunpack.c.l.s4 1966171168
        %v5220 = vunpack.c.0.s8 %v5219
        %v5221 = vlaneseq
        %v5222 = vshrl.u32 %v5221, 7
        %v5223 = vsub.s32 %v5220, %v5222
        %v5224 = vrot.slane %v5217, %v5223
        %v5226 = vunpack.c.l.s4 1966171168
        %v5227 = vunpack.c.0.s8 %v5226
        %v5228 = vlaneseq
        %v5229 = vshrl.u32 %v5228, 7
        %v5230 = vsub.s32 %v5227, %v5229
        %v5231 = vrot.slane %v5192, %v5230
        %v5233 = vunpack.c.l.s4 1966171168
        %v5234 = vunpack.c.0.s8 %v5233
        %v5235 = vlaneseq
        %v5236 = vshrl.u32 %v5235, 7
        %v5237 = vsub.s32 %v5234, %v5236
        %v5238 = vrot.slane %v5231, %v5237
        %v5240 = vunpack.c.l.s4 1966171168
        %v5241 = vunpack.c.0.s8 %v5240
        %v5242 = vlaneseq
        %v5243 = vshrl.u32 %v5242, 7
        %v5244 = vsub.s32 %v5241, %v5243
        %v5245 = vrot.slane %v5201, %v5244
        %v5247 = vunpack.c.l.s4 1966171168
        %v5248 = vunpack.c.0.s8 %v5247
        %v5249 = vlaneseq
        %v5250 = vshrl.u32 %v5249, 7
        %v5251 = vsub.s32 %v5248, %v5250
        %v5252 = vrot.slane %v5245, %v5251
        %v5254 = vunpack.c.l.s4 1966171168
        %v5255 = vunpack.c.0.s8 %v5254
        %v5256 = vlaneseq
        %v5257 = vshrl.u32 %v5256, 7
        %v5258 = vsub.s32 %v5255, %v5257
        %v5259 = vrot.slane %v5210, %v5258
        %v5261 = vunpack.c.l.s4 1966171168
        %v5262 = vunpack.c.0.s8 %v5261
        %v5263 = vlaneseq
        %v5264 = vshrl.u32 %v5263, 7
        %v5265 = vsub.s32 %v5262, %v5264
        %v5266 = vrot.slane %v5259, %v5265
        %v5271 = vsel %vm634, %v5224, inf
        %v5272 = vsel %vm635, %v5238, inf
        %v5273 = vsel %vm636, %v5252, inf
        %v5274 = vsel %vm637, %v5266, inf
        %v5279 = vcombine.low %v5271, %v5272
        %v5280 = vcombine.low %v5273, %v5274
        %v5282 = vunpack.c.l.s4 1966171168
        %v5283 = vunpack.c.0.s8 %v5282
        %v5284 = vlaneseq
        %v5285 = vshrl.u32 %v5284, 7
        %v5286 = vsub.s32 %v5283, %v5285
        %v5287 = vrot.slane %v5279, %v5286
        %v5289 = vunpack.c.l.s4 1966171168
        %v5290 = vunpack.c.0.s8 %v5289
        %v5291 = vlaneseq
        %v5292 = vshrl.u32 %v5291, 7
        %v5293 = vsub.s32 %v5290, %v5292
        %v5294 = vrot.slane %v5280, %v5293
        %v5295 = vcombine.low %v5287, %v5294
        %v5297 = vunpack.c.l.s4 1966171168
        %v5298 = vunpack.c.0.s8 %v5297
        %v5299 = vlaneseq
        %v5300 = vshrl.u32 %v5299, 7
        %v5301 = vsub.s32 %v5298, %v5300
        %v5302 = vrot.slane %v5295, %v5301
        %v5304 = vsel %vm5147, %v5302, inf
        %5305 = vmin.xlane.f32.xlu0 %v5304
        %v5306 = vpop.xlane.xlu0 %5305
        %v5307 = vsub.f32 %v5150, %v5306
        %v5308 = vmul.f32 %v5307, 0.5
        %v5309 = vsub.f32 %v5150, %v5308
        %v5311 = vlaneseq
        %v5312 = vshrl.u32 %v5311, 7
        %v5313 = vsub.s32 0, %v5312
        %v5314 = vrot.slane %v5309, %v5313
        %v5315 = vlaneseq
        %v5316 = vshrl.u32 %v5315, 7
        %v5317 = vsub.s32 1, %v5316
        %v5318 = vrot.slane %v5309, %v5317
        %v5319 = vlaneseq
        %v5320 = vshrl.u32 %v5319, 7
        %v5321 = vsub.s32 2, %v5320
        %v5322 = vrot.slane %v5309, %v5321
        %v5323 = vlaneseq
        %v5324 = vshrl.u32 %v5323, 7
        %v5325 = vsub.s32 3, %v5324
        %v5326 = vrot.slane %v5309, %v5325
        %vm5331 = vcmp.gt.f32.partialorder %v4255, %v5314
        %vm5332 = vcmp.gt.f32.partialorder %v4257, %v5314
        %vm5333 = vcmp.gt.f32.partialorder %v4259, %v5318
        %vm5334 = vcmp.gt.f32.partialorder %v4261, %v5318
        %vm5335 = vcmp.gt.f32.partialorder %v4263, %v5322
        %vm5336 = vcmp.gt.f32.partialorder %v4265, %v5322
        %vm5337 = vcmp.gt.f32.partialorder %v4267, %v5326
        %vm5338 = vcmp.gt.f32.partialorder %v4269, %v5326
        %v5339 = vsel %vm634, 1, 0
        %v5340 = vsel %vm635, 1, 0
        %v5341 = vsel %vm636, 1, 0
        %v5342 = vsel %vm637, 1, 0
        %v5343 = vlaneseq
        %v5344 = vshrl.u32 %v5343, 7
        %v5345 = vsub.s32 0, %v5344
        %v5346 = vrot.slane %v5339, %v5345
        %v5347 = vlaneseq
        %v5348 = vshrl.u32 %v5347, 7
        %v5349 = vsub.s32 0, %v5348
        %v5350 = vrot.slane %v5340, %v5349
        %v5351 = vlaneseq
        %v5352 = vshrl.u32 %v5351, 7
        %v5353 = vsub.s32 0, %v5352
        %v5354 = vrot.slane %v5341, %v5353
        %v5355 = vlaneseq
        %v5356 = vshrl.u32 %v5355, 7
        %v5357 = vsub.s32 0, %v5356
        %v5358 = vrot.slane %v5342, %v5357
        %5360 = vbcast.lane.b32.xlu0 %v5346, 256
        %v5361 = vpop.permute.xlu0 %5360
        %s5363 = sor.u32 256, 8
        %5364 = vbcast.lane.b32.xlu0 %v5346, %s5363
        %v5365 = vpop.permute.xlu0 %5364
        %5367 = vbcast.lane.b32.xlu0 %v5350, 256
        %v5368 = vpop.permute.xlu0 %5367
        %s5370 = sor.u32 256, 8
        %5371 = vbcast.lane.b32.xlu0 %v5350, %s5370
        %v5372 = vpop.permute.xlu0 %5371
        %5374 = vbcast.lane.b32.xlu0 %v5354, 256
        %v5375 = vpop.permute.xlu0 %5374
        %s5377 = sor.u32 256, 8
        %5378 = vbcast.lane.b32.xlu0 %v5354, %s5377
        %v5379 = vpop.permute.xlu0 %5378
        %5381 = vbcast.lane.b32.xlu0 %v5358, 256
        %v5382 = vpop.permute.xlu0 %5381
        %s5384 = sor.u32 256, 8
        %5385 = vbcast.lane.b32.xlu0 %v5358, %s5384
        %v5386 = vpop.permute.xlu0 %5385
        %vm5387 = vcmp.ne.s32.totalorder %v5361, 0
        %vm5388 = vcmp.ne.s32.totalorder %v5365, 0
        %vm5389 = vcmp.ne.s32.totalorder %v5368, 0
        %vm5390 = vcmp.ne.s32.totalorder %v5372, 0
        %vm5391 = vcmp.ne.s32.totalorder %v5375, 0
        %vm5392 = vcmp.ne.s32.totalorder %v5379, 0
        %vm5393 = vcmp.ne.s32.totalorder %v5382, 0
        %vm5394 = vcmp.ne.s32.totalorder %v5386, 0
        %vm5395 = vmand %vm5331, %vm5387
        %vm5396 = vmand %vm5332, %vm5388
        %vm5397 = vmand %vm5333, %vm5389
        %vm5398 = vmand %vm5334, %vm5390
        %vm5399 = vmand %vm5335, %vm5391
        %vm5400 = vmand %vm5336, %vm5392
        %vm5401 = vmand %vm5337, %vm5393
        %vm5402 = vmand %vm5338, %vm5394
        %v5403 = vsel %vm5395, 1, 0
        %v5404 = vsel %vm5396, 1, 0
        %v5405 = vsel %vm5397, 1, 0
        %v5406 = vsel %vm5398, 1, 0
        %v5407 = vsel %vm5399, 1, 0
        %v5408 = vsel %vm5400, 1, 0
        %v5409 = vsel %vm5401, 1, 0
        %v5410 = vsel %vm5402, 1, 0
        %v5411 = vcvt.s32.f32 %v5403
        %v5412 = vcvt.s32.f32 %v5404
        %v5413 = vcvt.s32.f32 %v5405
        %v5414 = vcvt.s32.f32 %v5406
        %v5415 = vcvt.s32.f32 %v5407
        %v5416 = vcvt.s32.f32 %v5408
        %v5417 = vcvt.s32.f32 %v5409
        %v5418 = vcvt.s32.f32 %v5410
        %v5427 = vcombine.high %v5411, %v5411
        %v5429 = vunpack.c.l.s4 1966171168
        %v5430 = vunpack.c.0.s8 %v5429
        %v5431 = vlaneseq
        %v5432 = vshrl.u32 %v5431, 7
        %v5433 = vsub.s32 %v5430, %v5432
        %v5434 = vrot.slane %v5411, %v5433
        %v5436 = vunpack.c.l.s4 1966171168
        %v5437 = vunpack.c.0.s8 %v5436
        %v5438 = vlaneseq
        %v5439 = vshrl.u32 %v5438, 7
        %v5440 = vsub.s32 %v5437, %v5439
        %v5441 = vrot.slane %v5427, %v5440
        %v5442 = vcombine.high %v5434, %v5434
        %v5443 = vcombine.high %v5441, %v5441
        %v5445 = vunpack.c.l.s4 1966171168
        %v5446 = vunpack.c.0.s8 %v5445
        %v5447 = vlaneseq
        %v5448 = vshrl.u32 %v5447, 7
        %v5449 = vsub.s32 %v5446, %v5448
        %v5450 = vrot.slane %v5434, %v5449
        %v5452 = vunpack.c.l.s4 1966171168
        %v5453 = vunpack.c.0.s8 %v5452
        %v5454 = vlaneseq
        %v5455 = vshrl.u32 %v5454, 7
        %v5456 = vsub.s32 %v5453, %v5455
        %v5457 = vrot.slane %v5441, %v5456
        %v5459 = vunpack.c.l.s4 1966171168
        %v5460 = vunpack.c.0.s8 %v5459
        %v5461 = vlaneseq
        %v5462 = vshrl.u32 %v5461, 7
        %v5463 = vsub.s32 %v5460, %v5462
        %v5464 = vrot.slane %v5442, %v5463
        %v5466 = vunpack.c.l.s4 1966171168
        %v5467 = vunpack.c.0.s8 %v5466
        %v5468 = vlaneseq
        %v5469 = vshrl.u32 %v5468, 7
        %v5470 = vsub.s32 %v5467, %v5469
        %v5471 = vrot.slane %v5443, %v5470
        %v5472 = vcombine.high %v5450, %v5450
        %v5473 = vcombine.high %v5457, %v5457
        %v5474 = vcombine.high %v5464, %v5464
        %v5475 = vcombine.high %v5471, %v5471
        %v5476 = vcombine.high %v5412, %v5412
        %v5478 = vunpack.c.l.s4 1966171168
        %v5479 = vunpack.c.0.s8 %v5478
        %v5480 = vlaneseq
        %v5481 = vshrl.u32 %v5480, 7
        %v5482 = vsub.s32 %v5479, %v5481
        %v5483 = vrot.slane %v5412, %v5482
        %v5485 = vunpack.c.l.s4 1966171168
        %v5486 = vunpack.c.0.s8 %v5485
        %v5487 = vlaneseq
        %v5488 = vshrl.u32 %v5487, 7
        %v5489 = vsub.s32 %v5486, %v5488
        %v5490 = vrot.slane %v5476, %v5489
        %v5491 = vcombine.high %v5483, %v5483
        %v5492 = vcombine.high %v5490, %v5490
        %v5494 = vunpack.c.l.s4 1966171168
        %v5495 = vunpack.c.0.s8 %v5494
        %v5496 = vlaneseq
        %v5497 = vshrl.u32 %v5496, 7
        %v5498 = vsub.s32 %v5495, %v5497
        %v5499 = vrot.slane %v5483, %v5498
        %v5501 = vunpack.c.l.s4 1966171168
        %v5502 = vunpack.c.0.s8 %v5501
        %v5503 = vlaneseq
        %v5504 = vshrl.u32 %v5503, 7
        %v5505 = vsub.s32 %v5502, %v5504
        %v5506 = vrot.slane %v5490, %v5505
        %v5508 = vunpack.c.l.s4 1966171168
        %v5509 = vunpack.c.0.s8 %v5508
        %v5510 = vlaneseq
        %v5511 = vshrl.u32 %v5510, 7
        %v5512 = vsub.s32 %v5509, %v5511
        %v5513 = vrot.slane %v5491, %v5512
        %v5515 = vunpack.c.l.s4 1966171168
        %v5516 = vunpack.c.0.s8 %v5515
        %v5517 = vlaneseq
        %v5518 = vshrl.u32 %v5517, 7
        %v5519 = vsub.s32 %v5516, %v5518
        %v5520 = vrot.slane %v5492, %v5519
        %v5521 = vcombine.high %v5499, %v5499
        %v5522 = vcombine.high %v5506, %v5506
        %v5523 = vcombine.high %v5513, %v5513
        %v5524 = vcombine.high %v5520, %v5520
        %v5525 = vcombine.high %v5413, %v5413
        %v5527 = vunpack.c.l.s4 1966171168
        %v5528 = vunpack.c.0.s8 %v5527
        %v5529 = vlaneseq
        %v5530 = vshrl.u32 %v5529, 7
        %v5531 = vsub.s32 %v5528, %v5530
        %v5532 = vrot.slane %v5413, %v5531
        %v5534 = vunpack.c.l.s4 1966171168
        %v5535 = vunpack.c.0.s8 %v5534
        %v5536 = vlaneseq
        %v5537 = vshrl.u32 %v5536, 7
        %v5538 = vsub.s32 %v5535, %v5537
        %v5539 = vrot.slane %v5525, %v5538
        %v5540 = vcombine.high %v5532, %v5532
        %v5541 = vcombine.high %v5539, %v5539
        %v5543 = vunpack.c.l.s4 1966171168
        %v5544 = vunpack.c.0.s8 %v5543
        %v5545 = vlaneseq
        %v5546 = vshrl.u32 %v5545, 7
        %v5547 = vsub.s32 %v5544, %v5546
        %v5548 = vrot.slane %v5532, %v5547
        %v5550 = vunpack.c.l.s4 1966171168
        %v5551 = vunpack.c.0.s8 %v5550
        %v5552 = vlaneseq
        %v5553 = vshrl.u32 %v5552, 7
        %v5554 = vsub.s32 %v5551, %v5553
        %v5555 = vrot.slane %v5539, %v5554
        %v5557 = vunpack.c.l.s4 1966171168
        %v5558 = vunpack.c.0.s8 %v5557
        %v5559 = vlaneseq
        %v5560 = vshrl.u32 %v5559, 7
        %v5561 = vsub.s32 %v5558, %v5560
        %v5562 = vrot.slane %v5540, %v5561
        %v5564 = vunpack.c.l.s4 1966171168
        %v5565 = vunpack.c.0.s8 %v5564
        %v5566 = vlaneseq
        %v5567 = vshrl.u32 %v5566, 7
        %v5568 = vsub.s32 %v5565, %v5567
        %v5569 = vrot.slane %v5541, %v5568
        %v5570 = vcombine.high %v5548, %v5548
        %v5571 = vcombine.high %v5555, %v5555
        %v5572 = vcombine.high %v5562, %v5562
        %v5573 = vcombine.high %v5569, %v5569
        %v5574 = vcombine.high %v5414, %v5414
        %v5576 = vunpack.c.l.s4 1966171168
        %v5577 = vunpack.c.0.s8 %v5576
        %v5578 = vlaneseq
        %v5579 = vshrl.u32 %v5578, 7
        %v5580 = vsub.s32 %v5577, %v5579
        %v5581 = vrot.slane %v5414, %v5580
        %v5583 = vunpack.c.l.s4 1966171168
        %v5584 = vunpack.c.0.s8 %v5583
        %v5585 = vlaneseq
        %v5586 = vshrl.u32 %v5585, 7
        %v5587 = vsub.s32 %v5584, %v5586
        %v5588 = vrot.slane %v5574, %v5587
        %v5589 = vcombine.high %v5581, %v5581
        %v5590 = vcombine.high %v5588, %v5588
        %v5592 = vunpack.c.l.s4 1966171168
        %v5593 = vunpack.c.0.s8 %v5592
        %v5594 = vlaneseq
        %v5595 = vshrl.u32 %v5594, 7
        %v5596 = vsub.s32 %v5593, %v5595
        %v5597 = vrot.slane %v5581, %v5596
        %v5599 = vunpack.c.l.s4 1966171168
        %v5600 = vunpack.c.0.s8 %v5599
        %v5601 = vlaneseq
        %v5602 = vshrl.u32 %v5601, 7
        %v5603 = vsub.s32 %v5600, %v5602
        %v5604 = vrot.slane %v5588, %v5603
        %v5606 = vunpack.c.l.s4 1966171168
        %v5607 = vunpack.c.0.s8 %v5606
        %v5608 = vlaneseq
        %v5609 = vshrl.u32 %v5608, 7
        %v5610 = vsub.s32 %v5607, %v5609
        %v5611 = vrot.slane %v5589, %v5610
        %v5613 = vunpack.c.l.s4 1966171168
        %v5614 = vunpack.c.0.s8 %v5613
        %v5615 = vlaneseq
        %v5616 = vshrl.u32 %v5615, 7
        %v5617 = vsub.s32 %v5614, %v5616
        %v5618 = vrot.slane %v5590, %v5617
        %v5619 = vcombine.high %v5597, %v5597
        %v5620 = vcombine.high %v5604, %v5604
        %v5621 = vcombine.high %v5611, %v5611
        %v5622 = vcombine.high %v5618, %v5618
        %v5623 = vcombine.high %v5415, %v5415
        %v5625 = vunpack.c.l.s4 1966171168
        %v5626 = vunpack.c.0.s8 %v5625
        %v5627 = vlaneseq
        %v5628 = vshrl.u32 %v5627, 7
        %v5629 = vsub.s32 %v5626, %v5628
        %v5630 = vrot.slane %v5415, %v5629
        %v5632 = vunpack.c.l.s4 1966171168
        %v5633 = vunpack.c.0.s8 %v5632
        %v5634 = vlaneseq
        %v5635 = vshrl.u32 %v5634, 7
        %v5636 = vsub.s32 %v5633, %v5635
        %v5637 = vrot.slane %v5623, %v5636
        %v5638 = vcombine.high %v5630, %v5630
        %v5639 = vcombine.high %v5637, %v5637
        %v5641 = vunpack.c.l.s4 1966171168
        %v5642 = vunpack.c.0.s8 %v5641
        %v5643 = vlaneseq
        %v5644 = vshrl.u32 %v5643, 7
        %v5645 = vsub.s32 %v5642, %v5644
        %v5646 = vrot.slane %v5630, %v5645
        %v5648 = vunpack.c.l.s4 1966171168
        %v5649 = vunpack.c.0.s8 %v5648
        %v5650 = vlaneseq
        %v5651 = vshrl.u32 %v5650, 7
        %v5652 = vsub.s32 %v5649, %v5651
        %v5653 = vrot.slane %v5637, %v5652
        %v5655 = vunpack.c.l.s4 1966171168
        %v5656 = vunpack.c.0.s8 %v5655
        %v5657 = vlaneseq
        %v5658 = vshrl.u32 %v5657, 7
        %v5659 = vsub.s32 %v5656, %v5658
        %v5660 = vrot.slane %v5638, %v5659
        %v5662 = vunpack.c.l.s4 1966171168
        %v5663 = vunpack.c.0.s8 %v5662
        %v5664 = vlaneseq
        %v5665 = vshrl.u32 %v5664, 7
        %v5666 = vsub.s32 %v5663, %v5665
        %v5667 = vrot.slane %v5639, %v5666
        %v5668 = vcombine.high %v5646, %v5646
        %v5669 = vcombine.high %v5653, %v5653
        %v5670 = vcombine.high %v5660, %v5660
        %v5671 = vcombine.high %v5667, %v5667
        %v5672 = vcombine.high %v5416, %v5416
        %v5674 = vunpack.c.l.s4 1966171168
        %v5675 = vunpack.c.0.s8 %v5674
        %v5676 = vlaneseq
        %v5677 = vshrl.u32 %v5676, 7
        %v5678 = vsub.s32 %v5675, %v5677
        %v5679 = vrot.slane %v5416, %v5678
        %v5681 = vunpack.c.l.s4 1966171168
        %v5682 = vunpack.c.0.s8 %v5681
        %v5683 = vlaneseq
        %v5684 = vshrl.u32 %v5683, 7
        %v5685 = vsub.s32 %v5682, %v5684
        %v5686 = vrot.slane %v5672, %v5685
        %v5687 = vcombine.high %v5679, %v5679
        %v5688 = vcombine.high %v5686, %v5686
        %v5690 = vunpack.c.l.s4 1966171168
        %v5691 = vunpack.c.0.s8 %v5690
        %v5692 = vlaneseq
        %v5693 = vshrl.u32 %v5692, 7
        %v5694 = vsub.s32 %v5691, %v5693
        %v5695 = vrot.slane %v5679, %v5694
        %v5697 = vunpack.c.l.s4 1966171168
        %v5698 = vunpack.c.0.s8 %v5697
        %v5699 = vlaneseq
        %v5700 = vshrl.u32 %v5699, 7
        %v5701 = vsub.s32 %v5698, %v5700
        %v5702 = vrot.slane %v5686, %v5701
        %v5704 = vunpack.c.l.s4 1966171168
        %v5705 = vunpack.c.0.s8 %v5704
        %v5706 = vlaneseq
        %v5707 = vshrl.u32 %v5706, 7
        %v5708 = vsub.s32 %v5705, %v5707
        %v5709 = vrot.slane %v5687, %v5708
        %v5711 = vunpack.c.l.s4 1966171168
        %v5712 = vunpack.c.0.s8 %v5711
        %v5713 = vlaneseq
        %v5714 = vshrl.u32 %v5713, 7
        %v5715 = vsub.s32 %v5712, %v5714
        %v5716 = vrot.slane %v5688, %v5715
        %v5717 = vcombine.high %v5695, %v5695
        %v5718 = vcombine.high %v5702, %v5702
        %v5719 = vcombine.high %v5709, %v5709
        %v5720 = vcombine.high %v5716, %v5716
        %v5721 = vcombine.high %v5417, %v5417
        %v5723 = vunpack.c.l.s4 1966171168
        %v5724 = vunpack.c.0.s8 %v5723
        %v5725 = vlaneseq
        %v5726 = vshrl.u32 %v5725, 7
        %v5727 = vsub.s32 %v5724, %v5726
        %v5728 = vrot.slane %v5417, %v5727
        %v5730 = vunpack.c.l.s4 1966171168
        %v5731 = vunpack.c.0.s8 %v5730
        %v5732 = vlaneseq
        %v5733 = vshrl.u32 %v5732, 7
        %v5734 = vsub.s32 %v5731, %v5733
        %v5735 = vrot.slane %v5721, %v5734
        %v5736 = vcombine.high %v5728, %v5728
        %v5737 = vcombine.high %v5735, %v5735
        %v5739 = vunpack.c.l.s4 1966171168
        %v5740 = vunpack.c.0.s8 %v5739
        %v5741 = vlaneseq
        %v5742 = vshrl.u32 %v5741, 7
        %v5743 = vsub.s32 %v5740, %v5742
        %v5744 = vrot.slane %v5728, %v5743
        %v5746 = vunpack.c.l.s4 1966171168
        %v5747 = vunpack.c.0.s8 %v5746
        %v5748 = vlaneseq
        %v5749 = vshrl.u32 %v5748, 7
        %v5750 = vsub.s32 %v5747, %v5749
        %v5751 = vrot.slane %v5735, %v5750
        %v5753 = vunpack.c.l.s4 1966171168
        %v5754 = vunpack.c.0.s8 %v5753
        %v5755 = vlaneseq
        %v5756 = vshrl.u32 %v5755, 7
        %v5757 = vsub.s32 %v5754, %v5756
        %v5758 = vrot.slane %v5736, %v5757
        %v5760 = vunpack.c.l.s4 1966171168
        %v5761 = vunpack.c.0.s8 %v5760
        %v5762 = vlaneseq
        %v5763 = vshrl.u32 %v5762, 7
        %v5764 = vsub.s32 %v5761, %v5763
        %v5765 = vrot.slane %v5737, %v5764
        %v5766 = vcombine.high %v5744, %v5744
        %v5767 = vcombine.high %v5751, %v5751
        %v5768 = vcombine.high %v5758, %v5758
        %v5769 = vcombine.high %v5765, %v5765
        %v5770 = vcombine.high %v5418, %v5418
        %v5772 = vunpack.c.l.s4 1966171168
        %v5773 = vunpack.c.0.s8 %v5772
        %v5774 = vlaneseq
        %v5775 = vshrl.u32 %v5774, 7
        %v5776 = vsub.s32 %v5773, %v5775
        %v5777 = vrot.slane %v5418, %v5776
        %v5779 = vunpack.c.l.s4 1966171168
        %v5780 = vunpack.c.0.s8 %v5779
        %v5781 = vlaneseq
        %v5782 = vshrl.u32 %v5781, 7
        %v5783 = vsub.s32 %v5780, %v5782
        %v5784 = vrot.slane %v5770, %v5783
        %v5785 = vcombine.high %v5777, %v5777
        %v5786 = vcombine.high %v5784, %v5784
        %v5788 = vunpack.c.l.s4 1966171168
        %v5789 = vunpack.c.0.s8 %v5788
        %v5790 = vlaneseq
        %v5791 = vshrl.u32 %v5790, 7
        %v5792 = vsub.s32 %v5789, %v5791
        %v5793 = vrot.slane %v5777, %v5792
        %v5795 = vunpack.c.l.s4 1966171168
        %v5796 = vunpack.c.0.s8 %v5795
        %v5797 = vlaneseq
        %v5798 = vshrl.u32 %v5797, 7
        %v5799 = vsub.s32 %v5796, %v5798
        %v5800 = vrot.slane %v5784, %v5799
        %v5802 = vunpack.c.l.s4 1966171168
        %v5803 = vunpack.c.0.s8 %v5802
        %v5804 = vlaneseq
        %v5805 = vshrl.u32 %v5804, 7
        %v5806 = vsub.s32 %v5803, %v5805
        %v5807 = vrot.slane %v5785, %v5806
        %v5809 = vunpack.c.l.s4 1966171168
        %v5810 = vunpack.c.0.s8 %v5809
        %v5811 = vlaneseq
        %v5812 = vshrl.u32 %v5811, 7
        %v5813 = vsub.s32 %v5810, %v5812
        %v5814 = vrot.slane %v5786, %v5813
        %v5815 = vcombine.high %v5793, %v5793
        %v5816 = vcombine.high %v5800, %v5800
        %v5817 = vcombine.high %v5807, %v5807
        %v5818 = vcombine.high %v5814, %v5814
        %v5819 = vcombine.low %v5450, %v5464
        %v5820 = vcombine.low %v5472, %v5474
        %v5821 = vcombine.low %v5457, %v5471
        %v5822 = vcombine.low %v5473, %v5475
        %v5824 = vunpack.c.l.s4 1966171168
        %v5825 = vunpack.c.0.s8 %v5824
        %v5826 = vlaneseq
        %v5827 = vshrl.u32 %v5826, 7
        %v5828 = vsub.s32 %v5825, %v5827
        %v5829 = vrot.slane %v5819, %v5828
        %v5831 = vunpack.c.l.s4 1966171168
        %v5832 = vunpack.c.0.s8 %v5831
        %v5833 = vlaneseq
        %v5834 = vshrl.u32 %v5833, 7
        %v5835 = vsub.s32 %v5832, %v5834
        %v5836 = vrot.slane %v5820, %v5835
        %v5838 = vunpack.c.l.s4 1966171168
        %v5839 = vunpack.c.0.s8 %v5838
        %v5840 = vlaneseq
        %v5841 = vshrl.u32 %v5840, 7
        %v5842 = vsub.s32 %v5839, %v5841
        %v5843 = vrot.slane %v5821, %v5842
        %v5845 = vunpack.c.l.s4 1966171168
        %v5846 = vunpack.c.0.s8 %v5845
        %v5847 = vlaneseq
        %v5848 = vshrl.u32 %v5847, 7
        %v5849 = vsub.s32 %v5846, %v5848
        %v5850 = vrot.slane %v5822, %v5849
        %v5851 = vcombine.low %v5829, %v5836
        %v5852 = vcombine.low %v5843, %v5850
        %v5854 = vunpack.c.l.s4 1966171168
        %v5855 = vunpack.c.0.s8 %v5854
        %v5856 = vlaneseq
        %v5857 = vshrl.u32 %v5856, 7
        %v5858 = vsub.s32 %v5855, %v5857
        %v5859 = vrot.slane %v5851, %v5858
        %v5861 = vunpack.c.l.s4 1966171168
        %v5862 = vunpack.c.0.s8 %v5861
        %v5863 = vlaneseq
        %v5864 = vshrl.u32 %v5863, 7
        %v5865 = vsub.s32 %v5862, %v5864
        %v5866 = vrot.slane %v5852, %v5865
        %v5867 = vcombine.low %v5859, %v5866
        %v5868 = vcombine.low %v5499, %v5513
        %v5869 = vcombine.low %v5521, %v5523
        %v5870 = vcombine.low %v5506, %v5520
        %v5871 = vcombine.low %v5522, %v5524
        %v5873 = vunpack.c.l.s4 1966171168
        %v5874 = vunpack.c.0.s8 %v5873
        %v5875 = vlaneseq
        %v5876 = vshrl.u32 %v5875, 7
        %v5877 = vsub.s32 %v5874, %v5876
        %v5878 = vrot.slane %v5868, %v5877
        %v5880 = vunpack.c.l.s4 1966171168
        %v5881 = vunpack.c.0.s8 %v5880
        %v5882 = vlaneseq
        %v5883 = vshrl.u32 %v5882, 7
        %v5884 = vsub.s32 %v5881, %v5883
        %v5885 = vrot.slane %v5869, %v5884
        %v5887 = vunpack.c.l.s4 1966171168
        %v5888 = vunpack.c.0.s8 %v5887
        %v5889 = vlaneseq
        %v5890 = vshrl.u32 %v5889, 7
        %v5891 = vsub.s32 %v5888, %v5890
        %v5892 = vrot.slane %v5870, %v5891
        %v5894 = vunpack.c.l.s4 1966171168
        %v5895 = vunpack.c.0.s8 %v5894
        %v5896 = vlaneseq
        %v5897 = vshrl.u32 %v5896, 7
        %v5898 = vsub.s32 %v5895, %v5897
        %v5899 = vrot.slane %v5871, %v5898
        %v5900 = vcombine.low %v5878, %v5885
        %v5901 = vcombine.low %v5892, %v5899
        %v5903 = vunpack.c.l.s4 1966171168
        %v5904 = vunpack.c.0.s8 %v5903
        %v5905 = vlaneseq
        %v5906 = vshrl.u32 %v5905, 7
        %v5907 = vsub.s32 %v5904, %v5906
        %v5908 = vrot.slane %v5900, %v5907
        %v5910 = vunpack.c.l.s4 1966171168
        %v5911 = vunpack.c.0.s8 %v5910
        %v5912 = vlaneseq
        %v5913 = vshrl.u32 %v5912, 7
        %v5914 = vsub.s32 %v5911, %v5913
        %v5915 = vrot.slane %v5901, %v5914
        %v5916 = vcombine.low %v5908, %v5915
        %v5917 = vcombine.low %v5548, %v5562
        %v5918 = vcombine.low %v5570, %v5572
        %v5919 = vcombine.low %v5555, %v5569
        %v5920 = vcombine.low %v5571, %v5573
        %v5922 = vunpack.c.l.s4 1966171168
        %v5923 = vunpack.c.0.s8 %v5922
        %v5924 = vlaneseq
        %v5925 = vshrl.u32 %v5924, 7
        %v5926 = vsub.s32 %v5923, %v5925
        %v5927 = vrot.slane %v5917, %v5926
        %v5929 = vunpack.c.l.s4 1966171168
        %v5930 = vunpack.c.0.s8 %v5929
        %v5931 = vlaneseq
        %v5932 = vshrl.u32 %v5931, 7
        %v5933 = vsub.s32 %v5930, %v5932
        %v5934 = vrot.slane %v5918, %v5933
        %v5936 = vunpack.c.l.s4 1966171168
        %v5937 = vunpack.c.0.s8 %v5936
        %v5938 = vlaneseq
        %v5939 = vshrl.u32 %v5938, 7
        %v5940 = vsub.s32 %v5937, %v5939
        %v5941 = vrot.slane %v5919, %v5940
        %v5943 = vunpack.c.l.s4 1966171168
        %v5944 = vunpack.c.0.s8 %v5943
        %v5945 = vlaneseq
        %v5946 = vshrl.u32 %v5945, 7
        %v5947 = vsub.s32 %v5944, %v5946
        %v5948 = vrot.slane %v5920, %v5947
        %v5949 = vcombine.low %v5927, %v5934
        %v5950 = vcombine.low %v5941, %v5948
        %v5952 = vunpack.c.l.s4 1966171168
        %v5953 = vunpack.c.0.s8 %v5952
        %v5954 = vlaneseq
        %v5955 = vshrl.u32 %v5954, 7
        %v5956 = vsub.s32 %v5953, %v5955
        %v5957 = vrot.slane %v5949, %v5956
        %v5959 = vunpack.c.l.s4 1966171168
        %v5960 = vunpack.c.0.s8 %v5959
        %v5961 = vlaneseq
        %v5962 = vshrl.u32 %v5961, 7
        %v5963 = vsub.s32 %v5960, %v5962
        %v5964 = vrot.slane %v5950, %v5963
        %v5965 = vcombine.low %v5957, %v5964
        %v5966 = vcombine.low %v5597, %v5611
        %v5967 = vcombine.low %v5619, %v5621
        %v5968 = vcombine.low %v5604, %v5618
        %v5969 = vcombine.low %v5620, %v5622
        %v5971 = vunpack.c.l.s4 1966171168
        %v5972 = vunpack.c.0.s8 %v5971
        %v5973 = vlaneseq
        %v5974 = vshrl.u32 %v5973, 7
        %v5975 = vsub.s32 %v5972, %v5974
        %v5976 = vrot.slane %v5966, %v5975
        %v5978 = vunpack.c.l.s4 1966171168
        %v5979 = vunpack.c.0.s8 %v5978
        %v5980 = vlaneseq
        %v5981 = vshrl.u32 %v5980, 7
        %v5982 = vsub.s32 %v5979, %v5981
        %v5983 = vrot.slane %v5967, %v5982
        %v5985 = vunpack.c.l.s4 1966171168
        %v5986 = vunpack.c.0.s8 %v5985
        %v5987 = vlaneseq
        %v5988 = vshrl.u32 %v5987, 7
        %v5989 = vsub.s32 %v5986, %v5988
        %v5990 = vrot.slane %v5968, %v5989
        %v5992 = vunpack.c.l.s4 1966171168
        %v5993 = vunpack.c.0.s8 %v5992
        %v5994 = vlaneseq
        %v5995 = vshrl.u32 %v5994, 7
        %v5996 = vsub.s32 %v5993, %v5995
        %v5997 = vrot.slane %v5969, %v5996
        %v5998 = vcombine.low %v5976, %v5983
        %v5999 = vcombine.low %v5990, %v5997
        %v6001 = vunpack.c.l.s4 1966171168
        %v6002 = vunpack.c.0.s8 %v6001
        %v6003 = vlaneseq
        %v6004 = vshrl.u32 %v6003, 7
        %v6005 = vsub.s32 %v6002, %v6004
        %v6006 = vrot.slane %v5998, %v6005
        %v6008 = vunpack.c.l.s4 1966171168
        %v6009 = vunpack.c.0.s8 %v6008
        %v6010 = vlaneseq
        %v6011 = vshrl.u32 %v6010, 7
        %v6012 = vsub.s32 %v6009, %v6011
        %v6013 = vrot.slane %v5999, %v6012
        %v6014 = vcombine.low %v6006, %v6013
        %v6015 = vcombine.low %v5646, %v5660
        %v6016 = vcombine.low %v5668, %v5670
        %v6017 = vcombine.low %v5653, %v5667
        %v6018 = vcombine.low %v5669, %v5671
        %v6020 = vunpack.c.l.s4 1966171168
        %v6021 = vunpack.c.0.s8 %v6020
        %v6022 = vlaneseq
        %v6023 = vshrl.u32 %v6022, 7
        %v6024 = vsub.s32 %v6021, %v6023
        %v6025 = vrot.slane %v6015, %v6024
        %v6027 = vunpack.c.l.s4 1966171168
        %v6028 = vunpack.c.0.s8 %v6027
        %v6029 = vlaneseq
        %v6030 = vshrl.u32 %v6029, 7
        %v6031 = vsub.s32 %v6028, %v6030
        %v6032 = vrot.slane %v6016, %v6031
        %v6034 = vunpack.c.l.s4 1966171168
        %v6035 = vunpack.c.0.s8 %v6034
        %v6036 = vlaneseq
        %v6037 = vshrl.u32 %v6036, 7
        %v6038 = vsub.s32 %v6035, %v6037
        %v6039 = vrot.slane %v6017, %v6038
        %v6041 = vunpack.c.l.s4 1966171168
        %v6042 = vunpack.c.0.s8 %v6041
        %v6043 = vlaneseq
        %v6044 = vshrl.u32 %v6043, 7
        %v6045 = vsub.s32 %v6042, %v6044
        %v6046 = vrot.slane %v6018, %v6045
        %v6047 = vcombine.low %v6025, %v6032
        %v6048 = vcombine.low %v6039, %v6046
        %v6050 = vunpack.c.l.s4 1966171168
        %v6051 = vunpack.c.0.s8 %v6050
        %v6052 = vlaneseq
        %v6053 = vshrl.u32 %v6052, 7
        %v6054 = vsub.s32 %v6051, %v6053
        %v6055 = vrot.slane %v6047, %v6054
        %v6057 = vunpack.c.l.s4 1966171168
        %v6058 = vunpack.c.0.s8 %v6057
        %v6059 = vlaneseq
        %v6060 = vshrl.u32 %v6059, 7
        %v6061 = vsub.s32 %v6058, %v6060
        %v6062 = vrot.slane %v6048, %v6061
        %v6063 = vcombine.low %v6055, %v6062
        %v6064 = vcombine.low %v5695, %v5709
        %v6065 = vcombine.low %v5717, %v5719
        %v6066 = vcombine.low %v5702, %v5716
        %v6067 = vcombine.low %v5718, %v5720
        %v6069 = vunpack.c.l.s4 1966171168
        %v6070 = vunpack.c.0.s8 %v6069
        %v6071 = vlaneseq
        %v6072 = vshrl.u32 %v6071, 7
        %v6073 = vsub.s32 %v6070, %v6072
        %v6074 = vrot.slane %v6064, %v6073
        %v6076 = vunpack.c.l.s4 1966171168
        %v6077 = vunpack.c.0.s8 %v6076
        %v6078 = vlaneseq
        %v6079 = vshrl.u32 %v6078, 7
        %v6080 = vsub.s32 %v6077, %v6079
        %v6081 = vrot.slane %v6065, %v6080
        %v6083 = vunpack.c.l.s4 1966171168
        %v6084 = vunpack.c.0.s8 %v6083
        %v6085 = vlaneseq
        %v6086 = vshrl.u32 %v6085, 7
        %v6087 = vsub.s32 %v6084, %v6086
        %v6088 = vrot.slane %v6066, %v6087
        %v6090 = vunpack.c.l.s4 1966171168
        %v6091 = vunpack.c.0.s8 %v6090
        %v6092 = vlaneseq
        %v6093 = vshrl.u32 %v6092, 7
        %v6094 = vsub.s32 %v6091, %v6093
        %v6095 = vrot.slane %v6067, %v6094
        %v6096 = vcombine.low %v6074, %v6081
        %v6097 = vcombine.low %v6088, %v6095
        %v6099 = vunpack.c.l.s4 1966171168
        %v6100 = vunpack.c.0.s8 %v6099
        %v6101 = vlaneseq
        %v6102 = vshrl.u32 %v6101, 7
        %v6103 = vsub.s32 %v6100, %v6102
        %v6104 = vrot.slane %v6096, %v6103
        %v6106 = vunpack.c.l.s4 1966171168
        %v6107 = vunpack.c.0.s8 %v6106
        %v6108 = vlaneseq
        %v6109 = vshrl.u32 %v6108, 7
        %v6110 = vsub.s32 %v6107, %v6109
        %v6111 = vrot.slane %v6097, %v6110
        %v6112 = vcombine.low %v6104, %v6111
        %v6113 = vcombine.low %v5744, %v5758
        %v6114 = vcombine.low %v5766, %v5768
        %v6115 = vcombine.low %v5751, %v5765
        %v6116 = vcombine.low %v5767, %v5769
        %v6118 = vunpack.c.l.s4 1966171168
        %v6119 = vunpack.c.0.s8 %v6118
        %v6120 = vlaneseq
        %v6121 = vshrl.u32 %v6120, 7
        %v6122 = vsub.s32 %v6119, %v6121
        %v6123 = vrot.slane %v6113, %v6122
        %v6125 = vunpack.c.l.s4 1966171168
        %v6126 = vunpack.c.0.s8 %v6125
        %v6127 = vlaneseq
        %v6128 = vshrl.u32 %v6127, 7
        %v6129 = vsub.s32 %v6126, %v6128
        %v6130 = vrot.slane %v6114, %v6129
        %v6132 = vunpack.c.l.s4 1966171168
        %v6133 = vunpack.c.0.s8 %v6132
        %v6134 = vlaneseq
        %v6135 = vshrl.u32 %v6134, 7
        %v6136 = vsub.s32 %v6133, %v6135
        %v6137 = vrot.slane %v6115, %v6136
        %v6139 = vunpack.c.l.s4 1966171168
        %v6140 = vunpack.c.0.s8 %v6139
        %v6141 = vlaneseq
        %v6142 = vshrl.u32 %v6141, 7
        %v6143 = vsub.s32 %v6140, %v6142
        %v6144 = vrot.slane %v6116, %v6143
        %v6145 = vcombine.low %v6123, %v6130
        %v6146 = vcombine.low %v6137, %v6144
        %v6148 = vunpack.c.l.s4 1966171168
        %v6149 = vunpack.c.0.s8 %v6148
        %v6150 = vlaneseq
        %v6151 = vshrl.u32 %v6150, 7
        %v6152 = vsub.s32 %v6149, %v6151
        %v6153 = vrot.slane %v6145, %v6152
        %v6155 = vunpack.c.l.s4 1966171168
        %v6156 = vunpack.c.0.s8 %v6155
        %v6157 = vlaneseq
        %v6158 = vshrl.u32 %v6157, 7
        %v6159 = vsub.s32 %v6156, %v6158
        %v6160 = vrot.slane %v6146, %v6159
        %v6161 = vcombine.low %v6153, %v6160
        %v6162 = vcombine.low %v5793, %v5807
        %v6163 = vcombine.low %v5815, %v5817
        %v6164 = vcombine.low %v5800, %v5814
        %v6165 = vcombine.low %v5816, %v5818
        %v6167 = vunpack.c.l.s4 1966171168
        %v6168 = vunpack.c.0.s8 %v6167
        %v6169 = vlaneseq
        %v6170 = vshrl.u32 %v6169, 7
        %v6171 = vsub.s32 %v6168, %v6170
        %v6172 = vrot.slane %v6162, %v6171
        %v6174 = vunpack.c.l.s4 1966171168
        %v6175 = vunpack.c.0.s8 %v6174
        %v6176 = vlaneseq
        %v6177 = vshrl.u32 %v6176, 7
        %v6178 = vsub.s32 %v6175, %v6177
        %v6179 = vrot.slane %v6163, %v6178
        %v6181 = vunpack.c.l.s4 1966171168
        %v6182 = vunpack.c.0.s8 %v6181
        %v6183 = vlaneseq
        %v6184 = vshrl.u32 %v6183, 7
        %v6185 = vsub.s32 %v6182, %v6184
        %v6186 = vrot.slane %v6164, %v6185
        %v6188 = vunpack.c.l.s4 1966171168
        %v6189 = vunpack.c.0.s8 %v6188
        %v6190 = vlaneseq
        %v6191 = vshrl.u32 %v6190, 7
        %v6192 = vsub.s32 %v6189, %v6191
        %v6193 = vrot.slane %v6165, %v6192
        %v6194 = vcombine.low %v6172, %v6179
        %v6195 = vcombine.low %v6186, %v6193
        %v6197 = vunpack.c.l.s4 1966171168
        %v6198 = vunpack.c.0.s8 %v6197
        %v6199 = vlaneseq
        %v6200 = vshrl.u32 %v6199, 7
        %v6201 = vsub.s32 %v6198, %v6200
        %v6202 = vrot.slane %v6194, %v6201
        %v6204 = vunpack.c.l.s4 1966171168
        %v6205 = vunpack.c.0.s8 %v6204
        %v6206 = vlaneseq
        %v6207 = vshrl.u32 %v6206, 7
        %v6208 = vsub.s32 %v6205, %v6207
        %v6209 = vrot.slane %v6195, %v6208
        %v6210 = vcombine.low %v6202, %v6209
        %6211 = vset.pattern.permute.xlu0 0
        %6212 = vperm.xlu0 %6211, %v5867
        %v6213 = vpop.permute.xlu0 %6212
        %6214 = vset.pattern.permute.xlu0 0
        %6215 = vperm.xlu0 %6214, %v5916
        %v6216 = vpop.permute.xlu0 %6215
        %6217 = vset.pattern.permute.xlu0 0
        %6218 = vperm.xlu0 %6217, %v5965
        %v6219 = vpop.permute.xlu0 %6218
        %6220 = vset.pattern.permute.xlu0 0
        %6221 = vperm.xlu0 %6220, %v6014
        %v6222 = vpop.permute.xlu0 %6221
        %6223 = vset.pattern.permute.xlu0 0
        %6224 = vperm.xlu0 %6223, %v6063
        %v6225 = vpop.permute.xlu0 %6224
        %6226 = vset.pattern.permute.xlu0 0
        %6227 = vperm.xlu0 %6226, %v6112
        %v6228 = vpop.permute.xlu0 %6227
        %6229 = vset.pattern.permute.xlu0 0
        %6230 = vperm.xlu0 %6229, %v6161
        %v6231 = vpop.permute.xlu0 %6230
        %6232 = vset.pattern.permute.xlu0 0
        %6233 = vperm.xlu0 %6232, %v6210
        %v6234 = vpop.permute.xlu0 %6233
        %v6235 = vlaneseq
        %v6236 = vshrl.u32 %v6235, 7
        %v6237 = vsub.s32 %v5015, %v6236
        %v6238 = vrot.slane %v6213, %v6237
        %v6239 = vlaneseq
        %v6240 = vshrl.u32 %v6239, 7
        %v6241 = vsub.s32 %v5020, %v6240
        %v6242 = vrot.slane %v6216, %v6241
        %v6243 = vsel %vm5025, %v6242, %v6238
        %v6244 = vlaneseq
        %v6245 = vshrl.u32 %v6244, 7
        %v6246 = vsub.s32 %v5015, %v6245
        %v6247 = vrot.slane %v6219, %v6246
        %v6248 = vlaneseq
        %v6249 = vshrl.u32 %v6248, 7
        %v6250 = vsub.s32 %v5020, %v6249
        %v6251 = vrot.slane %v6222, %v6250
        %v6252 = vsel %vm5025, %v6251, %v6247
        %v6253 = vlaneseq
        %v6254 = vshrl.u32 %v6253, 7
        %v6255 = vsub.s32 %v5015, %v6254
        %v6256 = vrot.slane %v6225, %v6255
        %v6257 = vlaneseq
        %v6258 = vshrl.u32 %v6257, 7
        %v6259 = vsub.s32 %v5020, %v6258
        %v6260 = vrot.slane %v6228, %v6259
        %v6261 = vsel %vm5025, %v6260, %v6256
        %v6262 = vlaneseq
        %v6263 = vshrl.u32 %v6262, 7
        %v6264 = vsub.s32 %v5015, %v6263
        %v6265 = vrot.slane %v6231, %v6264
        %v6266 = vlaneseq
        %v6267 = vshrl.u32 %v6266, 7
        %v6268 = vsub.s32 %v5020, %v6267
        %v6269 = vrot.slane %v6234, %v6268
        %v6270 = vsel %vm5025, %v6269, %v6265
        %v6272 = vunpack.c.l.s4 1966171168
        %v6273 = vunpack.c.0.s8 %v6272
        %v6274 = vlaneseq
        %v6275 = vshrl.u32 %v6274, 7
        %v6276 = vsub.s32 %v6273, %v6275
        %v6277 = vrot.slane %v6243, %v6276
        %v6279 = vunpack.c.l.s4 1966171168
        %v6280 = vunpack.c.0.s8 %v6279
        %v6281 = vlaneseq
        %v6282 = vshrl.u32 %v6281, 7
        %v6283 = vsub.s32 %v6280, %v6282
        %v6284 = vrot.slane %v6277, %v6283
        %v6286 = vunpack.c.l.s4 1966171168
        %v6287 = vunpack.c.0.s8 %v6286
        %v6288 = vlaneseq
        %v6289 = vshrl.u32 %v6288, 7
        %v6290 = vsub.s32 %v6287, %v6289
        %v6291 = vrot.slane %v6252, %v6290
        %v6293 = vunpack.c.l.s4 1966171168
        %v6294 = vunpack.c.0.s8 %v6293
        %v6295 = vlaneseq
        %v6296 = vshrl.u32 %v6295, 7
        %v6297 = vsub.s32 %v6294, %v6296
        %v6298 = vrot.slane %v6291, %v6297
        %v6300 = vunpack.c.l.s4 1966171168
        %v6301 = vunpack.c.0.s8 %v6300
        %v6302 = vlaneseq
        %v6303 = vshrl.u32 %v6302, 7
        %v6304 = vsub.s32 %v6301, %v6303
        %v6305 = vrot.slane %v6261, %v6304
        %v6307 = vunpack.c.l.s4 1966171168
        %v6308 = vunpack.c.0.s8 %v6307
        %v6309 = vlaneseq
        %v6310 = vshrl.u32 %v6309, 7
        %v6311 = vsub.s32 %v6308, %v6310
        %v6312 = vrot.slane %v6305, %v6311
        %v6314 = vunpack.c.l.s4 1966171168
        %v6315 = vunpack.c.0.s8 %v6314
        %v6316 = vlaneseq
        %v6317 = vshrl.u32 %v6316, 7
        %v6318 = vsub.s32 %v6315, %v6317
        %v6319 = vrot.slane %v6270, %v6318
        %v6321 = vunpack.c.l.s4 1966171168
        %v6322 = vunpack.c.0.s8 %v6321
        %v6323 = vlaneseq
        %v6324 = vshrl.u32 %v6323, 7
        %v6325 = vsub.s32 %v6322, %v6324
        %v6326 = vrot.slane %v6319, %v6325
        %v6331 = vsub.f32 %v630, %v6284
        %v6332 = vsub.f32 %v631, %v6298
        %v6333 = vsub.f32 %v632, %v6312
        %v6334 = vsub.f32 %v633, %v6326
        %v6335 = vcombine.low %v630, %v631
        %v6336 = vcombine.low %v632, %v633
        %v6338 = vunpack.c.l.s4 1966171168
        %v6339 = vunpack.c.0.s8 %v6338
        %v6340 = vlaneseq
        %v6341 = vshrl.u32 %v6340, 7
        %v6342 = vsub.s32 %v6339, %v6341
        %v6343 = vrot.slane %v6335, %v6342
        %v6345 = vunpack.c.l.s4 1966171168
        %v6346 = vunpack.c.0.s8 %v6345
        %v6347 = vlaneseq
        %v6348 = vshrl.u32 %v6347, 7
        %v6349 = vsub.s32 %v6346, %v6348
        %v6350 = vrot.slane %v6336, %v6349
        %v6351 = vcombine.low %v6343, %v6350
        %v6353 = vunpack.c.l.s4 1966171168
        %v6354 = vunpack.c.0.s8 %v6353
        %v6355 = vlaneseq
        %v6356 = vshrl.u32 %v6355, 7
        %v6357 = vsub.s32 %v6354, %v6356
        %v6358 = vrot.slane %v6351, %v6357
        %v6360 = vsel %vm5147, %v6358, 0.0
        %6361 = vadd.xlane.f32.xlu0 %v6360
        %v6362 = vpop.xlane.xlu0 %6361
        %v6363 = vmax.f32 %v6362, 1.0
        %6364 = vset.pattern.permute.xlu0 0
        %6365 = vperm.xlu0 %6364, %v5411
        %v6366 = vpop.permute.xlu0 %6365
        %6367 = vset.pattern.permute.xlu0 0
        %6368 = vperm.xlu0 %6367, %v5412
        %v6369 = vpop.permute.xlu0 %6368
        %6370 = vset.pattern.permute.xlu0 0
        %6371 = vperm.xlu0 %6370, %v5413
        %v6372 = vpop.permute.xlu0 %6371
        %6373 = vset.pattern.permute.xlu0 0
        %6374 = vperm.xlu0 %6373, %v5414
        %v6375 = vpop.permute.xlu0 %6374
        %6376 = vset.pattern.permute.xlu0 0
        %6377 = vperm.xlu0 %6376, %v5415
        %v6378 = vpop.permute.xlu0 %6377
        %6379 = vset.pattern.permute.xlu0 0
        %6380 = vperm.xlu0 %6379, %v5416
        %v6381 = vpop.permute.xlu0 %6380
        %6382 = vset.pattern.permute.xlu0 0
        %6383 = vperm.xlu0 %6382, %v5417
        %v6384 = vpop.permute.xlu0 %6383
        %6385 = vset.pattern.permute.xlu0 0
        %6386 = vperm.xlu0 %6385, %v5418
        %v6387 = vpop.permute.xlu0 %6386
        %v6388 = vlaneseq
        %v6389 = vshrl.u32 %v6388, 7
        %v6390 = vsub.s32 %v5015, %v6389
        %v6391 = vrot.slane %v6366, %v6390
        %v6392 = vlaneseq
        %v6393 = vshrl.u32 %v6392, 7
        %v6394 = vsub.s32 %v5020, %v6393
        %v6395 = vrot.slane %v6369, %v6394
        %v6396 = vsel %vm5025, %v6395, %v6391
        %v6397 = vlaneseq
        %v6398 = vshrl.u32 %v6397, 7
        %v6399 = vsub.s32 %v5015, %v6398
        %v6400 = vrot.slane %v6372, %v6399
        %v6401 = vlaneseq
        %v6402 = vshrl.u32 %v6401, 7
        %v6403 = vsub.s32 %v5020, %v6402
        %v6404 = vrot.slane %v6375, %v6403
        %v6405 = vsel %vm5025, %v6404, %v6400
        %v6406 = vlaneseq
        %v6407 = vshrl.u32 %v6406, 7
        %v6408 = vsub.s32 %v5015, %v6407
        %v6409 = vrot.slane %v6378, %v6408
        %v6410 = vlaneseq
        %v6411 = vshrl.u32 %v6410, 7
        %v6412 = vsub.s32 %v5020, %v6411
        %v6413 = vrot.slane %v6381, %v6412
        %v6414 = vsel %vm5025, %v6413, %v6409
        %v6415 = vlaneseq
        %v6416 = vshrl.u32 %v6415, 7
        %v6417 = vsub.s32 %v5015, %v6416
        %v6418 = vrot.slane %v6384, %v6417
        %v6419 = vlaneseq
        %v6420 = vshrl.u32 %v6419, 7
        %v6421 = vsub.s32 %v5020, %v6420
        %v6422 = vrot.slane %v6387, %v6421
        %v6423 = vsel %vm5025, %v6422, %v6418
        %vm6424 = vcmask 1041409
        %v6425 = vsel %vm6424, %v6405, %v6396
        %vm6426 = vcmask 1042434
        %v6427 = vsel %vm6426, %v6414, %v6425
        %vm6428 = vcmask 1043459
        %v6429 = vsel %vm6428, %v6423, %v6427
        %v6431 = vsel %vm5147, %v6429, 0.0
        %6432 = vadd.xlane.f32.xlu0 %v6431
        %v6433 = vpop.xlane.xlu0 %6432
        %v6434 = vmax.f32 %v6433, 1.0
        %v6439 = vcombine.low %v6331, %v6332
        %v6440 = vcombine.low %v6333, %v6334
        %v6442 = vunpack.c.l.s4 1966171168
        %v6443 = vunpack.c.0.s8 %v6442
        %v6444 = vlaneseq
        %v6445 = vshrl.u32 %v6444, 7
        %v6446 = vsub.s32 %v6443, %v6445
        %v6447 = vrot.slane %v6439, %v6446
        %v6449 = vunpack.c.l.s4 1966171168
        %v6450 = vunpack.c.0.s8 %v6449
        %v6451 = vlaneseq
        %v6452 = vshrl.u32 %v6451, 7
        %v6453 = vsub.s32 %v6450, %v6452
        %v6454 = vrot.slane %v6440, %v6453
        %v6455 = vcombine.low %v6447, %v6454
        %v6457 = vunpack.c.l.s4 1966171168
        %v6458 = vunpack.c.0.s8 %v6457
        %v6459 = vlaneseq
        %v6460 = vshrl.u32 %v6459, 7
        %v6461 = vsub.s32 %v6458, %v6460
        %v6462 = vrot.slane %v6455, %v6461
        %v6464 = vsel %vm5147, %v6462, 0.0
        %6465 = vadd.xlane.f32.xlu0 %v6464
        %v6466 = vpop.xlane.xlu0 %6465
        %v6467 = vmax.f32 %v6466, 1.0
        %v6468 = vld [vmem:[#allocation12] sm:$0xf]
        %v6469 = vld [vmem:[#allocation12 + $0x4] sm:$0xf]
        %v6470 = vld [vmem:[#allocation12 + $0x8] sm:$0xf]
        %v6471 = vld [vmem:[#allocation12 + $0xc] sm:$0xf]
        %v6472 = vld [vmem:[#allocation12 + $0x10] sm:$0xf]
        %v6473 = vld [vmem:[#allocation12 + $0x14] sm:$0xf]
        %v6474 = vld [vmem:[#allocation12 + $0x18] sm:$0xf]
        %v6475 = vld [vmem:[#allocation12 + $0x1c] sm:$0xf]
        %v6476 = vld [vmem:[#allocation12 + $0x20] sm:$0xf]
        %v6477 = vld [vmem:[#allocation12 + $0x24] sm:$0xf]
        %v6478 = vld [vmem:[#allocation12 + $0x28] sm:$0xf]
        %v6479 = vld [vmem:[#allocation12 + $0x2c] sm:$0xf]
        %v6480 = vld [vmem:[#allocation12 + $0x30] sm:$0xf]
        %v6481 = vld [vmem:[#allocation12 + $0x34] sm:$0xf]
        %v6482 = vld [vmem:[#allocation12 + $0x38] sm:$0xf]
        %v6483 = vld [vmem:[#allocation12 + $0x3c] sm:$0xf]
        %v6484 = vld [vmem:[#allocation12 + $0x40] sm:$0xf]
        %v6485 = vld [vmem:[#allocation12 + $0x44] sm:$0xf]
        %v6486 = vld [vmem:[#allocation12 + $0x48] sm:$0xf]
        %v6487 = vld [vmem:[#allocation12 + $0x4c] sm:$0xf]
        %v6488 = vld [vmem:[#allocation12 + $0x50] sm:$0xf]
        %v6489 = vld [vmem:[#allocation12 + $0x54] sm:$0xf]
        %v6490 = vld [vmem:[#allocation12 + $0x58] sm:$0xf]
        %v6491 = vld [vmem:[#allocation12 + $0x5c] sm:$0xf]
        %v6492 = vld [vmem:[#allocation12 + $0x60] sm:$0xf]
        %v6493 = vld [vmem:[#allocation12 + $0x64] sm:$0xf]
        %v6494 = vld [vmem:[#allocation12 + $0x68] sm:$0xf]
        %v6495 = vld [vmem:[#allocation12 + $0x6c] sm:$0xf]
        %v6496 = vld [vmem:[#allocation12 + $0x70] sm:$0xf]
        %v6497 = vld [vmem:[#allocation12 + $0x74] sm:$0xf]
        %v6498 = vld [vmem:[#allocation12 + $0x78] sm:$0xf]
        %v6499 = vld [vmem:[#allocation12 + $0x7c] sm:$0xf]
        %v6500 = vld [vmem:[#allocation12 + $0x80] sm:$0xf]
        %v6501 = vld [vmem:[#allocation12 + $0x84] sm:$0xf]
        %v6502 = vld [vmem:[#allocation12 + $0x88] sm:$0xf]
        %v6503 = vld [vmem:[#allocation12 + $0x8c] sm:$0xf]
        %v6504 = vld [vmem:[#allocation12 + $0x90] sm:$0xf]
        %v6505 = vld [vmem:[#allocation12 + $0x94] sm:$0xf]
        %v6506 = vld [vmem:[#allocation12 + $0x98] sm:$0xf]
        %v6507 = vld [vmem:[#allocation12 + $0x9c] sm:$0xf]
        %v6508 = vld [vmem:[#allocation12 + $0xa0] sm:$0xf]
        %v6509 = vld [vmem:[#allocation12 + $0xa4] sm:$0xf]
        %v6510 = vld [vmem:[#allocation12 + $0xa8] sm:$0xf]
        %v6511 = vld [vmem:[#allocation12 + $0xac] sm:$0xf]
        %v6512 = vld [vmem:[#allocation12 + $0xb0] sm:$0xf]
        %v6513 = vld [vmem:[#allocation12 + $0xb4] sm:$0xf]
        %v6514 = vld [vmem:[#allocation12 + $0xb8] sm:$0xf]
        %v6515 = vld [vmem:[#allocation12 + $0xbc] sm:$0xf]
        %v6516 = vld [vmem:[#allocation12 + $0xc0] sm:$0xf]
        %v6517 = vld [vmem:[#allocation12 + $0xc4] sm:$0xf]
        %v6518 = vld [vmem:[#allocation12 + $0xc8] sm:$0xf]
        %v6519 = vld [vmem:[#allocation12 + $0xcc] sm:$0xf]
        %v6520 = vld [vmem:[#allocation12 + $0xd0] sm:$0xf]
        %v6521 = vld [vmem:[#allocation12 + $0xd4] sm:$0xf]
        %v6522 = vld [vmem:[#allocation12 + $0xd8] sm:$0xf]
        %v6523 = vld [vmem:[#allocation12 + $0xdc] sm:$0xf]
        %v6524 = vld [vmem:[#allocation12 + $0xe0] sm:$0xf]
        %v6525 = vld [vmem:[#allocation12 + $0xe4] sm:$0xf]
        %v6526 = vld [vmem:[#allocation12 + $0xe8] sm:$0xf]
        %v6527 = vld [vmem:[#allocation12 + $0xec] sm:$0xf]
        %v6528 = vld [vmem:[#allocation12 + $0xf0] sm:$0xf]
        %v6529 = vld [vmem:[#allocation12 + $0xf4] sm:$0xf]
        %v6530 = vld [vmem:[#allocation12 + $0xf8] sm:$0xf]
        %v6531 = vld [vmem:[#allocation12 + $0xfc] sm:$0xf]
        %v6596 = vunpack.c.l.b16 %v6468
        %v6597 = vunpack.c.l.b16 %v6469
        %v6598 = vunpack.c.l.b16 %v6470
        %v6599 = vunpack.c.l.b16 %v6471
        %v6600 = vunpack.c.l.b16 %v6472
        %v6601 = vunpack.c.l.b16 %v6473
        %v6602 = vunpack.c.l.b16 %v6474
        %v6603 = vunpack.c.l.b16 %v6475
        %v6604 = vunpack.c.l.b16 %v6476
        %v6605 = vunpack.c.l.b16 %v6477
        %v6606 = vunpack.c.l.b16 %v6478
        %v6607 = vunpack.c.l.b16 %v6479
        %v6608 = vunpack.c.l.b16 %v6480
        %v6609 = vunpack.c.l.b16 %v6481
        %v6610 = vunpack.c.l.b16 %v6482
        %v6611 = vunpack.c.l.b16 %v6483
        %v6612 = vunpack.c.l.b16 %v6484
        %v6613 = vunpack.c.l.b16 %v6485
        %v6614 = vunpack.c.l.b16 %v6486
        %v6615 = vunpack.c.l.b16 %v6487
        %v6616 = vunpack.c.l.b16 %v6488
        %v6617 = vunpack.c.l.b16 %v6489
        %v6618 = vunpack.c.l.b16 %v6490
        %v6619 = vunpack.c.l.b16 %v6491
        %v6620 = vunpack.c.l.b16 %v6492
        %v6621 = vunpack.c.l.b16 %v6493
        %v6622 = vunpack.c.l.b16 %v6494
        %v6623 = vunpack.c.l.b16 %v6495
        %v6624 = vunpack.c.l.b16 %v6496
        %v6625 = vunpack.c.l.b16 %v6497
        %v6626 = vunpack.c.l.b16 %v6498
        %v6627 = vunpack.c.l.b16 %v6499
        %v6628 = vunpack.c.l.b16 %v6500
        %v6629 = vunpack.c.l.b16 %v6501
        %v6630 = vunpack.c.l.b16 %v6502
        %v6631 = vunpack.c.l.b16 %v6503
        %v6632 = vunpack.c.l.b16 %v6504
        %v6633 = vunpack.c.l.b16 %v6505
        %v6634 = vunpack.c.l.b16 %v6506
        %v6635 = vunpack.c.l.b16 %v6507
        %v6636 = vunpack.c.l.b16 %v6508
        %v6637 = vunpack.c.l.b16 %v6509
        %v6638 = vunpack.c.l.b16 %v6510
        %v6639 = vunpack.c.l.b16 %v6511
        %v6640 = vunpack.c.l.b16 %v6512
        %v6641 = vunpack.c.l.b16 %v6513
        %v6642 = vunpack.c.l.b16 %v6514
        %v6643 = vunpack.c.l.b16 %v6515
        %v6644 = vunpack.c.l.b16 %v6516
        %v6645 = vunpack.c.l.b16 %v6517
        %v6646 = vunpack.c.l.b16 %v6518
        %v6647 = vunpack.c.l.b16 %v6519
        %v6648 = vunpack.c.l.b16 %v6520
        %v6649 = vunpack.c.l.b16 %v6521
        %v6650 = vunpack.c.l.b16 %v6522
        %v6651 = vunpack.c.l.b16 %v6523
        %v6652 = vunpack.c.l.b16 %v6524
        %v6653 = vunpack.c.l.b16 %v6525
        %v6654 = vunpack.c.l.b16 %v6526
        %v6655 = vunpack.c.l.b16 %v6527
        %v6656 = vunpack.c.l.b16 %v6528
        %v6657 = vunpack.c.l.b16 %v6529
        %v6658 = vunpack.c.l.b16 %v6530
        %v6659 = vunpack.c.l.b16 %v6531
        %v6660 = vpack.c.b16 %v6597, %v6596
        %v6661 = vpack.c.b16 %v6599, %v6598
        %v6662 = vpack.c.b16 %v6601, %v6600
        %v6663 = vpack.c.b16 %v6603, %v6602
        %v6664 = vpack.c.b16 %v6605, %v6604
        %v6665 = vpack.c.b16 %v6607, %v6606
        %v6666 = vpack.c.b16 %v6609, %v6608
        %v6667 = vpack.c.b16 %v6611, %v6610
        %v6668 = vpack.c.b16 %v6613, %v6612
        %v6669 = vpack.c.b16 %v6615, %v6614
        %v6670 = vpack.c.b16 %v6617, %v6616
        %v6671 = vpack.c.b16 %v6619, %v6618
        %v6672 = vpack.c.b16 %v6621, %v6620
        %v6673 = vpack.c.b16 %v6623, %v6622
        %v6674 = vpack.c.b16 %v6625, %v6624
        %v6675 = vpack.c.b16 %v6627, %v6626
        %v6676 = vpack.c.b16 %v6629, %v6628
        %v6677 = vpack.c.b16 %v6631, %v6630
        %v6678 = vpack.c.b16 %v6633, %v6632
        %v6679 = vpack.c.b16 %v6635, %v6634
        %v6680 = vpack.c.b16 %v6637, %v6636
        %v6681 = vpack.c.b16 %v6639, %v6638
        %v6682 = vpack.c.b16 %v6641, %v6640
        %v6683 = vpack.c.b16 %v6643, %v6642
        %v6684 = vpack.c.b16 %v6645, %v6644
        %v6685 = vpack.c.b16 %v6647, %v6646
        %v6686 = vpack.c.b16 %v6649, %v6648
        %v6687 = vpack.c.b16 %v6651, %v6650
        %v6688 = vpack.c.b16 %v6653, %v6652
        %v6689 = vpack.c.b16 %v6655, %v6654
        %v6690 = vpack.c.b16 %v6657, %v6656
        %v6691 = vpack.c.b16 %v6659, %v6658
        %6724 = vmatprep.subr.bf16.mxu0 0
        %6725 = vmatpush1.bf16.msra.mxu0 %v6667
        %6726 = vmatprep.subr.bf16.mxu0 0
        %6727 = vmatpush1.bf16.msra.mxu0 %v6666
        %6728 = vmatprep.subr.bf16.mxu0 0
        %6729 = vmatpush1.bf16.msra.mxu0 %v6665
        %6730 = vmatprep.subr.bf16.mxu0 0
        %6731 = vmatpush1.bf16.msra.mxu0 %v6664
        %6732 = vmatprep.subr.bf16.mxu0 0
        %6733 = vmatpush1.bf16.msra.mxu0 %v6663
        %6734 = vmatprep.subr.bf16.mxu0 0
        %6735 = vmatpush1.bf16.msra.mxu0 %v6662
        %6736 = vmatprep.subr.bf16.mxu0 0
        %6737 = vmatpush1.bf16.msra.mxu0 %v6661
        %6738 = vmatprep.subr.bf16.mxu0 0
        %6739 = vmatpush1.bf16.msra.mxu0 %v6660
        %6740 = vmatprep.subr.bf16.mxu0 0
        %6741 = vmatpush2.bf16.msra.mxu0 %v6675
        %6742 = vmatprep.subr.bf16.mxu0 0
        %6743 = vmatpush2.bf16.msra.mxu0 %v6674
        %6744 = vmatprep.subr.bf16.mxu0 0
        %6745 = vmatpush2.bf16.msra.mxu0 %v6673
        %6746 = vmatprep.subr.bf16.mxu0 0
        %6747 = vmatpush2.bf16.msra.mxu0 %v6672
        %6748 = vmatprep.subr.bf16.mxu0 0
        %6749 = vmatpush2.bf16.msra.mxu0 %v6671
        %6750 = vmatprep.subr.bf16.mxu0 0
        %6751 = vmatpush2.bf16.msra.mxu0 %v6670
        %6752 = vmatprep.subr.bf16.mxu0 0
        %6753 = vmatpush2.bf16.msra.mxu0 %v6669
        %6754 = vmatprep.subr.bf16.mxu0 0
        %6755 = vmatpush2.bf16.msra.mxu0 %v6668
        %6756 = vmatprep.mubr.bf16.mxu0 %v985
        %6757 = vmatmul.mubr.bf16.gmra.mxu0 %v984
        %v6758 = vpop.f32.mrf.mxu0
        %v6759 = vadd.f32 0.0, %v6758
        %v6760 = vpop.f32.mrf.mxu0
        %v6761 = vpop.f32.mrf.mxu0
        %v6762 = vadd.f32 0.0, %v6761
        %v6763 = vpop.f32.mrf.mxu0
        %6764 = vmatprep.mubr.bf16.mxu0 %v989
        %6765 = vmatmul.mubr.bf16.gmra.mxu0 %v988
        %v6766 = vpop.f32.mrf.mxu0
        %v6767 = vadd.f32 0.0, %v6766
        %v6768 = vpop.f32.mrf.mxu0
        %v6769 = vpop.f32.mrf.mxu0
        %v6770 = vadd.f32 0.0, %v6769
        %v6771 = vpop.f32.mrf.mxu0
        %6772 = vmatprep.mubr.bf16.mxu0 %v993
        %6773 = vmatmul.mubr.bf16.gmra.mxu0 %v992
        %v6774 = vpop.f32.mrf.mxu0
        %v6775 = vadd.f32 0.0, %v6774
        %v6776 = vpop.f32.mrf.mxu0
        %v6777 = vpop.f32.mrf.mxu0
        %v6778 = vadd.f32 0.0, %v6777
        %v6779 = vpop.f32.mrf.mxu0
        %6780 = vmatprep.mubr.bf16.mxu0 %v997
        %6781 = vmatmul.mubr.bf16.gmra.mxu0 %v996
        %v6782 = vpop.f32.mrf.mxu0
        %v6783 = vadd.f32 0.0, %v6782
        %v6784 = vpop.f32.mrf.mxu0
        %v6785 = vpop.f32.mrf.mxu0
        %v6786 = vadd.f32 0.0, %v6785
        %v6787 = vpop.f32.mrf.mxu0
        %6788 = vdwg.mxu0
        %6789 = vmatprep.subr.bf16.mxu0 0
        %6790 = vmatpush1.bf16.msra.mxu0 %v6683
        %6791 = vmatprep.subr.bf16.mxu0 0
        %6792 = vmatpush1.bf16.msra.mxu0 %v6682
        %6793 = vmatprep.subr.bf16.mxu0 0
        %6794 = vmatpush1.bf16.msra.mxu0 %v6681
        %6795 = vmatprep.subr.bf16.mxu0 0
        %6796 = vmatpush1.bf16.msra.mxu0 %v6680
        %6797 = vmatprep.subr.bf16.mxu0 0
        %6798 = vmatpush1.bf16.msra.mxu0 %v6679
        %6799 = vmatprep.subr.bf16.mxu0 0
        %6800 = vmatpush1.bf16.msra.mxu0 %v6678
        %6801 = vmatprep.subr.bf16.mxu0 0
        %6802 = vmatpush1.bf16.msra.mxu0 %v6677
        %6803 = vmatprep.subr.bf16.mxu0 0
        %6804 = vmatpush1.bf16.msra.mxu0 %v6676
        %6805 = vmatprep.subr.bf16.mxu0 0
        %6806 = vmatpush2.bf16.msra.mxu0 %v6691
        %6807 = vmatprep.subr.bf16.mxu0 0
        %6808 = vmatpush2.bf16.msra.mxu0 %v6690
        %6809 = vmatprep.subr.bf16.mxu0 0
        %6810 = vmatpush2.bf16.msra.mxu0 %v6689
        %6811 = vmatprep.subr.bf16.mxu0 0
        %6812 = vmatpush2.bf16.msra.mxu0 %v6688
        %6813 = vmatprep.subr.bf16.mxu0 0
        %6814 = vmatpush2.bf16.msra.mxu0 %v6687
        %6815 = vmatprep.subr.bf16.mxu0 0
        %6816 = vmatpush2.bf16.msra.mxu0 %v6686
        %6817 = vmatprep.subr.bf16.mxu0 0
        %6818 = vmatpush2.bf16.msra.mxu0 %v6685
        %6819 = vmatprep.subr.bf16.mxu0 0
        %6820 = vmatpush2.bf16.msra.mxu0 %v6684
        %6821 = vmatprep.mubr.bf16.mxu0 %v987
        %6822 = vmatmul.mubr.bf16.gmra.mxu0 %v986
        %v6823 = vpop.f32.mrf.mxu0
        %v6824 = vadd.f32 %v6759, %v6823
        %v6825 = vpop.f32.mrf.mxu0
        %v6826 = vpop.f32.mrf.mxu0
        %v6827 = vadd.f32 %v6762, %v6826
        %v6828 = vpop.f32.mrf.mxu0
        %6829 = vmatprep.mubr.bf16.mxu0 %v991
        %6830 = vmatmul.mubr.bf16.gmra.mxu0 %v990
        %v6831 = vpop.f32.mrf.mxu0
        %v6832 = vadd.f32 %v6767, %v6831
        %v6833 = vpop.f32.mrf.mxu0
        %v6834 = vpop.f32.mrf.mxu0
        %v6835 = vadd.f32 %v6770, %v6834
        %v6836 = vpop.f32.mrf.mxu0
        %6837 = vmatprep.mubr.bf16.mxu0 %v995
        %6838 = vmatmul.mubr.bf16.gmra.mxu0 %v994
        %v6839 = vpop.f32.mrf.mxu0
        %v6840 = vadd.f32 %v6775, %v6839
        %v6841 = vpop.f32.mrf.mxu0
        %v6842 = vpop.f32.mrf.mxu0
        %v6843 = vadd.f32 %v6778, %v6842
        %v6844 = vpop.f32.mrf.mxu0
        %6845 = vmatprep.mubr.bf16.mxu0 %v999
        %6846 = vmatmul.mubr.bf16.gmra.mxu0 %v998
        %v6847 = vpop.f32.mrf.mxu0
        %v6848 = vadd.f32 %v6783, %v6847
        %v6849 = vpop.f32.mrf.mxu0
        %v6850 = vpop.f32.mrf.mxu0
        %v6851 = vadd.f32 %v6786, %v6850
        %v6852 = vpop.f32.mrf.mxu0
        %6853 = vdwg.mxu0
        %v6854 = vld [vmem:[%s10] sm:$0x1]
        %v6856 = vlaneseq
        %v6857 = vshrl.u32 %v6856, 7
        %v6858 = vsub.s32 0, %v6857
        %v6859 = vrot.slane %v6854, %v6858
        %v6861 = vadd.f32 %v6824, %v6859
        %v6862 = vadd.f32 %v6827, %v6859
        %v6863 = vadd.f32 %v6832, %v6859
        %v6864 = vadd.f32 %v6835, %v6859
        %v6865 = vadd.f32 %v6840, %v6859
        %v6866 = vadd.f32 %v6843, %v6859
        %v6867 = vadd.f32 %v6848, %v6859
        %v6868 = vadd.f32 %v6851, %v6859
        %6869 = vst [vmem:[%s601] sm:$0xff] %v6861
        %6870 = vst [vmem:[%s601 + $0x8] sm:$0xff] %v6862
        %6871 = vst [vmem:[%s601 + $0x10] sm:$0xff] %v6863
        %6872 = vst [vmem:[%s601 + $0x18] sm:$0xff] %v6864
        %6873 = vst [vmem:[%s601 + $0x20] sm:$0xff] %v6865
        %6874 = vst [vmem:[%s601 + $0x28] sm:$0xff] %v6866
        %6875 = vst [vmem:[%s601 + $0x30] sm:$0xff] %v6867
        %6876 = vst [vmem:[%s601 + $0x38] sm:$0xff] %v6868
        %v6878 = vlaneseq
        %v6879 = vshrl.u32 %v6878, 7
        %v6880 = vsub.s32 0, %v6879
        %v6881 = vrot.slane %v6363, %v6880
        %v6882 = vlaneseq
        %v6883 = vshrl.u32 %v6882, 7
        %v6884 = vsub.s32 1, %v6883
        %v6885 = vrot.slane %v6363, %v6884
        %v6886 = vlaneseq
        %v6887 = vshrl.u32 %v6886, 7
        %v6888 = vsub.s32 2, %v6887
        %v6889 = vrot.slane %v6363, %v6888
        %v6890 = vlaneseq
        %v6891 = vshrl.u32 %v6890, 7
        %v6892 = vsub.s32 3, %v6891
        %v6893 = vrot.slane %v6363, %v6892
        %v6898 = vrcp.pop %v6881
        %v6899 = vmul.f32 %v4326, %v6898
        %v6900 = vmul.f32 %v4327, %v6898
        %v6901 = vrcp.pop %v6885
        %v6902 = vmul.f32 %v4328, %v6901
        %v6903 = vmul.f32 %v4329, %v6901
        %v6904 = vrcp.pop %v6889
        %v6905 = vmul.f32 %v4330, %v6904
        %v6906 = vmul.f32 %v4331, %v6904
        %v6907 = vrcp.pop %v6893
        %v6908 = vmul.f32 %v4332, %v6907
        %v6909 = vmul.f32 %v4333, %v6907
        %v6911 = vlaneseq
        %v6912 = vshrl.u32 %v6911, 7
        %v6913 = vsub.s32 0, %v6912
        %v6914 = vrot.slane %v6434, %v6913
        %v6915 = vlaneseq
        %v6916 = vshrl.u32 %v6915, 7
        %v6917 = vsub.s32 1, %v6916
        %v6918 = vrot.slane %v6434, %v6917
        %v6919 = vlaneseq
        %v6920 = vshrl.u32 %v6919, 7
        %v6921 = vsub.s32 2, %v6920
        %v6922 = vrot.slane %v6434, %v6921
        %v6923 = vlaneseq
        %v6924 = vshrl.u32 %v6923, 7
        %v6925 = vsub.s32 3, %v6924
        %v6926 = vrot.slane %v6434, %v6925
        %v6931 = vrcp.pop %v6914
        %v6932 = vmul.f32 %v5411, %v6931
        %v6933 = vmul.f32 %v5412, %v6931
        %v6934 = vrcp.pop %v6918
        %v6935 = vmul.f32 %v5413, %v6934
        %v6936 = vmul.f32 %v5414, %v6934
        %v6937 = vrcp.pop %v6922
        %v6938 = vmul.f32 %v5415, %v6937
        %v6939 = vmul.f32 %v5416, %v6937
        %v6940 = vrcp.pop %v6926
        %v6941 = vmul.f32 %v5417, %v6940
        %v6942 = vmul.f32 %v5418, %v6940
        %v6944 = vlaneseq
        %v6945 = vshrl.u32 %v6944, 7
        %v6946 = vsub.s32 0, %v6945
        %v6947 = vrot.slane %v6467, %v6946
        %v6948 = vlaneseq
        %v6949 = vshrl.u32 %v6948, 7
        %v6950 = vsub.s32 1, %v6949
        %v6951 = vrot.slane %v6467, %v6950
        %v6952 = vlaneseq
        %v6953 = vshrl.u32 %v6952, 7
        %v6954 = vsub.s32 2, %v6953
        %v6955 = vrot.slane %v6467, %v6954
        %v6956 = vlaneseq
        %v6957 = vshrl.u32 %v6956, 7
        %v6958 = vsub.s32 3, %v6957
        %v6959 = vrot.slane %v6467, %v6958
        %v6964 = vrcp.pop %v6947
        %v6965 = vmul.f32 %v6331, %v6964
        %v6966 = vrcp.pop %v6951
        %v6967 = vmul.f32 %v6332, %v6966
        %v6968 = vrcp.pop %v6955
        %v6969 = vmul.f32 %v6333, %v6968
        %v6970 = vrcp.pop %v6959
        %v6971 = vmul.f32 %v6334, %v6970
        %v6972 = vlaneseq
        %v6973 = vshrl.u32 %v6972, 7
        %vm6974 = vcmp.eq.s32.totalorder %v6973, 0
        %vm6975 = vcmp.eq.s32.totalorder %v6973, 1
        %v6980 = vlaneseq
        %v6981 = vshrl.u32 %v6980, 7
        %v6982 = vsub.s32 0, %v6981
        %v6983 = vrot.slane %v6965, %v6982
        %v6984 = vlaneseq
        %v6985 = vshrl.u32 %v6984, 7
        %v6986 = vsub.s32 0, %v6985
        %v6987 = vrot.slane %v6967, %v6986
        %v6988 = vlaneseq
        %v6989 = vshrl.u32 %v6988, 7
        %v6990 = vsub.s32 0, %v6989
        %v6991 = vrot.slane %v6969, %v6990
        %v6992 = vlaneseq
        %v6993 = vshrl.u32 %v6992, 7
        %v6994 = vsub.s32 0, %v6993
        %v6995 = vrot.slane %v6971, %v6994
        %7008 = vset.pattern.permute.xlu0 0
        %7009 = vperm.xlu0 %7008, %v6932
        %v7010 = vpop.permute.xlu0 %7009
        %7011 = vset.pattern.permute.xlu0 0
        %7012 = vperm.xlu0 %7011, %v6933
        %v7013 = vpop.permute.xlu0 %7012
        %7014 = vset.pattern.permute.xlu0 0
        %7015 = vperm.xlu0 %7014, %v6935
        %v7016 = vpop.permute.xlu0 %7015
        %7017 = vset.pattern.permute.xlu0 0
        %7018 = vperm.xlu0 %7017, %v6936
        %v7019 = vpop.permute.xlu0 %7018
        %7020 = vset.pattern.permute.xlu0 0
        %7021 = vperm.xlu0 %7020, %v6938
        %v7022 = vpop.permute.xlu0 %7021
        %7023 = vset.pattern.permute.xlu0 0
        %7024 = vperm.xlu0 %7023, %v6939
        %v7025 = vpop.permute.xlu0 %7024
        %7026 = vset.pattern.permute.xlu0 0
        %7027 = vperm.xlu0 %7026, %v6941
        %v7028 = vpop.permute.xlu0 %7027
        %7029 = vset.pattern.permute.xlu0 0
        %7030 = vperm.xlu0 %7029, %v6942
        %v7031 = vpop.permute.xlu0 %7030
        %v7032 = vlaneseq
        %v7033 = vshrl.u32 %v7032, 7
        %v7034 = vsub.s32 %v5015, %v7033
        %v7035 = vrot.slane %v7010, %v7034
        %v7036 = vlaneseq
        %v7037 = vshrl.u32 %v7036, 7
        %v7038 = vsub.s32 %v5020, %v7037
        %v7039 = vrot.slane %v7013, %v7038
        %v7040 = vsel %vm5025, %v7039, %v7035
        %v7041 = vlaneseq
        %v7042 = vshrl.u32 %v7041, 7
        %v7043 = vsub.s32 %v5015, %v7042
        %v7044 = vrot.slane %v7016, %v7043
        %v7045 = vlaneseq
        %v7046 = vshrl.u32 %v7045, 7
        %v7047 = vsub.s32 %v5020, %v7046
        %v7048 = vrot.slane %v7019, %v7047
        %v7049 = vsel %vm5025, %v7048, %v7044
        %v7050 = vlaneseq
        %v7051 = vshrl.u32 %v7050, 7
        %v7052 = vsub.s32 %v5015, %v7051
        %v7053 = vrot.slane %v7022, %v7052
        %v7054 = vlaneseq
        %v7055 = vshrl.u32 %v7054, 7
        %v7056 = vsub.s32 %v5020, %v7055
        %v7057 = vrot.slane %v7025, %v7056
        %v7058 = vsel %vm5025, %v7057, %v7053
        %v7059 = vlaneseq
        %v7060 = vshrl.u32 %v7059, 7
        %v7061 = vsub.s32 %v5015, %v7060
        %v7062 = vrot.slane %v7028, %v7061
        %v7063 = vlaneseq
        %v7064 = vshrl.u32 %v7063, 7
        %v7065 = vsub.s32 %v5020, %v7064
        %v7066 = vrot.slane %v7031, %v7065
        %v7067 = vsel %vm5025, %v7066, %v7062
        %v7068 = vsel %vm6426, %v7040, %v7040
        %v7069 = vsel %vm6426, %v7049, %v7049
        %v7070 = vsel %vm6426, %v7058, %v7058
        %v7071 = vsel %vm6426, %v7067, %v7067
        %v7076 = vsel %vm6975, %v7068, %v6983
        %v7077 = vsel %vm6975, %v7069, %v6987
        %v7078 = vsel %vm6975, %v7070, %v6991
        %v7079 = vsel %vm6975, %v7071, %v6995
        %7088 = vset.pattern.permute.xlu0 0
        %7089 = vperm.xlu0 %7088, %v6899
        %v7090 = vpop.permute.xlu0 %7089
        %7091 = vset.pattern.permute.xlu0 0
        %7092 = vperm.xlu0 %7091, %v6900
        %v7093 = vpop.permute.xlu0 %7092
        %7094 = vset.pattern.permute.xlu0 0
        %7095 = vperm.xlu0 %7094, %v6902
        %v7096 = vpop.permute.xlu0 %7095
        %7097 = vset.pattern.permute.xlu0 0
        %7098 = vperm.xlu0 %7097, %v6903
        %v7099 = vpop.permute.xlu0 %7098
        %7100 = vset.pattern.permute.xlu0 0
        %7101 = vperm.xlu0 %7100, %v6905
        %v7102 = vpop.permute.xlu0 %7101
        %7103 = vset.pattern.permute.xlu0 0
        %7104 = vperm.xlu0 %7103, %v6906
        %v7105 = vpop.permute.xlu0 %7104
        %7106 = vset.pattern.permute.xlu0 0
        %7107 = vperm.xlu0 %7106, %v6908
        %v7108 = vpop.permute.xlu0 %7107
        %7109 = vset.pattern.permute.xlu0 0
        %7110 = vperm.xlu0 %7109, %v6909
        %v7111 = vpop.permute.xlu0 %7110
        %v7112 = vlaneseq
        %v7113 = vshrl.u32 %v7112, 7
        %v7114 = vsub.s32 %v5015, %v7113
        %v7115 = vrot.slane %v7090, %v7114
        %v7116 = vlaneseq
        %v7117 = vshrl.u32 %v7116, 7
        %v7118 = vsub.s32 %v5020, %v7117
        %v7119 = vrot.slane %v7093, %v7118
        %v7120 = vsel %vm5025, %v7119, %v7115
        %v7121 = vlaneseq
        %v7122 = vshrl.u32 %v7121, 7
        %v7123 = vsub.s32 %v5015, %v7122
        %v7124 = vrot.slane %v7096, %v7123
        %v7125 = vlaneseq
        %v7126 = vshrl.u32 %v7125, 7
        %v7127 = vsub.s32 %v5020, %v7126
        %v7128 = vrot.slane %v7099, %v7127
        %v7129 = vsel %vm5025, %v7128, %v7124
        %v7130 = vlaneseq
        %v7131 = vshrl.u32 %v7130, 7
        %v7132 = vsub.s32 %v5015, %v7131
        %v7133 = vrot.slane %v7102, %v7132
        %v7134 = vlaneseq
        %v7135 = vshrl.u32 %v7134, 7
        %v7136 = vsub.s32 %v5020, %v7135
        %v7137 = vrot.slane %v7105, %v7136
        %v7138 = vsel %vm5025, %v7137, %v7133
        %v7139 = vlaneseq
        %v7140 = vshrl.u32 %v7139, 7
        %v7141 = vsub.s32 %v5015, %v7140
        %v7142 = vrot.slane %v7108, %v7141
        %v7143 = vlaneseq
        %v7144 = vshrl.u32 %v7143, 7
        %v7145 = vsub.s32 %v5020, %v7144
        %v7146 = vrot.slane %v7111, %v7145
        %v7147 = vsel %vm5025, %v7146, %v7142
        %v7148 = vsel %vm6426, %v7120, %v7120
        %v7149 = vsel %vm6426, %v7129, %v7129
        %v7150 = vsel %vm6426, %v7138, %v7138
        %v7151 = vsel %vm6426, %v7147, %v7147
        %v7156 = vsel %vm6974, %v7148, %v7076
        %v7157 = vsel %vm6974, %v7149, %v7077
        %v7158 = vsel %vm6974, %v7150, %v7078
        %v7159 = vsel %vm6974, %v7151, %v7079
        %v7160 = vlaneseq
        %v7161 = vshrl.u32 %v7160, 7
        %v7162 = vsub.s32 0, %v7161
        %v7163 = vrot.slane %v7156, %v7162
        %7165 = vbcast.lane.b32.xlu0 %v7163, 256
        %v7166 = vpop.permute.xlu0 %7165
        %s7168 = sor.u32 256, 8
        %7169 = vbcast.lane.b32.xlu0 %v7163, %s7168
        %v7170 = vpop.permute.xlu0 %7169
        %v7171 = vlaneseq
        %v7172 = vshrl.u32 %v7171, 7
        %v7173 = vsub.s32 1, %v7172
        %v7174 = vrot.slane %v7156, %v7173
        %7176 = vbcast.lane.b32.xlu0 %v7174, 256
        %v7177 = vpop.permute.xlu0 %7176
        %s7179 = sor.u32 256, 8
        %7180 = vbcast.lane.b32.xlu0 %v7174, %s7179
        %v7181 = vpop.permute.xlu0 %7180
        %v7182 = vlaneseq
        %v7183 = vshrl.u32 %v7182, 7
        %v7184 = vsub.s32 2, %v7183
        %v7185 = vrot.slane %v7156, %v7184
        %7187 = vbcast.lane.b32.xlu0 %v7185, 256
        %v7188 = vpop.permute.xlu0 %7187
        %s7190 = sor.u32 256, 8
        %7191 = vbcast.lane.b32.xlu0 %v7185, %s7190
        %v7192 = vpop.permute.xlu0 %7191
        %v7193 = vlaneseq
        %v7194 = vshrl.u32 %v7193, 7
        %v7195 = vsub.s32 0, %v7194
        %v7196 = vrot.slane %v7157, %v7195
        %7198 = vbcast.lane.b32.xlu0 %v7196, 256
        %v7199 = vpop.permute.xlu0 %7198
        %s7201 = sor.u32 256, 8
        %7202 = vbcast.lane.b32.xlu0 %v7196, %s7201
        %v7203 = vpop.permute.xlu0 %7202
        %v7204 = vlaneseq
        %v7205 = vshrl.u32 %v7204, 7
        %v7206 = vsub.s32 1, %v7205
        %v7207 = vrot.slane %v7157, %v7206
        %7209 = vbcast.lane.b32.xlu0 %v7207, 256
        %v7210 = vpop.permute.xlu0 %7209
        %s7212 = sor.u32 256, 8
        %7213 = vbcast.lane.b32.xlu0 %v7207, %s7212
        %v7214 = vpop.permute.xlu0 %7213
        %v7215 = vlaneseq
        %v7216 = vshrl.u32 %v7215, 7
        %v7217 = vsub.s32 2, %v7216
        %v7218 = vrot.slane %v7157, %v7217
        %7220 = vbcast.lane.b32.xlu0 %v7218, 256
        %v7221 = vpop.permute.xlu0 %7220
        %s7223 = sor.u32 256, 8
        %7224 = vbcast.lane.b32.xlu0 %v7218, %s7223
        %v7225 = vpop.permute.xlu0 %7224
        %v7226 = vlaneseq
        %v7227 = vshrl.u32 %v7226, 7
        %v7228 = vsub.s32 0, %v7227
        %v7229 = vrot.slane %v7158, %v7228
        %7231 = vbcast.lane.b32.xlu0 %v7229, 256
        %v7232 = vpop.permute.xlu0 %7231
        %s7234 = sor.u32 256, 8
        %7235 = vbcast.lane.b32.xlu0 %v7229, %s7234
        %v7236 = vpop.permute.xlu0 %7235
        %v7237 = vlaneseq
        %v7238 = vshrl.u32 %v7237, 7
        %v7239 = vsub.s32 1, %v7238
        %v7240 = vrot.slane %v7158, %v7239
        %7242 = vbcast.lane.b32.xlu0 %v7240, 256
        %v7243 = vpop.permute.xlu0 %7242
        %s7245 = sor.u32 256, 8
        %7246 = vbcast.lane.b32.xlu0 %v7240, %s7245
        %v7247 = vpop.permute.xlu0 %7246
        %v7248 = vlaneseq
        %v7249 = vshrl.u32 %v7248, 7
        %v7250 = vsub.s32 2, %v7249
        %v7251 = vrot.slane %v7158, %v7250
        %7253 = vbcast.lane.b32.xlu0 %v7251, 256
        %v7254 = vpop.permute.xlu0 %7253
        %s7256 = sor.u32 256, 8
        %7257 = vbcast.lane.b32.xlu0 %v7251, %s7256
        %v7258 = vpop.permute.xlu0 %7257
        %v7259 = vlaneseq
        %v7260 = vshrl.u32 %v7259, 7
        %v7261 = vsub.s32 0, %v7260
        %v7262 = vrot.slane %v7159, %v7261
        %7264 = vbcast.lane.b32.xlu0 %v7262, 256
        %v7265 = vpop.permute.xlu0 %7264
        %s7267 = sor.u32 256, 8
        %7268 = vbcast.lane.b32.xlu0 %v7262, %s7267
        %v7269 = vpop.permute.xlu0 %7268
        %v7270 = vlaneseq
        %v7271 = vshrl.u32 %v7270, 7
        %v7272 = vsub.s32 1, %v7271
        %v7273 = vrot.slane %v7159, %v7272
        %7275 = vbcast.lane.b32.xlu0 %v7273, 256
        %v7276 = vpop.permute.xlu0 %7275
        %s7278 = sor.u32 256, 8
        %7279 = vbcast.lane.b32.xlu0 %v7273, %s7278
        %v7280 = vpop.permute.xlu0 %7279
        %v7281 = vlaneseq
        %v7282 = vshrl.u32 %v7281, 7
        %v7283 = vsub.s32 2, %v7282
        %v7284 = vrot.slane %v7159, %v7283
        %7286 = vbcast.lane.b32.xlu0 %v7284, 256
        %v7287 = vpop.permute.xlu0 %7286
        %s7289 = sor.u32 256, 8
        %7290 = vbcast.lane.b32.xlu0 %v7284, %s7289
        %v7291 = vpop.permute.xlu0 %7290
        %v7292 = vmul.f32 %v7166, %v6824
        %v7293 = vmul.f32 %v7170, %v6827
        %v7294 = vmul.f32 %v7177, %v6824
        %v7295 = vmul.f32 %v7181, %v6827
        %v7296 = vmul.f32 %v7188, %v6824
        %v7297 = vmul.f32 %v7192, %v6827
        %v7298 = vmul.f32 %v7199, %v6832
        %v7299 = vmul.f32 %v7203, %v6835
        %v7300 = vmul.f32 %v7210, %v6832
        %v7301 = vmul.f32 %v7214, %v6835
        %v7302 = vmul.f32 %v7221, %v6832
        %v7303 = vmul.f32 %v7225, %v6835
        %v7304 = vmul.f32 %v7232, %v6840
        %v7305 = vmul.f32 %v7236, %v6843
        %v7306 = vmul.f32 %v7243, %v6840
        %v7307 = vmul.f32 %v7247, %v6843
        %v7308 = vmul.f32 %v7254, %v6840
        %v7309 = vmul.f32 %v7258, %v6843
        %v7310 = vmul.f32 %v7265, %v6848
        %v7311 = vmul.f32 %v7269, %v6851
        %v7312 = vmul.f32 %v7276, %v6848
        %v7313 = vmul.f32 %v7280, %v6851
        %v7314 = vmul.f32 %v7287, %v6848
        %v7315 = vmul.f32 %v7291, %v6851
        %v7316 = vadd.f32 %v7292, %v7293
        %v7317 = vrot.slane %v7316, 4
        %v7318 = vadd.f32 %v7316, %v7317
        %v7319 = vrot.slane %v7318, 2
        %v7320 = vadd.f32 %v7318, %v7319
        %v7321 = vrot.slane %v7320, 1
        %v7322 = vadd.f32 %v7320, %v7321
        %v7323 = vadd.f32 %v7294, %v7295
        %v7324 = vrot.slane %v7323, 4
        %v7325 = vadd.f32 %v7323, %v7324
        %v7326 = vrot.slane %v7325, 2
        %v7327 = vadd.f32 %v7325, %v7326
        %v7328 = vrot.slane %v7327, 1
        %v7329 = vadd.f32 %v7327, %v7328
        %v7330 = vadd.f32 %v7296, %v7297
        %v7331 = vrot.slane %v7330, 4
        %v7332 = vadd.f32 %v7330, %v7331
        %v7333 = vrot.slane %v7332, 2
        %v7334 = vadd.f32 %v7332, %v7333
        %v7335 = vrot.slane %v7334, 1
        %v7336 = vadd.f32 %v7334, %v7335
        %v7337 = vadd.f32 %v7298, %v7299
        %v7338 = vrot.slane %v7337, 4
        %v7339 = vadd.f32 %v7337, %v7338
        %v7340 = vrot.slane %v7339, 2
        %v7341 = vadd.f32 %v7339, %v7340
        %v7342 = vrot.slane %v7341, 1
        %v7343 = vadd.f32 %v7341, %v7342
        %v7344 = vadd.f32 %v7300, %v7301
        %v7345 = vrot.slane %v7344, 4
        %v7346 = vadd.f32 %v7344, %v7345
        %v7347 = vrot.slane %v7346, 2
        %v7348 = vadd.f32 %v7346, %v7347
        %v7349 = vrot.slane %v7348, 1
        %v7350 = vadd.f32 %v7348, %v7349
        %v7351 = vadd.f32 %v7302, %v7303
        %v7352 = vrot.slane %v7351, 4
        %v7353 = vadd.f32 %v7351, %v7352
        %v7354 = vrot.slane %v7353, 2
        %v7355 = vadd.f32 %v7353, %v7354
        %v7356 = vrot.slane %v7355, 1
        %v7357 = vadd.f32 %v7355, %v7356
        %v7358 = vadd.f32 %v7304, %v7305
        %v7359 = vrot.slane %v7358, 4
        %v7360 = vadd.f32 %v7358, %v7359
        %v7361 = vrot.slane %v7360, 2
        %v7362 = vadd.f32 %v7360, %v7361
        %v7363 = vrot.slane %v7362, 1
        %v7364 = vadd.f32 %v7362, %v7363
        %v7365 = vadd.f32 %v7306, %v7307
        %v7366 = vrot.slane %v7365, 4
        %v7367 = vadd.f32 %v7365, %v7366
        %v7368 = vrot.slane %v7367, 2
        %v7369 = vadd.f32 %v7367, %v7368
        %v7370 = vrot.slane %v7369, 1
        %v7371 = vadd.f32 %v7369, %v7370
        %v7372 = vadd.f32 %v7308, %v7309
        %v7373 = vrot.slane %v7372, 4
        %v7374 = vadd.f32 %v7372, %v7373
        %v7375 = vrot.slane %v7374, 2
        %v7376 = vadd.f32 %v7374, %v7375
        %v7377 = vrot.slane %v7376, 1
        %v7378 = vadd.f32 %v7376, %v7377
        %v7379 = vadd.f32 %v7310, %v7311
        %v7380 = vrot.slane %v7379, 4
        %v7381 = vadd.f32 %v7379, %v7380
        %v7382 = vrot.slane %v7381, 2
        %v7383 = vadd.f32 %v7381, %v7382
        %v7384 = vrot.slane %v7383, 1
        %v7385 = vadd.f32 %v7383, %v7384
        %v7386 = vadd.f32 %v7312, %v7313
        %v7387 = vrot.slane %v7386, 4
        %v7388 = vadd.f32 %v7386, %v7387
        %v7389 = vrot.slane %v7388, 2
        %v7390 = vadd.f32 %v7388, %v7389
        %v7391 = vrot.slane %v7390, 1
        %v7392 = vadd.f32 %v7390, %v7391
        %v7393 = vadd.f32 %v7314, %v7315
        %v7394 = vrot.slane %v7393, 4
        %v7395 = vadd.f32 %v7393, %v7394
        %v7396 = vrot.slane %v7395, 2
        %v7397 = vadd.f32 %v7395, %v7396
        %v7398 = vrot.slane %v7397, 1
        %v7399 = vadd.f32 %v7397, %v7398
        %v7400 = vadd.f32 %v7322, %v6859
        %v7401 = vadd.f32 %v7329, %v6859
        %v7402 = vadd.f32 %v7336, %v6859
        %v7403 = vadd.f32 %v7343, %v6859
        %v7404 = vadd.f32 %v7350, %v6859
        %v7405 = vadd.f32 %v7357, %v6859
        %v7406 = vadd.f32 %v7364, %v6859
        %v7407 = vadd.f32 %v7371, %v6859
        %v7408 = vadd.f32 %v7378, %v6859
        %v7409 = vadd.f32 %v7385, %v6859
        %v7410 = vadd.f32 %v7392, %v6859
        %v7411 = vadd.f32 %v7399, %v6859
        %v7424 = vrot.slane %v7401, 7
        %v7425 = vsel %vm6424, %v7424, %v7400
        %v7426 = vrot.slane %v7402, 6
        %v7427 = vsel %vm6426, %v7426, %v7425
        %v7428 = vrot.slane %v7404, 7
        %v7429 = vsel %vm6424, %v7428, %v7403
        %v7430 = vrot.slane %v7405, 6
        %v7431 = vsel %vm6426, %v7430, %v7429
        %v7432 = vrot.slane %v7407, 7
        %v7433 = vsel %vm6424, %v7432, %v7406
        %v7434 = vrot.slane %v7408, 6
        %v7435 = vsel %vm6426, %v7434, %v7433
        %v7436 = vrot.slane %v7410, 7
        %v7437 = vsel %vm6424, %v7436, %v7409
        %v7438 = vrot.slane %v7411, 6
        %v7439 = vsel %vm6426, %v7438, %v7437
        %7444 = vst [vmem:[%s610] sm:$0x7] %v7427
        %7445 = vst [vmem:[%s610 + $0x4] sm:$0x7] %v7431
        %7446 = vst [vmem:[%s610 + $0x8] sm:$0x7] %v7435
        %7447 = vst [vmem:[%s610 + $0xc] sm:$0x7] %v7439
        %7456 = vset.pattern.permute.xlu0 0
        %7457 = vperm.xlu0 %7456, %v4326
        %v7458 = vpop.permute.xlu0 %7457
        %7459 = vset.pattern.permute.xlu0 0
        %7460 = vperm.xlu0 %7459, %v4327
        %v7461 = vpop.permute.xlu0 %7460
        %7462 = vset.pattern.permute.xlu0 0
        %7463 = vperm.xlu0 %7462, %v4328
        %v7464 = vpop.permute.xlu0 %7463
        %7465 = vset.pattern.permute.xlu0 0
        %7466 = vperm.xlu0 %7465, %v4329
        %v7467 = vpop.permute.xlu0 %7466
        %7468 = vset.pattern.permute.xlu0 0
        %7469 = vperm.xlu0 %7468, %v4330
        %v7470 = vpop.permute.xlu0 %7469
        %7471 = vset.pattern.permute.xlu0 0
        %7472 = vperm.xlu0 %7471, %v4331
        %v7473 = vpop.permute.xlu0 %7472
        %7474 = vset.pattern.permute.xlu0 0
        %7475 = vperm.xlu0 %7474, %v4332
        %v7476 = vpop.permute.xlu0 %7475
        %7477 = vset.pattern.permute.xlu0 0
        %7478 = vperm.xlu0 %7477, %v4333
        %v7479 = vpop.permute.xlu0 %7478
        %v7480 = vlaneseq
        %v7481 = vshrl.u32 %v7480, 7
        %v7482 = vsub.s32 %v5015, %v7481
        %v7483 = vrot.slane %v7458, %v7482
        %v7484 = vlaneseq
        %v7485 = vshrl.u32 %v7484, 7
        %v7486 = vsub.s32 %v5020, %v7485
        %v7487 = vrot.slane %v7461, %v7486
        %v7488 = vsel %vm5025, %v7487, %v7483
        %v7489 = vlaneseq
        %v7490 = vshrl.u32 %v7489, 7
        %v7491 = vsub.s32 %v5015, %v7490
        %v7492 = vrot.slane %v7464, %v7491
        %v7493 = vlaneseq
        %v7494 = vshrl.u32 %v7493, 7
        %v7495 = vsub.s32 %v5020, %v7494
        %v7496 = vrot.slane %v7467, %v7495
        %v7497 = vsel %vm5025, %v7496, %v7492
        %v7498 = vlaneseq
        %v7499 = vshrl.u32 %v7498, 7
        %v7500 = vsub.s32 %v5015, %v7499
        %v7501 = vrot.slane %v7470, %v7500
        %v7502 = vlaneseq
        %v7503 = vshrl.u32 %v7502, 7
        %v7504 = vsub.s32 %v5020, %v7503
        %v7505 = vrot.slane %v7473, %v7504
        %v7506 = vsel %vm5025, %v7505, %v7501
        %v7507 = vlaneseq
        %v7508 = vshrl.u32 %v7507, 7
        %v7509 = vsub.s32 %v5015, %v7508
        %v7510 = vrot.slane %v7476, %v7509
        %v7511 = vlaneseq
        %v7512 = vshrl.u32 %v7511, 7
        %v7513 = vsub.s32 %v5020, %v7512
        %v7514 = vrot.slane %v7479, %v7513
        %v7515 = vsel %vm5025, %v7514, %v7510
        %v7516 = vsel %vm6424, %v7497, %v7488
        %v7517 = vsel %vm6426, %v7506, %v7516
        %v7518 = vsel %vm6428, %v7515, %v7517
        %7520 = vrot.lane.b32.xlu0 %v6462, 16
        %v7521 = vpop.permute.xlu0 %7520
        %vm7523 = vcmask 130048
        %v7524 = vsel %vm7523, %v7518, %v7521
        %vm7525 = vcmask 261120
        %v7526 = vsel %vm7525, %v7524, 0.0
        %v7529 = vunpack.c.l.s4 1966171168
        %v7530 = vunpack.c.0.s8 %v7529
        %v7531 = vlaneseq
        %v7532 = vshrl.u32 %v7531, 7
        %v7533 = vsub.s32 %v7530, %v7532
        %v7534 = vrot.slane %v7526, %v7533
        %v7535 = vcombine.high %v7534, %v7534
        %v7537 = vunpack.c.l.s4 1966171168
        %v7538 = vunpack.c.0.s8 %v7537
        %v7539 = vlaneseq
        %v7540 = vshrl.u32 %v7539, 7
        %v7541 = vsub.s32 %v7538, %v7540
        %v7542 = vrot.slane %v7534, %v7541
        %v7544 = vunpack.c.l.s4 1966171168
        %v7545 = vunpack.c.0.s8 %v7544
        %v7546 = vlaneseq
        %v7547 = vshrl.u32 %v7546, 7
        %v7548 = vsub.s32 %v7545, %v7547
        %v7549 = vrot.slane %v7535, %v7548
        %v7550 = vcombine.high %v7542, %v7542
        %v7551 = vcombine.high %v7549, %v7549
        %7556 = vst [vmem:[%s587] sm:$0x1] %v7542
        %7557 = vst [vmem:[%s587 + $0x1] sm:$0x1] %v7549
        %7558 = vst [vmem:[%s587 + $0x2] sm:$0x1] %v7550
        %7559 = vst [vmem:[%s587 + $0x3] sm:$0x1] %v7551
        %s7560 = sand.u32 %s295, 1
        %s7561 = scalar_lea.sflag [#allocation5], %s7560
        %s7562 = sand.u32 %s295, 1
        %s7563 = smul.addr %s7562, 4
        %s7564 = scalar_lea.vmem [#allocation14], %s7563
        %s7565 = smul.u32 4, %s41
        %p7566 = scmp.lt.s32.totalorder %s7565, 7
        %s7567 = scalar_select %p7566, %s7565, 7
        %s7568 = smul.addr %s7567, 4
        %s7569 = scalar_lea.vmem %s12, %s7568
        %s7570 = sand.u32 %s347, 1
        %s7571 = scalar_lea.sflag [#allocation16], %s7570
        %s7572 = sand.u32 %s347, 1
        %s7573 = smul.addr %s7572, 64
        %s7574 = scalar_lea.vmem [#allocation15], %s7573
        // Predicated region
        $region89: #{tpu_custom_call.1} parent=63 // pred_check
          %p7575 = pneg %p305
        $region90: #{tpu_custom_call.1} parent=63 // pred_check_branch
          %7577 = sbr.rel (%p7575) target = $region92
        $region91: #{tpu_custom_call.1} parent=63 // pred_region
          %s7578 = smul.u32 4, %s41
          %s7580 = ssub.s32 64, 64
          %7581 = vsyncadd %s7561, %s7580
          %s7582 = smul.addr %s7578, 16
          %s7583 = scalar_lea.hbm %s11, %s7582
          %s7584 = sshll.u32 %s7564, 4
          %s7585 = int_to_ptr.vmem [resolvable:$true] %s7584
          %7590 = dma.vmem_to_hbm [thread:$0]  %s7585, 64, %s7583, %s7561, 16, 16, 1
        $region92: #{tpu_custom_call.1} parent=63 // pred_fallthru
          _
        // Predicated region
        $region93: #{tpu_custom_call.1} parent=63 // pred_check
          %p7591 = pneg %p331
        $region94: #{tpu_custom_call.1} parent=63 // pred_check_branch
          %7593 = sbr.rel (%p7591) target = $region96
        $region95: #{tpu_custom_call.1} parent=63 // pred_region
          %s7594 = smul.u32 4, %s41
        $region96: #{tpu_custom_call.1} parent=63 // pred_fallthru
          _
        // Predicated region
        $region97: #{tpu_custom_call.1} parent=63 // pred_check
          %p7595 = pneg %p357
        $region98: #{tpu_custom_call.1} parent=63 // pred_check_branch
          %7597 = sbr.rel (%p7595) target = $region100
        $region99: #{tpu_custom_call.1} parent=63 // pred_region
          %s7598 = smul.u32 4, %s41
          %s7600 = ssub.s32 1024, 1024
          %7601 = vsyncadd %s7571, %s7600
          %s7602 = smul.addr %s7598, 2
          %s7603 = smul.addr %s7602, 128
          %s7604 = scalar_lea.hbm %s13, %s7603
          %s7605 = sshll.u32 %s7574, 4
          %s7606 = int_to_ptr.vmem [resolvable:$true] %s7605
          %7611 = dma.vmem_to_hbm [thread:$0]  %s7606, 1024, %s7604, %s7571, 128, 128, 8
        $region100: #{tpu_custom_call.1} parent=63 // pred_fallthru
          _
      $region64: #{tpu_custom_call.1} parent=5 // pred_fallthru
        _
      %p7612 = scmp.le.s32.totalorder 2, %s36
      // Predicated region
      $region101: #{tpu_custom_call.1} parent=5 // pred_check
        %p7613 = pneg %p7612
      $region102: #{tpu_custom_call.1} parent=5 // pred_check_branch
        %7615 = sbr.rel (%p7613) target = $region104
      $region103: #{tpu_custom_call.1} parent=5 // pred_region
        %s7616 = ssub.s32 %s36, 2
        // Predicated region
        $region105: #{tpu_custom_call.1} parent=103 // pred_check
          %p7617 = pneg %p311
        $region106: #{tpu_custom_call.1} parent=103 // pred_check_branch
          %7619 = sbr.rel (%p7617) target = $region108
        $region107: #{tpu_custom_call.1} parent=103 // pred_region
          %s7620 = sand.u32 %s296, 1
          %s7621 = scalar_lea.sflag [#allocation5], %s7620
          %s7622 = sand.u32 %s296, 1
          %s7623 = smul.addr %s7622, 4
          %s7624 = scalar_lea.vmem [#allocation14], %s7623
          %7625 = dma.done %s7621, 64
        $region108: #{tpu_custom_call.1} parent=103 // pred_fallthru
          _
        // Predicated region
        $region109: #{tpu_custom_call.1} parent=103 // pred_check
          %p7626 = pneg %p337
        $region110: #{tpu_custom_call.1} parent=103 // pred_check_branch
          %7628 = sbr.rel (%p7626) target = $region112
        $region111: #{tpu_custom_call.1} parent=103 // pred_region
          %s7629 = smul.u32 4, %s42
          %p7630 = scmp.lt.s32.totalorder %s7629, 7
          %s7631 = scalar_select %p7630, %s7629, 7
          %s7632 = smul.addr %s7631, 4
          %s7633 = scalar_lea.vmem %s12, %s7632
        $region112: #{tpu_custom_call.1} parent=103 // pred_fallthru
          _
        // Predicated region
        $region113: #{tpu_custom_call.1} parent=103 // pred_check
          %p7634 = pneg %p363
        $region114: #{tpu_custom_call.1} parent=103 // pred_check_branch
          %7636 = sbr.rel (%p7634) target = $region116
        $region115: #{tpu_custom_call.1} parent=103 // pred_region
          %s7637 = sand.u32 %s348, 1
          %s7638 = scalar_lea.sflag [#allocation16], %s7637
          %s7639 = sand.u32 %s348, 1
          %s7640 = smul.addr %s7639, 64
          %s7641 = scalar_lea.vmem [#allocation15], %s7640
          %7642 = dma.done %s7638, 1024
        $region116: #{tpu_custom_call.1} parent=103 // pred_fallthru
          _
      $region104: #{tpu_custom_call.1} parent=5 // pred_fallthru
        _
    $region6: #{tpu_custom_call.1} parent=1 // loop_footer
      %s40 = sadd.s32 1, %s36
    $region7: #{tpu_custom_call.1} parent=1 // loop_footer_branch
      %35 = sbr.rel target = $region3
    $region8: #{tpu_custom_call.1} parent=1 // loop_exit
      _
    %7643 = vsyncpa [#allocation4], 1
    %s7644 = scalar_lea.sflag [#allocation4], 1
    %7645 = vsyncpa %s7644, 1
    %7646 = vsyncpa [#allocation7], 1
    %s7647 = scalar_lea.sflag [#allocation7], 1
    %7648 = vsyncpa %s7647, 1
    %7649 = vsyncpa [#allocation10], 1
    %7650 = vsyncpa [#allocation13], 1
    %7651 = vsyncpa [#allocation5], 1
    %s7652 = scalar_lea.sflag [#allocation5], 1
    %7653 = vsyncpa %s7652, 1
    %7654 = vsyncpa [#allocation16], 1
    %s7655 = scalar_lea.sflag [#allocation16], 1
    %7656 = vsyncpa %s7655, 1

</llo_original>
